<compile_context>
chip_gen: v5e
topology: v5e:2x2
jax: 0.10.0
libtpu: 0.0.40
codegen_flags: <defaults>
</compile_context>

<pallas_src>
import jax
import jax.numpy as jnp
import numpy as np
from jax.experimental import pallas as pl
from jax.experimental.pallas import tpu as pltpu

# Fixed CarRacing geometry implied by fc_size = 8*8*64 (96x96x3 frames).
IMG = 96
C_IN = 3
S2D = 4                      # conv1 stride == space-to-depth factor
XS = IMG // S2D              # 24   s2d spatial
XC = C_IN * S2D * S2D        # 48   s2d channels
XPH = XS // 2                # 12   per-phase width (row/col parity split)
XP_ROWS = XPH * XPH          # 144  valid flat rows per input phase
XP_PAD_ROWS = 160            # padded so every static tap slice stays in bounds
C1 = 32
H1P_ROWS = XPH * XPH         # 144  flat rows per conv1 output phase (width 12)
C2 = 64
H2W = 10
H2_ROWS = H2W * XPH          # 120  conv2 out, flat width 12 (cols 10,11 junk)
H2_PAD_ROWS = 128
C3 = 64
H3W = 8
H3_ROWS = H3W * XPH          # 96   conv3 out, flat width 12 (cols 8..11 junk)
FC_K = H3W * H3W * C3        # 4096


# ----------------------------------------------------------------------------
# Fused conv1 -> conv2 -> conv3 kernel (one image per grid step, VMEM resident)
# ----------------------------------------------------------------------------
def _cnn_stack_kernel(xp_ref, w1_ref, b1_ref, w2_ref, b2_ref, w3_ref, b3_ref,
                      h3_ref, h1_ref, h2_ref):
    # xp_ref: (1, 4, 160, 48) bf16  phase-split, width-flattened s2d input
    # w1: (192, 32)  w2: (512, 64)  w3: (576, 64) bf16 ;  b*: (1, C) f32
    # h3_ref: (1, 96, 64) bf16 output ; h1_ref/h2_ref: VMEM scratch

    # ---- conv1: 2x2 stride-1 conv on s2d input, written per parity phase ----
    for rh in range(2):
        for rw in range(2):
            acc = jnp.zeros((H1P_ROWS, C1), jnp.float32)
            for dh in range(2):
                for dw in range(2):
                    src = ((rh + dh) % 2) * 2 + ((rw + dw) % 2)
                    off = ((rh + dh) // 2) * XPH + ((rw + dw) // 2)
                    slab = xp_ref[0, src, off:off + H1P_ROWS, :]
                    s = dh * 2 + dw
                    wblk = w1_ref[s * XC:(s + 1) * XC, :]
                    acc += jnp.dot(slab, wblk,
                                   preferred_element_type=jnp.float32)
            acc = jnp.maximum(acc + b1_ref[...], 0.0)
            h1_ref[rh * 2 + rw] = acc.astype(h1_ref.dtype)

    # ---- conv2: 4x4 stride-2 conv via the parity-phase decomposition --------
    acc = jnp.zeros((H2_ROWS, C2), jnp.float32)
    idx = 0
    for rh in range(2):
        for rw in range(2):
            for ph in range(2):
                for pw in range(2):
                    off = ph * XPH + pw
                    slab = h1_ref[rh * 2 + rw, off:off + H2_ROWS, :]
                    wblk = w2_ref[idx * C1:(idx + 1) * C1, :]
                    acc += jnp.dot(slab, wblk,
                                   preferred_element_type=jnp.float32)
                    idx += 1
    acc = jnp.maximum(acc + b2_ref[...], 0.0)
    h2_ref[0:H2_ROWS, :] = acc.astype(h2_ref.dtype)
    h2_ref[H2_ROWS:H2_PAD_ROWS, :] = jnp.zeros(
        (H2_PAD_ROWS - H2_ROWS, C2), h2_ref.dtype)

    # ---- conv3: 3x3 stride-1 conv -------------------------------------------
    acc = jnp.zeros((H3_ROWS, C3), jnp.float32)
    for dh in range(3):
        for dw in range(3):
            off = dh * XPH + dw
            slab = h2_ref[off:off + H3_ROWS, :]
            s = dh * 3 + dw
            wblk = w3_ref[s * C2:(s + 1) * C2, :]
            acc += jnp.dot(slab, wblk, preferred_element_type=jnp.float32)
    acc = jnp.maximum(acc + b3_ref[...], 0.0)
    h3_ref[0] = acc.astype(h3_ref.dtype)


def _conv_stack(xp, w1, b1, w2, b2, w3, b3):
    B = xp.shape[0]
    return pl.pallas_call(
        _cnn_stack_kernel,
        out_shape=jax.ShapeDtypeStruct((B, H3_ROWS, C3), jnp.bfloat16),
        grid_spec=pltpu.PrefetchScalarGridSpec(
            num_scalar_prefetch=0,
            grid=(B,),
            in_specs=[
                pl.BlockSpec((1, 4, XP_PAD_ROWS, XC), lambda b: (b, 0, 0, 0)),
                pl.BlockSpec((4 * XC, C1), lambda b: (0, 0)),
                pl.BlockSpec((1, C1), lambda b: (0, 0)),
                pl.BlockSpec((16 * C1, C2), lambda b: (0, 0)),
                pl.BlockSpec((1, C2), lambda b: (0, 0)),
                pl.BlockSpec((9 * C2, C3), lambda b: (0, 0)),
                pl.BlockSpec((1, C3), lambda b: (0, 0)),
            ],
            out_specs=pl.BlockSpec((1, H3_ROWS, C3), lambda b: (b, 0, 0)),
            scratch_shapes=[
                pltpu.VMEM((4, H1P_ROWS, C1), jnp.bfloat16),   # conv1 phases
                pltpu.VMEM((H2_PAD_ROWS, C2), jnp.bfloat16),   # conv2 output
            ],
        ),
        compiler_params=pltpu.CompilerParams(
            dimension_semantics=("parallel",)),
    )(xp, w1, b1, w2, b2, w3, b3)


# ----------------------------------------------------------------------------
# Tiny fc kernel: out = a @ w + b (full-extent blocks, no padding)
# ----------------------------------------------------------------------------
def _fc_kernel(a_ref, w_ref, b_ref, o_ref):
    o_ref[...] = (jnp.dot(a_ref[...], w_ref[...],
                          preferred_element_type=jnp.float32)
                  + b_ref[...]).astype(o_ref.dtype)


def _fc(a, w, b):
    M, K = a.shape
    _, N = w.shape
    return pl.pallas_call(
        _fc_kernel,
        out_shape=jax.ShapeDtypeStruct((M, N), jnp.float32),
        grid_spec=pltpu.PrefetchScalarGridSpec(
            num_scalar_prefetch=0,
            grid=(1,),
            in_specs=[
                pl.BlockSpec((M, K), lambda i: (0, 0)),
                pl.BlockSpec((K, N), lambda i: (0, 0)),
                pl.BlockSpec((1, N), lambda i: (0, 0)),
            ],
            out_specs=pl.BlockSpec((M, N), lambda i: (0, 0)),
        ),
    )(a, w, b)


# ----------------------------------------------------------------------------
# Input prep (XLA, pure data movement on the raw frames, inside the jit)
# ----------------------------------------------------------------------------
def _prep_input(x_nhwc):
    B = x_nhwc.shape[0]
    x = x_nhwc.astype(jnp.bfloat16)                 # 1/255 folded into w1
    # space-to-depth 4x4: conv1 becomes a 2x2 stride-1 conv on 48 channels
    x = x.reshape(B, XS, S2D, XS, S2D, C_IN).transpose(0, 1, 3, 2, 4, 5)
    x = x.reshape(B, XS, XS, XC)
    # row/col parity phase split + width-flatten (absorbs conv strides so the
    # kernel only ever does contiguous slices)
    x = x.reshape(B, XPH, 2, XPH, 2, XC).transpose(0, 2, 4, 1, 3, 5)
    x = x.reshape(B, 4, XP_ROWS, XC)
    return jnp.pad(x, ((0, 0), (0, 0), (0, XP_PAD_ROWS - XP_ROWS), (0, 0)))


# ----------------------------------------------------------------------------
# One-time parameter preparation (layout + 1/255 fold); done OUTSIDE the jit.
# ----------------------------------------------------------------------------
def prepare_params(params):
    # conv1: OIHW -> per-(dh,dw) blocks over the s2d feature order (fh,fw,c)
    w1 = params["w1"].astype(jnp.float32) / 255.0
    w1 = w1.reshape(C1, C_IN, 2, S2D, 2, S2D)       # [co, c, dh, fh, dw, fw]
    w1 = w1.transpose(2, 4, 3, 5, 1, 0).reshape(4 * XC, C1)

    # conv2: OIHW with taps regrouped by (rh, rw, ph, pw) to match the kernel
    w2 = params["w2"].astype(jnp.float32)
    w2 = w2.reshape(C2, C1, 2, 2, 2, 2)             # [co, c, ph, rh, pw, rw]
    w2 = w2.transpose(3, 5, 2, 4, 1, 0).reshape(16 * C1, C2)

    # conv3: OIHW -> (dh, dw, c) row blocks
    w3 = params["w3"].astype(jnp.float32)
    w3 = w3.transpose(2, 3, 1, 0).reshape(9 * C2, C3)

    # fc: permute rows so an (h, w, c) flatten matches PyTorch's NCHW flatten
    out_dim = params["w_fc"].shape[0]
    wfc = params["w_fc"].astype(jnp.float32).reshape(out_dim, C3, H3W, H3W)
    wfc = wfc.transpose(2, 3, 1, 0).reshape(FC_K, out_dim)

    return {
        "w1": w1.astype(jnp.bfloat16),
        "b1": params["b1"].astype(jnp.float32).reshape(1, C1),
        "w2": w2.astype(jnp.bfloat16),
        "b2": params["b2"].astype(jnp.float32).reshape(1, C2),
        "w3": w3.astype(jnp.bfloat16),
        "b3": params["b3"].astype(jnp.float32).reshape(1, C3),
        "w_fc": wfc.astype(jnp.bfloat16),
        "b_fc": params["b_fc"].astype(jnp.float32).reshape(1, out_dim),
    }


# ----------------------------------------------------------------------------
# CNNEncoder forward (expects prepared params)
# ----------------------------------------------------------------------------
def cnn_encoder_forward(p, x_nhwc):
    """x_nhwc: (B, 96, 96, 3) raw pixel values in [0, 255]."""
    B = x_nhwc.shape[0]
    xp = _prep_input(x_nhwc)
    h3 = _conv_stack(xp, p["w1"], p["b1"], p["w2"], p["b2"], p["w3"], p["b3"])
    # drop the width-padding garbage columns, flatten in (h, w, c) order
    h3 = h3.reshape(B, H3W, XPH, C3)[:, :, :H3W, :].reshape(B, FC_K)
    return _fc(h3, p["w_fc"], p["b_fc"])


def init_params(key, output_dim):
    ks = jax.random.split(key, 8)

    def w(k, shape, fan_in):
        return jax.random.normal(k, shape, jnp.float32) / np.float32(np.sqrt(fan_in))

    return {
        "w1": w(ks[0], (C1, C_IN, 8, 8), C_IN * 8 * 8),
        "b1": w(ks[1], (C1,), C_IN * 8 * 8),
        "w2": w(ks[2], (C2, C1, 4, 4), C1 * 4 * 4),
        "b2": w(ks[3], (C2,), C1 * 4 * 4),
        "w3": w(ks[4], (C3, C2, 3, 3), C2 * 3 * 3),
        "b3": w(ks[5], (C3,), C2 * 3 * 3),
        "w_fc": w(ks[6], (output_dim, FC_K), FC_K),
        "b_fc": w(ks[7], (output_dim,), FC_K),
    }


# ----------------------------------------------------------------------------
# Pure-JAX f32 reference (original module semantics)
# ----------------------------------------------------------------------------
def reference_forward(params, x_nhwc):
    h = x_nhwc.astype(jnp.float32) / 255.0

    def conv(h, w, b, stride):
        w_hwio = jnp.transpose(w, (2, 3, 1, 0))
        y = jax.lax.conv_general_dilated(
            h, w_hwio, (stride, stride), "VALID",
            dimension_numbers=("NHWC", "HWIO", "NHWC"),
            precision=jax.lax.Precision.HIGHEST) + b
        return jnp.maximum(y, 0.0)

    h = conv(h, params["w1"], params["b1"], 4)
    h = conv(h, params["w2"], params["b2"], 2)
    h = conv(h, params["w3"], params["b3"], 1)
    B = h.shape[0]
    h = jnp.transpose(h, (0, 3, 1, 2)).reshape(B, -1)      # NCHW flatten
    return jnp.dot(h, params["w_fc"].T,
                   precision=jax.lax.Precision.HIGHEST) + params["b_fc"]


if __name__ == "__main__":
    key = jax.random.PRNGKey(0)
    k_x, k_p = jax.random.split(key)

    B, OUTPUT_DIM = 2, 32
    # The module's fc_size = 8*8*64 forces 96x96x3 inputs (CarRacing frames).
    x = jax.random.uniform(k_x, (B, IMG, IMG, C_IN), jnp.float32,
                           minval=0.0, maxval=255.0)
    params = init_params(k_p, OUTPUT_DIM)
    prepared = prepare_params(params)

    fwd = jax.jit(cnn_encoder_forward)
    out = jax.block_until_ready(fwd(prepared, x))
    ref = jax.block_until_ready(reference_forward(params, x))

    assert out.shape == (B, OUTPUT_DIM), out.shape
    # bf16 MXU feed / bf16 intermediates vs. f32 HIGHEST reference.
    np.testing.assert_allclose(np.asarray(out), np.asarray(ref),
                               rtol=3e-2, atol=3e-2)
    print("KERNEL_OK")
</pallas_src>

<mosaic_0001>
module attributes {stable_mosaic.version = 11 : i64} {
  func.func @_cnn_stack_kernel(%arg0: i32, %arg1: memref<1x4x160x48xbf16, #tpu.memory_space<vmem>>, %arg2: memref<192x32xbf16, #tpu.memory_space<vmem>>, %arg3: memref<1x32xf32, #tpu.memory_space<vmem>>, %arg4: memref<512x64xbf16, #tpu.memory_space<vmem>>, %arg5: memref<1x64xf32, #tpu.memory_space<vmem>>, %arg6: memref<576x64xbf16, #tpu.memory_space<vmem>>, %arg7: memref<1x64xf32, #tpu.memory_space<vmem>>, %arg8: memref<1x96x64xbf16, #tpu.memory_space<vmem>>, %arg9: memref<4x144x32xbf16, #tpu.memory_space<vmem>>, %arg10: memref<128x64xbf16, #tpu.memory_space<vmem>>) attributes {dimension_semantics = [#tpu.dimension_semantics<parallel>], iteration_bounds = array<i64: 2>, scalar_prefetch = 0 : i64, scratch_operands = 2 : i64, tpu.core_type = #tpu.core_type<tc>, window_params = [{transform_indices = @transform_0, window_bounds = array<i64: 1, 4, 160, 48>}, {pipeline_mode = #tpu.pipeline_mode<synchronous>, transform_indices = @transform_1, window_bounds = array<i64: 192, 32>}, {pipeline_mode = #tpu.pipeline_mode<synchronous>, transform_indices = @transform_2, window_bounds = array<i64: 1, 32>}, {pipeline_mode = #tpu.pipeline_mode<synchronous>, transform_indices = @transform_3, window_bounds = array<i64: 512, 64>}, {pipeline_mode = #tpu.pipeline_mode<synchronous>, transform_indices = @transform_4, window_bounds = array<i64: 1, 64>}, {pipeline_mode = #tpu.pipeline_mode<synchronous>, transform_indices = @transform_5, window_bounds = array<i64: 576, 64>}, {pipeline_mode = #tpu.pipeline_mode<synchronous>, transform_indices = @transform_6, window_bounds = array<i64: 1, 64>}, {transform_indices = @transform_7, window_bounds = array<i64: 1, 96, 64>}]} {
    %cst = arith.constant 0.000000e+00 : f32
    %0 = vector.broadcast %cst : f32 to vector<144x32xf32>
    %c0 = arith.constant 0 : index
    %c0_0 = arith.constant 0 : index
    %c0_1 = arith.constant 0 : index
    %c0_2 = arith.constant 0 : index
    %1 = vector.load %arg1[%c0, %c0_0, %c0_1, %c0_2] : memref<1x4x160x48xbf16, #tpu.memory_space<vmem>>, vector<1x1x144x48xbf16>
    %2 = vector.shape_cast %1 : vector<1x1x144x48xbf16> to vector<144x48xbf16>
    %c0_3 = arith.constant 0 : index
    %c0_4 = arith.constant 0 : index
    %3 = vector.load %arg2[%c0_3, %c0_4] : memref<192x32xbf16, #tpu.memory_space<vmem>>, vector<48x32xbf16>
    %cst_5 = arith.constant dense<0.000000e+00> : vector<144x32xf32>
    %4 = tpu.matmul %2, %3, %cst_5 {dimension_numbers = #tpu.dot_dimension_numbers<[1], [0], [0], [1], [0, 0, 1, 1], [], []>} : vector<144x48xbf16>, vector<48x32xbf16>, vector<144x32xf32> -> vector<144x32xf32>
    %5 = arith.addf %0, %4 : vector<144x32xf32>
    %c0_6 = arith.constant 0 : index
    %c1 = arith.constant 1 : index
    %c0_7 = arith.constant 0 : index
    %c0_8 = arith.constant 0 : index
    %6 = vector.load %arg1[%c0_6, %c1, %c0_7, %c0_8] : memref<1x4x160x48xbf16, #tpu.memory_space<vmem>>, vector<1x1x144x48xbf16>
    %7 = vector.shape_cast %6 : vector<1x1x144x48xbf16> to vector<144x48xbf16>
    %c48 = arith.constant 48 : index
    %c0_9 = arith.constant 0 : index
    %8 = vector.load %arg2[%c48, %c0_9] : memref<192x32xbf16, #tpu.memory_space<vmem>>, vector<48x32xbf16>
    %cst_10 = arith.constant dense<0.000000e+00> : vector<144x32xf32>
    %9 = tpu.matmul %7, %8, %cst_10 {dimension_numbers = #tpu.dot_dimension_numbers<[1], [0], [0], [1], [0, 0, 1, 1], [], []>} : vector<144x48xbf16>, vector<48x32xbf16>, vector<144x32xf32> -> vector<144x32xf32>
    %10 = arith.addf %5, %9 : vector<144x32xf32>
    %c0_11 = arith.constant 0 : index
    %c2 = arith.constant 2 : index
    %c0_12 = arith.constant 0 : index
    %c0_13 = arith.constant 0 : index
    %11 = vector.load %arg1[%c0_11, %c2, %c0_12, %c0_13] : memref<1x4x160x48xbf16, #tpu.memory_space<vmem>>, vector<1x1x144x48xbf16>
    %12 = vector.shape_cast %11 : vector<1x1x144x48xbf16> to vector<144x48xbf16>
    %c96 = arith.constant 96 : index
    %c0_14 = arith.constant 0 : index
    %13 = vector.load %arg2[%c96, %c0_14] : memref<192x32xbf16, #tpu.memory_space<vmem>>, vector<48x32xbf16>
    %cst_15 = arith.constant dense<0.000000e+00> : vector<144x32xf32>
    %14 = tpu.matmul %12, %13, %cst_15 {dimension_numbers = #tpu.dot_dimension_numbers<[1], [0], [0], [1], [0, 0, 1, 1], [], []>} : vector<144x48xbf16>, vector<48x32xbf16>, vector<144x32xf32> -> vector<144x32xf32>
    %15 = arith.addf %10, %14 : vector<144x32xf32>
    %c0_16 = arith.constant 0 : index
    %c3 = arith.constant 3 : index
    %c0_17 = arith.constant 0 : index
    %c0_18 = arith.constant 0 : index
    %16 = vector.load %arg1[%c0_16, %c3, %c0_17, %c0_18] : memref<1x4x160x48xbf16, #tpu.memory_space<vmem>>, vector<1x1x144x48xbf16>
    %17 = vector.shape_cast %16 : vector<1x1x144x48xbf16> to vector<144x48xbf16>
    %c144 = arith.constant 144 : index
    %c0_19 = arith.constant 0 : index
    %18 = vector.load %arg2[%c144, %c0_19] : memref<192x32xbf16, #tpu.memory_space<vmem>>, vector<48x32xbf16>
    %cst_20 = arith.constant dense<0.000000e+00> : vector<144x32xf32>
    %19 = tpu.matmul %17, %18, %cst_20 {dimension_numbers = #tpu.dot_dimension_numbers<[1], [0], [0], [1], [0, 0, 1, 1], [], []>} : vector<144x48xbf16>, vector<48x32xbf16>, vector<144x32xf32> -> vector<144x32xf32>
    %20 = arith.addf %15, %19 : vector<144x32xf32>
    %c0_21 = arith.constant 0 : index
    %c0_22 = arith.constant 0 : index
    %21 = vector.load %arg3[%c0_21, %c0_22] : memref<1x32xf32, #tpu.memory_space<vmem>>, vector<1x32xf32>
    %22 = vector.broadcast %21 : vector<1x32xf32> to vector<144x32xf32>
    %23 = arith.addf %20, %22 : vector<144x32xf32>
    %cst_23 = arith.constant 0.000000e+00 : f32
    %24 = vector.broadcast %cst_23 : f32 to vector<144x32xf32>
    %25 = arith.maximumf %23, %24 : vector<144x32xf32>
    %26 = arith.truncf %25 : vector<144x32xf32> to vector<144x32xbf16>
    %c0_24 = arith.constant 0 : index
    %c0_25 = arith.constant 0 : index
    %c0_26 = arith.constant 0 : index
    %27 = vector.load %arg9[%c0_24, %c0_25, %c0_26] : memref<4x144x32xbf16, #tpu.memory_space<vmem>>, vector<1x144x32xbf16>
    %28 = vector.shape_cast %27 : vector<1x144x32xbf16> to vector<144x32xbf16>
    %29 = vector.shape_cast %26 : vector<144x32xbf16> to vector<1x144x32xbf16>
    tpu.vector_store %arg9[%c0_24, %c0_25, %c0_26], %29 {strides = array<i32>} : memref<4x144x32xbf16, #tpu.memory_space<vmem>>, vector<1x144x32xbf16>,
    %cst_27 = arith.constant 0.000000e+00 : f32
    %30 = vector.broadcast %cst_27 : f32 to vector<144x32xf32>
    %c0_28 = arith.constant 0 : index
    %c1_29 = arith.constant 1 : index
    %c0_30 = arith.constant 0 : index
    %c0_31 = arith.constant 0 : index
    %31 = vector.load %arg1[%c0_28, %c1_29, %c0_30, %c0_31] : memref<1x4x160x48xbf16, #tpu.memory_space<vmem>>, vector<1x1x144x48xbf16>
    %32 = vector.shape_cast %31 : vector<1x1x144x48xbf16> to vector<144x48xbf16>
    %c0_32 = arith.constant 0 : index
    %c0_33 = arith.constant 0 : index
    %33 = vector.load %arg2[%c0_32, %c0_33] : memref<192x32xbf16, #tpu.memory_space<vmem>>, vector<48x32xbf16>
    %cst_34 = arith.constant dense<0.000000e+00> : vector<144x32xf32>
    %34 = tpu.matmul %32, %33, %cst_34 {dimension_numbers = #tpu.dot_dimension_numbers<[1], [0], [0], [1], [0, 0, 1, 1], [], []>} : vector<144x48xbf16>, vector<48x32xbf16>, vector<144x32xf32> -> vector<144x32xf32>
    %35 = arith.addf %30, %34 : vector<144x32xf32>
    %c0_35 = arith.constant 0 : index
    %c0_36 = arith.constant 0 : index
    %c1_37 = arith.constant 1 : index
    %c0_38 = arith.constant 0 : index
    %36 = vector.load %arg1[%c0_35, %c0_36, %c1_37, %c0_38] : memref<1x4x160x48xbf16, #tpu.memory_space<vmem>>, vector<1x1x144x48xbf16>
    %37 = vector.shape_cast %36 : vector<1x1x144x48xbf16> to vector<144x48xbf16>
    %c48_39 = arith.constant 48 : index
    %c0_40 = arith.constant 0 : index
    %38 = vector.load %arg2[%c48_39, %c0_40] : memref<192x32xbf16, #tpu.memory_space<vmem>>, vector<48x32xbf16>
    %cst_41 = arith.constant dense<0.000000e+00> : vector<144x32xf32>
    %39 = tpu.matmul %37, %38, %cst_41 {dimension_numbers = #tpu.dot_dimension_numbers<[1], [0], [0], [1], [0, 0, 1, 1], [], []>} : vector<144x48xbf16>, vector<48x32xbf16>, vector<144x32xf32> -> vector<144x32xf32>
    %40 = arith.addf %35, %39 : vector<144x32xf32>
    %c0_42 = arith.constant 0 : index
    %c3_43 = arith.constant 3 : index
    %c0_44 = arith.constant 0 : index
    %c0_45 = arith.constant 0 : index
    %41 = vector.load %arg1[%c0_42, %c3_43, %c0_44, %c0_45] : memref<1x4x160x48xbf16, #tpu.memory_space<vmem>>, vector<1x1x144x48xbf16>
    %42 = vector.shape_cast %41 : vector<1x1x144x48xbf16> to vector<144x48xbf16>
    %c96_46 = arith.constant 96 : index
    %c0_47 = arith.constant 0 : index
    %43 = vector.load %arg2[%c96_46, %c0_47] : memref<192x32xbf16, #tpu.memory_space<vmem>>, vector<48x32xbf16>
    %cst_48 = arith.constant dense<0.000000e+00> : vector<144x32xf32>
    %44 = tpu.matmul %42, %43, %cst_48 {dimension_numbers = #tpu.dot_dimension_numbers<[1], [0], [0], [1], [0, 0, 1, 1], [], []>} : vector<144x48xbf16>, vector<48x32xbf16>, vector<144x32xf32> -> vector<144x32xf32>
    %45 = arith.addf %40, %44 : vector<144x32xf32>
    %c0_49 = arith.constant 0 : index
    %c2_50 = arith.constant 2 : index
    %c1_51 = arith.constant 1 : index
    %c0_52 = arith.constant 0 : index
    %46 = vector.load %arg1[%c0_49, %c2_50, %c1_51, %c0_52] : memref<1x4x160x48xbf16, #tpu.memory_space<vmem>>, vector<1x1x144x48xbf16>
    %47 = vector.shape_cast %46 : vector<1x1x144x48xbf16> to vector<144x48xbf16>
    %c144_53 = arith.constant 144 : index
    %c0_54 = arith.constant 0 : index
    %48 = vector.load %arg2[%c144_53, %c0_54] : memref<192x32xbf16, #tpu.memory_space<vmem>>, vector<48x32xbf16>
    %cst_55 = arith.constant dense<0.000000e+00> : vector<144x32xf32>
    %49 = tpu.matmul %47, %48, %cst_55 {dimension_numbers = #tpu.dot_dimension_numbers<[1], [0], [0], [1], [0, 0, 1, 1], [], []>} : vector<144x48xbf16>, vector<48x32xbf16>, vector<144x32xf32> -> vector<144x32xf32>
    %50 = arith.addf %45, %49 : vector<144x32xf32>
    %c0_56 = arith.constant 0 : index
    %c0_57 = arith.constant 0 : index
    %51 = vector.load %arg3[%c0_56, %c0_57] : memref<1x32xf32, #tpu.memory_space<vmem>>, vector<1x32xf32>
    %52 = vector.broadcast %51 : vector<1x32xf32> to vector<144x32xf32>
    %53 = arith.addf %50, %52 : vector<144x32xf32>
    %cst_58 = arith.constant 0.000000e+00 : f32
    %54 = vector.broadcast %cst_58 : f32 to vector<144x32xf32>
    %55 = arith.maximumf %53, %54 : vector<144x32xf32>
    %56 = arith.truncf %55 : vector<144x32xf32> to vector<144x32xbf16>
    %c1_59 = arith.constant 1 : index
    %c0_60 = arith.constant 0 : index
    %c0_61 = arith.constant 0 : index
    %57 = vector.load %arg9[%c1_59, %c0_60, %c0_61] : memref<4x144x32xbf16, #tpu.memory_space<vmem>>, vector<1x144x32xbf16>
    %58 = vector.shape_cast %57 : vector<1x144x32xbf16> to vector<144x32xbf16>
    %59 = vector.shape_cast %56 : vector<144x32xbf16> to vector<1x144x32xbf16>
    tpu.vector_store %arg9[%c1_59, %c0_60, %c0_61], %59 {strides = array<i32>} : memref<4x144x32xbf16, #tpu.memory_space<vmem>>, vector<1x144x32xbf16>,
    %cst_62 = arith.constant 0.000000e+00 : f32
    %60 = vector.broadcast %cst_62 : f32 to vector<144x32xf32>
    %c0_63 = arith.constant 0 : index
    %c2_64 = arith.constant 2 : index
    %c0_65 = arith.constant 0 : index
    %c0_66 = arith.constant 0 : index
    %61 = vector.load %arg1[%c0_63, %c2_64, %c0_65, %c0_66] : memref<1x4x160x48xbf16, #tpu.memory_space<vmem>>, vector<1x1x144x48xbf16>
    %62 = vector.shape_cast %61 : vector<1x1x144x48xbf16> to vector<144x48xbf16>
    %c0_67 = arith.constant 0 : index
    %c0_68 = arith.constant 0 : index
    %63 = vector.load %arg2[%c0_67, %c0_68] : memref<192x32xbf16, #tpu.memory_space<vmem>>, vector<48x32xbf16>
    %cst_69 = arith.constant dense<0.000000e+00> : vector<144x32xf32>
    %64 = tpu.matmul %62, %63, %cst_69 {dimension_numbers = #tpu.dot_dimension_numbers<[1], [0], [0], [1], [0, 0, 1, 1], [], []>} : vector<144x48xbf16>, vector<48x32xbf16>, vector<144x32xf32> -> vector<144x32xf32>
    %65 = arith.addf %60, %64 : vector<144x32xf32>
    %c0_70 = arith.constant 0 : index
    %c3_71 = arith.constant 3 : index
    %c0_72 = arith.constant 0 : index
    %c0_73 = arith.constant 0 : index
    %66 = vector.load %arg1[%c0_70, %c3_71, %c0_72, %c0_73] : memref<1x4x160x48xbf16, #tpu.memory_space<vmem>>, vector<1x1x144x48xbf16>
    %67 = vector.shape_cast %66 : vector<1x1x144x48xbf16> to vector<144x48xbf16>
    %c48_74 = arith.constant 48 : index
    %c0_75 = arith.constant 0 : index
    %68 = vector.load %arg2[%c48_74, %c0_75] : memref<192x32xbf16, #tpu.memory_space<vmem>>, vector<48x32xbf16>
    %cst_76 = arith.constant dense<0.000000e+00> : vector<144x32xf32>
    %69 = tpu.matmul %67, %68, %cst_76 {dimension_numbers = #tpu.dot_dimension_numbers<[1], [0], [0], [1], [0, 0, 1, 1], [], []>} : vector<144x48xbf16>, vector<48x32xbf16>, vector<144x32xf32> -> vector<144x32xf32>
    %70 = arith.addf %65, %69 : vector<144x32xf32>
    %c0_77 = arith.constant 0 : index
    %c0_78 = arith.constant 0 : index
    %c12 = arith.constant 12 : index
    %c0_79 = arith.constant 0 : index
    %71 = vector.load %arg1[%c0_77, %c0_78, %c12, %c0_79] : memref<1x4x160x48xbf16, #tpu.memory_space<vmem>>, vector<1x1x144x48xbf16>
    %72 = vector.shape_cast %71 : vector<1x1x144x48xbf16> to vector<144x48xbf16>
    %c96_80 = arith.constant 96 : index
    %c0_81 = arith.constant 0 : index
    %73 = vector.load %arg2[%c96_80, %c0_81] : memref<192x32xbf16, #tpu.memory_space<vmem>>, vector<48x32xbf16>
    %cst_82 = arith.constant dense<0.000000e+00> : vector<144x32xf32>
    %74 = tpu.matmul %72, %73, %cst_82 {dimension_numbers = #tpu.dot_dimension_numbers<[1], [0], [0], [1], [0, 0, 1, 1], [], []>} : vector<144x48xbf16>, vector<48x32xbf16>, vector<144x32xf32> -> vector<144x32xf32>
    %75 = arith.addf %70, %74 : vector<144x32xf32>
    %c0_83 = arith.constant 0 : index
    %c1_84 = arith.constant 1 : index
    %c12_85 = arith.constant 12 : index
    %c0_86 = arith.constant 0 : index
    %76 = vector.load %arg1[%c0_83, %c1_84, %c12_85, %c0_86] : memref<1x4x160x48xbf16, #tpu.memory_space<vmem>>, vector<1x1x144x48xbf16>
    %77 = vector.shape_cast %76 : vector<1x1x144x48xbf16> to vector<144x48xbf16>
    %c144_87 = arith.constant 144 : index
    %c0_88 = arith.constant 0 : index
    %78 = vector.load %arg2[%c144_87, %c0_88] : memref<192x32xbf16, #tpu.memory_space<vmem>>, vector<48x32xbf16>
    %cst_89 = arith.constant dense<0.000000e+00> : vector<144x32xf32>
    %79 = tpu.matmul %77, %78, %cst_89 {dimension_numbers = #tpu.dot_dimension_numbers<[1], [0], [0], [1], [0, 0, 1, 1], [], []>} : vector<144x48xbf16>, vector<48x32xbf16>, vector<144x32xf32> -> vector<144x32xf32>
    %80 = arith.addf %75, %79 : vector<144x32xf32>
    %c0_90 = arith.constant 0 : index
    %c0_91 = arith.constant 0 : index
    %81 = vector.load %arg3[%c0_90, %c0_91] : memref<1x32xf32, #tpu.memory_space<vmem>>, vector<1x32xf32>
    %82 = vector.broadcast %81 : vector<1x32xf32> to vector<144x32xf32>
    %83 = arith.addf %80, %82 : vector<144x32xf32>
    %cst_92 = arith.constant 0.000000e+00 : f32
    %84 = vector.broadcast %cst_92 : f32 to vector<144x32xf32>
    %85 = arith.maximumf %83, %84 : vector<144x32xf32>
    %86 = arith.truncf %85 : vector<144x32xf32> to vector<144x32xbf16>
    %c2_93 = arith.constant 2 : index
    %c0_94 = arith.constant 0 : index
    %c0_95 = arith.constant 0 : index
    %87 = vector.load %arg9[%c2_93, %c0_94, %c0_95] : memref<4x144x32xbf16, #tpu.memory_space<vmem>>, vector<1x144x32xbf16>
    %88 = vector.shape_cast %87 : vector<1x144x32xbf16> to vector<144x32xbf16>
    %89 = vector.shape_cast %86 : vector<144x32xbf16> to vector<1x144x32xbf16>
    tpu.vector_store %arg9[%c2_93, %c0_94, %c0_95], %89 {strides = array<i32>} : memref<4x144x32xbf16, #tpu.memory_space<vmem>>, vector<1x144x32xbf16>,
    %cst_96 = arith.constant 0.000000e+00 : f32
    %90 = vector.broadcast %cst_96 : f32 to vector<144x32xf32>
    %c0_97 = arith.constant 0 : index
    %c3_98 = arith.constant 3 : index
    %c0_99 = arith.constant 0 : index
    %c0_100 = arith.constant 0 : index
    %91 = vector.load %arg1[%c0_97, %c3_98, %c0_99, %c0_100] : memref<1x4x160x48xbf16, #tpu.memory_space<vmem>>, vector<1x1x144x48xbf16>
    %92 = vector.shape_cast %91 : vector<1x1x144x48xbf16> to vector<144x48xbf16>
    %c0_101 = arith.constant 0 : index
    %c0_102 = arith.constant 0 : index
    %93 = vector.load %arg2[%c0_101, %c0_102] : memref<192x32xbf16, #tpu.memory_space<vmem>>, vector<48x32xbf16>
    %cst_103 = arith.constant dense<0.000000e+00> : vector<144x32xf32>
    %94 = tpu.matmul %92, %93, %cst_103 {dimension_numbers = #tpu.dot_dimension_numbers<[1], [0], [0], [1], [0, 0, 1, 1], [], []>} : vector<144x48xbf16>, vector<48x32xbf16>, vector<144x32xf32> -> vector<144x32xf32>
    %95 = arith.addf %90, %94 : vector<144x32xf32>
    %c0_104 = arith.constant 0 : index
    %c2_105 = arith.constant 2 : index
    %c1_106 = arith.constant 1 : index
    %c0_107 = arith.constant 0 : index
    %96 = vector.load %arg1[%c0_104, %c2_105, %c1_106, %c0_107] : memref<1x4x160x48xbf16, #tpu.memory_space<vmem>>, vector<1x1x144x48xbf16>
    %97 = vector.shape_cast %96 : vector<1x1x144x48xbf16> to vector<144x48xbf16>
    %c48_108 = arith.constant 48 : index
    %c0_109 = arith.constant 0 : index
    %98 = vector.load %arg2[%c48_108, %c0_109] : memref<192x32xbf16, #tpu.memory_space<vmem>>, vector<48x32xbf16>
    %cst_110 = arith.constant dense<0.000000e+00> : vector<144x32xf32>
    %99 = tpu.matmul %97, %98, %cst_110 {dimension_numbers = #tpu.dot_dimension_numbers<[1], [0], [0], [1], [0, 0, 1, 1], [], []>} : vector<144x48xbf16>, vector<48x32xbf16>, vector<144x32xf32> -> vector<144x32xf32>
    %100 = arith.addf %95, %99 : vector<144x32xf32>
    %c0_111 = arith.constant 0 : index
    %c1_112 = arith.constant 1 : index
    %c12_113 = arith.constant 12 : index
    %c0_114 = arith.constant 0 : index
    %101 = vector.load %arg1[%c0_111, %c1_112, %c12_113, %c0_114] : memref<1x4x160x48xbf16, #tpu.memory_space<vmem>>, vector<1x1x144x48xbf16>
    %102 = vector.shape_cast %101 : vector<1x1x144x48xbf16> to vector<144x48xbf16>
    %c96_115 = arith.constant 96 : index
    %c0_116 = arith.constant 0 : index
    %103 = vector.load %arg2[%c96_115, %c0_116] : memref<192x32xbf16, #tpu.memory_space<vmem>>, vector<48x32xbf16>
    %cst_117 = arith.constant dense<0.000000e+00> : vector<144x32xf32>
    %104 = tpu.matmul %102, %103, %cst_117 {dimension_numbers = #tpu.dot_dimension_numbers<[1], [0], [0], [1], [0, 0, 1, 1], [], []>} : vector<144x48xbf16>, vector<48x32xbf16>, vector<144x32xf32> -> vector<144x32xf32>
    %105 = arith.addf %100, %104 : vector<144x32xf32>
    %c0_118 = arith.constant 0 : index
    %c0_119 = arith.constant 0 : index
    %c13 = arith.constant 13 : index
    %c0_120 = arith.constant 0 : index
    %106 = vector.load %arg1[%c0_118, %c0_119, %c13, %c0_120] : memref<1x4x160x48xbf16, #tpu.memory_space<vmem>>, vector<1x1x144x48xbf16>
    %107 = vector.shape_cast %106 : vector<1x1x144x48xbf16> to vector<144x48xbf16>
    %c144_121 = arith.constant 144 : index
    %c0_122 = arith.constant 0 : index
    %108 = vector.load %arg2[%c144_121, %c0_122] : memref<192x32xbf16, #tpu.memory_space<vmem>>, vector<48x32xbf16>
    %cst_123 = arith.constant dense<0.000000e+00> : vector<144x32xf32>
    %109 = tpu.matmul %107, %108, %cst_123 {dimension_numbers = #tpu.dot_dimension_numbers<[1], [0], [0], [1], [0, 0, 1, 1], [], []>} : vector<144x48xbf16>, vector<48x32xbf16>, vector<144x32xf32> -> vector<144x32xf32>
    %110 = arith.addf %105, %109 : vector<144x32xf32>
    %c0_124 = arith.constant 0 : index
    %c0_125 = arith.constant 0 : index
    %111 = vector.load %arg3[%c0_124, %c0_125] : memref<1x32xf32, #tpu.memory_space<vmem>>, vector<1x32xf32>
    %112 = vector.broadcast %111 : vector<1x32xf32> to vector<144x32xf32>
    %113 = arith.addf %110, %112 : vector<144x32xf32>
    %cst_126 = arith.constant 0.000000e+00 : f32
    %114 = vector.broadcast %cst_126 : f32 to vector<144x32xf32>
    %115 = arith.maximumf %113, %114 : vector<144x32xf32>
    %116 = arith.truncf %115 : vector<144x32xf32> to vector<144x32xbf16>
    %c3_127 = arith.constant 3 : index
    %c0_128 = arith.constant 0 : index
    %c0_129 = arith.constant 0 : index
    %117 = vector.load %arg9[%c3_127, %c0_128, %c0_129] : memref<4x144x32xbf16, #tpu.memory_space<vmem>>, vector<1x144x32xbf16>
    %118 = vector.shape_cast %117 : vector<1x144x32xbf16> to vector<144x32xbf16>
    %119 = vector.shape_cast %116 : vector<144x32xbf16> to vector<1x144x32xbf16>
    tpu.vector_store %arg9[%c3_127, %c0_128, %c0_129], %119 {strides = array<i32>} : memref<4x144x32xbf16, #tpu.memory_space<vmem>>, vector<1x144x32xbf16>,
    %cst_130 = arith.constant 0.000000e+00 : f32
    %120 = vector.broadcast %cst_130 : f32 to vector<120x64xf32>
    %c0_131 = arith.constant 0 : index
    %c0_132 = arith.constant 0 : index
    %c0_133 = arith.constant 0 : index
    %121 = vector.load %arg9[%c0_131, %c0_132, %c0_133] : memref<4x144x32xbf16, #tpu.memory_space<vmem>>, vector<1x120x32xbf16>
    %122 = vector.shape_cast %121 : vector<1x120x32xbf16> to vector<120x32xbf16>
    %c0_134 = arith.constant 0 : index
    %c0_135 = arith.constant 0 : index
    %123 = vector.load %arg4[%c0_134, %c0_135] : memref<512x64xbf16, #tpu.memory_space<vmem>>, vector<32x64xbf16>
    %cst_136 = arith.constant dense<0.000000e+00> : vector<120x64xf32>
    %124 = tpu.matmul %122, %123, %cst_136 {dimension_numbers = #tpu.dot_dimension_numbers<[1], [0], [0], [1], [0, 0, 1, 1], [], []>} : vector<120x32xbf16>, vector<32x64xbf16>, vector<120x64xf32> -> vector<120x64xf32>
    %125 = arith.addf %120, %124 : vector<120x64xf32>
    %c0_137 = arith.constant 0 : index
    %c1_138 = arith.constant 1 : index
    %c0_139 = arith.constant 0 : index
    %126 = vector.load %arg9[%c0_137, %c1_138, %c0_139] : memref<4x144x32xbf16, #tpu.memory_space<vmem>>, vector<1x120x32xbf16>
    %127 = vector.shape_cast %126 : vector<1x120x32xbf16> to vector<120x32xbf16>
    %c32 = arith.constant 32 : index
    %c0_140 = arith.constant 0 : index
    %128 = vector.load %arg4[%c32, %c0_140] : memref<512x64xbf16, #tpu.memory_space<vmem>>, vector<32x64xbf16>
    %cst_141 = arith.constant dense<0.000000e+00> : vector<120x64xf32>
    %129 = tpu.matmul %127, %128, %cst_141 {dimension_numbers = #tpu.dot_dimension_numbers<[1], [0], [0], [1], [0, 0, 1, 1], [], []>} : vector<120x32xbf16>, vector<32x64xbf16>, vector<120x64xf32> -> vector<120x64xf32>
    %130 = arith.addf %125, %129 : vector<120x64xf32>
    %c0_142 = arith.constant 0 : index
    %c12_143 = arith.constant 12 : index
    %c0_144 = arith.constant 0 : index
    %131 = vector.load %arg9[%c0_142, %c12_143, %c0_144] : memref<4x144x32xbf16, #tpu.memory_space<vmem>>, vector<1x120x32xbf16>
    %132 = vector.shape_cast %131 : vector<1x120x32xbf16> to vector<120x32xbf16>
    %c64 = arith.constant 64 : index
    %c0_145 = arith.constant 0 : index
    %133 = vector.load %arg4[%c64, %c0_145] : memref<512x64xbf16, #tpu.memory_space<vmem>>, vector<32x64xbf16>
    %cst_146 = arith.constant dense<0.000000e+00> : vector<120x64xf32>
    %134 = tpu.matmul %132, %133, %cst_146 {dimension_numbers = #tpu.dot_dimension_numbers<[1], [0], [0], [1], [0, 0, 1, 1], [], []>} : vector<120x32xbf16>, vector<32x64xbf16>, vector<120x64xf32> -> vector<120x64xf32>
    %135 = arith.addf %130, %134 : vector<120x64xf32>
    %c0_147 = arith.constant 0 : index
    %c13_148 = arith.constant 13 : index
    %c0_149 = arith.constant 0 : index
    %136 = vector.load %arg9[%c0_147, %c13_148, %c0_149] : memref<4x144x32xbf16, #tpu.memory_space<vmem>>, vector<1x120x32xbf16>
    %137 = vector.shape_cast %136 : vector<1x120x32xbf16> to vector<120x32xbf16>
    %c96_150 = arith.constant 96 : index
    %c0_151 = arith.constant 0 : index
    %138 = vector.load %arg4[%c96_150, %c0_151] : memref<512x64xbf16, #tpu.memory_space<vmem>>, vector<32x64xbf16>
    %cst_152 = arith.constant dense<0.000000e+00> : vector<120x64xf32>
    %139 = tpu.matmul %137, %138, %cst_152 {dimension_numbers = #tpu.dot_dimension_numbers<[1], [0], [0], [1], [0, 0, 1, 1], [], []>} : vector<120x32xbf16>, vector<32x64xbf16>, vector<120x64xf32> -> vector<120x64xf32>
    %140 = arith.addf %135, %139 : vector<120x64xf32>
    %c1_153 = arith.constant 1 : index
    %c0_154 = arith.constant 0 : index
    %c0_155 = arith.constant 0 : index
    %141 = vector.load %arg9[%c1_153, %c0_154, %c0_155] : memref<4x144x32xbf16, #tpu.memory_space<vmem>>, vector<1x120x32xbf16>
    %142 = vector.shape_cast %141 : vector<1x120x32xbf16> to vector<120x32xbf16>
    %c128 = arith.constant 128 : index
    %c0_156 = arith.constant 0 : index
    %143 = vector.load %arg4[%c128, %c0_156] : memref<512x64xbf16, #tpu.memory_space<vmem>>, vector<32x64xbf16>
    %cst_157 = arith.constant dense<0.000000e+00> : vector<120x64xf32>
    %144 = tpu.matmul %142, %143, %cst_157 {dimension_numbers = #tpu.dot_dimension_numbers<[1], [0], [0], [1], [0, 0, 1, 1], [], []>} : vector<120x32xbf16>, vector<32x64xbf16>, vector<120x64xf32> -> vector<120x64xf32>
    %145 = arith.addf %140, %144 : vector<120x64xf32>
    %c1_158 = arith.constant 1 : index
    %c1_159 = arith.constant 1 : index
    %c0_160 = arith.constant 0 : index
    %146 = vector.load %arg9[%c1_158, %c1_159, %c0_160] : memref<4x144x32xbf16, #tpu.memory_space<vmem>>, vector<1x120x32xbf16>
    %147 = vector.shape_cast %146 : vector<1x120x32xbf16> to vector<120x32xbf16>
    %c160 = arith.constant 160 : index
    %c0_161 = arith.constant 0 : index
    %148 = vector.load %arg4[%c160, %c0_161] : memref<512x64xbf16, #tpu.memory_space<vmem>>, vector<32x64xbf16>
    %cst_162 = arith.constant dense<0.000000e+00> : vector<120x64xf32>
    %149 = tpu.matmul %147, %148, %cst_162 {dimension_numbers = #tpu.dot_dimension_numbers<[1], [0], [0], [1], [0, 0, 1, 1], [], []>} : vector<120x32xbf16>, vector<32x64xbf16>, vector<120x64xf32> -> vector<120x64xf32>
    %150 = arith.addf %145, %149 : vector<120x64xf32>
    %c1_163 = arith.constant 1 : index
    %c12_164 = arith.constant 12 : index
    %c0_165 = arith.constant 0 : index
    %151 = vector.load %arg9[%c1_163, %c12_164, %c0_165] : memref<4x144x32xbf16, #tpu.memory_space<vmem>>, vector<1x120x32xbf16>
    %152 = vector.shape_cast %151 : vector<1x120x32xbf16> to vector<120x32xbf16>
    %c192 = arith.constant 192 : index
    %c0_166 = arith.constant 0 : index
    %153 = vector.load %arg4[%c192, %c0_166] : memref<512x64xbf16, #tpu.memory_space<vmem>>, vector<32x64xbf16>
    %cst_167 = arith.constant dense<0.000000e+00> : vector<120x64xf32>
    %154 = tpu.matmul %152, %153, %cst_167 {dimension_numbers = #tpu.dot_dimension_numbers<[1], [0], [0], [1], [0, 0, 1, 1], [], []>} : vector<120x32xbf16>, vector<32x64xbf16>, vector<120x64xf32> -> vector<120x64xf32>
    %155 = arith.addf %150, %154 : vector<120x64xf32>
    %c1_168 = arith.constant 1 : index
    %c13_169 = arith.constant 13 : index
    %c0_170 = arith.constant 0 : index
    %156 = vector.load %arg9[%c1_168, %c13_169, %c0_170] : memref<4x144x32xbf16, #tpu.memory_space<vmem>>, vector<1x120x32xbf16>
    %157 = vector.shape_cast %156 : vector<1x120x32xbf16> to vector<120x32xbf16>
    %c224 = arith.constant 224 : index
    %c0_171 = arith.constant 0 : index
    %158 = vector.load %arg4[%c224, %c0_171] : memref<512x64xbf16, #tpu.memory_space<vmem>>, vector<32x64xbf16>
    %cst_172 = arith.constant dense<0.000000e+00> : vector<120x64xf32>
    %159 = tpu.matmul %157, %158, %cst_172 {dimension_numbers = #tpu.dot_dimension_numbers<[1], [0], [0], [1], [0, 0, 1, 1], [], []>} : vector<120x32xbf16>, vector<32x64xbf16>, vector<120x64xf32> -> vector<120x64xf32>
    %160 = arith.addf %155, %159 : vector<120x64xf32>
    %c2_173 = arith.constant 2 : index
    %c0_174 = arith.constant 0 : index
    %c0_175 = arith.constant 0 : index
    %161 = vector.load %arg9[%c2_173, %c0_174, %c0_175] : memref<4x144x32xbf16, #tpu.memory_space<vmem>>, vector<1x120x32xbf16>
    %162 = vector.shape_cast %161 : vector<1x120x32xbf16> to vector<120x32xbf16>
    %c256 = arith.constant 256 : index
    %c0_176 = arith.constant 0 : index
    %163 = vector.load %arg4[%c256, %c0_176] : memref<512x64xbf16, #tpu.memory_space<vmem>>, vector<32x64xbf16>
    %cst_177 = arith.constant dense<0.000000e+00> : vector<120x64xf32>
    %164 = tpu.matmul %162, %163, %cst_177 {dimension_numbers = #tpu.dot_dimension_numbers<[1], [0], [0], [1], [0, 0, 1, 1], [], []>} : vector<120x32xbf16>, vector<32x64xbf16>, vector<120x64xf32> -> vector<120x64xf32>
    %165 = arith.addf %160, %164 : vector<120x64xf32>
    %c2_178 = arith.constant 2 : index
    %c1_179 = arith.constant 1 : index
    %c0_180 = arith.constant 0 : index
    %166 = vector.load %arg9[%c2_178, %c1_179, %c0_180] : memref<4x144x32xbf16, #tpu.memory_space<vmem>>, vector<1x120x32xbf16>
    %167 = vector.shape_cast %166 : vector<1x120x32xbf16> to vector<120x32xbf16>
    %c288 = arith.constant 288 : index
    %c0_181 = arith.constant 0 : index
    %168 = vector.load %arg4[%c288, %c0_181] : memref<512x64xbf16, #tpu.memory_space<vmem>>, vector<32x64xbf16>
    %cst_182 = arith.constant dense<0.000000e+00> : vector<120x64xf32>
    %169 = tpu.matmul %167, %168, %cst_182 {dimension_numbers = #tpu.dot_dimension_numbers<[1], [0], [0], [1], [0, 0, 1, 1], [], []>} : vector<120x32xbf16>, vector<32x64xbf16>, vector<120x64xf32> -> vector<120x64xf32>
    %170 = arith.addf %165, %169 : vector<120x64xf32>
    %c2_183 = arith.constant 2 : index
    %c12_184 = arith.constant 12 : index
    %c0_185 = arith.constant 0 : index
    %171 = vector.load %arg9[%c2_183, %c12_184, %c0_185] : memref<4x144x32xbf16, #tpu.memory_space<vmem>>, vector<1x120x32xbf16>
    %172 = vector.shape_cast %171 : vector<1x120x32xbf16> to vector<120x32xbf16>
    %c320 = arith.constant 320 : index
    %c0_186 = arith.constant 0 : index
    %173 = vector.load %arg4[%c320, %c0_186] : memref<512x64xbf16, #tpu.memory_space<vmem>>, vector<32x64xbf16>
    %cst_187 = arith.constant dense<0.000000e+00> : vector<120x64xf32>
    %174 = tpu.matmul %172, %173, %cst_187 {dimension_numbers = #tpu.dot_dimension_numbers<[1], [0], [0], [1], [0, 0, 1, 1], [], []>} : vector<120x32xbf16>, vector<32x64xbf16>, vector<120x64xf32> -> vector<120x64xf32>
    %175 = arith.addf %170, %174 : vector<120x64xf32>
    %c2_188 = arith.constant 2 : index
    %c13_189 = arith.constant 13 : index
    %c0_190 = arith.constant 0 : index
    %176 = vector.load %arg9[%c2_188, %c13_189, %c0_190] : memref<4x144x32xbf16, #tpu.memory_space<vmem>>, vector<1x120x32xbf16>
    %177 = vector.shape_cast %176 : vector<1x120x32xbf16> to vector<120x32xbf16>
    %c352 = arith.constant 352 : index
    %c0_191 = arith.constant 0 : index
    %178 = vector.load %arg4[%c352, %c0_191] : memref<512x64xbf16, #tpu.memory_space<vmem>>, vector<32x64xbf16>
    %cst_192 = arith.constant dense<0.000000e+00> : vector<120x64xf32>
    %179 = tpu.matmul %177, %178, %cst_192 {dimension_numbers = #tpu.dot_dimension_numbers<[1], [0], [0], [1], [0, 0, 1, 1], [], []>} : vector<120x32xbf16>, vector<32x64xbf16>, vector<120x64xf32> -> vector<120x64xf32>
    %180 = arith.addf %175, %179 : vector<120x64xf32>
    %c3_193 = arith.constant 3 : index
    %c0_194 = arith.constant 0 : index
    %c0_195 = arith.constant 0 : index
    %181 = vector.load %arg9[%c3_193, %c0_194, %c0_195] : memref<4x144x32xbf16, #tpu.memory_space<vmem>>, vector<1x120x32xbf16>
    %182 = vector.shape_cast %181 : vector<1x120x32xbf16> to vector<120x32xbf16>
    %c384 = arith.constant 384 : index
    %c0_196 = arith.constant 0 : index
    %183 = vector.load %arg4[%c384, %c0_196] : memref<512x64xbf16, #tpu.memory_space<vmem>>, vector<32x64xbf16>
    %cst_197 = arith.constant dense<0.000000e+00> : vector<120x64xf32>
    %184 = tpu.matmul %182, %183, %cst_197 {dimension_numbers = #tpu.dot_dimension_numbers<[1], [0], [0], [1], [0, 0, 1, 1], [], []>} : vector<120x32xbf16>, vector<32x64xbf16>, vector<120x64xf32> -> vector<120x64xf32>
    %185 = arith.addf %180, %184 : vector<120x64xf32>
    %c3_198 = arith.constant 3 : index
    %c1_199 = arith.constant 1 : index
    %c0_200 = arith.constant 0 : index
    %186 = vector.load %arg9[%c3_198, %c1_199, %c0_200] : memref<4x144x32xbf16, #tpu.memory_space<vmem>>, vector<1x120x32xbf16>
    %187 = vector.shape_cast %186 : vector<1x120x32xbf16> to vector<120x32xbf16>
    %c416 = arith.constant 416 : index
    %c0_201 = arith.constant 0 : index
    %188 = vector.load %arg4[%c416, %c0_201] : memref<512x64xbf16, #tpu.memory_space<vmem>>, vector<32x64xbf16>
    %cst_202 = arith.constant dense<0.000000e+00> : vector<120x64xf32>
    %189 = tpu.matmul %187, %188, %cst_202 {dimension_numbers = #tpu.dot_dimension_numbers<[1], [0], [0], [1], [0, 0, 1, 1], [], []>} : vector<120x32xbf16>, vector<32x64xbf16>, vector<120x64xf32> -> vector<120x64xf32>
    %190 = arith.addf %185, %189 : vector<120x64xf32>
    %c3_203 = arith.constant 3 : index
    %c12_204 = arith.constant 12 : index
    %c0_205 = arith.constant 0 : index
    %191 = vector.load %arg9[%c3_203, %c12_204, %c0_205] : memref<4x144x32xbf16, #tpu.memory_space<vmem>>, vector<1x120x32xbf16>
    %192 = vector.shape_cast %191 : vector<1x120x32xbf16> to vector<120x32xbf16>
    %c448 = arith.constant 448 : index
    %c0_206 = arith.constant 0 : index
    %193 = vector.load %arg4[%c448, %c0_206] : memref<512x64xbf16, #tpu.memory_space<vmem>>, vector<32x64xbf16>
    %cst_207 = arith.constant dense<0.000000e+00> : vector<120x64xf32>
    %194 = tpu.matmul %192, %193, %cst_207 {dimension_numbers = #tpu.dot_dimension_numbers<[1], [0], [0], [1], [0, 0, 1, 1], [], []>} : vector<120x32xbf16>, vector<32x64xbf16>, vector<120x64xf32> -> vector<120x64xf32>
    %195 = arith.addf %190, %194 : vector<120x64xf32>
    %c3_208 = arith.constant 3 : index
    %c13_209 = arith.constant 13 : index
    %c0_210 = arith.constant 0 : index
    %196 = vector.load %arg9[%c3_208, %c13_209, %c0_210] : memref<4x144x32xbf16, #tpu.memory_space<vmem>>, vector<1x120x32xbf16>
    %197 = vector.shape_cast %196 : vector<1x120x32xbf16> to vector<120x32xbf16>
    %c480 = arith.constant 480 : index
    %c0_211 = arith.constant 0 : index
    %198 = vector.load %arg4[%c480, %c0_211] : memref<512x64xbf16, #tpu.memory_space<vmem>>, vector<32x64xbf16>
    %cst_212 = arith.constant dense<0.000000e+00> : vector<120x64xf32>
    %199 = tpu.matmul %197, %198, %cst_212 {dimension_numbers = #tpu.dot_dimension_numbers<[1], [0], [0], [1], [0, 0, 1, 1], [], []>} : vector<120x32xbf16>, vector<32x64xbf16>, vector<120x64xf32> -> vector<120x64xf32>
    %200 = arith.addf %195, %199 : vector<120x64xf32>
    %c0_213 = arith.constant 0 : index
    %c0_214 = arith.constant 0 : index
    %201 = vector.load %arg5[%c0_213, %c0_214] : memref<1x64xf32, #tpu.memory_space<vmem>>, vector<1x64xf32>
    %202 = vector.broadcast %201 : vector<1x64xf32> to vector<120x64xf32>
    %203 = arith.addf %200, %202 : vector<120x64xf32>
    %cst_215 = arith.constant 0.000000e+00 : f32
    %204 = vector.broadcast %cst_215 : f32 to vector<120x64xf32>
    %205 = arith.maximumf %203, %204 : vector<120x64xf32>
    %206 = arith.truncf %205 : vector<120x64xf32> to vector<120x64xbf16>
    %c0_216 = arith.constant 0 : index
    %c0_217 = arith.constant 0 : index
    %207 = vector.load %arg10[%c0_216, %c0_217] : memref<128x64xbf16, #tpu.memory_space<vmem>>, vector<120x64xbf16>
    tpu.vector_store %arg10[%c0_216, %c0_217], %206 {strides = array<i32>} : memref<128x64xbf16, #tpu.memory_space<vmem>>, vector<120x64xbf16>,
    %cst_218 = arith.constant 0.000000e+00 : bf16
    %208 = vector.broadcast %cst_218 : bf16 to vector<8x64xbf16>
    %c120 = arith.constant 120 : index
    %c0_219 = arith.constant 0 : index
    %209 = vector.load %arg10[%c120, %c0_219] : memref<128x64xbf16, #tpu.memory_space<vmem>>, vector<8x64xbf16>
    tpu.vector_store %arg10[%c120, %c0_219], %208 {strides = array<i32>} : memref<128x64xbf16, #tpu.memory_space<vmem>>, vector<8x64xbf16>,
    %cst_220 = arith.constant 0.000000e+00 : f32
    %210 = vector.broadcast %cst_220 : f32 to vector<96x64xf32>
    %c0_221 = arith.constant 0 : index
    %c0_222 = arith.constant 0 : index
    %211 = vector.load %arg10[%c0_221, %c0_222] : memref<128x64xbf16, #tpu.memory_space<vmem>>, vector<96x64xbf16>
    %c0_223 = arith.constant 0 : index
    %c0_224 = arith.constant 0 : index
    %212 = vector.load %arg6[%c0_223, %c0_224] : memref<576x64xbf16, #tpu.memory_space<vmem>>, vector<64x64xbf16>
    %cst_225 = arith.constant dense<0.000000e+00> : vector<96x64xf32>
    %213 = tpu.matmul %211, %212, %cst_225 {dimension_numbers = #tpu.dot_dimension_numbers<[1], [0], [0], [1], [0, 0, 1, 1], [], []>} : vector<96x64xbf16>, vector<64x64xbf16>, vector<96x64xf32> -> vector<96x64xf32>
    %214 = arith.addf %210, %213 : vector<96x64xf32>
    %c1_226 = arith.constant 1 : index
    %c0_227 = arith.constant 0 : index
    %215 = vector.load %arg10[%c1_226, %c0_227] : memref<128x64xbf16, #tpu.memory_space<vmem>>, vector<96x64xbf16>
    %c64_228 = arith.constant 64 : index
    %c0_229 = arith.constant 0 : index
    %216 = vector.load %arg6[%c64_228, %c0_229] : memref<576x64xbf16, #tpu.memory_space<vmem>>, vector<64x64xbf16>
    %cst_230 = arith.constant dense<0.000000e+00> : vector<96x64xf32>
    %217 = tpu.matmul %215, %216, %cst_230 {dimension_numbers = #tpu.dot_dimension_numbers<[1], [0], [0], [1], [0, 0, 1, 1], [], []>} : vector<96x64xbf16>, vector<64x64xbf16>, vector<96x64xf32> -> vector<96x64xf32>
    %218 = arith.addf %214, %217 : vector<96x64xf32>
    %c2_231 = arith.constant 2 : index
    %c0_232 = arith.constant 0 : index
    %219 = vector.load %arg10[%c2_231, %c0_232] : memref<128x64xbf16, #tpu.memory_space<vmem>>, vector<96x64xbf16>
    %c128_233 = arith.constant 128 : index
    %c0_234 = arith.constant 0 : index
    %220 = vector.load %arg6[%c128_233, %c0_234] : memref<576x64xbf16, #tpu.memory_space<vmem>>, vector<64x64xbf16>
    %cst_235 = arith.constant dense<0.000000e+00> : vector<96x64xf32>
    %221 = tpu.matmul %219, %220, %cst_235 {dimension_numbers = #tpu.dot_dimension_numbers<[1], [0], [0], [1], [0, 0, 1, 1], [], []>} : vector<96x64xbf16>, vector<64x64xbf16>, vector<96x64xf32> -> vector<96x64xf32>
    %222 = arith.addf %218, %221 : vector<96x64xf32>
    %c12_236 = arith.constant 12 : index
    %c0_237 = arith.constant 0 : index
    %223 = vector.load %arg10[%c12_236, %c0_237] : memref<128x64xbf16, #tpu.memory_space<vmem>>, vector<96x64xbf16>
    %c192_238 = arith.constant 192 : index
    %c0_239 = arith.constant 0 : index
    %224 = vector.load %arg6[%c192_238, %c0_239] : memref<576x64xbf16, #tpu.memory_space<vmem>>, vector<64x64xbf16>
    %cst_240 = arith.constant dense<0.000000e+00> : vector<96x64xf32>
    %225 = tpu.matmul %223, %224, %cst_240 {dimension_numbers = #tpu.dot_dimension_numbers<[1], [0], [0], [1], [0, 0, 1, 1], [], []>} : vector<96x64xbf16>, vector<64x64xbf16>, vector<96x64xf32> -> vector<96x64xf32>
    %226 = arith.addf %222, %225 : vector<96x64xf32>
    %c13_241 = arith.constant 13 : index
    %c0_242 = arith.constant 0 : index
    %227 = vector.load %arg10[%c13_241, %c0_242] : memref<128x64xbf16, #tpu.memory_space<vmem>>, vector<96x64xbf16>
    %c256_243 = arith.constant 256 : index
    %c0_244 = arith.constant 0 : index
    %228 = vector.load %arg6[%c256_243, %c0_244] : memref<576x64xbf16, #tpu.memory_space<vmem>>, vector<64x64xbf16>
    %cst_245 = arith.constant dense<0.000000e+00> : vector<96x64xf32>
    %229 = tpu.matmul %227, %228, %cst_245 {dimension_numbers = #tpu.dot_dimension_numbers<[1], [0], [0], [1], [0, 0, 1, 1], [], []>} : vector<96x64xbf16>, vector<64x64xbf16>, vector<96x64xf32> -> vector<96x64xf32>
    %230 = arith.addf %226, %229 : vector<96x64xf32>
    %c14 = arith.constant 14 : index
    %c0_246 = arith.constant 0 : index
    %231 = vector.load %arg10[%c14, %c0_246] : memref<128x64xbf16, #tpu.memory_space<vmem>>, vector<96x64xbf16>
    %c320_247 = arith.constant 320 : index
    %c0_248 = arith.constant 0 : index
    %232 = vector.load %arg6[%c320_247, %c0_248] : memref<576x64xbf16, #tpu.memory_space<vmem>>, vector<64x64xbf16>
    %cst_249 = arith.constant dense<0.000000e+00> : vector<96x64xf32>
    %233 = tpu.matmul %231, %232, %cst_249 {dimension_numbers = #tpu.dot_dimension_numbers<[1], [0], [0], [1], [0, 0, 1, 1], [], []>} : vector<96x64xbf16>, vector<64x64xbf16>, vector<96x64xf32> -> vector<96x64xf32>
    %234 = arith.addf %230, %233 : vector<96x64xf32>
    %c24 = arith.constant 24 : index
    %c0_250 = arith.constant 0 : index
    %235 = vector.load %arg10[%c24, %c0_250] : memref<128x64xbf16, #tpu.memory_space<vmem>>, vector<96x64xbf16>
    %c384_251 = arith.constant 384 : index
    %c0_252 = arith.constant 0 : index
    %236 = vector.load %arg6[%c384_251, %c0_252] : memref<576x64xbf16, #tpu.memory_space<vmem>>, vector<64x64xbf16>
    %cst_253 = arith.constant dense<0.000000e+00> : vector<96x64xf32>
    %237 = tpu.matmul %235, %236, %cst_253 {dimension_numbers = #tpu.dot_dimension_numbers<[1], [0], [0], [1], [0, 0, 1, 1], [], []>} : vector<96x64xbf16>, vector<64x64xbf16>, vector<96x64xf32> -> vector<96x64xf32>
    %238 = arith.addf %234, %237 : vector<96x64xf32>
    %c25 = arith.constant 25 : index
    %c0_254 = arith.constant 0 : index
    %239 = vector.load %arg10[%c25, %c0_254] : memref<128x64xbf16, #tpu.memory_space<vmem>>, vector<96x64xbf16>
    %c448_255 = arith.constant 448 : index
    %c0_256 = arith.constant 0 : index
    %240 = vector.load %arg6[%c448_255, %c0_256] : memref<576x64xbf16, #tpu.memory_space<vmem>>, vector<64x64xbf16>
    %cst_257 = arith.constant dense<0.000000e+00> : vector<96x64xf32>
    %241 = tpu.matmul %239, %240, %cst_257 {dimension_numbers = #tpu.dot_dimension_numbers<[1], [0], [0], [1], [0, 0, 1, 1], [], []>} : vector<96x64xbf16>, vector<64x64xbf16>, vector<96x64xf32> -> vector<96x64xf32>
    %242 = arith.addf %238, %241 : vector<96x64xf32>
    %c26 = arith.constant 26 : index
    %c0_258 = arith.constant 0 : index
    %243 = vector.load %arg10[%c26, %c0_258] : memref<128x64xbf16, #tpu.memory_space<vmem>>, vector<96x64xbf16>
    %c512 = arith.constant 512 : index
    %c0_259 = arith.constant 0 : index
    %244 = vector.load %arg6[%c512, %c0_259] : memref<576x64xbf16, #tpu.memory_space<vmem>>, vector<64x64xbf16>
    %cst_260 = arith.constant dense<0.000000e+00> : vector<96x64xf32>
    %245 = tpu.matmul %243, %244, %cst_260 {dimension_numbers = #tpu.dot_dimension_numbers<[1], [0], [0], [1], [0, 0, 1, 1], [], []>} : vector<96x64xbf16>, vector<64x64xbf16>, vector<96x64xf32> -> vector<96x64xf32>
    %246 = arith.addf %242, %245 : vector<96x64xf32>
    %c0_261 = arith.constant 0 : index
    %c0_262 = arith.constant 0 : index
    %247 = vector.load %arg7[%c0_261, %c0_262] : memref<1x64xf32, #tpu.memory_space<vmem>>, vector<1x64xf32>
    %248 = vector.broadcast %247 : vector<1x64xf32> to vector<96x64xf32>
    %249 = arith.addf %246, %248 : vector<96x64xf32>
    %cst_263 = arith.constant 0.000000e+00 : f32
    %250 = vector.broadcast %cst_263 : f32 to vector<96x64xf32>
    %251 = arith.maximumf %249, %250 : vector<96x64xf32>
    %252 = arith.truncf %251 : vector<96x64xf32> to vector<96x64xbf16>
    %c0_264 = arith.constant 0 : index
    %c0_265 = arith.constant 0 : index
    %c0_266 = arith.constant 0 : index
    %253 = vector.load %arg8[%c0_264, %c0_265, %c0_266] : memref<1x96x64xbf16, #tpu.memory_space<vmem>>, vector<1x96x64xbf16>
    %254 = vector.shape_cast %253 : vector<1x96x64xbf16> to vector<96x64xbf16>
    %255 = vector.shape_cast %252 : vector<96x64xbf16> to vector<1x96x64xbf16>
    tpu.vector_store %arg8[%c0_264, %c0_265, %c0_266], %255 {strides = array<i32>} : memref<1x96x64xbf16, #tpu.memory_space<vmem>>, vector<1x96x64xbf16>,
    return
  }
  func.func @transform_0(%arg0: i32) -> (i32, i32, i32, i32) {
    %c0_i32 = arith.constant 0 : i32
    %c0_i32_0 = arith.constant 0 : i32
    %c0_i32_1 = arith.constant 0 : i32
    %c0_i32_2 = arith.constant 0 : i32
    return %arg0, %c0_i32, %c0_i32_0, %c0_i32_1 : i32, i32, i32, i32
  }
  func.func @transform_1(%arg0: i32) -> (i32, i32) {
    %c0_i32 = arith.constant 0 : i32
    %c0_i32_0 = arith.constant 0 : i32
    %c0_i32_1 = arith.constant 0 : i32
    return %c0_i32, %c0_i32_0 : i32, i32
  }
  func.func @transform_2(%arg0: i32) -> (i32, i32) {
    %c0_i32 = arith.constant 0 : i32
    %c0_i32_0 = arith.constant 0 : i32
    %c0_i32_1 = arith.constant 0 : i32
    return %c0_i32, %c0_i32_0 : i32, i32
  }
  func.func @transform_3(%arg0: i32) -> (i32, i32) {
    %c0_i32 = arith.constant 0 : i32
    %c0_i32_0 = arith.constant 0 : i32
    %c0_i32_1 = arith.constant 0 : i32
    return %c0_i32, %c0_i32_0 : i32, i32
  }
  func.func @transform_4(%arg0: i32) -> (i32, i32) {
    %c0_i32 = arith.constant 0 : i32
    %c0_i32_0 = arith.constant 0 : i32
    %c0_i32_1 = arith.constant 0 : i32
    return %c0_i32, %c0_i32_0 : i32, i32
  }
  func.func @transform_5(%arg0: i32) -> (i32, i32) {
    %c0_i32 = arith.constant 0 : i32
    %c0_i32_0 = arith.constant 0 : i32
    %c0_i32_1 = arith.constant 0 : i32
    return %c0_i32, %c0_i32_0 : i32, i32
  }
  func.func @transform_6(%arg0: i32) -> (i32, i32) {
    %c0_i32 = arith.constant 0 : i32
    %c0_i32_0 = arith.constant 0 : i32
    %c0_i32_1 = arith.constant 0 : i32
    return %c0_i32, %c0_i32_0 : i32, i32
  }
  func.func @transform_7(%arg0: i32) -> (i32, i32, i32) {
    %c0_i32 = arith.constant 0 : i32
    %c0_i32_0 = arith.constant 0 : i32
    %c0_i32_1 = arith.constant 0 : i32
    return %arg0, %c0_i32, %c0_i32_0 : i32, i32, i32
  }
}

module attributes {stable_mosaic.version = 11 : i64} {
  func.func @_fc_kernel(%arg0: i32, %arg1: memref<2x4096xbf16, #tpu.memory_space<vmem>>, %arg2: memref<4096x32xbf16, #tpu.memory_space<vmem>>, %arg3: memref<1x32xf32, #tpu.memory_space<vmem>>, %arg4: memref<2x32xf32, #tpu.memory_space<vmem>>) attributes {dimension_semantics = [#tpu.dimension_semantics<arbitrary>], iteration_bounds = array<i64: 1>, scalar_prefetch = 0 : i64, scratch_operands = 0 : i64, tpu.core_type = #tpu.core_type<tc>, window_params = [{pipeline_mode = #tpu.pipeline_mode<synchronous>, transform_indices = @transform_0, window_bounds = array<i64: 2, 4096>}, {pipeline_mode = #tpu.pipeline_mode<synchronous>, transform_indices = @transform_1, window_bounds = array<i64: 4096, 32>}, {pipeline_mode = #tpu.pipeline_mode<synchronous>, transform_indices = @transform_2, window_bounds = array<i64: 1, 32>}, {pipeline_mode = #tpu.pipeline_mode<synchronous>, transform_indices = @transform_3, window_bounds = array<i64: 2, 32>}]} {
    %c0 = arith.constant 0 : index
    %c0_0 = arith.constant 0 : index
    %0 = vector.load %arg1[%c0, %c0_0] : memref<2x4096xbf16, #tpu.memory_space<vmem>>, vector<2x4096xbf16>
    %c0_1 = arith.constant 0 : index
    %c0_2 = arith.constant 0 : index
    %1 = vector.load %arg2[%c0_1, %c0_2] : memref<4096x32xbf16, #tpu.memory_space<vmem>>, vector<4096x32xbf16>
    %cst = arith.constant dense<0.000000e+00> : vector<2x32xf32>
    %2 = tpu.matmul %0, %1, %cst {dimension_numbers = #tpu.dot_dimension_numbers<[1], [0], [0], [1], [0, 0, 1, 1], [], []>} : vector<2x4096xbf16>, vector<4096x32xbf16>, vector<2x32xf32> -> vector<2x32xf32>
    %c0_3 = arith.constant 0 : index
    %c0_4 = arith.constant 0 : index
    %3 = vector.load %arg3[%c0_3, %c0_4] : memref<1x32xf32, #tpu.memory_space<vmem>>, vector<1x32xf32>
    %4 = vector.broadcast %3 : vector<1x32xf32> to vector<2x32xf32>
    %5 = arith.addf %2, %4 : vector<2x32xf32>
    %c0_5 = arith.constant 0 : index
    %c0_6 = arith.constant 0 : index
    %6 = vector.load %arg4[%c0_5, %c0_6] : memref<2x32xf32, #tpu.memory_space<vmem>>, vector<2x32xf32>
    tpu.vector_store %arg4[%c0_5, %c0_6], %5 {strides = array<i32>} : memref<2x32xf32, #tpu.memory_space<vmem>>, vector<2x32xf32>,
    return
  }
  func.func @transform_0(%arg0: i32) -> (i32, i32) {
    %c0_i32 = arith.constant 0 : i32
    %c0_i32_0 = arith.constant 0 : i32
    %c0_i32_1 = arith.constant 0 : i32
    return %c0_i32, %c0_i32_0 : i32, i32
  }
  func.func @transform_1(%arg0: i32) -> (i32, i32) {
    %c0_i32 = arith.constant 0 : i32
    %c0_i32_0 = arith.constant 0 : i32
    %c0_i32_1 = arith.constant 0 : i32
    return %c0_i32, %c0_i32_0 : i32, i32
  }
  func.func @transform_2(%arg0: i32) -> (i32, i32) {
    %c0_i32 = arith.constant 0 : i32
    %c0_i32_0 = arith.constant 0 : i32
    %c0_i32_1 = arith.constant 0 : i32
    return %c0_i32, %c0_i32_0 : i32, i32
  }
  func.func @transform_3(%arg0: i32) -> (i32, i32) {
    %c0_i32 = arith.constant 0 : i32
    %c0_i32_0 = arith.constant 0 : i32
    %c0_i32_1 = arith.constant 0 : i32
    return %c0_i32, %c0_i32_0 : i32, i32
  }
}

</mosaic_0001>

<llo_original>
// kernel: cnn_encoder_forward.2
$region0: #{cnn_encoder_forward.2}
  #allocation0 [shape = 'u32[]', space=smem, size = 0x4, offset = 0x4, fixed_abs, tag = 'smem constant byte address 0x4 - core index']
  #allocation1 [shape = 'u32[72,128]{1,0:T(1,128)}', space=vmem, size = 0x9000, scoped, tag = 'internal scratch']
  #allocation2 [shape = 'bf16[4,144,32]{2,1,0:T(8,128)(2,1)}', space=vmem, size = 0x24000, scoped, tag = 'scratch operand']
  #allocation3 [shape = 'bf16[128,64]{1,0:T(8,128)(2,1)}', space=vmem, size = 0x8000, scoped, tag = 'scratch operand']
  %s0 = inlined_call_operand.vmem [shape: bf16[2,4,160,48], index: 0, kind: input, shape index: {}]
  %s1 = inlined_call_operand.vmem [shape: bf16[192,32], index: 1, kind: input, shape index: {}]
  %s2 = inlined_call_operand.vmem [shape: f32[1,32], index: 2, kind: input, shape index: {}]
  %s3 = inlined_call_operand.vmem [shape: bf16[512,64], index: 3, kind: input, shape index: {}]
  %s4 = inlined_call_operand.vmem [shape: f32[1,64], index: 4, kind: input, shape index: {}]
  %s5 = inlined_call_operand.vmem [shape: bf16[576,64], index: 5, kind: input, shape index: {}]
  %s6 = inlined_call_operand.vmem [shape: f32[1,64], index: 6, kind: input, shape index: {}]
  %s7 = inlined_call_operand.vmem [shape: bf16[2,96,64], index: 7, kind: output, shape index: {}]
  %s8 = sld [smem:[#allocation0]]
  $region61: #{cnn_encoder_forward.2} parent=0
    _
  %s10 = ssub.s32 1, %s8
  %s11 = scalar_select 0, %s10, %s8
  loop: start=0, step=1, limit=4
  $region2: #{cnn_encoder_forward.2} parent=0 // loop_pre_header
    _
  $region3: #{cnn_encoder_forward.2} parent=0 // loop_header
    %s13 = sphi 0, %s17
    %p14 = scmp.ge.s32.totalorder %s13, 4
    %s23 = sphi 0, %s25
    %s26 = sphi 0, %s23
    %s27 = sphi 0, %s26
    %s43 = sphi 0, %s27
    %s47 = sphi 0, %s47
    %s49 = sphi 0, %s47
    %s50 = sphi 0, %s49
    %s64 = sphi 0, %s50
    %s68 = sphi 0, %s68
    %s70 = sphi 0, %s68
    %s71 = sphi 0, %s70
    %s85 = sphi 0, %s71
    %s89 = sphi 0, %s89
    %s91 = sphi 0, %s89
    %s92 = sphi 0, %s91
    %s106 = sphi 0, %s92
    %s110 = sphi 0, %s110
    %s112 = sphi 0, %s110
    %s113 = sphi 0, %s112
    %s127 = sphi 0, %s113
    %s131 = sphi 0, %s131
    %s133 = sphi 0, %s131
    %s134 = sphi 0, %s133
    %s148 = sphi 0, %s134
    %s152 = sphi 0, %s152
    %s154 = sphi 0, %s152
    %s155 = sphi 0, %s154
    %s169 = sphi 0, %s155
    %s175 = sphi 0, %s177
    %s178 = sphi 0, %s175
    %s179 = sphi 0, %s178
    %s195 = sphi 0, %s179
  $region4: #{cnn_encoder_forward.2} parent=0 // loop_header_branch
    %16 = sbr.rel (%p14) target = $region8
  $region5: #{cnn_encoder_forward.2} parent=0 // loop_body
    %s18 = ssub.s32 %s13, 1
    %s19 = ssub.s32 %s13, 2
    %s20 = sadd.s32 %s13, 1
    %s21 = ssub.s32 %s13, %s20
    %p22 = scmp.eq.s32.totalorder %s21, 0
    %s24 = sadd.s32 %s23, 1
    %s25 = scalar_select %p22, %s23, %s24
    %p28 = pneg %p22
    %p29 = scmp.eq.s32.totalorder %s13, 1
    %p30 = por %p28, %p29
    %p31 = scmp.ne.s32.totalorder %s23, %s26
    %p32 = scmp.eq.s32.totalorder %s13, 0
    %p33 = por %p31, %p32
    %p34 = scmp.ne.s32.totalorder %s23, %s26
    %p35 = scmp.eq.s32.totalorder %s18, 1
    %p36 = por %p34, %p35
    %p37 = scmp.ne.s32.totalorder %s26, %s27
    %p38 = scmp.eq.s32.totalorder %s18, 0
    %p39 = por %p37, %p38
    %p40 = scmp.ne.s32.totalorder %s26, %s27
    %p41 = scmp.eq.s32.totalorder %s19, 1
    %p42 = por %p40, %p41
    %p44 = scmp.ne.s32.totalorder %s27, %s43
    %p45 = scmp.eq.s32.totalorder %s19, 0
    %p46 = por %p44, %p45
    %s48 = sadd.s32 %s47, 1
    %p51 = scmp.eq.s32.totalorder %s13, 1
    %p52 = scmp.ne.s32.totalorder %s47, %s49
    %p53 = scmp.eq.s32.totalorder %s13, 0
    %p54 = por %p52, %p53
    %p55 = scmp.ne.s32.totalorder %s47, %s49
    %p56 = scmp.eq.s32.totalorder %s18, 1
    %p57 = por %p55, %p56
    %p58 = scmp.ne.s32.totalorder %s49, %s50
    %p59 = scmp.eq.s32.totalorder %s18, 0
    %p60 = por %p58, %p59
    %p61 = scmp.ne.s32.totalorder %s49, %s50
    %p62 = scmp.eq.s32.totalorder %s19, 1
    %p63 = por %p61, %p62
    %p65 = scmp.ne.s32.totalorder %s50, %s64
    %p66 = scmp.eq.s32.totalorder %s19, 0
    %p67 = por %p65, %p66
    %s69 = sadd.s32 %s68, 1
    %p72 = scmp.eq.s32.totalorder %s13, 1
    %p73 = scmp.ne.s32.totalorder %s68, %s70
    %p74 = scmp.eq.s32.totalorder %s13, 0
    %p75 = por %p73, %p74
    %p76 = scmp.ne.s32.totalorder %s68, %s70
    %p77 = scmp.eq.s32.totalorder %s18, 1
    %p78 = por %p76, %p77
    %p79 = scmp.ne.s32.totalorder %s70, %s71
    %p80 = scmp.eq.s32.totalorder %s18, 0
    %p81 = por %p79, %p80
    %p82 = scmp.ne.s32.totalorder %s70, %s71
    %p83 = scmp.eq.s32.totalorder %s19, 1
    %p84 = por %p82, %p83
    %p86 = scmp.ne.s32.totalorder %s71, %s85
    %p87 = scmp.eq.s32.totalorder %s19, 0
    %p88 = por %p86, %p87
    %s90 = sadd.s32 %s89, 1
    %p93 = scmp.eq.s32.totalorder %s13, 1
    %p94 = scmp.ne.s32.totalorder %s89, %s91
    %p95 = scmp.eq.s32.totalorder %s13, 0
    %p96 = por %p94, %p95
    %p97 = scmp.ne.s32.totalorder %s89, %s91
    %p98 = scmp.eq.s32.totalorder %s18, 1
    %p99 = por %p97, %p98
    %p100 = scmp.ne.s32.totalorder %s91, %s92
    %p101 = scmp.eq.s32.totalorder %s18, 0
    %p102 = por %p100, %p101
    %p103 = scmp.ne.s32.totalorder %s91, %s92
    %p104 = scmp.eq.s32.totalorder %s19, 1
    %p105 = por %p103, %p104
    %p107 = scmp.ne.s32.totalorder %s92, %s106
    %p108 = scmp.eq.s32.totalorder %s19, 0
    %p109 = por %p107, %p108
    %s111 = sadd.s32 %s110, 1
    %p114 = scmp.eq.s32.totalorder %s13, 1
    %p115 = scmp.ne.s32.totalorder %s110, %s112
    %p116 = scmp.eq.s32.totalorder %s13, 0
    %p117 = por %p115, %p116
    %p118 = scmp.ne.s32.totalorder %s110, %s112
    %p119 = scmp.eq.s32.totalorder %s18, 1
    %p120 = por %p118, %p119
    %p121 = scmp.ne.s32.totalorder %s112, %s113
    %p122 = scmp.eq.s32.totalorder %s18, 0
    %p123 = por %p121, %p122
    %p124 = scmp.ne.s32.totalorder %s112, %s113
    %p125 = scmp.eq.s32.totalorder %s19, 1
    %p126 = por %p124, %p125
    %p128 = scmp.ne.s32.totalorder %s113, %s127
    %p129 = scmp.eq.s32.totalorder %s19, 0
    %p130 = por %p128, %p129
    %s132 = sadd.s32 %s131, 1
    %p135 = scmp.eq.s32.totalorder %s13, 1
    %p136 = scmp.ne.s32.totalorder %s131, %s133
    %p137 = scmp.eq.s32.totalorder %s13, 0
    %p138 = por %p136, %p137
    %p139 = scmp.ne.s32.totalorder %s131, %s133
    %p140 = scmp.eq.s32.totalorder %s18, 1
    %p141 = por %p139, %p140
    %p142 = scmp.ne.s32.totalorder %s133, %s134
    %p143 = scmp.eq.s32.totalorder %s18, 0
    %p144 = por %p142, %p143
    %p145 = scmp.ne.s32.totalorder %s133, %s134
    %p146 = scmp.eq.s32.totalorder %s19, 1
    %p147 = por %p145, %p146
    %p149 = scmp.ne.s32.totalorder %s134, %s148
    %p150 = scmp.eq.s32.totalorder %s19, 0
    %p151 = por %p149, %p150
    %s153 = sadd.s32 %s152, 1
    %p156 = scmp.eq.s32.totalorder %s13, 1
    %p157 = scmp.ne.s32.totalorder %s152, %s154
    %p158 = scmp.eq.s32.totalorder %s13, 0
    %p159 = por %p157, %p158
    %p160 = scmp.ne.s32.totalorder %s152, %s154
    %p161 = scmp.eq.s32.totalorder %s18, 1
    %p162 = por %p160, %p161
    %p163 = scmp.ne.s32.totalorder %s154, %s155
    %p164 = scmp.eq.s32.totalorder %s18, 0
    %p165 = por %p163, %p164
    %p166 = scmp.ne.s32.totalorder %s154, %s155
    %p167 = scmp.eq.s32.totalorder %s19, 1
    %p168 = por %p166, %p167
    %p170 = scmp.ne.s32.totalorder %s155, %s169
    %p171 = scmp.eq.s32.totalorder %s19, 0
    %p172 = por %p170, %p171
    %s173 = ssub.s32 %s13, %s20
    %p174 = scmp.eq.s32.totalorder %s173, 0
    %s176 = sadd.s32 %s175, 1
    %s177 = scalar_select %p174, %s175, %s176
    %p180 = pneg %p174
    %p181 = scmp.eq.s32.totalorder %s13, 1
    %p182 = por %p180, %p181
    %p183 = scmp.ne.s32.totalorder %s175, %s178
    %p184 = scmp.eq.s32.totalorder %s13, 0
    %p185 = por %p183, %p184
    %p186 = scmp.ne.s32.totalorder %s175, %s178
    %p187 = scmp.eq.s32.totalorder %s18, 1
    %p188 = por %p186, %p187
    %p189 = scmp.ne.s32.totalorder %s178, %s179
    %p190 = scmp.eq.s32.totalorder %s18, 0
    %p191 = por %p189, %p190
    %p192 = scmp.ne.s32.totalorder %s178, %s179
    %p193 = scmp.eq.s32.totalorder %s19, 1
    %p194 = por %p192, %p193
    %p196 = scmp.ne.s32.totalorder %s179, %s195
    %p197 = scmp.eq.s32.totalorder %s19, 0
    %p198 = por %p196, %p197
    %p199 = scmp.le.s32.totalorder 1, %s13
    %p200 = scmp.lt.s32.totalorder %s13, 3
    %p201 = pnand %p199, %p200
    %p202 = pneg %p201
    // Predicated region
    $region9: #{cnn_encoder_forward.2} parent=5 // pred_check
      _
    $region10: #{cnn_encoder_forward.2} parent=5 // pred_check_branch
      %204 = sbr.rel (%p201) target = $region12
    $region11: #{cnn_encoder_forward.2} parent=5 // pred_region
      %s205 = ssub.s32 %s13, 1
      // Predicated region
      $region13: #{cnn_encoder_forward.2} parent=11 // pred_check
        %p206 = pneg %p60
      $region14: #{cnn_encoder_forward.2} parent=11 // pred_check_branch
        %208 = sbr.rel (%p206) target = $region16
      $region15: #{cnn_encoder_forward.2} parent=11 // pred_region
        _
      $region16: #{cnn_encoder_forward.2} parent=11 // pred_fallthru
        _
      // Predicated region
      $region17: #{cnn_encoder_forward.2} parent=11 // pred_check
        %p209 = pneg %p81
      $region18: #{cnn_encoder_forward.2} parent=11 // pred_check_branch
        %211 = sbr.rel (%p209) target = $region20
      $region19: #{cnn_encoder_forward.2} parent=11 // pred_region
        _
      $region20: #{cnn_encoder_forward.2} parent=11 // pred_fallthru
        _
      // Predicated region
      $region21: #{cnn_encoder_forward.2} parent=11 // pred_check
        %p212 = pneg %p102
      $region22: #{cnn_encoder_forward.2} parent=11 // pred_check_branch
        %214 = sbr.rel (%p212) target = $region24
      $region23: #{cnn_encoder_forward.2} parent=11 // pred_region
        _
      $region24: #{cnn_encoder_forward.2} parent=11 // pred_fallthru
        _
      // Predicated region
      $region25: #{cnn_encoder_forward.2} parent=11 // pred_check
        %p215 = pneg %p123
      $region26: #{cnn_encoder_forward.2} parent=11 // pred_check_branch
        %217 = sbr.rel (%p215) target = $region28
      $region27: #{cnn_encoder_forward.2} parent=11 // pred_region
        _
      $region28: #{cnn_encoder_forward.2} parent=11 // pred_fallthru
        _
      // Predicated region
      $region29: #{cnn_encoder_forward.2} parent=11 // pred_check
        %p218 = pneg %p144
      $region30: #{cnn_encoder_forward.2} parent=11 // pred_check_branch
        %220 = sbr.rel (%p218) target = $region32
      $region31: #{cnn_encoder_forward.2} parent=11 // pred_region
        _
      $region32: #{cnn_encoder_forward.2} parent=11 // pred_fallthru
        _
      // Predicated region
      $region33: #{cnn_encoder_forward.2} parent=11 // pred_check
        %p221 = pneg %p165
      $region34: #{cnn_encoder_forward.2} parent=11 // pred_check_branch
        %223 = sbr.rel (%p221) target = $region36
      $region35: #{cnn_encoder_forward.2} parent=11 // pred_region
        _
      $region36: #{cnn_encoder_forward.2} parent=11 // pred_fallthru
        _
    $region12: #{cnn_encoder_forward.2} parent=5 // pred_fallthru
      _
    %p224 = scmp.lt.s32.totalorder %s13, 2
    // Predicated region
    $region37: #{cnn_encoder_forward.2} parent=5 // pred_check
      %p225 = pneg %p224
    $region38: #{cnn_encoder_forward.2} parent=5 // pred_check_branch
      %227 = sbr.rel (%p225) target = $region40
    $region39: #{cnn_encoder_forward.2} parent=5 // pred_region
      // Predicated region
      $region41: #{cnn_encoder_forward.2} parent=39 // pred_check
        %p228 = pneg %p33
      $region42: #{cnn_encoder_forward.2} parent=39 // pred_check_branch
        %230 = sbr.rel (%p228) target = $region44
      $region43: #{cnn_encoder_forward.2} parent=39 // pred_region
        %p231 = scmp.lt.s32.totalorder %s13, 1
        %s232 = scalar_select %p231, %s13, 1
        %s233 = smul.addr %s232, 80
        %s234 = smul.addr %s233, 4
        %s235 = scalar_lea.vmem %s0, %s234
      $region44: #{cnn_encoder_forward.2} parent=39 // pred_fallthru
        _
    $region40: #{cnn_encoder_forward.2} parent=5 // pred_fallthru
      _
    %p236 = scmp.le.s32.totalorder 1, %s13
    %p237 = scmp.lt.s32.totalorder %s13, 3
    %p238 = pnand %p236, %p237
    %p239 = pneg %p238
    // Predicated region
    $region45: #{cnn_encoder_forward.2} parent=5 // pred_check
      _
    $region46: #{cnn_encoder_forward.2} parent=5 // pred_check_branch
      %241 = sbr.rel (%p238) target = $region48
    $region47: #{cnn_encoder_forward.2} parent=5 // pred_region
      %s242 = ssub.s32 %s13, 1
      %p243 = scmp.lt.s32.totalorder %s18, 1
      %s244 = scalar_select %p243, %s18, 1
      %s245 = smul.addr %s244, 80
      %s246 = smul.addr %s245, 4
      %s247 = scalar_lea.vmem %s0, %s246
      %p248 = pneg %p39
      %p249 = pneg %p36
      %p250 = pneg %p60
      %p251 = pneg %p57
      %p252 = pneg %p81
      %p253 = pneg %p78
      %p254 = pneg %p102
      %p255 = pneg %p99
      %p256 = pneg %p123
      %p257 = pneg %p120
      %p258 = pneg %p144
      %p259 = pneg %p141
      %p260 = pneg %p165
      %p261 = pneg %p162
      %p262 = pneg %p191
      %p263 = pneg %p188
      %p264 = scmp.lt.s32.totalorder %s18, 1
      %s265 = scalar_select %p264, %s18, 1
      %s266 = smul.addr %s265, 12
      %s267 = smul.addr %s266, 4
      %s268 = scalar_lea.vmem %s7, %s267
      %p269 = scmp.lt.s32.totalorder %s18, 1
      %s270 = scalar_select %p269, %s18, 1
      %s271 = smul.addr %s270, 80
      %s272 = smul.addr %s271, 4
      %s273 = scalar_lea.vmem %s0, %s272
      %p274 = scmp.lt.s32.totalorder %s18, 1
      %s275 = scalar_select %p274, %s18, 1
      %s276 = smul.addr %s275, 12
      %s277 = smul.addr %s276, 4
      %s278 = scalar_lea.vmem %s7, %s277
      %v280 = vld [vmem:[%s273] sm:$0xf]
      %v281 = vld [vmem:[%s273 + $0x4] sm:$0xf]
      %v282 = vld [vmem:[%s273 + $0x8] sm:$0xf]
      %v283 = vld [vmem:[%s273 + $0xc] sm:$0xf]
      %v284 = vld [vmem:[%s273 + $0x10] sm:$0xf]
      %v285 = vld [vmem:[%s273 + $0x14] sm:$0xf]
      %v286 = vld [vmem:[%s273 + $0x18] sm:$0xf]
      %v287 = vld [vmem:[%s273 + $0x1c] sm:$0xf]
      %v288 = vld [vmem:[%s273 + $0x20] sm:$0xf]
      %v289 = vld [vmem:[%s273 + $0x24] sm:$0xf]
      %v290 = vld [vmem:[%s273 + $0x28] sm:$0xf]
      %v291 = vld [vmem:[%s273 + $0x2c] sm:$0xf]
      %v292 = vld [vmem:[%s273 + $0x30] sm:$0xf]
      %v293 = vld [vmem:[%s273 + $0x34] sm:$0xf]
      %v294 = vld [vmem:[%s273 + $0x38] sm:$0xf]
      %v295 = vld [vmem:[%s273 + $0x3c] sm:$0xf]
      %v296 = vld [vmem:[%s273 + $0x40] sm:$0xf]
      %v297 = vld [vmem:[%s273 + $0x44] sm:$0xf]
      %v298 = vld [vmem:[%s1] sm:$0xf]
      %v299 = vld [vmem:[%s1 + $0x4] sm:$0xf]
      %v300 = vld [vmem:[%s1 + $0x8] sm:$0xf]
      %v301 = vld [vmem:[%s1 + $0xc] sm:$0xf]
      %v302 = vld [vmem:[%s1 + $0x10] sm:$0xf]
      %v303 = vld [vmem:[%s1 + $0x14] sm:$0xf]
      %s304 = scalar_lea.vmem %s273, 80
      %v305 = vld [vmem:[%s304] sm:$0xf]
      %v306 = vld [vmem:[%s304 + $0x4] sm:$0xf]
      %v307 = vld [vmem:[%s304 + $0x8] sm:$0xf]
      %v308 = vld [vmem:[%s304 + $0xc] sm:$0xf]
      %v309 = vld [vmem:[%s304 + $0x10] sm:$0xf]
      %v310 = vld [vmem:[%s304 + $0x14] sm:$0xf]
      %v311 = vld [vmem:[%s304 + $0x18] sm:$0xf]
      %v312 = vld [vmem:[%s304 + $0x1c] sm:$0xf]
      %v313 = vld [vmem:[%s304 + $0x20] sm:$0xf]
      %v314 = vld [vmem:[%s304 + $0x24] sm:$0xf]
      %v315 = vld [vmem:[%s304 + $0x28] sm:$0xf]
      %v316 = vld [vmem:[%s304 + $0x2c] sm:$0xf]
      %v317 = vld [vmem:[%s304 + $0x30] sm:$0xf]
      %v318 = vld [vmem:[%s304 + $0x34] sm:$0xf]
      %v319 = vld [vmem:[%s304 + $0x38] sm:$0xf]
      %v320 = vld [vmem:[%s304 + $0x3c] sm:$0xf]
      %v321 = vld [vmem:[%s304 + $0x40] sm:$0xf]
      %v322 = vld [vmem:[%s304 + $0x44] sm:$0xf]
      %v323 = vld [vmem:[%s1 + $0x18] sm:$0xf]
      %v324 = vld [vmem:[%s1 + $0x1c] sm:$0xf]
      %v325 = vld [vmem:[%s1 + $0x20] sm:$0xf]
      %v326 = vld [vmem:[%s1 + $0x24] sm:$0xf]
      %v327 = vld [vmem:[%s1 + $0x28] sm:$0xf]
      %v328 = vld [vmem:[%s1 + $0x2c] sm:$0xf]
      %v347 = vunpack.c.l.b16 %v305
      %v348 = vunpack.c.l.b16 %v306
      %v349 = vunpack.c.l.b16 %v307
      %v350 = vunpack.c.l.b16 %v308
      %v351 = vunpack.c.l.b16 %v309
      %v352 = vunpack.c.l.b16 %v310
      %v353 = vunpack.c.l.b16 %v311
      %v354 = vunpack.c.l.b16 %v312
      %v355 = vunpack.c.l.b16 %v313
      %v356 = vunpack.c.l.b16 %v314
      %v357 = vunpack.c.l.b16 %v315
      %v358 = vunpack.c.l.b16 %v316
      %v359 = vunpack.c.l.b16 %v317
      %v360 = vunpack.c.l.b16 %v318
      %v361 = vunpack.c.l.b16 %v319
      %v362 = vunpack.c.l.b16 %v320
      %v363 = vunpack.c.l.b16 %v321
      %v364 = vunpack.c.l.b16 %v322
      %v365 = vpack.c.b16 %v348, %v347
      %v366 = vpack.c.b16 %v350, %v349
      %v367 = vpack.c.b16 %v352, %v351
      %v368 = vpack.c.b16 %v354, %v353
      %v369 = vpack.c.b16 %v356, %v355
      %v370 = vpack.c.b16 %v358, %v357
      %v371 = vpack.c.b16 %v360, %v359
      %v372 = vpack.c.b16 %v362, %v361
      %v373 = vpack.c.b16 %v364, %v363
      %v380 = vunpack.c.l.b16 %v323
      %v381 = vunpack.c.l.b16 %v324
      %v382 = vunpack.c.l.b16 %v325
      %v383 = vunpack.c.l.b16 %v326
      %v384 = vunpack.c.l.b16 %v327
      %v385 = vunpack.c.l.b16 %v328
      %v386 = vpack.c.b16 %v381, %v380
      %v387 = vpack.c.b16 %v383, %v382
      %v388 = vpack.c.b16 %v385, %v384
      %vm392 = vcmask 392192
      %v394 = vsel %vm392, %v365, 0
      %v397 = vsel %vm392, %v366, 0
      %v400 = vsel %vm392, %v367, 0
      %v403 = vsel %vm392, %v368, 0
      %v406 = vsel %vm392, %v369, 0
      %v409 = vsel %vm392, %v370, 0
      %v412 = vsel %vm392, %v371, 0
      %v415 = vsel %vm392, %v372, 0
      %v418 = vsel %vm392, %v373, 0
      %420 = vmatpush.bf16.msra.mxu0 0
      %421 = vmatpush.bf16.msra.mxu0 0
      %422 = vmatpush.bf16.msra.mxu0 0
      %423 = vmatpush.bf16.msra.mxu0 0
      %424 = vmatpush.bf16.msra.mxu0 0
      %425 = vmatpush.bf16.msra.mxu0 %v388
      %426 = vmatpush.bf16.msra.mxu0 %v387
      %427 = vmatpush.bf16.msra.mxu0 %v386
      %428 = vmatmul.bf16.gmra.mxu0 %v394
      %v429 = vpop.f32.mrf.mxu0
      %v430 = vadd.f32 0.0, %v429
      %v431 = vpop.f32.mrf.mxu0
      %v432 = vadd.f32 0.0, %v431
      %433 = vmatmul.bf16.gmra.mxu0 %v397
      %v434 = vpop.f32.mrf.mxu0
      %v435 = vadd.f32 0.0, %v434
      %v436 = vpop.f32.mrf.mxu0
      %v437 = vadd.f32 0.0, %v436
      %438 = vmatmul.bf16.gmra.mxu0 %v400
      %v439 = vpop.f32.mrf.mxu0
      %v440 = vadd.f32 0.0, %v439
      %v441 = vpop.f32.mrf.mxu0
      %v442 = vadd.f32 0.0, %v441
      %443 = vmatmul.bf16.gmra.mxu0 %v403
      %v444 = vpop.f32.mrf.mxu0
      %v445 = vadd.f32 0.0, %v444
      %v446 = vpop.f32.mrf.mxu0
      %v447 = vadd.f32 0.0, %v446
      %448 = vmatmul.bf16.gmra.mxu0 %v406
      %v449 = vpop.f32.mrf.mxu0
      %v450 = vadd.f32 0.0, %v449
      %v451 = vpop.f32.mrf.mxu0
      %v452 = vadd.f32 0.0, %v451
      %453 = vmatmul.bf16.gmra.mxu0 %v409
      %v454 = vpop.f32.mrf.mxu0
      %v455 = vadd.f32 0.0, %v454
      %v456 = vpop.f32.mrf.mxu0
      %v457 = vadd.f32 0.0, %v456
      %458 = vmatmul.bf16.gmra.mxu0 %v412
      %v459 = vpop.f32.mrf.mxu0
      %v460 = vadd.f32 0.0, %v459
      %v461 = vpop.f32.mrf.mxu0
      %v462 = vadd.f32 0.0, %v461
      %463 = vmatmul.bf16.gmra.mxu0 %v415
      %v464 = vpop.f32.mrf.mxu0
      %v465 = vadd.f32 0.0, %v464
      %v466 = vpop.f32.mrf.mxu0
      %v467 = vadd.f32 0.0, %v466
      %468 = vmatmul.bf16.gmra.mxu0 %v418
      %v469 = vpop.f32.mrf.mxu0
      %v470 = vadd.f32 0.0, %v469
      %v471 = vpop.f32.mrf.mxu0
      %v472 = vadd.f32 0.0, %v471
      %473 = vdwg.mxu0
      %v492 = vunpack.c.l.b16 %v280
      %v493 = vunpack.c.l.b16 %v281
      %v494 = vunpack.c.l.b16 %v282
      %v495 = vunpack.c.l.b16 %v283
      %v496 = vunpack.c.l.b16 %v284
      %v497 = vunpack.c.l.b16 %v285
      %v498 = vunpack.c.l.b16 %v286
      %v499 = vunpack.c.l.b16 %v287
      %v500 = vunpack.c.l.b16 %v288
      %v501 = vunpack.c.l.b16 %v289
      %v502 = vunpack.c.l.b16 %v290
      %v503 = vunpack.c.l.b16 %v291
      %v504 = vunpack.c.l.b16 %v292
      %v505 = vunpack.c.l.b16 %v293
      %v506 = vunpack.c.l.b16 %v294
      %v507 = vunpack.c.l.b16 %v295
      %v508 = vunpack.c.l.b16 %v296
      %v509 = vunpack.c.l.b16 %v297
      %v510 = vpack.c.b16 %v493, %v492
      %v511 = vpack.c.b16 %v495, %v494
      %v512 = vpack.c.b16 %v497, %v496
      %v513 = vpack.c.b16 %v499, %v498
      %v514 = vpack.c.b16 %v501, %v500
      %v515 = vpack.c.b16 %v503, %v502
      %v516 = vpack.c.b16 %v505, %v504
      %v517 = vpack.c.b16 %v507, %v506
      %v518 = vpack.c.b16 %v509, %v508
      %v525 = vunpack.c.l.b16 %v298
      %v526 = vunpack.c.l.b16 %v299
      %v527 = vunpack.c.l.b16 %v300
      %v528 = vunpack.c.l.b16 %v301
      %v529 = vunpack.c.l.b16 %v302
      %v530 = vunpack.c.l.b16 %v303
      %v531 = vpack.c.b16 %v526, %v525
      %v532 = vpack.c.b16 %v528, %v527
      %v533 = vpack.c.b16 %v530, %v529
      %v538 = vsel %vm392, %v510, 0
      %v541 = vsel %vm392, %v511, 0
      %v544 = vsel %vm392, %v512, 0
      %v547 = vsel %vm392, %v513, 0
      %v550 = vsel %vm392, %v514, 0
      %v553 = vsel %vm392, %v515, 0
      %v556 = vsel %vm392, %v516, 0
      %v559 = vsel %vm392, %v517, 0
      %v562 = vsel %vm392, %v518, 0
      %564 = vmatpush.bf16.msra.mxu0 0
      %565 = vmatpush.bf16.msra.mxu0 0
      %566 = vmatpush.bf16.msra.mxu0 0
      %567 = vmatpush.bf16.msra.mxu0 0
      %568 = vmatpush.bf16.msra.mxu0 0
      %569 = vmatpush.bf16.msra.mxu0 %v533
      %570 = vmatpush.bf16.msra.mxu0 %v532
      %571 = vmatpush.bf16.msra.mxu0 %v531
      %572 = vmatmul.bf16.gmra.mxu0 %v538
      %v573 = vpop.f32.mrf.mxu0
      %v574 = vadd.f32 %v430, %v573
      %v575 = vpop.f32.mrf.mxu0
      %v576 = vadd.f32 %v432, %v575
      %577 = vmatmul.bf16.gmra.mxu0 %v541
      %v578 = vpop.f32.mrf.mxu0
      %v579 = vadd.f32 %v435, %v578
      %v580 = vpop.f32.mrf.mxu0
      %v581 = vadd.f32 %v437, %v580
      %582 = vmatmul.bf16.gmra.mxu0 %v544
      %v583 = vpop.f32.mrf.mxu0
      %v584 = vadd.f32 %v440, %v583
      %v585 = vpop.f32.mrf.mxu0
      %v586 = vadd.f32 %v442, %v585
      %587 = vmatmul.bf16.gmra.mxu0 %v547
      %v588 = vpop.f32.mrf.mxu0
      %v589 = vadd.f32 %v445, %v588
      %v590 = vpop.f32.mrf.mxu0
      %v591 = vadd.f32 %v447, %v590
      %592 = vmatmul.bf16.gmra.mxu0 %v550
      %v593 = vpop.f32.mrf.mxu0
      %v594 = vadd.f32 %v450, %v593
      %v595 = vpop.f32.mrf.mxu0
      %v596 = vadd.f32 %v452, %v595
      %597 = vmatmul.bf16.gmra.mxu0 %v553
      %v598 = vpop.f32.mrf.mxu0
      %v599 = vadd.f32 %v455, %v598
      %v600 = vpop.f32.mrf.mxu0
      %v601 = vadd.f32 %v457, %v600
      %602 = vmatmul.bf16.gmra.mxu0 %v556
      %v603 = vpop.f32.mrf.mxu0
      %v604 = vadd.f32 %v460, %v603
      %v605 = vpop.f32.mrf.mxu0
      %v606 = vadd.f32 %v462, %v605
      %607 = vmatmul.bf16.gmra.mxu0 %v559
      %v608 = vpop.f32.mrf.mxu0
      %v609 = vadd.f32 %v465, %v608
      %v610 = vpop.f32.mrf.mxu0
      %v611 = vadd.f32 %v467, %v610
      %612 = vmatmul.bf16.gmra.mxu0 %v562
      %v613 = vpop.f32.mrf.mxu0
      %v614 = vadd.f32 %v470, %v613
      %v615 = vpop.f32.mrf.mxu0
      %v616 = vadd.f32 %v472, %v615
      %617 = vdwg.mxu0
      %s618 = scalar_lea.vmem %s273, 160
      %v619 = vld [vmem:[%s618] sm:$0xf]
      %v620 = vld [vmem:[%s618 + $0x4] sm:$0xf]
      %v621 = vld [vmem:[%s618 + $0x8] sm:$0xf]
      %v622 = vld [vmem:[%s618 + $0xc] sm:$0xf]
      %v623 = vld [vmem:[%s618 + $0x10] sm:$0xf]
      %v624 = vld [vmem:[%s618 + $0x14] sm:$0xf]
      %v625 = vld [vmem:[%s618 + $0x18] sm:$0xf]
      %v626 = vld [vmem:[%s618 + $0x1c] sm:$0xf]
      %v627 = vld [vmem:[%s618 + $0x20] sm:$0xf]
      %v628 = vld [vmem:[%s618 + $0x24] sm:$0xf]
      %v629 = vld [vmem:[%s618 + $0x28] sm:$0xf]
      %v630 = vld [vmem:[%s618 + $0x2c] sm:$0xf]
      %v631 = vld [vmem:[%s618 + $0x30] sm:$0xf]
      %v632 = vld [vmem:[%s618 + $0x34] sm:$0xf]
      %v633 = vld [vmem:[%s618 + $0x38] sm:$0xf]
      %v634 = vld [vmem:[%s618 + $0x3c] sm:$0xf]
      %v635 = vld [vmem:[%s618 + $0x40] sm:$0xf]
      %v636 = vld [vmem:[%s618 + $0x44] sm:$0xf]
      %v637 = vld [vmem:[%s1 + $0x30] sm:$0xf]
      %v638 = vld [vmem:[%s1 + $0x34] sm:$0xf]
      %v639 = vld [vmem:[%s1 + $0x38] sm:$0xf]
      %v640 = vld [vmem:[%s1 + $0x3c] sm:$0xf]
      %v641 = vld [vmem:[%s1 + $0x40] sm:$0xf]
      %v642 = vld [vmem:[%s1 + $0x44] sm:$0xf]
      %v661 = vunpack.c.l.b16 %v619
      %v662 = vunpack.c.l.b16 %v620
      %v663 = vunpack.c.l.b16 %v621
      %v664 = vunpack.c.l.b16 %v622
      %v665 = vunpack.c.l.b16 %v623
      %v666 = vunpack.c.l.b16 %v624
      %v667 = vunpack.c.l.b16 %v625
      %v668 = vunpack.c.l.b16 %v626
      %v669 = vunpack.c.l.b16 %v627
      %v670 = vunpack.c.l.b16 %v628
      %v671 = vunpack.c.l.b16 %v629
      %v672 = vunpack.c.l.b16 %v630
      %v673 = vunpack.c.l.b16 %v631
      %v674 = vunpack.c.l.b16 %v632
      %v675 = vunpack.c.l.b16 %v633
      %v676 = vunpack.c.l.b16 %v634
      %v677 = vunpack.c.l.b16 %v635
      %v678 = vunpack.c.l.b16 %v636
      %v679 = vpack.c.b16 %v662, %v661
      %v680 = vpack.c.b16 %v664, %v663
      %v681 = vpack.c.b16 %v666, %v665
      %v682 = vpack.c.b16 %v668, %v667
      %v683 = vpack.c.b16 %v670, %v669
      %v684 = vpack.c.b16 %v672, %v671
      %v685 = vpack.c.b16 %v674, %v673
      %v686 = vpack.c.b16 %v676, %v675
      %v687 = vpack.c.b16 %v678, %v677
      %v694 = vunpack.c.l.b16 %v637
      %v695 = vunpack.c.l.b16 %v638
      %v696 = vunpack.c.l.b16 %v639
      %v697 = vunpack.c.l.b16 %v640
      %v698 = vunpack.c.l.b16 %v641
      %v699 = vunpack.c.l.b16 %v642
      %v700 = vpack.c.b16 %v695, %v694
      %v701 = vpack.c.b16 %v697, %v696
      %v702 = vpack.c.b16 %v699, %v698
      %v707 = vsel %vm392, %v679, 0
      %v710 = vsel %vm392, %v680, 0
      %v713 = vsel %vm392, %v681, 0
      %v716 = vsel %vm392, %v682, 0
      %v719 = vsel %vm392, %v683, 0
      %v722 = vsel %vm392, %v684, 0
      %v725 = vsel %vm392, %v685, 0
      %v728 = vsel %vm392, %v686, 0
      %v731 = vsel %vm392, %v687, 0
      %733 = vmatpush.bf16.msra.mxu0 0
      %734 = vmatpush.bf16.msra.mxu0 0
      %735 = vmatpush.bf16.msra.mxu0 0
      %736 = vmatpush.bf16.msra.mxu0 0
      %737 = vmatpush.bf16.msra.mxu0 0
      %738 = vmatpush.bf16.msra.mxu0 %v702
      %739 = vmatpush.bf16.msra.mxu0 %v701
      %740 = vmatpush.bf16.msra.mxu0 %v700
      %741 = vmatmul.bf16.gmra.mxu0 %v707
      %v742 = vpop.f32.mrf.mxu0
      %v743 = vadd.f32 0.0, %v742
      %v744 = vpop.f32.mrf.mxu0
      %v745 = vadd.f32 0.0, %v744
      %746 = vmatmul.bf16.gmra.mxu0 %v710
      %v747 = vpop.f32.mrf.mxu0
      %v748 = vadd.f32 0.0, %v747
      %v749 = vpop.f32.mrf.mxu0
      %v750 = vadd.f32 0.0, %v749
      %751 = vmatmul.bf16.gmra.mxu0 %v713
      %v752 = vpop.f32.mrf.mxu0
      %v753 = vadd.f32 0.0, %v752
      %v754 = vpop.f32.mrf.mxu0
      %v755 = vadd.f32 0.0, %v754
      %756 = vmatmul.bf16.gmra.mxu0 %v716
      %v757 = vpop.f32.mrf.mxu0
      %v758 = vadd.f32 0.0, %v757
      %v759 = vpop.f32.mrf.mxu0
      %v760 = vadd.f32 0.0, %v759
      %761 = vmatmul.bf16.gmra.mxu0 %v719
      %v762 = vpop.f32.mrf.mxu0
      %v763 = vadd.f32 0.0, %v762
      %v764 = vpop.f32.mrf.mxu0
      %v765 = vadd.f32 0.0, %v764
      %766 = vmatmul.bf16.gmra.mxu0 %v722
      %v767 = vpop.f32.mrf.mxu0
      %v768 = vadd.f32 0.0, %v767
      %v769 = vpop.f32.mrf.mxu0
      %v770 = vadd.f32 0.0, %v769
      %771 = vmatmul.bf16.gmra.mxu0 %v725
      %v772 = vpop.f32.mrf.mxu0
      %v773 = vadd.f32 0.0, %v772
      %v774 = vpop.f32.mrf.mxu0
      %v775 = vadd.f32 0.0, %v774
      %776 = vmatmul.bf16.gmra.mxu0 %v728
      %v777 = vpop.f32.mrf.mxu0
      %v778 = vadd.f32 0.0, %v777
      %v779 = vpop.f32.mrf.mxu0
      %v780 = vadd.f32 0.0, %v779
      %781 = vmatmul.bf16.gmra.mxu0 %v731
      %v782 = vpop.f32.mrf.mxu0
      %v783 = vadd.f32 0.0, %v782
      %v784 = vpop.f32.mrf.mxu0
      %v785 = vadd.f32 0.0, %v784
      %786 = vdwg.mxu0
      %v787 = vadd.f32 %v574, %v743
      %v788 = vadd.f32 %v576, %v745
      %v789 = vadd.f32 %v579, %v748
      %v790 = vadd.f32 %v581, %v750
      %v791 = vadd.f32 %v584, %v753
      %v792 = vadd.f32 %v586, %v755
      %v793 = vadd.f32 %v589, %v758
      %v794 = vadd.f32 %v591, %v760
      %v795 = vadd.f32 %v594, %v763
      %v796 = vadd.f32 %v596, %v765
      %v797 = vadd.f32 %v599, %v768
      %v798 = vadd.f32 %v601, %v770
      %v799 = vadd.f32 %v604, %v773
      %v800 = vadd.f32 %v606, %v775
      %v801 = vadd.f32 %v609, %v778
      %v802 = vadd.f32 %v611, %v780
      %v803 = vadd.f32 %v614, %v783
      %v804 = vadd.f32 %v616, %v785
      %s805 = scalar_lea.vmem %s273, 240
      %v806 = vld [vmem:[%s805] sm:$0xf]
      %v807 = vld [vmem:[%s805 + $0x4] sm:$0xf]
      %v808 = vld [vmem:[%s805 + $0x8] sm:$0xf]
      %v809 = vld [vmem:[%s805 + $0xc] sm:$0xf]
      %v810 = vld [vmem:[%s805 + $0x10] sm:$0xf]
      %v811 = vld [vmem:[%s805 + $0x14] sm:$0xf]
      %v812 = vld [vmem:[%s805 + $0x18] sm:$0xf]
      %v813 = vld [vmem:[%s805 + $0x1c] sm:$0xf]
      %v814 = vld [vmem:[%s805 + $0x20] sm:$0xf]
      %v815 = vld [vmem:[%s805 + $0x24] sm:$0xf]
      %v816 = vld [vmem:[%s805 + $0x28] sm:$0xf]
      %v817 = vld [vmem:[%s805 + $0x2c] sm:$0xf]
      %v818 = vld [vmem:[%s805 + $0x30] sm:$0xf]
      %v819 = vld [vmem:[%s805 + $0x34] sm:$0xf]
      %v820 = vld [vmem:[%s805 + $0x38] sm:$0xf]
      %v821 = vld [vmem:[%s805 + $0x3c] sm:$0xf]
      %v822 = vld [vmem:[%s805 + $0x40] sm:$0xf]
      %v823 = vld [vmem:[%s805 + $0x44] sm:$0xf]
      %v824 = vld [vmem:[%s1 + $0x48] sm:$0xf]
      %v825 = vld [vmem:[%s1 + $0x4c] sm:$0xf]
      %v826 = vld [vmem:[%s1 + $0x50] sm:$0xf]
      %v827 = vld [vmem:[%s1 + $0x54] sm:$0xf]
      %v828 = vld [vmem:[%s1 + $0x58] sm:$0xf]
      %v829 = vld [vmem:[%s1 + $0x5c] sm:$0xf]
      %v848 = vunpack.c.l.b16 %v806
      %v849 = vunpack.c.l.b16 %v807
      %v850 = vunpack.c.l.b16 %v808
      %v851 = vunpack.c.l.b16 %v809
      %v852 = vunpack.c.l.b16 %v810
      %v853 = vunpack.c.l.b16 %v811
      %v854 = vunpack.c.l.b16 %v812
      %v855 = vunpack.c.l.b16 %v813
      %v856 = vunpack.c.l.b16 %v814
      %v857 = vunpack.c.l.b16 %v815
      %v858 = vunpack.c.l.b16 %v816
      %v859 = vunpack.c.l.b16 %v817
      %v860 = vunpack.c.l.b16 %v818
      %v861 = vunpack.c.l.b16 %v819
      %v862 = vunpack.c.l.b16 %v820
      %v863 = vunpack.c.l.b16 %v821
      %v864 = vunpack.c.l.b16 %v822
      %v865 = vunpack.c.l.b16 %v823
      %v866 = vpack.c.b16 %v849, %v848
      %v867 = vpack.c.b16 %v851, %v850
      %v868 = vpack.c.b16 %v853, %v852
      %v869 = vpack.c.b16 %v855, %v854
      %v870 = vpack.c.b16 %v857, %v856
      %v871 = vpack.c.b16 %v859, %v858
      %v872 = vpack.c.b16 %v861, %v860
      %v873 = vpack.c.b16 %v863, %v862
      %v874 = vpack.c.b16 %v865, %v864
      %v881 = vunpack.c.l.b16 %v824
      %v882 = vunpack.c.l.b16 %v825
      %v883 = vunpack.c.l.b16 %v826
      %v884 = vunpack.c.l.b16 %v827
      %v885 = vunpack.c.l.b16 %v828
      %v886 = vunpack.c.l.b16 %v829
      %v887 = vpack.c.b16 %v882, %v881
      %v888 = vpack.c.b16 %v884, %v883
      %v889 = vpack.c.b16 %v886, %v885
      %v894 = vsel %vm392, %v866, 0
      %v897 = vsel %vm392, %v867, 0
      %v900 = vsel %vm392, %v868, 0
      %v903 = vsel %vm392, %v869, 0
      %v906 = vsel %vm392, %v870, 0
      %v909 = vsel %vm392, %v871, 0
      %v912 = vsel %vm392, %v872, 0
      %v915 = vsel %vm392, %v873, 0
      %v918 = vsel %vm392, %v874, 0
      %920 = vmatpush.bf16.msra.mxu0 0
      %921 = vmatpush.bf16.msra.mxu0 0
      %922 = vmatpush.bf16.msra.mxu0 0
      %923 = vmatpush.bf16.msra.mxu0 0
      %924 = vmatpush.bf16.msra.mxu0 0
      %925 = vmatpush.bf16.msra.mxu0 %v889
      %926 = vmatpush.bf16.msra.mxu0 %v888
      %927 = vmatpush.bf16.msra.mxu0 %v887
      %928 = vmatmul.bf16.gmra.mxu0 %v894
      %v929 = vpop.f32.mrf.mxu0
      %v930 = vadd.f32 0.0, %v929
      %v931 = vpop.f32.mrf.mxu0
      %v932 = vadd.f32 0.0, %v931
      %933 = vmatmul.bf16.gmra.mxu0 %v897
      %v934 = vpop.f32.mrf.mxu0
      %v935 = vadd.f32 0.0, %v934
      %v936 = vpop.f32.mrf.mxu0
      %v937 = vadd.f32 0.0, %v936
      %938 = vmatmul.bf16.gmra.mxu0 %v900
      %v939 = vpop.f32.mrf.mxu0
      %v940 = vadd.f32 0.0, %v939
      %v941 = vpop.f32.mrf.mxu0
      %v942 = vadd.f32 0.0, %v941
      %943 = vmatmul.bf16.gmra.mxu0 %v903
      %v944 = vpop.f32.mrf.mxu0
      %v945 = vadd.f32 0.0, %v944
      %v946 = vpop.f32.mrf.mxu0
      %v947 = vadd.f32 0.0, %v946
      %948 = vmatmul.bf16.gmra.mxu0 %v906
      %v949 = vpop.f32.mrf.mxu0
      %v950 = vadd.f32 0.0, %v949
      %v951 = vpop.f32.mrf.mxu0
      %v952 = vadd.f32 0.0, %v951
      %953 = vmatmul.bf16.gmra.mxu0 %v909
      %v954 = vpop.f32.mrf.mxu0
      %v955 = vadd.f32 0.0, %v954
      %v956 = vpop.f32.mrf.mxu0
      %v957 = vadd.f32 0.0, %v956
      %958 = vmatmul.bf16.gmra.mxu0 %v912
      %v959 = vpop.f32.mrf.mxu0
      %v960 = vadd.f32 0.0, %v959
      %v961 = vpop.f32.mrf.mxu0
      %v962 = vadd.f32 0.0, %v961
      %963 = vmatmul.bf16.gmra.mxu0 %v915
      %v964 = vpop.f32.mrf.mxu0
      %v965 = vadd.f32 0.0, %v964
      %v966 = vpop.f32.mrf.mxu0
      %v967 = vadd.f32 0.0, %v966
      %968 = vmatmul.bf16.gmra.mxu0 %v918
      %v969 = vpop.f32.mrf.mxu0
      %v970 = vadd.f32 0.0, %v969
      %v971 = vpop.f32.mrf.mxu0
      %v972 = vadd.f32 0.0, %v971
      %973 = vdwg.mxu0
      %v974 = vadd.f32 %v787, %v930
      %v975 = vadd.f32 %v788, %v932
      %v976 = vadd.f32 %v789, %v935
      %v977 = vadd.f32 %v790, %v937
      %v978 = vadd.f32 %v791, %v940
      %v979 = vadd.f32 %v792, %v942
      %v980 = vadd.f32 %v793, %v945
      %v981 = vadd.f32 %v794, %v947
      %v982 = vadd.f32 %v795, %v950
      %v983 = vadd.f32 %v796, %v952
      %v984 = vadd.f32 %v797, %v955
      %v985 = vadd.f32 %v798, %v957
      %v986 = vadd.f32 %v799, %v960
      %v987 = vadd.f32 %v800, %v962
      %v988 = vadd.f32 %v801, %v965
      %v989 = vadd.f32 %v802, %v967
      %v990 = vadd.f32 %v803, %v970
      %v991 = vadd.f32 %v804, %v972
      %v992 = vld [vmem:[%s2] sm:$0x1]
      %v994 = vperm.slane %v992, 0
      %v996 = vadd.f32 %v974, %v994
      %v997 = vadd.f32 %v975, %v994
      %v998 = vadd.f32 %v976, %v994
      %v999 = vadd.f32 %v977, %v994
      %v1000 = vadd.f32 %v978, %v994
      %v1001 = vadd.f32 %v979, %v994
      %v1002 = vadd.f32 %v980, %v994
      %v1003 = vadd.f32 %v981, %v994
      %v1004 = vadd.f32 %v982, %v994
      %v1005 = vadd.f32 %v983, %v994
      %v1006 = vadd.f32 %v984, %v994
      %v1007 = vadd.f32 %v985, %v994
      %v1008 = vadd.f32 %v986, %v994
      %v1009 = vadd.f32 %v987, %v994
      %v1010 = vadd.f32 %v988, %v994
      %v1011 = vadd.f32 %v989, %v994
      %v1012 = vadd.f32 %v990, %v994
      %v1013 = vadd.f32 %v991, %v994
      %v1014 = vmax.f32 %v996, 0.0
      %v1015 = vmax.f32 %v997, 0.0
      %v1016 = vmax.f32 %v998, 0.0
      %v1017 = vmax.f32 %v999, 0.0
      %v1018 = vmax.f32 %v1000, 0.0
      %v1019 = vmax.f32 %v1001, 0.0
      %v1020 = vmax.f32 %v1002, 0.0
      %v1021 = vmax.f32 %v1003, 0.0
      %v1022 = vmax.f32 %v1004, 0.0
      %v1023 = vmax.f32 %v1005, 0.0
      %v1024 = vmax.f32 %v1006, 0.0
      %v1025 = vmax.f32 %v1007, 0.0
      %v1026 = vmax.f32 %v1008, 0.0
      %v1027 = vmax.f32 %v1009, 0.0
      %v1028 = vmax.f32 %v1010, 0.0
      %v1029 = vmax.f32 %v1011, 0.0
      %v1030 = vmax.f32 %v1012, 0.0
      %v1031 = vmax.f32 %v1013, 0.0
      %v1032 = vpack.c.bf16 %v1014, %v1014
      %v1033 = vpack.c.bf16 %v1015, %v1015
      %v1034 = vpack.c.bf16 %v1016, %v1016
      %v1035 = vpack.c.bf16 %v1017, %v1017
      %v1036 = vpack.c.bf16 %v1018, %v1018
      %v1037 = vpack.c.bf16 %v1019, %v1019
      %v1038 = vpack.c.bf16 %v1020, %v1020
      %v1039 = vpack.c.bf16 %v1021, %v1021
      %v1040 = vpack.c.bf16 %v1022, %v1022
      %v1041 = vpack.c.bf16 %v1023, %v1023
      %v1042 = vpack.c.bf16 %v1024, %v1024
      %v1043 = vpack.c.bf16 %v1025, %v1025
      %v1044 = vpack.c.bf16 %v1026, %v1026
      %v1045 = vpack.c.bf16 %v1027, %v1027
      %v1046 = vpack.c.bf16 %v1028, %v1028
      %v1047 = vpack.c.bf16 %v1029, %v1029
      %v1048 = vpack.c.bf16 %v1030, %v1030
      %v1049 = vpack.c.bf16 %v1031, %v1031
      %vm1050 = vcmask 257024
      %1051 = vst.msk [vmem:[#allocation2] sm:$0xf] %vm1050, %v1032
      %1052 = vst.msk [vmem:[#allocation2 + $0x4] sm:$0xf] %vm1050, %v1033
      %1053 = vst.msk [vmem:[#allocation2 + $0x8] sm:$0xf] %vm1050, %v1034
      %1054 = vst.msk [vmem:[#allocation2 + $0xc] sm:$0xf] %vm1050, %v1035
      %1055 = vst.msk [vmem:[#allocation2 + $0x10] sm:$0xf] %vm1050, %v1036
      %1056 = vst.msk [vmem:[#allocation2 + $0x14] sm:$0xf] %vm1050, %v1037
      %1057 = vst.msk [vmem:[#allocation2 + $0x18] sm:$0xf] %vm1050, %v1038
      %1058 = vst.msk [vmem:[#allocation2 + $0x1c] sm:$0xf] %vm1050, %v1039
      %1059 = vst.msk [vmem:[#allocation2 + $0x20] sm:$0xf] %vm1050, %v1040
      %1060 = vst.msk [vmem:[#allocation2 + $0x24] sm:$0xf] %vm1050, %v1041
      %1061 = vst.msk [vmem:[#allocation2 + $0x28] sm:$0xf] %vm1050, %v1042
      %1062 = vst.msk [vmem:[#allocation2 + $0x2c] sm:$0xf] %vm1050, %v1043
      %1063 = vst.msk [vmem:[#allocation2 + $0x30] sm:$0xf] %vm1050, %v1044
      %1064 = vst.msk [vmem:[#allocation2 + $0x34] sm:$0xf] %vm1050, %v1045
      %1065 = vst.msk [vmem:[#allocation2 + $0x38] sm:$0xf] %vm1050, %v1046
      %1066 = vst.msk [vmem:[#allocation2 + $0x3c] sm:$0xf] %vm1050, %v1047
      %1067 = vst.msk [vmem:[#allocation2 + $0x40] sm:$0xf] %vm1050, %v1048
      %1068 = vst.msk [vmem:[#allocation2 + $0x44] sm:$0xf] %vm1050, %v1049
      %v1069 = vld [vmem:[%s304] sm:$0xf]
      %v1070 = vld [vmem:[%s304 + $0x4] sm:$0xf]
      %v1071 = vld [vmem:[%s304 + $0x8] sm:$0xf]
      %v1072 = vld [vmem:[%s304 + $0xc] sm:$0xf]
      %v1073 = vld [vmem:[%s304 + $0x10] sm:$0xf]
      %v1074 = vld [vmem:[%s304 + $0x14] sm:$0xf]
      %v1075 = vld [vmem:[%s304 + $0x18] sm:$0xf]
      %v1076 = vld [vmem:[%s304 + $0x1c] sm:$0xf]
      %v1077 = vld [vmem:[%s304 + $0x20] sm:$0xf]
      %v1078 = vld [vmem:[%s304 + $0x24] sm:$0xf]
      %v1079 = vld [vmem:[%s304 + $0x28] sm:$0xf]
      %v1080 = vld [vmem:[%s304 + $0x2c] sm:$0xf]
      %v1081 = vld [vmem:[%s304 + $0x30] sm:$0xf]
      %v1082 = vld [vmem:[%s304 + $0x34] sm:$0xf]
      %v1083 = vld [vmem:[%s304 + $0x38] sm:$0xf]
      %v1084 = vld [vmem:[%s304 + $0x3c] sm:$0xf]
      %v1085 = vld [vmem:[%s304 + $0x40] sm:$0xf]
      %v1086 = vld [vmem:[%s304 + $0x44] sm:$0xf]
      %v1087 = vld [vmem:[%s1] sm:$0xf]
      %v1088 = vld [vmem:[%s1 + $0x4] sm:$0xf]
      %v1089 = vld [vmem:[%s1 + $0x8] sm:$0xf]
      %v1090 = vld [vmem:[%s1 + $0xc] sm:$0xf]
      %v1091 = vld [vmem:[%s1 + $0x10] sm:$0xf]
      %v1092 = vld [vmem:[%s1 + $0x14] sm:$0xf]
      %v1093 = vld [vmem:[%s273] sm:$0xf]
      %v1094 = vld [vmem:[%s273 + $0x4] sm:$0xf]
      %v1095 = vld [vmem:[%s273 + $0x8] sm:$0xf]
      %v1096 = vld [vmem:[%s273 + $0xc] sm:$0xf]
      %v1097 = vld [vmem:[%s273 + $0x10] sm:$0xf]
      %v1098 = vld [vmem:[%s273 + $0x14] sm:$0xf]
      %v1099 = vld [vmem:[%s273 + $0x18] sm:$0xf]
      %v1100 = vld [vmem:[%s273 + $0x1c] sm:$0xf]
      %v1101 = vld [vmem:[%s273 + $0x20] sm:$0xf]
      %v1102 = vld [vmem:[%s273 + $0x24] sm:$0xf]
      %v1103 = vld [vmem:[%s273 + $0x28] sm:$0xf]
      %v1104 = vld [vmem:[%s273 + $0x2c] sm:$0xf]
      %v1105 = vld [vmem:[%s273 + $0x30] sm:$0xf]
      %v1106 = vld [vmem:[%s273 + $0x34] sm:$0xf]
      %v1107 = vld [vmem:[%s273 + $0x38] sm:$0xf]
      %v1108 = vld [vmem:[%s273 + $0x3c] sm:$0xf]
      %v1109 = vld [vmem:[%s273 + $0x40] sm:$0xf]
      %v1110 = vld [vmem:[%s273 + $0x44] sm:$0xf]
      %v1111 = vld [vmem:[%s273 + $0x48] sm:$0x1]
      %v1112 = vld [vmem:[%s1 + $0x18] sm:$0xf]
      %v1113 = vld [vmem:[%s1 + $0x1c] sm:$0xf]
      %v1114 = vld [vmem:[%s1 + $0x20] sm:$0xf]
      %v1115 = vld [vmem:[%s1 + $0x24] sm:$0xf]
      %v1116 = vld [vmem:[%s1 + $0x28] sm:$0xf]
      %v1117 = vld [vmem:[%s1 + $0x2c] sm:$0xf]
      %v1137 = vunpack.c.l.b16 %v1093
      %v1138 = vunpack.c.l.b16 %v1094
      %v1139 = vunpack.c.l.b16 %v1095
      %v1140 = vunpack.c.l.b16 %v1096
      %v1141 = vunpack.c.l.b16 %v1097
      %v1142 = vunpack.c.l.b16 %v1098
      %v1143 = vunpack.c.l.b16 %v1099
      %v1144 = vunpack.c.l.b16 %v1100
      %v1145 = vunpack.c.l.b16 %v1101
      %v1146 = vunpack.c.l.b16 %v1102
      %v1147 = vunpack.c.l.b16 %v1103
      %v1148 = vunpack.c.l.b16 %v1104
      %v1149 = vunpack.c.l.b16 %v1105
      %v1150 = vunpack.c.l.b16 %v1106
      %v1151 = vunpack.c.l.b16 %v1107
      %v1152 = vunpack.c.l.b16 %v1108
      %v1153 = vunpack.c.l.b16 %v1109
      %v1154 = vunpack.c.l.b16 %v1110
      %v1155 = vunpack.c.l.b16 %v1111
      %v1156 = vpack.c.b16 %v1138, %v1137
      %v1157 = vpack.c.b16 %v1140, %v1139
      %v1158 = vpack.c.b16 %v1142, %v1141
      %v1159 = vpack.c.b16 %v1144, %v1143
      %v1160 = vpack.c.b16 %v1146, %v1145
      %v1161 = vpack.c.b16 %v1148, %v1147
      %v1162 = vpack.c.b16 %v1150, %v1149
      %v1163 = vpack.c.b16 %v1152, %v1151
      %v1164 = vpack.c.b16 %v1154, %v1153
      %v1165 = vpack.c.b16 %v1155, %v1155
      %vm1166 = vsmask.f32 7424
      %v1168 = vshrl.u32 %v1156, 16
      %v1170 = vshll.u32 %v1156, 16
      %v1172 = vrot.slane %v1170, 1
      %v1173 = vor.u32 %v1168, %v1172
      %v1175 = vshll.u32 %v1157, 16
      %v1177 = vrot.slane %v1175, 1
      %v1178 = vsel %vm1166, %v1173, %v1177
      %v1179 = vshrl.u32 %v1157, 16
      %v1181 = vor.u32 %v1179, %v1177
      %v1183 = vshll.u32 %v1158, 16
      %v1185 = vrot.slane %v1183, 1
      %v1186 = vsel %vm1166, %v1181, %v1185
      %v1187 = vshrl.u32 %v1158, 16
      %v1189 = vor.u32 %v1187, %v1185
      %v1191 = vshll.u32 %v1159, 16
      %v1193 = vrot.slane %v1191, 1
      %v1194 = vsel %vm1166, %v1189, %v1193
      %v1195 = vshrl.u32 %v1159, 16
      %v1197 = vor.u32 %v1195, %v1193
      %v1199 = vshll.u32 %v1160, 16
      %v1201 = vrot.slane %v1199, 1
      %v1202 = vsel %vm1166, %v1197, %v1201
      %v1203 = vshrl.u32 %v1160, 16
      %v1205 = vor.u32 %v1203, %v1201
      %v1207 = vshll.u32 %v1161, 16
      %v1209 = vrot.slane %v1207, 1
      %v1210 = vsel %vm1166, %v1205, %v1209
      %v1211 = vshrl.u32 %v1161, 16
      %v1213 = vor.u32 %v1211, %v1209
      %v1215 = vshll.u32 %v1162, 16
      %v1217 = vrot.slane %v1215, 1
      %v1218 = vsel %vm1166, %v1213, %v1217
      %v1219 = vshrl.u32 %v1162, 16
      %v1221 = vor.u32 %v1219, %v1217
      %v1223 = vshll.u32 %v1163, 16
      %v1225 = vrot.slane %v1223, 1
      %v1226 = vsel %vm1166, %v1221, %v1225
      %v1227 = vshrl.u32 %v1163, 16
      %v1229 = vor.u32 %v1227, %v1225
      %v1231 = vshll.u32 %v1164, 16
      %v1233 = vrot.slane %v1231, 1
      %v1234 = vsel %vm1166, %v1229, %v1233
      %v1235 = vshrl.u32 %v1164, 16
      %v1237 = vor.u32 %v1235, %v1233
      %v1239 = vshll.u32 %v1165, 16
      %v1241 = vrot.slane %v1239, 1
      %v1242 = vsel %vm1166, %v1237, %v1241
      %v1249 = vunpack.c.l.b16 %v1112
      %v1250 = vunpack.c.l.b16 %v1113
      %v1251 = vunpack.c.l.b16 %v1114
      %v1252 = vunpack.c.l.b16 %v1115
      %v1253 = vunpack.c.l.b16 %v1116
      %v1254 = vunpack.c.l.b16 %v1117
      %v1255 = vpack.c.b16 %v1250, %v1249
      %v1256 = vpack.c.b16 %v1252, %v1251
      %v1257 = vpack.c.b16 %v1254, %v1253
      %v1262 = vsel %vm392, %v1178, 0
      %v1265 = vsel %vm392, %v1186, 0
      %v1268 = vsel %vm392, %v1194, 0
      %v1271 = vsel %vm392, %v1202, 0
      %v1274 = vsel %vm392, %v1210, 0
      %v1277 = vsel %vm392, %v1218, 0
      %v1280 = vsel %vm392, %v1226, 0
      %v1283 = vsel %vm392, %v1234, 0
      %v1286 = vsel %vm392, %v1242, 0
      %1288 = vmatpush.bf16.msra.mxu0 0
      %1289 = vmatpush.bf16.msra.mxu0 0
      %1290 = vmatpush.bf16.msra.mxu0 0
      %1291 = vmatpush.bf16.msra.mxu0 0
      %1292 = vmatpush.bf16.msra.mxu0 0
      %1293 = vmatpush.bf16.msra.mxu0 %v1257
      %1294 = vmatpush.bf16.msra.mxu0 %v1256
      %1295 = vmatpush.bf16.msra.mxu0 %v1255
      %1296 = vmatmul.bf16.gmra.mxu0 %v1262
      %v1297 = vpop.f32.mrf.mxu0
      %v1298 = vadd.f32 0.0, %v1297
      %v1299 = vpop.f32.mrf.mxu0
      %v1300 = vadd.f32 0.0, %v1299
      %1301 = vmatmul.bf16.gmra.mxu0 %v1265
      %v1302 = vpop.f32.mrf.mxu0
      %v1303 = vadd.f32 0.0, %v1302
      %v1304 = vpop.f32.mrf.mxu0
      %v1305 = vadd.f32 0.0, %v1304
      %1306 = vmatmul.bf16.gmra.mxu0 %v1268
      %v1307 = vpop.f32.mrf.mxu0
      %v1308 = vadd.f32 0.0, %v1307
      %v1309 = vpop.f32.mrf.mxu0
      %v1310 = vadd.f32 0.0, %v1309
      %1311 = vmatmul.bf16.gmra.mxu0 %v1271
      %v1312 = vpop.f32.mrf.mxu0
      %v1313 = vadd.f32 0.0, %v1312
      %v1314 = vpop.f32.mrf.mxu0
      %v1315 = vadd.f32 0.0, %v1314
      %1316 = vmatmul.bf16.gmra.mxu0 %v1274
      %v1317 = vpop.f32.mrf.mxu0
      %v1318 = vadd.f32 0.0, %v1317
      %v1319 = vpop.f32.mrf.mxu0
      %v1320 = vadd.f32 0.0, %v1319
      %1321 = vmatmul.bf16.gmra.mxu0 %v1277
      %v1322 = vpop.f32.mrf.mxu0
      %v1323 = vadd.f32 0.0, %v1322
      %v1324 = vpop.f32.mrf.mxu0
      %v1325 = vadd.f32 0.0, %v1324
      %1326 = vmatmul.bf16.gmra.mxu0 %v1280
      %v1327 = vpop.f32.mrf.mxu0
      %v1328 = vadd.f32 0.0, %v1327
      %v1329 = vpop.f32.mrf.mxu0
      %v1330 = vadd.f32 0.0, %v1329
      %1331 = vmatmul.bf16.gmra.mxu0 %v1283
      %v1332 = vpop.f32.mrf.mxu0
      %v1333 = vadd.f32 0.0, %v1332
      %v1334 = vpop.f32.mrf.mxu0
      %v1335 = vadd.f32 0.0, %v1334
      %1336 = vmatmul.bf16.gmra.mxu0 %v1286
      %v1337 = vpop.f32.mrf.mxu0
      %v1338 = vadd.f32 0.0, %v1337
      %v1339 = vpop.f32.mrf.mxu0
      %v1340 = vadd.f32 0.0, %v1339
      %1341 = vdwg.mxu0
      %v1360 = vunpack.c.l.b16 %v1069
      %v1361 = vunpack.c.l.b16 %v1070
      %v1362 = vunpack.c.l.b16 %v1071
      %v1363 = vunpack.c.l.b16 %v1072
      %v1364 = vunpack.c.l.b16 %v1073
      %v1365 = vunpack.c.l.b16 %v1074
      %v1366 = vunpack.c.l.b16 %v1075
      %v1367 = vunpack.c.l.b16 %v1076
      %v1368 = vunpack.c.l.b16 %v1077
      %v1369 = vunpack.c.l.b16 %v1078
      %v1370 = vunpack.c.l.b16 %v1079
      %v1371 = vunpack.c.l.b16 %v1080
      %v1372 = vunpack.c.l.b16 %v1081
      %v1373 = vunpack.c.l.b16 %v1082
      %v1374 = vunpack.c.l.b16 %v1083
      %v1375 = vunpack.c.l.b16 %v1084
      %v1376 = vunpack.c.l.b16 %v1085
      %v1377 = vunpack.c.l.b16 %v1086
      %v1378 = vpack.c.b16 %v1361, %v1360
      %v1379 = vpack.c.b16 %v1363, %v1362
      %v1380 = vpack.c.b16 %v1365, %v1364
      %v1381 = vpack.c.b16 %v1367, %v1366
      %v1382 = vpack.c.b16 %v1369, %v1368
      %v1383 = vpack.c.b16 %v1371, %v1370
      %v1384 = vpack.c.b16 %v1373, %v1372
      %v1385 = vpack.c.b16 %v1375, %v1374
      %v1386 = vpack.c.b16 %v1377, %v1376
      %v1393 = vunpack.c.l.b16 %v1087
      %v1394 = vunpack.c.l.b16 %v1088
      %v1395 = vunpack.c.l.b16 %v1089
      %v1396 = vunpack.c.l.b16 %v1090
      %v1397 = vunpack.c.l.b16 %v1091
      %v1398 = vunpack.c.l.b16 %v1092
      %v1399 = vpack.c.b16 %v1394, %v1393
      %v1400 = vpack.c.b16 %v1396, %v1395
      %v1401 = vpack.c.b16 %v1398, %v1397
      %v1406 = vsel %vm392, %v1378, 0
      %v1409 = vsel %vm392, %v1379, 0
      %v1412 = vsel %vm392, %v1380, 0
      %v1415 = vsel %vm392, %v1381, 0
      %v1418 = vsel %vm392, %v1382, 0
      %v1421 = vsel %vm392, %v1383, 0
      %v1424 = vsel %vm392, %v1384, 0
      %v1427 = vsel %vm392, %v1385, 0
      %v1430 = vsel %vm392, %v1386, 0
      %1432 = vmatpush.bf16.msra.mxu0 0
      %1433 = vmatpush.bf16.msra.mxu0 0
      %1434 = vmatpush.bf16.msra.mxu0 0
      %1435 = vmatpush.bf16.msra.mxu0 0
      %1436 = vmatpush.bf16.msra.mxu0 0
      %1437 = vmatpush.bf16.msra.mxu0 %v1401
      %1438 = vmatpush.bf16.msra.mxu0 %v1400
      %1439 = vmatpush.bf16.msra.mxu0 %v1399
      %1440 = vmatmul.bf16.gmra.mxu0 %v1406
      %v1441 = vpop.f32.mrf.mxu0
      %v1442 = vadd.f32 %v1298, %v1441
      %v1443 = vpop.f32.mrf.mxu0
      %v1444 = vadd.f32 %v1300, %v1443
      %1445 = vmatmul.bf16.gmra.mxu0 %v1409
      %v1446 = vpop.f32.mrf.mxu0
      %v1447 = vadd.f32 %v1303, %v1446
      %v1448 = vpop.f32.mrf.mxu0
      %v1449 = vadd.f32 %v1305, %v1448
      %1450 = vmatmul.bf16.gmra.mxu0 %v1412
      %v1451 = vpop.f32.mrf.mxu0
      %v1452 = vadd.f32 %v1308, %v1451
      %v1453 = vpop.f32.mrf.mxu0
      %v1454 = vadd.f32 %v1310, %v1453
      %1455 = vmatmul.bf16.gmra.mxu0 %v1415
      %v1456 = vpop.f32.mrf.mxu0
      %v1457 = vadd.f32 %v1313, %v1456
      %v1458 = vpop.f32.mrf.mxu0
      %v1459 = vadd.f32 %v1315, %v1458
      %1460 = vmatmul.bf16.gmra.mxu0 %v1418
      %v1461 = vpop.f32.mrf.mxu0
      %v1462 = vadd.f32 %v1318, %v1461
      %v1463 = vpop.f32.mrf.mxu0
      %v1464 = vadd.f32 %v1320, %v1463
      %1465 = vmatmul.bf16.gmra.mxu0 %v1421
      %v1466 = vpop.f32.mrf.mxu0
      %v1467 = vadd.f32 %v1323, %v1466
      %v1468 = vpop.f32.mrf.mxu0
      %v1469 = vadd.f32 %v1325, %v1468
      %1470 = vmatmul.bf16.gmra.mxu0 %v1424
      %v1471 = vpop.f32.mrf.mxu0
      %v1472 = vadd.f32 %v1328, %v1471
      %v1473 = vpop.f32.mrf.mxu0
      %v1474 = vadd.f32 %v1330, %v1473
      %1475 = vmatmul.bf16.gmra.mxu0 %v1427
      %v1476 = vpop.f32.mrf.mxu0
      %v1477 = vadd.f32 %v1333, %v1476
      %v1478 = vpop.f32.mrf.mxu0
      %v1479 = vadd.f32 %v1335, %v1478
      %1480 = vmatmul.bf16.gmra.mxu0 %v1430
      %v1481 = vpop.f32.mrf.mxu0
      %v1482 = vadd.f32 %v1338, %v1481
      %v1483 = vpop.f32.mrf.mxu0
      %v1484 = vadd.f32 %v1340, %v1483
      %1485 = vdwg.mxu0
      %v1486 = vld [vmem:[%s805] sm:$0xf]
      %v1487 = vld [vmem:[%s805 + $0x4] sm:$0xf]
      %v1488 = vld [vmem:[%s805 + $0x8] sm:$0xf]
      %v1489 = vld [vmem:[%s805 + $0xc] sm:$0xf]
      %v1490 = vld [vmem:[%s805 + $0x10] sm:$0xf]
      %v1491 = vld [vmem:[%s805 + $0x14] sm:$0xf]
      %v1492 = vld [vmem:[%s805 + $0x18] sm:$0xf]
      %v1493 = vld [vmem:[%s805 + $0x1c] sm:$0xf]
      %v1494 = vld [vmem:[%s805 + $0x20] sm:$0xf]
      %v1495 = vld [vmem:[%s805 + $0x24] sm:$0xf]
      %v1496 = vld [vmem:[%s805 + $0x28] sm:$0xf]
      %v1497 = vld [vmem:[%s805 + $0x2c] sm:$0xf]
      %v1498 = vld [vmem:[%s805 + $0x30] sm:$0xf]
      %v1499 = vld [vmem:[%s805 + $0x34] sm:$0xf]
      %v1500 = vld [vmem:[%s805 + $0x38] sm:$0xf]
      %v1501 = vld [vmem:[%s805 + $0x3c] sm:$0xf]
      %v1502 = vld [vmem:[%s805 + $0x40] sm:$0xf]
      %v1503 = vld [vmem:[%s805 + $0x44] sm:$0xf]
      %v1504 = vld [vmem:[%s1 + $0x30] sm:$0xf]
      %v1505 = vld [vmem:[%s1 + $0x34] sm:$0xf]
      %v1506 = vld [vmem:[%s1 + $0x38] sm:$0xf]
      %v1507 = vld [vmem:[%s1 + $0x3c] sm:$0xf]
      %v1508 = vld [vmem:[%s1 + $0x40] sm:$0xf]
      %v1509 = vld [vmem:[%s1 + $0x44] sm:$0xf]
      %v1528 = vunpack.c.l.b16 %v1486
      %v1529 = vunpack.c.l.b16 %v1487
      %v1530 = vunpack.c.l.b16 %v1488
      %v1531 = vunpack.c.l.b16 %v1489
      %v1532 = vunpack.c.l.b16 %v1490
      %v1533 = vunpack.c.l.b16 %v1491
      %v1534 = vunpack.c.l.b16 %v1492
      %v1535 = vunpack.c.l.b16 %v1493
      %v1536 = vunpack.c.l.b16 %v1494
      %v1537 = vunpack.c.l.b16 %v1495
      %v1538 = vunpack.c.l.b16 %v1496
      %v1539 = vunpack.c.l.b16 %v1497
      %v1540 = vunpack.c.l.b16 %v1498
      %v1541 = vunpack.c.l.b16 %v1499
      %v1542 = vunpack.c.l.b16 %v1500
      %v1543 = vunpack.c.l.b16 %v1501
      %v1544 = vunpack.c.l.b16 %v1502
      %v1545 = vunpack.c.l.b16 %v1503
      %v1546 = vpack.c.b16 %v1529, %v1528
      %v1547 = vpack.c.b16 %v1531, %v1530
      %v1548 = vpack.c.b16 %v1533, %v1532
      %v1549 = vpack.c.b16 %v1535, %v1534
      %v1550 = vpack.c.b16 %v1537, %v1536
      %v1551 = vpack.c.b16 %v1539, %v1538
      %v1552 = vpack.c.b16 %v1541, %v1540
      %v1553 = vpack.c.b16 %v1543, %v1542
      %v1554 = vpack.c.b16 %v1545, %v1544
      %v1561 = vunpack.c.l.b16 %v1504
      %v1562 = vunpack.c.l.b16 %v1505
      %v1563 = vunpack.c.l.b16 %v1506
      %v1564 = vunpack.c.l.b16 %v1507
      %v1565 = vunpack.c.l.b16 %v1508
      %v1566 = vunpack.c.l.b16 %v1509
      %v1567 = vpack.c.b16 %v1562, %v1561
      %v1568 = vpack.c.b16 %v1564, %v1563
      %v1569 = vpack.c.b16 %v1566, %v1565
      %v1574 = vsel %vm392, %v1546, 0
      %v1577 = vsel %vm392, %v1547, 0
      %v1580 = vsel %vm392, %v1548, 0
      %v1583 = vsel %vm392, %v1549, 0
      %v1586 = vsel %vm392, %v1550, 0
      %v1589 = vsel %vm392, %v1551, 0
      %v1592 = vsel %vm392, %v1552, 0
      %v1595 = vsel %vm392, %v1553, 0
      %v1598 = vsel %vm392, %v1554, 0
      %1600 = vmatpush.bf16.msra.mxu0 0
      %1601 = vmatpush.bf16.msra.mxu0 0
      %1602 = vmatpush.bf16.msra.mxu0 0
      %1603 = vmatpush.bf16.msra.mxu0 0
      %1604 = vmatpush.bf16.msra.mxu0 0
      %1605 = vmatpush.bf16.msra.mxu0 %v1569
      %1606 = vmatpush.bf16.msra.mxu0 %v1568
      %1607 = vmatpush.bf16.msra.mxu0 %v1567
      %1608 = vmatmul.bf16.gmra.mxu0 %v1574
      %v1609 = vpop.f32.mrf.mxu0
      %v1610 = vadd.f32 0.0, %v1609
      %v1611 = vpop.f32.mrf.mxu0
      %v1612 = vadd.f32 0.0, %v1611
      %1613 = vmatmul.bf16.gmra.mxu0 %v1577
      %v1614 = vpop.f32.mrf.mxu0
      %v1615 = vadd.f32 0.0, %v1614
      %v1616 = vpop.f32.mrf.mxu0
      %v1617 = vadd.f32 0.0, %v1616
      %1618 = vmatmul.bf16.gmra.mxu0 %v1580
      %v1619 = vpop.f32.mrf.mxu0
      %v1620 = vadd.f32 0.0, %v1619
      %v1621 = vpop.f32.mrf.mxu0
      %v1622 = vadd.f32 0.0, %v1621
      %1623 = vmatmul.bf16.gmra.mxu0 %v1583
      %v1624 = vpop.f32.mrf.mxu0
      %v1625 = vadd.f32 0.0, %v1624
      %v1626 = vpop.f32.mrf.mxu0
      %v1627 = vadd.f32 0.0, %v1626
      %1628 = vmatmul.bf16.gmra.mxu0 %v1586
      %v1629 = vpop.f32.mrf.mxu0
      %v1630 = vadd.f32 0.0, %v1629
      %v1631 = vpop.f32.mrf.mxu0
      %v1632 = vadd.f32 0.0, %v1631
      %1633 = vmatmul.bf16.gmra.mxu0 %v1589
      %v1634 = vpop.f32.mrf.mxu0
      %v1635 = vadd.f32 0.0, %v1634
      %v1636 = vpop.f32.mrf.mxu0
      %v1637 = vadd.f32 0.0, %v1636
      %1638 = vmatmul.bf16.gmra.mxu0 %v1592
      %v1639 = vpop.f32.mrf.mxu0
      %v1640 = vadd.f32 0.0, %v1639
      %v1641 = vpop.f32.mrf.mxu0
      %v1642 = vadd.f32 0.0, %v1641
      %1643 = vmatmul.bf16.gmra.mxu0 %v1595
      %v1644 = vpop.f32.mrf.mxu0
      %v1645 = vadd.f32 0.0, %v1644
      %v1646 = vpop.f32.mrf.mxu0
      %v1647 = vadd.f32 0.0, %v1646
      %1648 = vmatmul.bf16.gmra.mxu0 %v1598
      %v1649 = vpop.f32.mrf.mxu0
      %v1650 = vadd.f32 0.0, %v1649
      %v1651 = vpop.f32.mrf.mxu0
      %v1652 = vadd.f32 0.0, %v1651
      %1653 = vdwg.mxu0
      %v1654 = vadd.f32 %v1442, %v1610
      %v1655 = vadd.f32 %v1444, %v1612
      %v1656 = vadd.f32 %v1447, %v1615
      %v1657 = vadd.f32 %v1449, %v1617
      %v1658 = vadd.f32 %v1452, %v1620
      %v1659 = vadd.f32 %v1454, %v1622
      %v1660 = vadd.f32 %v1457, %v1625
      %v1661 = vadd.f32 %v1459, %v1627
      %v1662 = vadd.f32 %v1462, %v1630
      %v1663 = vadd.f32 %v1464, %v1632
      %v1664 = vadd.f32 %v1467, %v1635
      %v1665 = vadd.f32 %v1469, %v1637
      %v1666 = vadd.f32 %v1472, %v1640
      %v1667 = vadd.f32 %v1474, %v1642
      %v1668 = vadd.f32 %v1477, %v1645
      %v1669 = vadd.f32 %v1479, %v1647
      %v1670 = vadd.f32 %v1482, %v1650
      %v1671 = vadd.f32 %v1484, %v1652
      %v1672 = vld [vmem:[%s618] sm:$0xf]
      %v1673 = vld [vmem:[%s618 + $0x4] sm:$0xf]
      %v1674 = vld [vmem:[%s618 + $0x8] sm:$0xf]
      %v1675 = vld [vmem:[%s618 + $0xc] sm:$0xf]
      %v1676 = vld [vmem:[%s618 + $0x10] sm:$0xf]
      %v1677 = vld [vmem:[%s618 + $0x14] sm:$0xf]
      %v1678 = vld [vmem:[%s618 + $0x18] sm:$0xf]
      %v1679 = vld [vmem:[%s618 + $0x1c] sm:$0xf]
      %v1680 = vld [vmem:[%s618 + $0x20] sm:$0xf]
      %v1681 = vld [vmem:[%s618 + $0x24] sm:$0xf]
      %v1682 = vld [vmem:[%s618 + $0x28] sm:$0xf]
      %v1683 = vld [vmem:[%s618 + $0x2c] sm:$0xf]
      %v1684 = vld [vmem:[%s618 + $0x30] sm:$0xf]
      %v1685 = vld [vmem:[%s618 + $0x34] sm:$0xf]
      %v1686 = vld [vmem:[%s618 + $0x38] sm:$0xf]
      %v1687 = vld [vmem:[%s618 + $0x3c] sm:$0xf]
      %v1688 = vld [vmem:[%s618 + $0x40] sm:$0xf]
      %v1689 = vld [vmem:[%s618 + $0x44] sm:$0xf]
      %v1690 = vld [vmem:[%s618 + $0x48] sm:$0x1]
      %v1691 = vld [vmem:[%s1 + $0x48] sm:$0xf]
      %v1692 = vld [vmem:[%s1 + $0x4c] sm:$0xf]
      %v1693 = vld [vmem:[%s1 + $0x50] sm:$0xf]
      %v1694 = vld [vmem:[%s1 + $0x54] sm:$0xf]
      %v1695 = vld [vmem:[%s1 + $0x58] sm:$0xf]
      %v1696 = vld [vmem:[%s1 + $0x5c] sm:$0xf]
      %v1716 = vunpack.c.l.b16 %v1672
      %v1717 = vunpack.c.l.b16 %v1673
      %v1718 = vunpack.c.l.b16 %v1674
      %v1719 = vunpack.c.l.b16 %v1675
      %v1720 = vunpack.c.l.b16 %v1676
      %v1721 = vunpack.c.l.b16 %v1677
      %v1722 = vunpack.c.l.b16 %v1678
      %v1723 = vunpack.c.l.b16 %v1679
      %v1724 = vunpack.c.l.b16 %v1680
      %v1725 = vunpack.c.l.b16 %v1681
      %v1726 = vunpack.c.l.b16 %v1682
      %v1727 = vunpack.c.l.b16 %v1683
      %v1728 = vunpack.c.l.b16 %v1684
      %v1729 = vunpack.c.l.b16 %v1685
      %v1730 = vunpack.c.l.b16 %v1686
      %v1731 = vunpack.c.l.b16 %v1687
      %v1732 = vunpack.c.l.b16 %v1688
      %v1733 = vunpack.c.l.b16 %v1689
      %v1734 = vunpack.c.l.b16 %v1690
      %v1735 = vpack.c.b16 %v1717, %v1716
      %v1736 = vpack.c.b16 %v1719, %v1718
      %v1737 = vpack.c.b16 %v1721, %v1720
      %v1738 = vpack.c.b16 %v1723, %v1722
      %v1739 = vpack.c.b16 %v1725, %v1724
      %v1740 = vpack.c.b16 %v1727, %v1726
      %v1741 = vpack.c.b16 %v1729, %v1728
      %v1742 = vpack.c.b16 %v1731, %v1730
      %v1743 = vpack.c.b16 %v1733, %v1732
      %v1744 = vpack.c.b16 %v1734, %v1734
      %v1746 = vshrl.u32 %v1735, 16
      %v1748 = vshll.u32 %v1735, 16
      %v1750 = vrot.slane %v1748, 1
      %v1751 = vor.u32 %v1746, %v1750
      %v1753 = vshll.u32 %v1736, 16
      %v1755 = vrot.slane %v1753, 1
      %v1756 = vsel %vm1166, %v1751, %v1755
      %v1757 = vshrl.u32 %v1736, 16
      %v1759 = vor.u32 %v1757, %v1755
      %v1761 = vshll.u32 %v1737, 16
      %v1763 = vrot.slane %v1761, 1
      %v1764 = vsel %vm1166, %v1759, %v1763
      %v1765 = vshrl.u32 %v1737, 16
      %v1767 = vor.u32 %v1765, %v1763
      %v1769 = vshll.u32 %v1738, 16
      %v1771 = vrot.slane %v1769, 1
      %v1772 = vsel %vm1166, %v1767, %v1771
      %v1773 = vshrl.u32 %v1738, 16
      %v1775 = vor.u32 %v1773, %v1771
      %v1777 = vshll.u32 %v1739, 16
      %v1779 = vrot.slane %v1777, 1
      %v1780 = vsel %vm1166, %v1775, %v1779
      %v1781 = vshrl.u32 %v1739, 16
      %v1783 = vor.u32 %v1781, %v1779
      %v1785 = vshll.u32 %v1740, 16
      %v1787 = vrot.slane %v1785, 1
      %v1788 = vsel %vm1166, %v1783, %v1787
      %v1789 = vshrl.u32 %v1740, 16
      %v1791 = vor.u32 %v1789, %v1787
      %v1793 = vshll.u32 %v1741, 16
      %v1795 = vrot.slane %v1793, 1
      %v1796 = vsel %vm1166, %v1791, %v1795
      %v1797 = vshrl.u32 %v1741, 16
      %v1799 = vor.u32 %v1797, %v1795
      %v1801 = vshll.u32 %v1742, 16
      %v1803 = vrot.slane %v1801, 1
      %v1804 = vsel %vm1166, %v1799, %v1803
      %v1805 = vshrl.u32 %v1742, 16
      %v1807 = vor.u32 %v1805, %v1803
      %v1809 = vshll.u32 %v1743, 16
      %v1811 = vrot.slane %v1809, 1
      %v1812 = vsel %vm1166, %v1807, %v1811
      %v1813 = vshrl.u32 %v1743, 16
      %v1815 = vor.u32 %v1813, %v1811
      %v1817 = vshll.u32 %v1744, 16
      %v1819 = vrot.slane %v1817, 1
      %v1820 = vsel %vm1166, %v1815, %v1819
      %v1827 = vunpack.c.l.b16 %v1691
      %v1828 = vunpack.c.l.b16 %v1692
      %v1829 = vunpack.c.l.b16 %v1693
      %v1830 = vunpack.c.l.b16 %v1694
      %v1831 = vunpack.c.l.b16 %v1695
      %v1832 = vunpack.c.l.b16 %v1696
      %v1833 = vpack.c.b16 %v1828, %v1827
      %v1834 = vpack.c.b16 %v1830, %v1829
      %v1835 = vpack.c.b16 %v1832, %v1831
      %v1840 = vsel %vm392, %v1756, 0
      %v1843 = vsel %vm392, %v1764, 0
      %v1846 = vsel %vm392, %v1772, 0
      %v1849 = vsel %vm392, %v1780, 0
      %v1852 = vsel %vm392, %v1788, 0
      %v1855 = vsel %vm392, %v1796, 0
      %v1858 = vsel %vm392, %v1804, 0
      %v1861 = vsel %vm392, %v1812, 0
      %v1864 = vsel %vm392, %v1820, 0
      %1866 = vmatpush.bf16.msra.mxu0 0
      %1867 = vmatpush.bf16.msra.mxu0 0
      %1868 = vmatpush.bf16.msra.mxu0 0
      %1869 = vmatpush.bf16.msra.mxu0 0
      %1870 = vmatpush.bf16.msra.mxu0 0
      %1871 = vmatpush.bf16.msra.mxu0 %v1835
      %1872 = vmatpush.bf16.msra.mxu0 %v1834
      %1873 = vmatpush.bf16.msra.mxu0 %v1833
      %1874 = vmatmul.bf16.gmra.mxu0 %v1840
      %v1875 = vpop.f32.mrf.mxu0
      %v1876 = vadd.f32 0.0, %v1875
      %v1877 = vpop.f32.mrf.mxu0
      %v1878 = vadd.f32 0.0, %v1877
      %1879 = vmatmul.bf16.gmra.mxu0 %v1843
      %v1880 = vpop.f32.mrf.mxu0
      %v1881 = vadd.f32 0.0, %v1880
      %v1882 = vpop.f32.mrf.mxu0
      %v1883 = vadd.f32 0.0, %v1882
      %1884 = vmatmul.bf16.gmra.mxu0 %v1846
      %v1885 = vpop.f32.mrf.mxu0
      %v1886 = vadd.f32 0.0, %v1885
      %v1887 = vpop.f32.mrf.mxu0
      %v1888 = vadd.f32 0.0, %v1887
      %1889 = vmatmul.bf16.gmra.mxu0 %v1849
      %v1890 = vpop.f32.mrf.mxu0
      %v1891 = vadd.f32 0.0, %v1890
      %v1892 = vpop.f32.mrf.mxu0
      %v1893 = vadd.f32 0.0, %v1892
      %1894 = vmatmul.bf16.gmra.mxu0 %v1852
      %v1895 = vpop.f32.mrf.mxu0
      %v1896 = vadd.f32 0.0, %v1895
      %v1897 = vpop.f32.mrf.mxu0
      %v1898 = vadd.f32 0.0, %v1897
      %1899 = vmatmul.bf16.gmra.mxu0 %v1855
      %v1900 = vpop.f32.mrf.mxu0
      %v1901 = vadd.f32 0.0, %v1900
      %v1902 = vpop.f32.mrf.mxu0
      %v1903 = vadd.f32 0.0, %v1902
      %1904 = vmatmul.bf16.gmra.mxu0 %v1858
      %v1905 = vpop.f32.mrf.mxu0
      %v1906 = vadd.f32 0.0, %v1905
      %v1907 = vpop.f32.mrf.mxu0
      %v1908 = vadd.f32 0.0, %v1907
      %1909 = vmatmul.bf16.gmra.mxu0 %v1861
      %v1910 = vpop.f32.mrf.mxu0
      %v1911 = vadd.f32 0.0, %v1910
      %v1912 = vpop.f32.mrf.mxu0
      %v1913 = vadd.f32 0.0, %v1912
      %1914 = vmatmul.bf16.gmra.mxu0 %v1864
      %v1915 = vpop.f32.mrf.mxu0
      %v1916 = vadd.f32 0.0, %v1915
      %v1917 = vpop.f32.mrf.mxu0
      %v1918 = vadd.f32 0.0, %v1917
      %1919 = vdwg.mxu0
      %v1920 = vadd.f32 %v1654, %v1876
      %v1921 = vadd.f32 %v1655, %v1878
      %v1922 = vadd.f32 %v1656, %v1881
      %v1923 = vadd.f32 %v1657, %v1883
      %v1924 = vadd.f32 %v1658, %v1886
      %v1925 = vadd.f32 %v1659, %v1888
      %v1926 = vadd.f32 %v1660, %v1891
      %v1927 = vadd.f32 %v1661, %v1893
      %v1928 = vadd.f32 %v1662, %v1896
      %v1929 = vadd.f32 %v1663, %v1898
      %v1930 = vadd.f32 %v1664, %v1901
      %v1931 = vadd.f32 %v1665, %v1903
      %v1932 = vadd.f32 %v1666, %v1906
      %v1933 = vadd.f32 %v1667, %v1908
      %v1934 = vadd.f32 %v1668, %v1911
      %v1935 = vadd.f32 %v1669, %v1913
      %v1936 = vadd.f32 %v1670, %v1916
      %v1937 = vadd.f32 %v1671, %v1918
      %v1938 = vld [vmem:[%s2] sm:$0x1]
      %v1940 = vperm.slane %v1938, 0
      %v1942 = vadd.f32 %v1920, %v1940
      %v1943 = vadd.f32 %v1921, %v1940
      %v1944 = vadd.f32 %v1922, %v1940
      %v1945 = vadd.f32 %v1923, %v1940
      %v1946 = vadd.f32 %v1924, %v1940
      %v1947 = vadd.f32 %v1925, %v1940
      %v1948 = vadd.f32 %v1926, %v1940
      %v1949 = vadd.f32 %v1927, %v1940
      %v1950 = vadd.f32 %v1928, %v1940
      %v1951 = vadd.f32 %v1929, %v1940
      %v1952 = vadd.f32 %v1930, %v1940
      %v1953 = vadd.f32 %v1931, %v1940
      %v1954 = vadd.f32 %v1932, %v1940
      %v1955 = vadd.f32 %v1933, %v1940
      %v1956 = vadd.f32 %v1934, %v1940
      %v1957 = vadd.f32 %v1935, %v1940
      %v1958 = vadd.f32 %v1936, %v1940
      %v1959 = vadd.f32 %v1937, %v1940
      %v1960 = vmax.f32 %v1942, 0.0
      %v1961 = vmax.f32 %v1943, 0.0
      %v1962 = vmax.f32 %v1944, 0.0
      %v1963 = vmax.f32 %v1945, 0.0
      %v1964 = vmax.f32 %v1946, 0.0
      %v1965 = vmax.f32 %v1947, 0.0
      %v1966 = vmax.f32 %v1948, 0.0
      %v1967 = vmax.f32 %v1949, 0.0
      %v1968 = vmax.f32 %v1950, 0.0
      %v1969 = vmax.f32 %v1951, 0.0
      %v1970 = vmax.f32 %v1952, 0.0
      %v1971 = vmax.f32 %v1953, 0.0
      %v1972 = vmax.f32 %v1954, 0.0
      %v1973 = vmax.f32 %v1955, 0.0
      %v1974 = vmax.f32 %v1956, 0.0
      %v1975 = vmax.f32 %v1957, 0.0
      %v1976 = vmax.f32 %v1958, 0.0
      %v1977 = vmax.f32 %v1959, 0.0
      %v1978 = vpack.c.bf16 %v1960, %v1960
      %v1979 = vpack.c.bf16 %v1961, %v1961
      %v1980 = vpack.c.bf16 %v1962, %v1962
      %v1981 = vpack.c.bf16 %v1963, %v1963
      %v1982 = vpack.c.bf16 %v1964, %v1964
      %v1983 = vpack.c.bf16 %v1965, %v1965
      %v1984 = vpack.c.bf16 %v1966, %v1966
      %v1985 = vpack.c.bf16 %v1967, %v1967
      %v1986 = vpack.c.bf16 %v1968, %v1968
      %v1987 = vpack.c.bf16 %v1969, %v1969
      %v1988 = vpack.c.bf16 %v1970, %v1970
      %v1989 = vpack.c.bf16 %v1971, %v1971
      %v1990 = vpack.c.bf16 %v1972, %v1972
      %v1991 = vpack.c.bf16 %v1973, %v1973
      %v1992 = vpack.c.bf16 %v1974, %v1974
      %v1993 = vpack.c.bf16 %v1975, %v1975
      %v1994 = vpack.c.bf16 %v1976, %v1976
      %v1995 = vpack.c.bf16 %v1977, %v1977
      %s1996 = scalar_lea.vmem [#allocation2], 72
      %1997 = vst.msk [vmem:[%s1996] sm:$0xf] %vm1050, %v1978
      %1998 = vst.msk [vmem:[%s1996 + $0x4] sm:$0xf] %vm1050, %v1979
      %1999 = vst.msk [vmem:[%s1996 + $0x8] sm:$0xf] %vm1050, %v1980
      %2000 = vst.msk [vmem:[%s1996 + $0xc] sm:$0xf] %vm1050, %v1981
      %2001 = vst.msk [vmem:[%s1996 + $0x10] sm:$0xf] %vm1050, %v1982
      %2002 = vst.msk [vmem:[%s1996 + $0x14] sm:$0xf] %vm1050, %v1983
      %2003 = vst.msk [vmem:[%s1996 + $0x18] sm:$0xf] %vm1050, %v1984
      %2004 = vst.msk [vmem:[%s1996 + $0x1c] sm:$0xf] %vm1050, %v1985
      %2005 = vst.msk [vmem:[%s1996 + $0x20] sm:$0xf] %vm1050, %v1986
      %2006 = vst.msk [vmem:[%s1996 + $0x24] sm:$0xf] %vm1050, %v1987
      %2007 = vst.msk [vmem:[%s1996 + $0x28] sm:$0xf] %vm1050, %v1988
      %2008 = vst.msk [vmem:[%s1996 + $0x2c] sm:$0xf] %vm1050, %v1989
      %2009 = vst.msk [vmem:[%s1996 + $0x30] sm:$0xf] %vm1050, %v1990
      %2010 = vst.msk [vmem:[%s1996 + $0x34] sm:$0xf] %vm1050, %v1991
      %2011 = vst.msk [vmem:[%s1996 + $0x38] sm:$0xf] %vm1050, %v1992
      %2012 = vst.msk [vmem:[%s1996 + $0x3c] sm:$0xf] %vm1050, %v1993
      %2013 = vst.msk [vmem:[%s1996 + $0x40] sm:$0xf] %vm1050, %v1994
      %2014 = vst.msk [vmem:[%s1996 + $0x44] sm:$0xf] %vm1050, %v1995
      %v2015 = vld [vmem:[%s618] sm:$0xf]
      %v2016 = vld [vmem:[%s618 + $0x4] sm:$0xf]
      %v2017 = vld [vmem:[%s618 + $0x8] sm:$0xf]
      %v2018 = vld [vmem:[%s618 + $0xc] sm:$0xf]
      %v2019 = vld [vmem:[%s618 + $0x10] sm:$0xf]
      %v2020 = vld [vmem:[%s618 + $0x14] sm:$0xf]
      %v2021 = vld [vmem:[%s618 + $0x18] sm:$0xf]
      %v2022 = vld [vmem:[%s618 + $0x1c] sm:$0xf]
      %v2023 = vld [vmem:[%s618 + $0x20] sm:$0xf]
      %v2024 = vld [vmem:[%s618 + $0x24] sm:$0xf]
      %v2025 = vld [vmem:[%s618 + $0x28] sm:$0xf]
      %v2026 = vld [vmem:[%s618 + $0x2c] sm:$0xf]
      %v2027 = vld [vmem:[%s618 + $0x30] sm:$0xf]
      %v2028 = vld [vmem:[%s618 + $0x34] sm:$0xf]
      %v2029 = vld [vmem:[%s618 + $0x38] sm:$0xf]
      %v2030 = vld [vmem:[%s618 + $0x3c] sm:$0xf]
      %v2031 = vld [vmem:[%s618 + $0x40] sm:$0xf]
      %v2032 = vld [vmem:[%s618 + $0x44] sm:$0xf]
      %v2033 = vld [vmem:[%s1] sm:$0xf]
      %v2034 = vld [vmem:[%s1 + $0x4] sm:$0xf]
      %v2035 = vld [vmem:[%s1 + $0x8] sm:$0xf]
      %v2036 = vld [vmem:[%s1 + $0xc] sm:$0xf]
      %v2037 = vld [vmem:[%s1 + $0x10] sm:$0xf]
      %v2038 = vld [vmem:[%s1 + $0x14] sm:$0xf]
      %v2039 = vld [vmem:[%s805] sm:$0xf]
      %v2040 = vld [vmem:[%s805 + $0x4] sm:$0xf]
      %v2041 = vld [vmem:[%s805 + $0x8] sm:$0xf]
      %v2042 = vld [vmem:[%s805 + $0xc] sm:$0xf]
      %v2043 = vld [vmem:[%s805 + $0x10] sm:$0xf]
      %v2044 = vld [vmem:[%s805 + $0x14] sm:$0xf]
      %v2045 = vld [vmem:[%s805 + $0x18] sm:$0xf]
      %v2046 = vld [vmem:[%s805 + $0x1c] sm:$0xf]
      %v2047 = vld [vmem:[%s805 + $0x20] sm:$0xf]
      %v2048 = vld [vmem:[%s805 + $0x24] sm:$0xf]
      %v2049 = vld [vmem:[%s805 + $0x28] sm:$0xf]
      %v2050 = vld [vmem:[%s805 + $0x2c] sm:$0xf]
      %v2051 = vld [vmem:[%s805 + $0x30] sm:$0xf]
      %v2052 = vld [vmem:[%s805 + $0x34] sm:$0xf]
      %v2053 = vld [vmem:[%s805 + $0x38] sm:$0xf]
      %v2054 = vld [vmem:[%s805 + $0x3c] sm:$0xf]
      %v2055 = vld [vmem:[%s805 + $0x40] sm:$0xf]
      %v2056 = vld [vmem:[%s805 + $0x44] sm:$0xf]
      %v2057 = vld [vmem:[%s1 + $0x18] sm:$0xf]
      %v2058 = vld [vmem:[%s1 + $0x1c] sm:$0xf]
      %v2059 = vld [vmem:[%s1 + $0x20] sm:$0xf]
      %v2060 = vld [vmem:[%s1 + $0x24] sm:$0xf]
      %v2061 = vld [vmem:[%s1 + $0x28] sm:$0xf]
      %v2062 = vld [vmem:[%s1 + $0x2c] sm:$0xf]
      %v2081 = vunpack.c.l.b16 %v2039
      %v2082 = vunpack.c.l.b16 %v2040
      %v2083 = vunpack.c.l.b16 %v2041
      %v2084 = vunpack.c.l.b16 %v2042
      %v2085 = vunpack.c.l.b16 %v2043
      %v2086 = vunpack.c.l.b16 %v2044
      %v2087 = vunpack.c.l.b16 %v2045
      %v2088 = vunpack.c.l.b16 %v2046
      %v2089 = vunpack.c.l.b16 %v2047
      %v2090 = vunpack.c.l.b16 %v2048
      %v2091 = vunpack.c.l.b16 %v2049
      %v2092 = vunpack.c.l.b16 %v2050
      %v2093 = vunpack.c.l.b16 %v2051
      %v2094 = vunpack.c.l.b16 %v2052
      %v2095 = vunpack.c.l.b16 %v2053
      %v2096 = vunpack.c.l.b16 %v2054
      %v2097 = vunpack.c.l.b16 %v2055
      %v2098 = vunpack.c.l.b16 %v2056
      %v2099 = vpack.c.b16 %v2082, %v2081
      %v2100 = vpack.c.b16 %v2084, %v2083
      %v2101 = vpack.c.b16 %v2086, %v2085
      %v2102 = vpack.c.b16 %v2088, %v2087
      %v2103 = vpack.c.b16 %v2090, %v2089
      %v2104 = vpack.c.b16 %v2092, %v2091
      %v2105 = vpack.c.b16 %v2094, %v2093
      %v2106 = vpack.c.b16 %v2096, %v2095
      %v2107 = vpack.c.b16 %v2098, %v2097
      %v2114 = vunpack.c.l.b16 %v2057
      %v2115 = vunpack.c.l.b16 %v2058
      %v2116 = vunpack.c.l.b16 %v2059
      %v2117 = vunpack.c.l.b16 %v2060
      %v2118 = vunpack.c.l.b16 %v2061
      %v2119 = vunpack.c.l.b16 %v2062
      %v2120 = vpack.c.b16 %v2115, %v2114
      %v2121 = vpack.c.b16 %v2117, %v2116
      %v2122 = vpack.c.b16 %v2119, %v2118
      %v2127 = vsel %vm392, %v2099, 0
      %v2130 = vsel %vm392, %v2100, 0
      %v2133 = vsel %vm392, %v2101, 0
      %v2136 = vsel %vm392, %v2102, 0
      %v2139 = vsel %vm392, %v2103, 0
      %v2142 = vsel %vm392, %v2104, 0
      %v2145 = vsel %vm392, %v2105, 0
      %v2148 = vsel %vm392, %v2106, 0
      %v2151 = vsel %vm392, %v2107, 0
      %2153 = vmatpush.bf16.msra.mxu0 0
      %2154 = vmatpush.bf16.msra.mxu0 0
      %2155 = vmatpush.bf16.msra.mxu0 0
      %2156 = vmatpush.bf16.msra.mxu0 0
      %2157 = vmatpush.bf16.msra.mxu0 0
      %2158 = vmatpush.bf16.msra.mxu0 %v2122
      %2159 = vmatpush.bf16.msra.mxu0 %v2121
      %2160 = vmatpush.bf16.msra.mxu0 %v2120
      %2161 = vmatmul.bf16.gmra.mxu0 %v2127
      %v2162 = vpop.f32.mrf.mxu0
      %v2163 = vadd.f32 0.0, %v2162
      %v2164 = vpop.f32.mrf.mxu0
      %v2165 = vadd.f32 0.0, %v2164
      %2166 = vmatmul.bf16.gmra.mxu0 %v2130
      %v2167 = vpop.f32.mrf.mxu0
      %v2168 = vadd.f32 0.0, %v2167
      %v2169 = vpop.f32.mrf.mxu0
      %v2170 = vadd.f32 0.0, %v2169
      %2171 = vmatmul.bf16.gmra.mxu0 %v2133
      %v2172 = vpop.f32.mrf.mxu0
      %v2173 = vadd.f32 0.0, %v2172
      %v2174 = vpop.f32.mrf.mxu0
      %v2175 = vadd.f32 0.0, %v2174
      %2176 = vmatmul.bf16.gmra.mxu0 %v2136
      %v2177 = vpop.f32.mrf.mxu0
      %v2178 = vadd.f32 0.0, %v2177
      %v2179 = vpop.f32.mrf.mxu0
      %v2180 = vadd.f32 0.0, %v2179
      %2181 = vmatmul.bf16.gmra.mxu0 %v2139
      %v2182 = vpop.f32.mrf.mxu0
      %v2183 = vadd.f32 0.0, %v2182
      %v2184 = vpop.f32.mrf.mxu0
      %v2185 = vadd.f32 0.0, %v2184
      %2186 = vmatmul.bf16.gmra.mxu0 %v2142
      %v2187 = vpop.f32.mrf.mxu0
      %v2188 = vadd.f32 0.0, %v2187
      %v2189 = vpop.f32.mrf.mxu0
      %v2190 = vadd.f32 0.0, %v2189
      %2191 = vmatmul.bf16.gmra.mxu0 %v2145
      %v2192 = vpop.f32.mrf.mxu0
      %v2193 = vadd.f32 0.0, %v2192
      %v2194 = vpop.f32.mrf.mxu0
      %v2195 = vadd.f32 0.0, %v2194
      %2196 = vmatmul.bf16.gmra.mxu0 %v2148
      %v2197 = vpop.f32.mrf.mxu0
      %v2198 = vadd.f32 0.0, %v2197
      %v2199 = vpop.f32.mrf.mxu0
      %v2200 = vadd.f32 0.0, %v2199
      %2201 = vmatmul.bf16.gmra.mxu0 %v2151
      %v2202 = vpop.f32.mrf.mxu0
      %v2203 = vadd.f32 0.0, %v2202
      %v2204 = vpop.f32.mrf.mxu0
      %v2205 = vadd.f32 0.0, %v2204
      %2206 = vdwg.mxu0
      %v2225 = vunpack.c.l.b16 %v2015
      %v2226 = vunpack.c.l.b16 %v2016
      %v2227 = vunpack.c.l.b16 %v2017
      %v2228 = vunpack.c.l.b16 %v2018
      %v2229 = vunpack.c.l.b16 %v2019
      %v2230 = vunpack.c.l.b16 %v2020
      %v2231 = vunpack.c.l.b16 %v2021
      %v2232 = vunpack.c.l.b16 %v2022
      %v2233 = vunpack.c.l.b16 %v2023
      %v2234 = vunpack.c.l.b16 %v2024
      %v2235 = vunpack.c.l.b16 %v2025
      %v2236 = vunpack.c.l.b16 %v2026
      %v2237 = vunpack.c.l.b16 %v2027
      %v2238 = vunpack.c.l.b16 %v2028
      %v2239 = vunpack.c.l.b16 %v2029
      %v2240 = vunpack.c.l.b16 %v2030
      %v2241 = vunpack.c.l.b16 %v2031
      %v2242 = vunpack.c.l.b16 %v2032
      %v2243 = vpack.c.b16 %v2226, %v2225
      %v2244 = vpack.c.b16 %v2228, %v2227
      %v2245 = vpack.c.b16 %v2230, %v2229
      %v2246 = vpack.c.b16 %v2232, %v2231
      %v2247 = vpack.c.b16 %v2234, %v2233
      %v2248 = vpack.c.b16 %v2236, %v2235
      %v2249 = vpack.c.b16 %v2238, %v2237
      %v2250 = vpack.c.b16 %v2240, %v2239
      %v2251 = vpack.c.b16 %v2242, %v2241
      %v2258 = vunpack.c.l.b16 %v2033
      %v2259 = vunpack.c.l.b16 %v2034
      %v2260 = vunpack.c.l.b16 %v2035
      %v2261 = vunpack.c.l.b16 %v2036
      %v2262 = vunpack.c.l.b16 %v2037
      %v2263 = vunpack.c.l.b16 %v2038
      %v2264 = vpack.c.b16 %v2259, %v2258
      %v2265 = vpack.c.b16 %v2261, %v2260
      %v2266 = vpack.c.b16 %v2263, %v2262
      %v2271 = vsel %vm392, %v2243, 0
      %v2274 = vsel %vm392, %v2244, 0
      %v2277 = vsel %vm392, %v2245, 0
      %v2280 = vsel %vm392, %v2246, 0
      %v2283 = vsel %vm392, %v2247, 0
      %v2286 = vsel %vm392, %v2248, 0
      %v2289 = vsel %vm392, %v2249, 0
      %v2292 = vsel %vm392, %v2250, 0
      %v2295 = vsel %vm392, %v2251, 0
      %2297 = vmatpush.bf16.msra.mxu0 0
      %2298 = vmatpush.bf16.msra.mxu0 0
      %2299 = vmatpush.bf16.msra.mxu0 0
      %2300 = vmatpush.bf16.msra.mxu0 0
      %2301 = vmatpush.bf16.msra.mxu0 0
      %2302 = vmatpush.bf16.msra.mxu0 %v2266
      %2303 = vmatpush.bf16.msra.mxu0 %v2265
      %2304 = vmatpush.bf16.msra.mxu0 %v2264
      %2305 = vmatmul.bf16.gmra.mxu0 %v2271
      %v2306 = vpop.f32.mrf.mxu0
      %v2307 = vadd.f32 %v2163, %v2306
      %v2308 = vpop.f32.mrf.mxu0
      %v2309 = vadd.f32 %v2165, %v2308
      %2310 = vmatmul.bf16.gmra.mxu0 %v2274
      %v2311 = vpop.f32.mrf.mxu0
      %v2312 = vadd.f32 %v2168, %v2311
      %v2313 = vpop.f32.mrf.mxu0
      %v2314 = vadd.f32 %v2170, %v2313
      %2315 = vmatmul.bf16.gmra.mxu0 %v2277
      %v2316 = vpop.f32.mrf.mxu0
      %v2317 = vadd.f32 %v2173, %v2316
      %v2318 = vpop.f32.mrf.mxu0
      %v2319 = vadd.f32 %v2175, %v2318
      %2320 = vmatmul.bf16.gmra.mxu0 %v2280
      %v2321 = vpop.f32.mrf.mxu0
      %v2322 = vadd.f32 %v2178, %v2321
      %v2323 = vpop.f32.mrf.mxu0
      %v2324 = vadd.f32 %v2180, %v2323
      %2325 = vmatmul.bf16.gmra.mxu0 %v2283
      %v2326 = vpop.f32.mrf.mxu0
      %v2327 = vadd.f32 %v2183, %v2326
      %v2328 = vpop.f32.mrf.mxu0
      %v2329 = vadd.f32 %v2185, %v2328
      %2330 = vmatmul.bf16.gmra.mxu0 %v2286
      %v2331 = vpop.f32.mrf.mxu0
      %v2332 = vadd.f32 %v2188, %v2331
      %v2333 = vpop.f32.mrf.mxu0
      %v2334 = vadd.f32 %v2190, %v2333
      %2335 = vmatmul.bf16.gmra.mxu0 %v2289
      %v2336 = vpop.f32.mrf.mxu0
      %v2337 = vadd.f32 %v2193, %v2336
      %v2338 = vpop.f32.mrf.mxu0
      %v2339 = vadd.f32 %v2195, %v2338
      %2340 = vmatmul.bf16.gmra.mxu0 %v2292
      %v2341 = vpop.f32.mrf.mxu0
      %v2342 = vadd.f32 %v2198, %v2341
      %v2343 = vpop.f32.mrf.mxu0
      %v2344 = vadd.f32 %v2200, %v2343
      %2345 = vmatmul.bf16.gmra.mxu0 %v2295
      %v2346 = vpop.f32.mrf.mxu0
      %v2347 = vadd.f32 %v2203, %v2346
      %v2348 = vpop.f32.mrf.mxu0
      %v2349 = vadd.f32 %v2205, %v2348
      %2350 = vdwg.mxu0
      %v2351 = vld [vmem:[%s273 + $0x4] sm:$0xc]
      %v2352 = vld [vmem:[%s273 + $0x8] sm:$0xf]
      %v2353 = vld [vmem:[%s273 + $0xc] sm:$0xf]
      %v2354 = vld [vmem:[%s273 + $0x10] sm:$0xf]
      %v2355 = vld [vmem:[%s273 + $0x14] sm:$0xf]
      %v2356 = vld [vmem:[%s273 + $0x18] sm:$0xf]
      %v2357 = vld [vmem:[%s273 + $0x1c] sm:$0xf]
      %v2358 = vld [vmem:[%s273 + $0x20] sm:$0xf]
      %v2359 = vld [vmem:[%s273 + $0x24] sm:$0xf]
      %v2360 = vld [vmem:[%s273 + $0x28] sm:$0xf]
      %v2361 = vld [vmem:[%s273 + $0x2c] sm:$0xf]
      %v2362 = vld [vmem:[%s273 + $0x30] sm:$0xf]
      %v2363 = vld [vmem:[%s273 + $0x34] sm:$0xf]
      %v2364 = vld [vmem:[%s273 + $0x38] sm:$0xf]
      %v2365 = vld [vmem:[%s273 + $0x3c] sm:$0xf]
      %v2366 = vld [vmem:[%s273 + $0x40] sm:$0xf]
      %v2367 = vld [vmem:[%s273 + $0x44] sm:$0xf]
      %v2368 = vld [vmem:[%s273 + $0x48] sm:$0xf]
      %v2369 = vld [vmem:[%s273 + $0x4c] sm:$0x3]
      %v2370 = vld [vmem:[%s1 + $0x30] sm:$0xf]
      %v2371 = vld [vmem:[%s1 + $0x34] sm:$0xf]
      %v2372 = vld [vmem:[%s1 + $0x38] sm:$0xf]
      %v2373 = vld [vmem:[%s1 + $0x3c] sm:$0xf]
      %v2374 = vld [vmem:[%s1 + $0x40] sm:$0xf]
      %v2375 = vld [vmem:[%s1 + $0x44] sm:$0xf]
      %v2395 = vunpack.c.l.b16 %v2351
      %v2396 = vunpack.c.l.b16 %v2352
      %v2397 = vunpack.c.l.b16 %v2353
      %v2398 = vunpack.c.l.b16 %v2354
      %v2399 = vunpack.c.l.b16 %v2355
      %v2400 = vunpack.c.l.b16 %v2356
      %v2401 = vunpack.c.l.b16 %v2357
      %v2402 = vunpack.c.l.b16 %v2358
      %v2403 = vunpack.c.l.b16 %v2359
      %v2404 = vunpack.c.l.b16 %v2360
      %v2405 = vunpack.c.l.b16 %v2361
      %v2406 = vunpack.c.l.b16 %v2362
      %v2407 = vunpack.c.l.b16 %v2363
      %v2408 = vunpack.c.l.b16 %v2364
      %v2409 = vunpack.c.l.b16 %v2365
      %v2410 = vunpack.c.l.b16 %v2366
      %v2411 = vunpack.c.l.b16 %v2367
      %v2412 = vunpack.c.l.b16 %v2368
      %v2413 = vunpack.c.l.b16 %v2369
      %v2414 = vpack.c.b16 %v2396, %v2395
      %v2415 = vpack.c.b16 %v2398, %v2397
      %v2416 = vpack.c.b16 %v2400, %v2399
      %v2417 = vpack.c.b16 %v2402, %v2401
      %v2418 = vpack.c.b16 %v2404, %v2403
      %v2419 = vpack.c.b16 %v2406, %v2405
      %v2420 = vpack.c.b16 %v2408, %v2407
      %v2421 = vpack.c.b16 %v2410, %v2409
      %v2422 = vpack.c.b16 %v2412, %v2411
      %v2423 = vpack.c.b16 %v2413, %v2413
      %vm2424 = vcmask 1045504
      %v2425 = vrot.slane %v2414, 2
      %v2426 = vrot.slane %v2415, 2
      %v2427 = vsel %vm2424, %v2425, %v2426
      %v2428 = vrot.slane %v2416, 2
      %v2429 = vsel %vm2424, %v2426, %v2428
      %v2430 = vrot.slane %v2417, 2
      %v2431 = vsel %vm2424, %v2428, %v2430
      %v2432 = vrot.slane %v2418, 2
      %v2433 = vsel %vm2424, %v2430, %v2432
      %v2434 = vrot.slane %v2419, 2
      %v2435 = vsel %vm2424, %v2432, %v2434
      %v2436 = vrot.slane %v2420, 2
      %v2437 = vsel %vm2424, %v2434, %v2436
      %v2438 = vrot.slane %v2421, 2
      %v2439 = vsel %vm2424, %v2436, %v2438
      %v2440 = vrot.slane %v2422, 2
      %v2441 = vsel %vm2424, %v2438, %v2440
      %v2442 = vrot.slane %v2423, 2
      %v2443 = vsel %vm2424, %v2440, %v2442
      %v2450 = vunpack.c.l.b16 %v2370
      %v2451 = vunpack.c.l.b16 %v2371
      %v2452 = vunpack.c.l.b16 %v2372
      %v2453 = vunpack.c.l.b16 %v2373
      %v2454 = vunpack.c.l.b16 %v2374
      %v2455 = vunpack.c.l.b16 %v2375
      %v2456 = vpack.c.b16 %v2451, %v2450
      %v2457 = vpack.c.b16 %v2453, %v2452
      %v2458 = vpack.c.b16 %v2455, %v2454
      %v2463 = vsel %vm392, %v2427, 0
      %v2466 = vsel %vm392, %v2429, 0
      %v2469 = vsel %vm392, %v2431, 0
      %v2472 = vsel %vm392, %v2433, 0
      %v2475 = vsel %vm392, %v2435, 0
      %v2478 = vsel %vm392, %v2437, 0
      %v2481 = vsel %vm392, %v2439, 0
      %v2484 = vsel %vm392, %v2441, 0
      %v2487 = vsel %vm392, %v2443, 0
      %2489 = vmatpush.bf16.msra.mxu0 0
      %2490 = vmatpush.bf16.msra.mxu0 0
      %2491 = vmatpush.bf16.msra.mxu0 0
      %2492 = vmatpush.bf16.msra.mxu0 0
      %2493 = vmatpush.bf16.msra.mxu0 0
      %2494 = vmatpush.bf16.msra.mxu0 %v2458
      %2495 = vmatpush.bf16.msra.mxu0 %v2457
      %2496 = vmatpush.bf16.msra.mxu0 %v2456
      %2497 = vmatmul.bf16.gmra.mxu0 %v2463
      %v2498 = vpop.f32.mrf.mxu0
      %v2499 = vadd.f32 0.0, %v2498
      %v2500 = vpop.f32.mrf.mxu0
      %v2501 = vadd.f32 0.0, %v2500
      %2502 = vmatmul.bf16.gmra.mxu0 %v2466
      %v2503 = vpop.f32.mrf.mxu0
      %v2504 = vadd.f32 0.0, %v2503
      %v2505 = vpop.f32.mrf.mxu0
      %v2506 = vadd.f32 0.0, %v2505
      %2507 = vmatmul.bf16.gmra.mxu0 %v2469
      %v2508 = vpop.f32.mrf.mxu0
      %v2509 = vadd.f32 0.0, %v2508
      %v2510 = vpop.f32.mrf.mxu0
      %v2511 = vadd.f32 0.0, %v2510
      %2512 = vmatmul.bf16.gmra.mxu0 %v2472
      %v2513 = vpop.f32.mrf.mxu0
      %v2514 = vadd.f32 0.0, %v2513
      %v2515 = vpop.f32.mrf.mxu0
      %v2516 = vadd.f32 0.0, %v2515
      %2517 = vmatmul.bf16.gmra.mxu0 %v2475
      %v2518 = vpop.f32.mrf.mxu0
      %v2519 = vadd.f32 0.0, %v2518
      %v2520 = vpop.f32.mrf.mxu0
      %v2521 = vadd.f32 0.0, %v2520
      %2522 = vmatmul.bf16.gmra.mxu0 %v2478
      %v2523 = vpop.f32.mrf.mxu0
      %v2524 = vadd.f32 0.0, %v2523
      %v2525 = vpop.f32.mrf.mxu0
      %v2526 = vadd.f32 0.0, %v2525
      %2527 = vmatmul.bf16.gmra.mxu0 %v2481
      %v2528 = vpop.f32.mrf.mxu0
      %v2529 = vadd.f32 0.0, %v2528
      %v2530 = vpop.f32.mrf.mxu0
      %v2531 = vadd.f32 0.0, %v2530
      %2532 = vmatmul.bf16.gmra.mxu0 %v2484
      %v2533 = vpop.f32.mrf.mxu0
      %v2534 = vadd.f32 0.0, %v2533
      %v2535 = vpop.f32.mrf.mxu0
      %v2536 = vadd.f32 0.0, %v2535
      %2537 = vmatmul.bf16.gmra.mxu0 %v2487
      %v2538 = vpop.f32.mrf.mxu0
      %v2539 = vadd.f32 0.0, %v2538
      %v2540 = vpop.f32.mrf.mxu0
      %v2541 = vadd.f32 0.0, %v2540
      %2542 = vdwg.mxu0
      %v2543 = vadd.f32 %v2307, %v2499
      %v2544 = vadd.f32 %v2309, %v2501
      %v2545 = vadd.f32 %v2312, %v2504
      %v2546 = vadd.f32 %v2314, %v2506
      %v2547 = vadd.f32 %v2317, %v2509
      %v2548 = vadd.f32 %v2319, %v2511
      %v2549 = vadd.f32 %v2322, %v2514
      %v2550 = vadd.f32 %v2324, %v2516
      %v2551 = vadd.f32 %v2327, %v2519
      %v2552 = vadd.f32 %v2329, %v2521
      %v2553 = vadd.f32 %v2332, %v2524
      %v2554 = vadd.f32 %v2334, %v2526
      %v2555 = vadd.f32 %v2337, %v2529
      %v2556 = vadd.f32 %v2339, %v2531
      %v2557 = vadd.f32 %v2342, %v2534
      %v2558 = vadd.f32 %v2344, %v2536
      %v2559 = vadd.f32 %v2347, %v2539
      %v2560 = vadd.f32 %v2349, %v2541
      %v2561 = vld [vmem:[%s304 + $0x4] sm:$0xc]
      %v2562 = vld [vmem:[%s304 + $0x8] sm:$0xf]
      %v2563 = vld [vmem:[%s304 + $0xc] sm:$0xf]
      %v2564 = vld [vmem:[%s304 + $0x10] sm:$0xf]
      %v2565 = vld [vmem:[%s304 + $0x14] sm:$0xf]
      %v2566 = vld [vmem:[%s304 + $0x18] sm:$0xf]
      %v2567 = vld [vmem:[%s304 + $0x1c] sm:$0xf]
      %v2568 = vld [vmem:[%s304 + $0x20] sm:$0xf]
      %v2569 = vld [vmem:[%s304 + $0x24] sm:$0xf]
      %v2570 = vld [vmem:[%s304 + $0x28] sm:$0xf]
      %v2571 = vld [vmem:[%s304 + $0x2c] sm:$0xf]
      %v2572 = vld [vmem:[%s304 + $0x30] sm:$0xf]
      %v2573 = vld [vmem:[%s304 + $0x34] sm:$0xf]
      %v2574 = vld [vmem:[%s304 + $0x38] sm:$0xf]
      %v2575 = vld [vmem:[%s304 + $0x3c] sm:$0xf]
      %v2576 = vld [vmem:[%s304 + $0x40] sm:$0xf]
      %v2577 = vld [vmem:[%s304 + $0x44] sm:$0xf]
      %v2578 = vld [vmem:[%s304 + $0x48] sm:$0xf]
      %v2579 = vld [vmem:[%s304 + $0x4c] sm:$0x3]
      %v2580 = vld [vmem:[%s1 + $0x48] sm:$0xf]
      %v2581 = vld [vmem:[%s1 + $0x4c] sm:$0xf]
      %v2582 = vld [vmem:[%s1 + $0x50] sm:$0xf]
      %v2583 = vld [vmem:[%s1 + $0x54] sm:$0xf]
      %v2584 = vld [vmem:[%s1 + $0x58] sm:$0xf]
      %v2585 = vld [vmem:[%s1 + $0x5c] sm:$0xf]
      %v2605 = vunpack.c.l.b16 %v2561
      %v2606 = vunpack.c.l.b16 %v2562
      %v2607 = vunpack.c.l.b16 %v2563
      %v2608 = vunpack.c.l.b16 %v2564
      %v2609 = vunpack.c.l.b16 %v2565
      %v2610 = vunpack.c.l.b16 %v2566
      %v2611 = vunpack.c.l.b16 %v2567
      %v2612 = vunpack.c.l.b16 %v2568
      %v2613 = vunpack.c.l.b16 %v2569
      %v2614 = vunpack.c.l.b16 %v2570
      %v2615 = vunpack.c.l.b16 %v2571
      %v2616 = vunpack.c.l.b16 %v2572
      %v2617 = vunpack.c.l.b16 %v2573
      %v2618 = vunpack.c.l.b16 %v2574
      %v2619 = vunpack.c.l.b16 %v2575
      %v2620 = vunpack.c.l.b16 %v2576
      %v2621 = vunpack.c.l.b16 %v2577
      %v2622 = vunpack.c.l.b16 %v2578
      %v2623 = vunpack.c.l.b16 %v2579
      %v2624 = vpack.c.b16 %v2606, %v2605
      %v2625 = vpack.c.b16 %v2608, %v2607
      %v2626 = vpack.c.b16 %v2610, %v2609
      %v2627 = vpack.c.b16 %v2612, %v2611
      %v2628 = vpack.c.b16 %v2614, %v2613
      %v2629 = vpack.c.b16 %v2616, %v2615
      %v2630 = vpack.c.b16 %v2618, %v2617
      %v2631 = vpack.c.b16 %v2620, %v2619
      %v2632 = vpack.c.b16 %v2622, %v2621
      %v2633 = vpack.c.b16 %v2623, %v2623
      %v2634 = vrot.slane %v2624, 2
      %v2635 = vrot.slane %v2625, 2
      %v2636 = vsel %vm2424, %v2634, %v2635
      %v2637 = vrot.slane %v2626, 2
      %v2638 = vsel %vm2424, %v2635, %v2637
      %v2639 = vrot.slane %v2627, 2
      %v2640 = vsel %vm2424, %v2637, %v2639
      %v2641 = vrot.slane %v2628, 2
      %v2642 = vsel %vm2424, %v2639, %v2641
      %v2643 = vrot.slane %v2629, 2
      %v2644 = vsel %vm2424, %v2641, %v2643
      %v2645 = vrot.slane %v2630, 2
      %v2646 = vsel %vm2424, %v2643, %v2645
      %v2647 = vrot.slane %v2631, 2
      %v2648 = vsel %vm2424, %v2645, %v2647
      %v2649 = vrot.slane %v2632, 2
      %v2650 = vsel %vm2424, %v2647, %v2649
      %v2651 = vrot.slane %v2633, 2
      %v2652 = vsel %vm2424, %v2649, %v2651
      %v2659 = vunpack.c.l.b16 %v2580
      %v2660 = vunpack.c.l.b16 %v2581
      %v2661 = vunpack.c.l.b16 %v2582
      %v2662 = vunpack.c.l.b16 %v2583
      %v2663 = vunpack.c.l.b16 %v2584
      %v2664 = vunpack.c.l.b16 %v2585
      %v2665 = vpack.c.b16 %v2660, %v2659
      %v2666 = vpack.c.b16 %v2662, %v2661
      %v2667 = vpack.c.b16 %v2664, %v2663
      %v2672 = vsel %vm392, %v2636, 0
      %v2675 = vsel %vm392, %v2638, 0
      %v2678 = vsel %vm392, %v2640, 0
      %v2681 = vsel %vm392, %v2642, 0
      %v2684 = vsel %vm392, %v2644, 0
      %v2687 = vsel %vm392, %v2646, 0
      %v2690 = vsel %vm392, %v2648, 0
      %v2693 = vsel %vm392, %v2650, 0
      %v2696 = vsel %vm392, %v2652, 0
      %2698 = vmatpush.bf16.msra.mxu0 0
      %2699 = vmatpush.bf16.msra.mxu0 0
      %2700 = vmatpush.bf16.msra.mxu0 0
      %2701 = vmatpush.bf16.msra.mxu0 0
      %2702 = vmatpush.bf16.msra.mxu0 0
      %2703 = vmatpush.bf16.msra.mxu0 %v2667
      %2704 = vmatpush.bf16.msra.mxu0 %v2666
      %2705 = vmatpush.bf16.msra.mxu0 %v2665
      %2706 = vmatmul.bf16.gmra.mxu0 %v2672
      %v2707 = vpop.f32.mrf.mxu0
      %v2708 = vadd.f32 0.0, %v2707
      %v2709 = vpop.f32.mrf.mxu0
      %v2710 = vadd.f32 0.0, %v2709
      %2711 = vmatmul.bf16.gmra.mxu0 %v2675
      %v2712 = vpop.f32.mrf.mxu0
      %v2713 = vadd.f32 0.0, %v2712
      %v2714 = vpop.f32.mrf.mxu0
      %v2715 = vadd.f32 0.0, %v2714
      %2716 = vmatmul.bf16.gmra.mxu0 %v2678
      %v2717 = vpop.f32.mrf.mxu0
      %v2718 = vadd.f32 0.0, %v2717
      %v2719 = vpop.f32.mrf.mxu0
      %v2720 = vadd.f32 0.0, %v2719
      %2721 = vmatmul.bf16.gmra.mxu0 %v2681
      %v2722 = vpop.f32.mrf.mxu0
      %v2723 = vadd.f32 0.0, %v2722
      %v2724 = vpop.f32.mrf.mxu0
      %v2725 = vadd.f32 0.0, %v2724
      %2726 = vmatmul.bf16.gmra.mxu0 %v2684
      %v2727 = vpop.f32.mrf.mxu0
      %v2728 = vadd.f32 0.0, %v2727
      %v2729 = vpop.f32.mrf.mxu0
      %v2730 = vadd.f32 0.0, %v2729
      %2731 = vmatmul.bf16.gmra.mxu0 %v2687
      %v2732 = vpop.f32.mrf.mxu0
      %v2733 = vadd.f32 0.0, %v2732
      %v2734 = vpop.f32.mrf.mxu0
      %v2735 = vadd.f32 0.0, %v2734
      %2736 = vmatmul.bf16.gmra.mxu0 %v2690
      %v2737 = vpop.f32.mrf.mxu0
      %v2738 = vadd.f32 0.0, %v2737
      %v2739 = vpop.f32.mrf.mxu0
      %v2740 = vadd.f32 0.0, %v2739
      %2741 = vmatmul.bf16.gmra.mxu0 %v2693
      %v2742 = vpop.f32.mrf.mxu0
      %v2743 = vadd.f32 0.0, %v2742
      %v2744 = vpop.f32.mrf.mxu0
      %v2745 = vadd.f32 0.0, %v2744
      %2746 = vmatmul.bf16.gmra.mxu0 %v2696
      %v2747 = vpop.f32.mrf.mxu0
      %v2748 = vadd.f32 0.0, %v2747
      %v2749 = vpop.f32.mrf.mxu0
      %v2750 = vadd.f32 0.0, %v2749
      %2751 = vdwg.mxu0
      %v2752 = vadd.f32 %v2543, %v2708
      %v2753 = vadd.f32 %v2544, %v2710
      %v2754 = vadd.f32 %v2545, %v2713
      %v2755 = vadd.f32 %v2546, %v2715
      %v2756 = vadd.f32 %v2547, %v2718
      %v2757 = vadd.f32 %v2548, %v2720
      %v2758 = vadd.f32 %v2549, %v2723
      %v2759 = vadd.f32 %v2550, %v2725
      %v2760 = vadd.f32 %v2551, %v2728
      %v2761 = vadd.f32 %v2552, %v2730
      %v2762 = vadd.f32 %v2553, %v2733
      %v2763 = vadd.f32 %v2554, %v2735
      %v2764 = vadd.f32 %v2555, %v2738
      %v2765 = vadd.f32 %v2556, %v2740
      %v2766 = vadd.f32 %v2557, %v2743
      %v2767 = vadd.f32 %v2558, %v2745
      %v2768 = vadd.f32 %v2559, %v2748
      %v2769 = vadd.f32 %v2560, %v2750
      %v2770 = vld [vmem:[%s2] sm:$0x1]
      %v2772 = vperm.slane %v2770, 0
      %v2774 = vadd.f32 %v2752, %v2772
      %v2775 = vadd.f32 %v2753, %v2772
      %v2776 = vadd.f32 %v2754, %v2772
      %v2777 = vadd.f32 %v2755, %v2772
      %v2778 = vadd.f32 %v2756, %v2772
      %v2779 = vadd.f32 %v2757, %v2772
      %v2780 = vadd.f32 %v2758, %v2772
      %v2781 = vadd.f32 %v2759, %v2772
      %v2782 = vadd.f32 %v2760, %v2772
      %v2783 = vadd.f32 %v2761, %v2772
      %v2784 = vadd.f32 %v2762, %v2772
      %v2785 = vadd.f32 %v2763, %v2772
      %v2786 = vadd.f32 %v2764, %v2772
      %v2787 = vadd.f32 %v2765, %v2772
      %v2788 = vadd.f32 %v2766, %v2772
      %v2789 = vadd.f32 %v2767, %v2772
      %v2790 = vadd.f32 %v2768, %v2772
      %v2791 = vadd.f32 %v2769, %v2772
      %v2792 = vmax.f32 %v2774, 0.0
      %v2793 = vmax.f32 %v2775, 0.0
      %v2794 = vmax.f32 %v2776, 0.0
      %v2795 = vmax.f32 %v2777, 0.0
      %v2796 = vmax.f32 %v2778, 0.0
      %v2797 = vmax.f32 %v2779, 0.0
      %v2798 = vmax.f32 %v2780, 0.0
      %v2799 = vmax.f32 %v2781, 0.0
      %v2800 = vmax.f32 %v2782, 0.0
      %v2801 = vmax.f32 %v2783, 0.0
      %v2802 = vmax.f32 %v2784, 0.0
      %v2803 = vmax.f32 %v2785, 0.0
      %v2804 = vmax.f32 %v2786, 0.0
      %v2805 = vmax.f32 %v2787, 0.0
      %v2806 = vmax.f32 %v2788, 0.0
      %v2807 = vmax.f32 %v2789, 0.0
      %v2808 = vmax.f32 %v2790, 0.0
      %v2809 = vmax.f32 %v2791, 0.0
      %v2810 = vpack.c.bf16 %v2792, %v2792
      %v2811 = vpack.c.bf16 %v2793, %v2793
      %v2812 = vpack.c.bf16 %v2794, %v2794
      %v2813 = vpack.c.bf16 %v2795, %v2795
      %v2814 = vpack.c.bf16 %v2796, %v2796
      %v2815 = vpack.c.bf16 %v2797, %v2797
      %v2816 = vpack.c.bf16 %v2798, %v2798
      %v2817 = vpack.c.bf16 %v2799, %v2799
      %v2818 = vpack.c.bf16 %v2800, %v2800
      %v2819 = vpack.c.bf16 %v2801, %v2801
      %v2820 = vpack.c.bf16 %v2802, %v2802
      %v2821 = vpack.c.bf16 %v2803, %v2803
      %v2822 = vpack.c.bf16 %v2804, %v2804
      %v2823 = vpack.c.bf16 %v2805, %v2805
      %v2824 = vpack.c.bf16 %v2806, %v2806
      %v2825 = vpack.c.bf16 %v2807, %v2807
      %v2826 = vpack.c.bf16 %v2808, %v2808
      %v2827 = vpack.c.bf16 %v2809, %v2809
      %s2828 = scalar_lea.vmem [#allocation2], 144
      %2829 = vst.msk [vmem:[%s2828] sm:$0xf] %vm1050, %v2810
      %2830 = vst.msk [vmem:[%s2828 + $0x4] sm:$0xf] %vm1050, %v2811
      %2831 = vst.msk [vmem:[%s2828 + $0x8] sm:$0xf] %vm1050, %v2812
      %2832 = vst.msk [vmem:[%s2828 + $0xc] sm:$0xf] %vm1050, %v2813
      %2833 = vst.msk [vmem:[%s2828 + $0x10] sm:$0xf] %vm1050, %v2814
      %2834 = vst.msk [vmem:[%s2828 + $0x14] sm:$0xf] %vm1050, %v2815
      %2835 = vst.msk [vmem:[%s2828 + $0x18] sm:$0xf] %vm1050, %v2816
      %2836 = vst.msk [vmem:[%s2828 + $0x1c] sm:$0xf] %vm1050, %v2817
      %2837 = vst.msk [vmem:[%s2828 + $0x20] sm:$0xf] %vm1050, %v2818
      %2838 = vst.msk [vmem:[%s2828 + $0x24] sm:$0xf] %vm1050, %v2819
      %2839 = vst.msk [vmem:[%s2828 + $0x28] sm:$0xf] %vm1050, %v2820
      %2840 = vst.msk [vmem:[%s2828 + $0x2c] sm:$0xf] %vm1050, %v2821
      %2841 = vst.msk [vmem:[%s2828 + $0x30] sm:$0xf] %vm1050, %v2822
      %2842 = vst.msk [vmem:[%s2828 + $0x34] sm:$0xf] %vm1050, %v2823
      %2843 = vst.msk [vmem:[%s2828 + $0x38] sm:$0xf] %vm1050, %v2824
      %2844 = vst.msk [vmem:[%s2828 + $0x3c] sm:$0xf] %vm1050, %v2825
      %2845 = vst.msk [vmem:[%s2828 + $0x40] sm:$0xf] %vm1050, %v2826
      %2846 = vst.msk [vmem:[%s2828 + $0x44] sm:$0xf] %vm1050, %v2827
      %v2847 = vld [vmem:[%s805] sm:$0xf]
      %v2848 = vld [vmem:[%s805 + $0x4] sm:$0xf]
      %v2849 = vld [vmem:[%s805 + $0x8] sm:$0xf]
      %v2850 = vld [vmem:[%s805 + $0xc] sm:$0xf]
      %v2851 = vld [vmem:[%s805 + $0x10] sm:$0xf]
      %v2852 = vld [vmem:[%s805 + $0x14] sm:$0xf]
      %v2853 = vld [vmem:[%s805 + $0x18] sm:$0xf]
      %v2854 = vld [vmem:[%s805 + $0x1c] sm:$0xf]
      %v2855 = vld [vmem:[%s805 + $0x20] sm:$0xf]
      %v2856 = vld [vmem:[%s805 + $0x24] sm:$0xf]
      %v2857 = vld [vmem:[%s805 + $0x28] sm:$0xf]
      %v2858 = vld [vmem:[%s805 + $0x2c] sm:$0xf]
      %v2859 = vld [vmem:[%s805 + $0x30] sm:$0xf]
      %v2860 = vld [vmem:[%s805 + $0x34] sm:$0xf]
      %v2861 = vld [vmem:[%s805 + $0x38] sm:$0xf]
      %v2862 = vld [vmem:[%s805 + $0x3c] sm:$0xf]
      %v2863 = vld [vmem:[%s805 + $0x40] sm:$0xf]
      %v2864 = vld [vmem:[%s805 + $0x44] sm:$0xf]
      %v2865 = vld [vmem:[%s1] sm:$0xf]
      %v2866 = vld [vmem:[%s1 + $0x4] sm:$0xf]
      %v2867 = vld [vmem:[%s1 + $0x8] sm:$0xf]
      %v2868 = vld [vmem:[%s1 + $0xc] sm:$0xf]
      %v2869 = vld [vmem:[%s1 + $0x10] sm:$0xf]
      %v2870 = vld [vmem:[%s1 + $0x14] sm:$0xf]
      %v2871 = vld [vmem:[%s618] sm:$0xf]
      %v2872 = vld [vmem:[%s618 + $0x4] sm:$0xf]
      %v2873 = vld [vmem:[%s618 + $0x8] sm:$0xf]
      %v2874 = vld [vmem:[%s618 + $0xc] sm:$0xf]
      %v2875 = vld [vmem:[%s618 + $0x10] sm:$0xf]
      %v2876 = vld [vmem:[%s618 + $0x14] sm:$0xf]
      %v2877 = vld [vmem:[%s618 + $0x18] sm:$0xf]
      %v2878 = vld [vmem:[%s618 + $0x1c] sm:$0xf]
      %v2879 = vld [vmem:[%s618 + $0x20] sm:$0xf]
      %v2880 = vld [vmem:[%s618 + $0x24] sm:$0xf]
      %v2881 = vld [vmem:[%s618 + $0x28] sm:$0xf]
      %v2882 = vld [vmem:[%s618 + $0x2c] sm:$0xf]
      %v2883 = vld [vmem:[%s618 + $0x30] sm:$0xf]
      %v2884 = vld [vmem:[%s618 + $0x34] sm:$0xf]
      %v2885 = vld [vmem:[%s618 + $0x38] sm:$0xf]
      %v2886 = vld [vmem:[%s618 + $0x3c] sm:$0xf]
      %v2887 = vld [vmem:[%s618 + $0x40] sm:$0xf]
      %v2888 = vld [vmem:[%s618 + $0x44] sm:$0xf]
      %v2889 = vld [vmem:[%s618 + $0x48] sm:$0x1]
      %v2890 = vld [vmem:[%s1 + $0x18] sm:$0xf]
      %v2891 = vld [vmem:[%s1 + $0x1c] sm:$0xf]
      %v2892 = vld [vmem:[%s1 + $0x20] sm:$0xf]
      %v2893 = vld [vmem:[%s1 + $0x24] sm:$0xf]
      %v2894 = vld [vmem:[%s1 + $0x28] sm:$0xf]
      %v2895 = vld [vmem:[%s1 + $0x2c] sm:$0xf]
      %v2915 = vunpack.c.l.b16 %v2871
      %v2916 = vunpack.c.l.b16 %v2872
      %v2917 = vunpack.c.l.b16 %v2873
      %v2918 = vunpack.c.l.b16 %v2874
      %v2919 = vunpack.c.l.b16 %v2875
      %v2920 = vunpack.c.l.b16 %v2876
      %v2921 = vunpack.c.l.b16 %v2877
      %v2922 = vunpack.c.l.b16 %v2878
      %v2923 = vunpack.c.l.b16 %v2879
      %v2924 = vunpack.c.l.b16 %v2880
      %v2925 = vunpack.c.l.b16 %v2881
      %v2926 = vunpack.c.l.b16 %v2882
      %v2927 = vunpack.c.l.b16 %v2883
      %v2928 = vunpack.c.l.b16 %v2884
      %v2929 = vunpack.c.l.b16 %v2885
      %v2930 = vunpack.c.l.b16 %v2886
      %v2931 = vunpack.c.l.b16 %v2887
      %v2932 = vunpack.c.l.b16 %v2888
      %v2933 = vunpack.c.l.b16 %v2889
      %v2934 = vpack.c.b16 %v2916, %v2915
      %v2935 = vpack.c.b16 %v2918, %v2917
      %v2936 = vpack.c.b16 %v2920, %v2919
      %v2937 = vpack.c.b16 %v2922, %v2921
      %v2938 = vpack.c.b16 %v2924, %v2923
      %v2939 = vpack.c.b16 %v2926, %v2925
      %v2940 = vpack.c.b16 %v2928, %v2927
      %v2941 = vpack.c.b16 %v2930, %v2929
      %v2942 = vpack.c.b16 %v2932, %v2931
      %v2943 = vpack.c.b16 %v2933, %v2933
      %v2945 = vshrl.u32 %v2934, 16
      %v2947 = vshll.u32 %v2934, 16
      %v2949 = vrot.slane %v2947, 1
      %v2950 = vor.u32 %v2945, %v2949
      %v2952 = vshll.u32 %v2935, 16
      %v2954 = vrot.slane %v2952, 1
      %v2955 = vsel %vm1166, %v2950, %v2954
      %v2956 = vshrl.u32 %v2935, 16
      %v2958 = vor.u32 %v2956, %v2954
      %v2960 = vshll.u32 %v2936, 16
      %v2962 = vrot.slane %v2960, 1
      %v2963 = vsel %vm1166, %v2958, %v2962
      %v2964 = vshrl.u32 %v2936, 16
      %v2966 = vor.u32 %v2964, %v2962
      %v2968 = vshll.u32 %v2937, 16
      %v2970 = vrot.slane %v2968, 1
      %v2971 = vsel %vm1166, %v2966, %v2970
      %v2972 = vshrl.u32 %v2937, 16
      %v2974 = vor.u32 %v2972, %v2970
      %v2976 = vshll.u32 %v2938, 16
      %v2978 = vrot.slane %v2976, 1
      %v2979 = vsel %vm1166, %v2974, %v2978
      %v2980 = vshrl.u32 %v2938, 16
      %v2982 = vor.u32 %v2980, %v2978
      %v2984 = vshll.u32 %v2939, 16
      %v2986 = vrot.slane %v2984, 1
      %v2987 = vsel %vm1166, %v2982, %v2986
      %v2988 = vshrl.u32 %v2939, 16
      %v2990 = vor.u32 %v2988, %v2986
      %v2992 = vshll.u32 %v2940, 16
      %v2994 = vrot.slane %v2992, 1
      %v2995 = vsel %vm1166, %v2990, %v2994
      %v2996 = vshrl.u32 %v2940, 16
      %v2998 = vor.u32 %v2996, %v2994
      %v3000 = vshll.u32 %v2941, 16
      %v3002 = vrot.slane %v3000, 1
      %v3003 = vsel %vm1166, %v2998, %v3002
      %v3004 = vshrl.u32 %v2941, 16
      %v3006 = vor.u32 %v3004, %v3002
      %v3008 = vshll.u32 %v2942, 16
      %v3010 = vrot.slane %v3008, 1
      %v3011 = vsel %vm1166, %v3006, %v3010
      %v3012 = vshrl.u32 %v2942, 16
      %v3014 = vor.u32 %v3012, %v3010
      %v3016 = vshll.u32 %v2943, 16
      %v3018 = vrot.slane %v3016, 1
      %v3019 = vsel %vm1166, %v3014, %v3018
      %v3026 = vunpack.c.l.b16 %v2890
      %v3027 = vunpack.c.l.b16 %v2891
      %v3028 = vunpack.c.l.b16 %v2892
      %v3029 = vunpack.c.l.b16 %v2893
      %v3030 = vunpack.c.l.b16 %v2894
      %v3031 = vunpack.c.l.b16 %v2895
      %v3032 = vpack.c.b16 %v3027, %v3026
      %v3033 = vpack.c.b16 %v3029, %v3028
      %v3034 = vpack.c.b16 %v3031, %v3030
      %v3039 = vsel %vm392, %v2955, 0
      %v3042 = vsel %vm392, %v2963, 0
      %v3045 = vsel %vm392, %v2971, 0
      %v3048 = vsel %vm392, %v2979, 0
      %v3051 = vsel %vm392, %v2987, 0
      %v3054 = vsel %vm392, %v2995, 0
      %v3057 = vsel %vm392, %v3003, 0
      %v3060 = vsel %vm392, %v3011, 0
      %v3063 = vsel %vm392, %v3019, 0
      %3065 = vmatpush.bf16.msra.mxu0 0
      %3066 = vmatpush.bf16.msra.mxu0 0
      %3067 = vmatpush.bf16.msra.mxu0 0
      %3068 = vmatpush.bf16.msra.mxu0 0
      %3069 = vmatpush.bf16.msra.mxu0 0
      %3070 = vmatpush.bf16.msra.mxu0 %v3034
      %3071 = vmatpush.bf16.msra.mxu0 %v3033
      %3072 = vmatpush.bf16.msra.mxu0 %v3032
      %3073 = vmatmul.bf16.gmra.mxu0 %v3039
      %v3074 = vpop.f32.mrf.mxu0
      %v3075 = vadd.f32 0.0, %v3074
      %v3076 = vpop.f32.mrf.mxu0
      %v3077 = vadd.f32 0.0, %v3076
      %3078 = vmatmul.bf16.gmra.mxu0 %v3042
      %v3079 = vpop.f32.mrf.mxu0
      %v3080 = vadd.f32 0.0, %v3079
      %v3081 = vpop.f32.mrf.mxu0
      %v3082 = vadd.f32 0.0, %v3081
      %3083 = vmatmul.bf16.gmra.mxu0 %v3045
      %v3084 = vpop.f32.mrf.mxu0
      %v3085 = vadd.f32 0.0, %v3084
      %v3086 = vpop.f32.mrf.mxu0
      %v3087 = vadd.f32 0.0, %v3086
      %3088 = vmatmul.bf16.gmra.mxu0 %v3048
      %v3089 = vpop.f32.mrf.mxu0
      %v3090 = vadd.f32 0.0, %v3089
      %v3091 = vpop.f32.mrf.mxu0
      %v3092 = vadd.f32 0.0, %v3091
      %3093 = vmatmul.bf16.gmra.mxu0 %v3051
      %v3094 = vpop.f32.mrf.mxu0
      %v3095 = vadd.f32 0.0, %v3094
      %v3096 = vpop.f32.mrf.mxu0
      %v3097 = vadd.f32 0.0, %v3096
      %3098 = vmatmul.bf16.gmra.mxu0 %v3054
      %v3099 = vpop.f32.mrf.mxu0
      %v3100 = vadd.f32 0.0, %v3099
      %v3101 = vpop.f32.mrf.mxu0
      %v3102 = vadd.f32 0.0, %v3101
      %3103 = vmatmul.bf16.gmra.mxu0 %v3057
      %v3104 = vpop.f32.mrf.mxu0
      %v3105 = vadd.f32 0.0, %v3104
      %v3106 = vpop.f32.mrf.mxu0
      %v3107 = vadd.f32 0.0, %v3106
      %3108 = vmatmul.bf16.gmra.mxu0 %v3060
      %v3109 = vpop.f32.mrf.mxu0
      %v3110 = vadd.f32 0.0, %v3109
      %v3111 = vpop.f32.mrf.mxu0
      %v3112 = vadd.f32 0.0, %v3111
      %3113 = vmatmul.bf16.gmra.mxu0 %v3063
      %v3114 = vpop.f32.mrf.mxu0
      %v3115 = vadd.f32 0.0, %v3114
      %v3116 = vpop.f32.mrf.mxu0
      %v3117 = vadd.f32 0.0, %v3116
      %3118 = vdwg.mxu0
      %v3137 = vunpack.c.l.b16 %v2847
      %v3138 = vunpack.c.l.b16 %v2848
      %v3139 = vunpack.c.l.b16 %v2849
      %v3140 = vunpack.c.l.b16 %v2850
      %v3141 = vunpack.c.l.b16 %v2851
      %v3142 = vunpack.c.l.b16 %v2852
      %v3143 = vunpack.c.l.b16 %v2853
      %v3144 = vunpack.c.l.b16 %v2854
      %v3145 = vunpack.c.l.b16 %v2855
      %v3146 = vunpack.c.l.b16 %v2856
      %v3147 = vunpack.c.l.b16 %v2857
      %v3148 = vunpack.c.l.b16 %v2858
      %v3149 = vunpack.c.l.b16 %v2859
      %v3150 = vunpack.c.l.b16 %v2860
      %v3151 = vunpack.c.l.b16 %v2861
      %v3152 = vunpack.c.l.b16 %v2862
      %v3153 = vunpack.c.l.b16 %v2863
      %v3154 = vunpack.c.l.b16 %v2864
      %v3155 = vpack.c.b16 %v3138, %v3137
      %v3156 = vpack.c.b16 %v3140, %v3139
      %v3157 = vpack.c.b16 %v3142, %v3141
      %v3158 = vpack.c.b16 %v3144, %v3143
      %v3159 = vpack.c.b16 %v3146, %v3145
      %v3160 = vpack.c.b16 %v3148, %v3147
      %v3161 = vpack.c.b16 %v3150, %v3149
      %v3162 = vpack.c.b16 %v3152, %v3151
      %v3163 = vpack.c.b16 %v3154, %v3153
      %v3170 = vunpack.c.l.b16 %v2865
      %v3171 = vunpack.c.l.b16 %v2866
      %v3172 = vunpack.c.l.b16 %v2867
      %v3173 = vunpack.c.l.b16 %v2868
      %v3174 = vunpack.c.l.b16 %v2869
      %v3175 = vunpack.c.l.b16 %v2870
      %v3176 = vpack.c.b16 %v3171, %v3170
      %v3177 = vpack.c.b16 %v3173, %v3172
      %v3178 = vpack.c.b16 %v3175, %v3174
      %v3183 = vsel %vm392, %v3155, 0
      %v3186 = vsel %vm392, %v3156, 0
      %v3189 = vsel %vm392, %v3157, 0
      %v3192 = vsel %vm392, %v3158, 0
      %v3195 = vsel %vm392, %v3159, 0
      %v3198 = vsel %vm392, %v3160, 0
      %v3201 = vsel %vm392, %v3161, 0
      %v3204 = vsel %vm392, %v3162, 0
      %v3207 = vsel %vm392, %v3163, 0
      %3209 = vmatpush.bf16.msra.mxu0 0
      %3210 = vmatpush.bf16.msra.mxu0 0
      %3211 = vmatpush.bf16.msra.mxu0 0
      %3212 = vmatpush.bf16.msra.mxu0 0
      %3213 = vmatpush.bf16.msra.mxu0 0
      %3214 = vmatpush.bf16.msra.mxu0 %v3178
      %3215 = vmatpush.bf16.msra.mxu0 %v3177
      %3216 = vmatpush.bf16.msra.mxu0 %v3176
      %3217 = vmatmul.bf16.gmra.mxu0 %v3183
      %v3218 = vpop.f32.mrf.mxu0
      %v3219 = vadd.f32 %v3075, %v3218
      %v3220 = vpop.f32.mrf.mxu0
      %v3221 = vadd.f32 %v3077, %v3220
      %3222 = vmatmul.bf16.gmra.mxu0 %v3186
      %v3223 = vpop.f32.mrf.mxu0
      %v3224 = vadd.f32 %v3080, %v3223
      %v3225 = vpop.f32.mrf.mxu0
      %v3226 = vadd.f32 %v3082, %v3225
      %3227 = vmatmul.bf16.gmra.mxu0 %v3189
      %v3228 = vpop.f32.mrf.mxu0
      %v3229 = vadd.f32 %v3085, %v3228
      %v3230 = vpop.f32.mrf.mxu0
      %v3231 = vadd.f32 %v3087, %v3230
      %3232 = vmatmul.bf16.gmra.mxu0 %v3192
      %v3233 = vpop.f32.mrf.mxu0
      %v3234 = vadd.f32 %v3090, %v3233
      %v3235 = vpop.f32.mrf.mxu0
      %v3236 = vadd.f32 %v3092, %v3235
      %3237 = vmatmul.bf16.gmra.mxu0 %v3195
      %v3238 = vpop.f32.mrf.mxu0
      %v3239 = vadd.f32 %v3095, %v3238
      %v3240 = vpop.f32.mrf.mxu0
      %v3241 = vadd.f32 %v3097, %v3240
      %3242 = vmatmul.bf16.gmra.mxu0 %v3198
      %v3243 = vpop.f32.mrf.mxu0
      %v3244 = vadd.f32 %v3100, %v3243
      %v3245 = vpop.f32.mrf.mxu0
      %v3246 = vadd.f32 %v3102, %v3245
      %3247 = vmatmul.bf16.gmra.mxu0 %v3201
      %v3248 = vpop.f32.mrf.mxu0
      %v3249 = vadd.f32 %v3105, %v3248
      %v3250 = vpop.f32.mrf.mxu0
      %v3251 = vadd.f32 %v3107, %v3250
      %3252 = vmatmul.bf16.gmra.mxu0 %v3204
      %v3253 = vpop.f32.mrf.mxu0
      %v3254 = vadd.f32 %v3110, %v3253
      %v3255 = vpop.f32.mrf.mxu0
      %v3256 = vadd.f32 %v3112, %v3255
      %3257 = vmatmul.bf16.gmra.mxu0 %v3207
      %v3258 = vpop.f32.mrf.mxu0
      %v3259 = vadd.f32 %v3115, %v3258
      %v3260 = vpop.f32.mrf.mxu0
      %v3261 = vadd.f32 %v3117, %v3260
      %3262 = vdwg.mxu0
      %v3263 = vld [vmem:[%s304 + $0x4] sm:$0xc]
      %v3264 = vld [vmem:[%s304 + $0x8] sm:$0xf]
      %v3265 = vld [vmem:[%s304 + $0xc] sm:$0xf]
      %v3266 = vld [vmem:[%s304 + $0x10] sm:$0xf]
      %v3267 = vld [vmem:[%s304 + $0x14] sm:$0xf]
      %v3268 = vld [vmem:[%s304 + $0x18] sm:$0xf]
      %v3269 = vld [vmem:[%s304 + $0x1c] sm:$0xf]
      %v3270 = vld [vmem:[%s304 + $0x20] sm:$0xf]
      %v3271 = vld [vmem:[%s304 + $0x24] sm:$0xf]
      %v3272 = vld [vmem:[%s304 + $0x28] sm:$0xf]
      %v3273 = vld [vmem:[%s304 + $0x2c] sm:$0xf]
      %v3274 = vld [vmem:[%s304 + $0x30] sm:$0xf]
      %v3275 = vld [vmem:[%s304 + $0x34] sm:$0xf]
      %v3276 = vld [vmem:[%s304 + $0x38] sm:$0xf]
      %v3277 = vld [vmem:[%s304 + $0x3c] sm:$0xf]
      %v3278 = vld [vmem:[%s304 + $0x40] sm:$0xf]
      %v3279 = vld [vmem:[%s304 + $0x44] sm:$0xf]
      %v3280 = vld [vmem:[%s304 + $0x48] sm:$0xf]
      %v3281 = vld [vmem:[%s304 + $0x4c] sm:$0x3]
      %v3282 = vld [vmem:[%s1 + $0x30] sm:$0xf]
      %v3283 = vld [vmem:[%s1 + $0x34] sm:$0xf]
      %v3284 = vld [vmem:[%s1 + $0x38] sm:$0xf]
      %v3285 = vld [vmem:[%s1 + $0x3c] sm:$0xf]
      %v3286 = vld [vmem:[%s1 + $0x40] sm:$0xf]
      %v3287 = vld [vmem:[%s1 + $0x44] sm:$0xf]
      %v3307 = vunpack.c.l.b16 %v3263
      %v3308 = vunpack.c.l.b16 %v3264
      %v3309 = vunpack.c.l.b16 %v3265
      %v3310 = vunpack.c.l.b16 %v3266
      %v3311 = vunpack.c.l.b16 %v3267
      %v3312 = vunpack.c.l.b16 %v3268
      %v3313 = vunpack.c.l.b16 %v3269
      %v3314 = vunpack.c.l.b16 %v3270
      %v3315 = vunpack.c.l.b16 %v3271
      %v3316 = vunpack.c.l.b16 %v3272
      %v3317 = vunpack.c.l.b16 %v3273
      %v3318 = vunpack.c.l.b16 %v3274
      %v3319 = vunpack.c.l.b16 %v3275
      %v3320 = vunpack.c.l.b16 %v3276
      %v3321 = vunpack.c.l.b16 %v3277
      %v3322 = vunpack.c.l.b16 %v3278
      %v3323 = vunpack.c.l.b16 %v3279
      %v3324 = vunpack.c.l.b16 %v3280
      %v3325 = vunpack.c.l.b16 %v3281
      %v3326 = vpack.c.b16 %v3308, %v3307
      %v3327 = vpack.c.b16 %v3310, %v3309
      %v3328 = vpack.c.b16 %v3312, %v3311
      %v3329 = vpack.c.b16 %v3314, %v3313
      %v3330 = vpack.c.b16 %v3316, %v3315
      %v3331 = vpack.c.b16 %v3318, %v3317
      %v3332 = vpack.c.b16 %v3320, %v3319
      %v3333 = vpack.c.b16 %v3322, %v3321
      %v3334 = vpack.c.b16 %v3324, %v3323
      %v3335 = vpack.c.b16 %v3325, %v3325
      %v3336 = vrot.slane %v3326, 2
      %v3337 = vrot.slane %v3327, 2
      %v3338 = vsel %vm2424, %v3336, %v3337
      %v3339 = vrot.slane %v3328, 2
      %v3340 = vsel %vm2424, %v3337, %v3339
      %v3341 = vrot.slane %v3329, 2
      %v3342 = vsel %vm2424, %v3339, %v3341
      %v3343 = vrot.slane %v3330, 2
      %v3344 = vsel %vm2424, %v3341, %v3343
      %v3345 = vrot.slane %v3331, 2
      %v3346 = vsel %vm2424, %v3343, %v3345
      %v3347 = vrot.slane %v3332, 2
      %v3348 = vsel %vm2424, %v3345, %v3347
      %v3349 = vrot.slane %v3333, 2
      %v3350 = vsel %vm2424, %v3347, %v3349
      %v3351 = vrot.slane %v3334, 2
      %v3352 = vsel %vm2424, %v3349, %v3351
      %v3353 = vrot.slane %v3335, 2
      %v3354 = vsel %vm2424, %v3351, %v3353
      %v3361 = vunpack.c.l.b16 %v3282
      %v3362 = vunpack.c.l.b16 %v3283
      %v3363 = vunpack.c.l.b16 %v3284
      %v3364 = vunpack.c.l.b16 %v3285
      %v3365 = vunpack.c.l.b16 %v3286
      %v3366 = vunpack.c.l.b16 %v3287
      %v3367 = vpack.c.b16 %v3362, %v3361
      %v3368 = vpack.c.b16 %v3364, %v3363
      %v3369 = vpack.c.b16 %v3366, %v3365
      %v3374 = vsel %vm392, %v3338, 0
      %v3377 = vsel %vm392, %v3340, 0
      %v3380 = vsel %vm392, %v3342, 0
      %v3383 = vsel %vm392, %v3344, 0
      %v3386 = vsel %vm392, %v3346, 0
      %v3389 = vsel %vm392, %v3348, 0
      %v3392 = vsel %vm392, %v3350, 0
      %v3395 = vsel %vm392, %v3352, 0
      %v3398 = vsel %vm392, %v3354, 0
      %3400 = vmatpush.bf16.msra.mxu0 0
      %3401 = vmatpush.bf16.msra.mxu0 0
      %3402 = vmatpush.bf16.msra.mxu0 0
      %3403 = vmatpush.bf16.msra.mxu0 0
      %3404 = vmatpush.bf16.msra.mxu0 0
      %3405 = vmatpush.bf16.msra.mxu0 %v3369
      %3406 = vmatpush.bf16.msra.mxu0 %v3368
      %3407 = vmatpush.bf16.msra.mxu0 %v3367
      %3408 = vmatmul.bf16.gmra.mxu0 %v3374
      %v3409 = vpop.f32.mrf.mxu0
      %v3410 = vadd.f32 0.0, %v3409
      %v3411 = vpop.f32.mrf.mxu0
      %v3412 = vadd.f32 0.0, %v3411
      %3413 = vmatmul.bf16.gmra.mxu0 %v3377
      %v3414 = vpop.f32.mrf.mxu0
      %v3415 = vadd.f32 0.0, %v3414
      %v3416 = vpop.f32.mrf.mxu0
      %v3417 = vadd.f32 0.0, %v3416
      %3418 = vmatmul.bf16.gmra.mxu0 %v3380
      %v3419 = vpop.f32.mrf.mxu0
      %v3420 = vadd.f32 0.0, %v3419
      %v3421 = vpop.f32.mrf.mxu0
      %v3422 = vadd.f32 0.0, %v3421
      %3423 = vmatmul.bf16.gmra.mxu0 %v3383
      %v3424 = vpop.f32.mrf.mxu0
      %v3425 = vadd.f32 0.0, %v3424
      %v3426 = vpop.f32.mrf.mxu0
      %v3427 = vadd.f32 0.0, %v3426
      %3428 = vmatmul.bf16.gmra.mxu0 %v3386
      %v3429 = vpop.f32.mrf.mxu0
      %v3430 = vadd.f32 0.0, %v3429
      %v3431 = vpop.f32.mrf.mxu0
      %v3432 = vadd.f32 0.0, %v3431
      %3433 = vmatmul.bf16.gmra.mxu0 %v3389
      %v3434 = vpop.f32.mrf.mxu0
      %v3435 = vadd.f32 0.0, %v3434
      %v3436 = vpop.f32.mrf.mxu0
      %v3437 = vadd.f32 0.0, %v3436
      %3438 = vmatmul.bf16.gmra.mxu0 %v3392
      %v3439 = vpop.f32.mrf.mxu0
      %v3440 = vadd.f32 0.0, %v3439
      %v3441 = vpop.f32.mrf.mxu0
      %v3442 = vadd.f32 0.0, %v3441
      %3443 = vmatmul.bf16.gmra.mxu0 %v3395
      %v3444 = vpop.f32.mrf.mxu0
      %v3445 = vadd.f32 0.0, %v3444
      %v3446 = vpop.f32.mrf.mxu0
      %v3447 = vadd.f32 0.0, %v3446
      %3448 = vmatmul.bf16.gmra.mxu0 %v3398
      %v3449 = vpop.f32.mrf.mxu0
      %v3450 = vadd.f32 0.0, %v3449
      %v3451 = vpop.f32.mrf.mxu0
      %v3452 = vadd.f32 0.0, %v3451
      %3453 = vdwg.mxu0
      %v3454 = vadd.f32 %v3219, %v3410
      %v3455 = vadd.f32 %v3221, %v3412
      %v3456 = vadd.f32 %v3224, %v3415
      %v3457 = vadd.f32 %v3226, %v3417
      %v3458 = vadd.f32 %v3229, %v3420
      %v3459 = vadd.f32 %v3231, %v3422
      %v3460 = vadd.f32 %v3234, %v3425
      %v3461 = vadd.f32 %v3236, %v3427
      %v3462 = vadd.f32 %v3239, %v3430
      %v3463 = vadd.f32 %v3241, %v3432
      %v3464 = vadd.f32 %v3244, %v3435
      %v3465 = vadd.f32 %v3246, %v3437
      %v3466 = vadd.f32 %v3249, %v3440
      %v3467 = vadd.f32 %v3251, %v3442
      %v3468 = vadd.f32 %v3254, %v3445
      %v3469 = vadd.f32 %v3256, %v3447
      %v3470 = vadd.f32 %v3259, %v3450
      %v3471 = vadd.f32 %v3261, %v3452
      %v3472 = vld [vmem:[%s273 + $0x4] sm:$0xc]
      %v3473 = vld [vmem:[%s273 + $0x8] sm:$0xf]
      %v3474 = vld [vmem:[%s273 + $0xc] sm:$0xf]
      %v3475 = vld [vmem:[%s273 + $0x10] sm:$0xf]
      %v3476 = vld [vmem:[%s273 + $0x14] sm:$0xf]
      %v3477 = vld [vmem:[%s273 + $0x18] sm:$0xf]
      %v3478 = vld [vmem:[%s273 + $0x1c] sm:$0xf]
      %v3479 = vld [vmem:[%s273 + $0x20] sm:$0xf]
      %v3480 = vld [vmem:[%s273 + $0x24] sm:$0xf]
      %v3481 = vld [vmem:[%s273 + $0x28] sm:$0xf]
      %v3482 = vld [vmem:[%s273 + $0x2c] sm:$0xf]
      %v3483 = vld [vmem:[%s273 + $0x30] sm:$0xf]
      %v3484 = vld [vmem:[%s273 + $0x34] sm:$0xf]
      %v3485 = vld [vmem:[%s273 + $0x38] sm:$0xf]
      %v3486 = vld [vmem:[%s273 + $0x3c] sm:$0xf]
      %v3487 = vld [vmem:[%s273 + $0x40] sm:$0xf]
      %v3488 = vld [vmem:[%s273 + $0x44] sm:$0xf]
      %v3489 = vld [vmem:[%s273 + $0x48] sm:$0xf]
      %v3490 = vld [vmem:[%s273 + $0x4c] sm:$0x7]
      %v3491 = vld [vmem:[%s1 + $0x48] sm:$0xf]
      %v3492 = vld [vmem:[%s1 + $0x4c] sm:$0xf]
      %v3493 = vld [vmem:[%s1 + $0x50] sm:$0xf]
      %v3494 = vld [vmem:[%s1 + $0x54] sm:$0xf]
      %v3495 = vld [vmem:[%s1 + $0x58] sm:$0xf]
      %v3496 = vld [vmem:[%s1 + $0x5c] sm:$0xf]
      %v3516 = vunpack.c.l.b16 %v3472
      %v3517 = vunpack.c.l.b16 %v3473
      %v3518 = vunpack.c.l.b16 %v3474
      %v3519 = vunpack.c.l.b16 %v3475
      %v3520 = vunpack.c.l.b16 %v3476
      %v3521 = vunpack.c.l.b16 %v3477
      %v3522 = vunpack.c.l.b16 %v3478
      %v3523 = vunpack.c.l.b16 %v3479
      %v3524 = vunpack.c.l.b16 %v3480
      %v3525 = vunpack.c.l.b16 %v3481
      %v3526 = vunpack.c.l.b16 %v3482
      %v3527 = vunpack.c.l.b16 %v3483
      %v3528 = vunpack.c.l.b16 %v3484
      %v3529 = vunpack.c.l.b16 %v3485
      %v3530 = vunpack.c.l.b16 %v3486
      %v3531 = vunpack.c.l.b16 %v3487
      %v3532 = vunpack.c.l.b16 %v3488
      %v3533 = vunpack.c.l.b16 %v3489
      %v3534 = vunpack.c.l.b16 %v3490
      %v3535 = vpack.c.b16 %v3517, %v3516
      %v3536 = vpack.c.b16 %v3519, %v3518
      %v3537 = vpack.c.b16 %v3521, %v3520
      %v3538 = vpack.c.b16 %v3523, %v3522
      %v3539 = vpack.c.b16 %v3525, %v3524
      %v3540 = vpack.c.b16 %v3527, %v3526
      %v3541 = vpack.c.b16 %v3529, %v3528
      %v3542 = vpack.c.b16 %v3531, %v3530
      %v3543 = vpack.c.b16 %v3533, %v3532
      %v3544 = vpack.c.b16 %v3534, %v3534
      %vm3545 = vsmask.f32 5376
      %v3547 = vshrl.u32 %v3535, 16
      %v3549 = vrot.slane %v3547, 2
      %v3550 = vshll.u32 %v3535, 16
      %v3552 = vrot.slane %v3550, 3
      %v3553 = vor.u32 %v3549, %v3552
      %v3555 = vshrl.u32 %v3536, 16
      %v3557 = vrot.slane %v3555, 2
      %v3558 = vshll.u32 %v3536, 16
      %v3560 = vrot.slane %v3558, 3
      %v3561 = vor.u32 %v3557, %v3560
      %v3562 = vsel %vm3545, %v3553, %v3561
      %v3564 = vshrl.u32 %v3537, 16
      %v3566 = vrot.slane %v3564, 2
      %v3567 = vshll.u32 %v3537, 16
      %v3569 = vrot.slane %v3567, 3
      %v3570 = vor.u32 %v3566, %v3569
      %v3571 = vsel %vm3545, %v3561, %v3570
      %v3573 = vshrl.u32 %v3538, 16
      %v3575 = vrot.slane %v3573, 2
      %v3576 = vshll.u32 %v3538, 16
      %v3578 = vrot.slane %v3576, 3
      %v3579 = vor.u32 %v3575, %v3578
      %v3580 = vsel %vm3545, %v3570, %v3579
      %v3582 = vshrl.u32 %v3539, 16
      %v3584 = vrot.slane %v3582, 2
      %v3585 = vshll.u32 %v3539, 16
      %v3587 = vrot.slane %v3585, 3
      %v3588 = vor.u32 %v3584, %v3587
      %v3589 = vsel %vm3545, %v3579, %v3588
      %v3591 = vshrl.u32 %v3540, 16
      %v3593 = vrot.slane %v3591, 2
      %v3594 = vshll.u32 %v3540, 16
      %v3596 = vrot.slane %v3594, 3
      %v3597 = vor.u32 %v3593, %v3596
      %v3598 = vsel %vm3545, %v3588, %v3597
      %v3600 = vshrl.u32 %v3541, 16
      %v3602 = vrot.slane %v3600, 2
      %v3603 = vshll.u32 %v3541, 16
      %v3605 = vrot.slane %v3603, 3
      %v3606 = vor.u32 %v3602, %v3605
      %v3607 = vsel %vm3545, %v3597, %v3606
      %v3609 = vshrl.u32 %v3542, 16
      %v3611 = vrot.slane %v3609, 2
      %v3612 = vshll.u32 %v3542, 16
      %v3614 = vrot.slane %v3612, 3
      %v3615 = vor.u32 %v3611, %v3614
      %v3616 = vsel %vm3545, %v3606, %v3615
      %v3618 = vshrl.u32 %v3543, 16
      %v3620 = vrot.slane %v3618, 2
      %v3621 = vshll.u32 %v3543, 16
      %v3623 = vrot.slane %v3621, 3
      %v3624 = vor.u32 %v3620, %v3623
      %v3625 = vsel %vm3545, %v3615, %v3624
      %v3627 = vshrl.u32 %v3544, 16
      %v3629 = vrot.slane %v3627, 2
      %v3630 = vshll.u32 %v3544, 16
      %v3632 = vrot.slane %v3630, 3
      %v3633 = vor.u32 %v3629, %v3632
      %v3634 = vsel %vm3545, %v3624, %v3633
      %v3641 = vunpack.c.l.b16 %v3491
      %v3642 = vunpack.c.l.b16 %v3492
      %v3643 = vunpack.c.l.b16 %v3493
      %v3644 = vunpack.c.l.b16 %v3494
      %v3645 = vunpack.c.l.b16 %v3495
      %v3646 = vunpack.c.l.b16 %v3496
      %v3647 = vpack.c.b16 %v3642, %v3641
      %v3648 = vpack.c.b16 %v3644, %v3643
      %v3649 = vpack.c.b16 %v3646, %v3645
      %v3654 = vsel %vm392, %v3562, 0
      %v3657 = vsel %vm392, %v3571, 0
      %v3660 = vsel %vm392, %v3580, 0
      %v3663 = vsel %vm392, %v3589, 0
      %v3666 = vsel %vm392, %v3598, 0
      %v3669 = vsel %vm392, %v3607, 0
      %v3672 = vsel %vm392, %v3616, 0
      %v3675 = vsel %vm392, %v3625, 0
      %v3678 = vsel %vm392, %v3634, 0
      %3680 = vmatpush.bf16.msra.mxu0 0
      %3681 = vmatpush.bf16.msra.mxu0 0
      %3682 = vmatpush.bf16.msra.mxu0 0
      %3683 = vmatpush.bf16.msra.mxu0 0
      %3684 = vmatpush.bf16.msra.mxu0 0
      %3685 = vmatpush.bf16.msra.mxu0 %v3649
      %3686 = vmatpush.bf16.msra.mxu0 %v3648
      %3687 = vmatpush.bf16.msra.mxu0 %v3647
      %3688 = vmatmul.bf16.gmra.mxu0 %v3654
      %v3689 = vpop.f32.mrf.mxu0
      %v3690 = vadd.f32 0.0, %v3689
      %v3691 = vpop.f32.mrf.mxu0
      %v3692 = vadd.f32 0.0, %v3691
      %3693 = vmatmul.bf16.gmra.mxu0 %v3657
      %v3694 = vpop.f32.mrf.mxu0
      %v3695 = vadd.f32 0.0, %v3694
      %v3696 = vpop.f32.mrf.mxu0
      %v3697 = vadd.f32 0.0, %v3696
      %3698 = vmatmul.bf16.gmra.mxu0 %v3660
      %v3699 = vpop.f32.mrf.mxu0
      %v3700 = vadd.f32 0.0, %v3699
      %v3701 = vpop.f32.mrf.mxu0
      %v3702 = vadd.f32 0.0, %v3701
      %3703 = vmatmul.bf16.gmra.mxu0 %v3663
      %v3704 = vpop.f32.mrf.mxu0
      %v3705 = vadd.f32 0.0, %v3704
      %v3706 = vpop.f32.mrf.mxu0
      %v3707 = vadd.f32 0.0, %v3706
      %3708 = vmatmul.bf16.gmra.mxu0 %v3666
      %v3709 = vpop.f32.mrf.mxu0
      %v3710 = vadd.f32 0.0, %v3709
      %v3711 = vpop.f32.mrf.mxu0
      %v3712 = vadd.f32 0.0, %v3711
      %3713 = vmatmul.bf16.gmra.mxu0 %v3669
      %v3714 = vpop.f32.mrf.mxu0
      %v3715 = vadd.f32 0.0, %v3714
      %v3716 = vpop.f32.mrf.mxu0
      %v3717 = vadd.f32 0.0, %v3716
      %3718 = vmatmul.bf16.gmra.mxu0 %v3672
      %v3719 = vpop.f32.mrf.mxu0
      %v3720 = vadd.f32 0.0, %v3719
      %v3721 = vpop.f32.mrf.mxu0
      %v3722 = vadd.f32 0.0, %v3721
      %3723 = vmatmul.bf16.gmra.mxu0 %v3675
      %v3724 = vpop.f32.mrf.mxu0
      %v3725 = vadd.f32 0.0, %v3724
      %v3726 = vpop.f32.mrf.mxu0
      %v3727 = vadd.f32 0.0, %v3726
      %3728 = vmatmul.bf16.gmra.mxu0 %v3678
      %v3729 = vpop.f32.mrf.mxu0
      %v3730 = vadd.f32 0.0, %v3729
      %v3731 = vpop.f32.mrf.mxu0
      %v3732 = vadd.f32 0.0, %v3731
      %3733 = vdwg.mxu0
      %v3734 = vadd.f32 %v3454, %v3690
      %v3735 = vadd.f32 %v3455, %v3692
      %v3736 = vadd.f32 %v3456, %v3695
      %v3737 = vadd.f32 %v3457, %v3697
      %v3738 = vadd.f32 %v3458, %v3700
      %v3739 = vadd.f32 %v3459, %v3702
      %v3740 = vadd.f32 %v3460, %v3705
      %v3741 = vadd.f32 %v3461, %v3707
      %v3742 = vadd.f32 %v3462, %v3710
      %v3743 = vadd.f32 %v3463, %v3712
      %v3744 = vadd.f32 %v3464, %v3715
      %v3745 = vadd.f32 %v3465, %v3717
      %v3746 = vadd.f32 %v3466, %v3720
      %v3747 = vadd.f32 %v3467, %v3722
      %v3748 = vadd.f32 %v3468, %v3725
      %v3749 = vadd.f32 %v3469, %v3727
      %v3750 = vadd.f32 %v3470, %v3730
      %v3751 = vadd.f32 %v3471, %v3732
      %v3752 = vld [vmem:[%s2] sm:$0x1]
      %v3754 = vperm.slane %v3752, 0
      %v3756 = vadd.f32 %v3734, %v3754
      %v3757 = vadd.f32 %v3735, %v3754
      %v3758 = vadd.f32 %v3736, %v3754
      %v3759 = vadd.f32 %v3737, %v3754
      %v3760 = vadd.f32 %v3738, %v3754
      %v3761 = vadd.f32 %v3739, %v3754
      %v3762 = vadd.f32 %v3740, %v3754
      %v3763 = vadd.f32 %v3741, %v3754
      %v3764 = vadd.f32 %v3742, %v3754
      %v3765 = vadd.f32 %v3743, %v3754
      %v3766 = vadd.f32 %v3744, %v3754
      %v3767 = vadd.f32 %v3745, %v3754
      %v3768 = vadd.f32 %v3746, %v3754
      %v3769 = vadd.f32 %v3747, %v3754
      %v3770 = vadd.f32 %v3748, %v3754
      %v3771 = vadd.f32 %v3749, %v3754
      %v3772 = vadd.f32 %v3750, %v3754
      %v3773 = vadd.f32 %v3751, %v3754
      %v3774 = vmax.f32 %v3756, 0.0
      %v3775 = vmax.f32 %v3757, 0.0
      %v3776 = vmax.f32 %v3758, 0.0
      %v3777 = vmax.f32 %v3759, 0.0
      %v3778 = vmax.f32 %v3760, 0.0
      %v3779 = vmax.f32 %v3761, 0.0
      %v3780 = vmax.f32 %v3762, 0.0
      %v3781 = vmax.f32 %v3763, 0.0
      %v3782 = vmax.f32 %v3764, 0.0
      %v3783 = vmax.f32 %v3765, 0.0
      %v3784 = vmax.f32 %v3766, 0.0
      %v3785 = vmax.f32 %v3767, 0.0
      %v3786 = vmax.f32 %v3768, 0.0
      %v3787 = vmax.f32 %v3769, 0.0
      %v3788 = vmax.f32 %v3770, 0.0
      %v3789 = vmax.f32 %v3771, 0.0
      %v3790 = vmax.f32 %v3772, 0.0
      %v3791 = vmax.f32 %v3773, 0.0
      %v3792 = vpack.c.bf16 %v3774, %v3774
      %v3793 = vpack.c.bf16 %v3775, %v3775
      %v3794 = vpack.c.bf16 %v3776, %v3776
      %v3795 = vpack.c.bf16 %v3777, %v3777
      %v3796 = vpack.c.bf16 %v3778, %v3778
      %v3797 = vpack.c.bf16 %v3779, %v3779
      %v3798 = vpack.c.bf16 %v3780, %v3780
      %v3799 = vpack.c.bf16 %v3781, %v3781
      %v3800 = vpack.c.bf16 %v3782, %v3782
      %v3801 = vpack.c.bf16 %v3783, %v3783
      %v3802 = vpack.c.bf16 %v3784, %v3784
      %v3803 = vpack.c.bf16 %v3785, %v3785
      %v3804 = vpack.c.bf16 %v3786, %v3786
      %v3805 = vpack.c.bf16 %v3787, %v3787
      %v3806 = vpack.c.bf16 %v3788, %v3788
      %v3807 = vpack.c.bf16 %v3789, %v3789
      %v3808 = vpack.c.bf16 %v3790, %v3790
      %v3809 = vpack.c.bf16 %v3791, %v3791
      %s3810 = scalar_lea.vmem [#allocation2], 216
      %3811 = vst.msk [vmem:[%s3810] sm:$0xf] %vm1050, %v3792
      %3812 = vst.msk [vmem:[%s3810 + $0x4] sm:$0xf] %vm1050, %v3793
      %3813 = vst.msk [vmem:[%s3810 + $0x8] sm:$0xf] %vm1050, %v3794
      %3814 = vst.msk [vmem:[%s3810 + $0xc] sm:$0xf] %vm1050, %v3795
      %3815 = vst.msk [vmem:[%s3810 + $0x10] sm:$0xf] %vm1050, %v3796
      %3816 = vst.msk [vmem:[%s3810 + $0x14] sm:$0xf] %vm1050, %v3797
      %3817 = vst.msk [vmem:[%s3810 + $0x18] sm:$0xf] %vm1050, %v3798
      %3818 = vst.msk [vmem:[%s3810 + $0x1c] sm:$0xf] %vm1050, %v3799
      %3819 = vst.msk [vmem:[%s3810 + $0x20] sm:$0xf] %vm1050, %v3800
      %3820 = vst.msk [vmem:[%s3810 + $0x24] sm:$0xf] %vm1050, %v3801
      %3821 = vst.msk [vmem:[%s3810 + $0x28] sm:$0xf] %vm1050, %v3802
      %3822 = vst.msk [vmem:[%s3810 + $0x2c] sm:$0xf] %vm1050, %v3803
      %3823 = vst.msk [vmem:[%s3810 + $0x30] sm:$0xf] %vm1050, %v3804
      %3824 = vst.msk [vmem:[%s3810 + $0x34] sm:$0xf] %vm1050, %v3805
      %3825 = vst.msk [vmem:[%s3810 + $0x38] sm:$0xf] %vm1050, %v3806
      %3826 = vst.msk [vmem:[%s3810 + $0x3c] sm:$0xf] %vm1050, %v3807
      %3827 = vst.msk [vmem:[%s3810 + $0x40] sm:$0xf] %vm1050, %v3808
      %3828 = vst.msk [vmem:[%s3810 + $0x44] sm:$0xf] %vm1050, %v3809
      %v3829 = vld [vmem:[#allocation2] sm:$0xf]
      %v3830 = vld [vmem:[#allocation2 + $0x4] sm:$0xf]
      %v3831 = vld [vmem:[#allocation2 + $0x8] sm:$0xf]
      %v3832 = vld [vmem:[#allocation2 + $0xc] sm:$0xf]
      %v3833 = vld [vmem:[#allocation2 + $0x10] sm:$0xf]
      %v3834 = vld [vmem:[#allocation2 + $0x14] sm:$0xf]
      %v3835 = vld [vmem:[#allocation2 + $0x18] sm:$0xf]
      %v3836 = vld [vmem:[#allocation2 + $0x1c] sm:$0xf]
      %v3837 = vld [vmem:[#allocation2 + $0x20] sm:$0xf]
      %v3838 = vld [vmem:[#allocation2 + $0x24] sm:$0xf]
      %v3839 = vld [vmem:[#allocation2 + $0x28] sm:$0xf]
      %v3840 = vld [vmem:[#allocation2 + $0x2c] sm:$0xf]
      %v3841 = vld [vmem:[#allocation2 + $0x30] sm:$0xf]
      %v3842 = vld [vmem:[#allocation2 + $0x34] sm:$0xf]
      %v3843 = vld [vmem:[#allocation2 + $0x38] sm:$0xf]
      %v3844 = vld [vmem:[%s3] sm:$0xf]
      %v3845 = vld [vmem:[%s3 + $0x4] sm:$0xf]
      %v3846 = vld [vmem:[%s3 + $0x8] sm:$0xf]
      %v3847 = vld [vmem:[%s3 + $0xc] sm:$0xf]
      %v3848 = vld [vmem:[#allocation2 + $0x3c] sm:$0x1]
      %v3849 = vld [vmem:[%s3 + $0x10] sm:$0xf]
      %v3850 = vld [vmem:[%s3 + $0x14] sm:$0xf]
      %v3851 = vld [vmem:[%s3 + $0x18] sm:$0xf]
      %v3852 = vld [vmem:[%s3 + $0x1c] sm:$0xf]
      %v3869 = vunpack.c.l.b16 %v3829
      %v3870 = vunpack.c.l.b16 %v3830
      %v3871 = vunpack.c.l.b16 %v3831
      %v3872 = vunpack.c.l.b16 %v3832
      %v3873 = vunpack.c.l.b16 %v3833
      %v3874 = vunpack.c.l.b16 %v3834
      %v3875 = vunpack.c.l.b16 %v3835
      %v3876 = vunpack.c.l.b16 %v3836
      %v3877 = vunpack.c.l.b16 %v3837
      %v3878 = vunpack.c.l.b16 %v3838
      %v3879 = vunpack.c.l.b16 %v3839
      %v3880 = vunpack.c.l.b16 %v3840
      %v3881 = vunpack.c.l.b16 %v3841
      %v3882 = vunpack.c.l.b16 %v3842
      %v3883 = vunpack.c.l.b16 %v3843
      %v3884 = vunpack.c.l.b16 %v3848
      %v3885 = vpack.c.b16 %v3870, %v3869
      %v3886 = vpack.c.b16 %v3872, %v3871
      %v3887 = vpack.c.b16 %v3874, %v3873
      %v3888 = vpack.c.b16 %v3876, %v3875
      %v3889 = vpack.c.b16 %v3878, %v3877
      %v3890 = vpack.c.b16 %v3880, %v3879
      %v3891 = vpack.c.b16 %v3882, %v3881
      %v3892 = vpack.c.b16 %v3884, %v3883
      %v3894 = vshrl.u32 %v3885, 16
      %v3896 = vshll.u32 %v3885, 16
      %v3898 = vrot.slane %v3896, 1
      %v3899 = vor.u32 %v3894, %v3898
      %v3901 = vshll.u32 %v3886, 16
      %v3903 = vrot.slane %v3901, 1
      %v3904 = vsel %vm1166, %v3899, %v3903
      %v3905 = vshrl.u32 %v3886, 16
      %v3907 = vor.u32 %v3905, %v3903
      %v3909 = vshll.u32 %v3887, 16
      %v3911 = vrot.slane %v3909, 1
      %v3912 = vsel %vm1166, %v3907, %v3911
      %v3913 = vshrl.u32 %v3887, 16
      %v3915 = vor.u32 %v3913, %v3911
      %v3917 = vshll.u32 %v3888, 16
      %v3919 = vrot.slane %v3917, 1
      %v3920 = vsel %vm1166, %v3915, %v3919
      %v3921 = vshrl.u32 %v3888, 16
      %v3923 = vor.u32 %v3921, %v3919
      %v3925 = vshll.u32 %v3889, 16
      %v3927 = vrot.slane %v3925, 1
      %v3928 = vsel %vm1166, %v3923, %v3927
      %v3929 = vshrl.u32 %v3889, 16
      %v3931 = vor.u32 %v3929, %v3927
      %v3933 = vshll.u32 %v3890, 16
      %v3935 = vrot.slane %v3933, 1
      %v3936 = vsel %vm1166, %v3931, %v3935
      %v3937 = vshrl.u32 %v3890, 16
      %v3939 = vor.u32 %v3937, %v3935
      %v3941 = vshll.u32 %v3891, 16
      %v3943 = vrot.slane %v3941, 1
      %v3944 = vsel %vm1166, %v3939, %v3943
      %v3945 = vshrl.u32 %v3891, 16
      %v3947 = vor.u32 %v3945, %v3943
      %v3949 = vshll.u32 %v3892, 16
      %v3951 = vrot.slane %v3949, 1
      %v3952 = vsel %vm1166, %v3947, %v3951
      %v3953 = vshrl.u32 %v3892, 16
      %v3955 = vor.u32 %v3953, %v3951
      %v3960 = vunpack.c.l.b16 %v3849
      %v3961 = vunpack.c.l.b16 %v3850
      %v3962 = vunpack.c.l.b16 %v3851
      %v3963 = vunpack.c.l.b16 %v3852
      %v3964 = vpack.c.b16 %v3961, %v3960
      %v3965 = vpack.c.b16 %v3963, %v3962
      %vm3968 = vcmask 261120
      %v3970 = vsel %vm3968, %v3904, 0
      %v3973 = vsel %vm3968, %v3912, 0
      %v3976 = vsel %vm3968, %v3920, 0
      %v3979 = vsel %vm3968, %v3928, 0
      %v3982 = vsel %vm3968, %v3936, 0
      %v3985 = vsel %vm3968, %v3944, 0
      %v3988 = vsel %vm3968, %v3952, 0
      %v3991 = vsel %vm3968, %v3955, 0
      %3993 = vmatpush.bf16.msra.mxu0 0
      %3994 = vmatpush.bf16.msra.mxu0 0
      %3995 = vmatpush.bf16.msra.mxu0 0
      %3996 = vmatpush.bf16.msra.mxu0 0
      %3997 = vmatpush.bf16.msra.mxu0 0
      %3998 = vmatpush.bf16.msra.mxu0 0
      %3999 = vmatpush.bf16.msra.mxu0 %v3965
      %4000 = vmatpush.bf16.msra.mxu0 %v3964
      %4001 = vmatmul.bf16.gmra.mxu0 %v3970
      %v4002 = vpop.f32.mrf.mxu0
      %v4003 = vadd.f32 0.0, %v4002
      %v4004 = vpop.f32.mrf.mxu0
      %v4005 = vadd.f32 0.0, %v4004
      %4006 = vmatmul.bf16.gmra.mxu0 %v3973
      %v4007 = vpop.f32.mrf.mxu0
      %v4008 = vadd.f32 0.0, %v4007
      %v4009 = vpop.f32.mrf.mxu0
      %v4010 = vadd.f32 0.0, %v4009
      %4011 = vmatmul.bf16.gmra.mxu0 %v3976
      %v4012 = vpop.f32.mrf.mxu0
      %v4013 = vadd.f32 0.0, %v4012
      %v4014 = vpop.f32.mrf.mxu0
      %v4015 = vadd.f32 0.0, %v4014
      %4016 = vmatmul.bf16.gmra.mxu0 %v3979
      %v4017 = vpop.f32.mrf.mxu0
      %v4018 = vadd.f32 0.0, %v4017
      %v4019 = vpop.f32.mrf.mxu0
      %v4020 = vadd.f32 0.0, %v4019
      %4021 = vmatmul.bf16.gmra.mxu0 %v3982
      %v4022 = vpop.f32.mrf.mxu0
      %v4023 = vadd.f32 0.0, %v4022
      %v4024 = vpop.f32.mrf.mxu0
      %v4025 = vadd.f32 0.0, %v4024
      %4026 = vmatmul.bf16.gmra.mxu0 %v3985
      %v4027 = vpop.f32.mrf.mxu0
      %v4028 = vadd.f32 0.0, %v4027
      %v4029 = vpop.f32.mrf.mxu0
      %v4030 = vadd.f32 0.0, %v4029
      %4031 = vmatmul.bf16.gmra.mxu0 %v3988
      %v4032 = vpop.f32.mrf.mxu0
      %v4033 = vadd.f32 0.0, %v4032
      %v4034 = vpop.f32.mrf.mxu0
      %v4035 = vadd.f32 0.0, %v4034
      %4036 = vmatmul.bf16.gmra.mxu0 %v3991
      %v4037 = vpop.f32.mrf.mxu0
      %v4038 = vadd.f32 0.0, %v4037
      %v4039 = vpop.f32.mrf.mxu0
      %4040 = vdwg.mxu0
      %v4041 = vpack.c.b16 %v3883, %v3883
      %v4046 = vunpack.c.l.b16 %v3844
      %v4047 = vunpack.c.l.b16 %v3845
      %v4048 = vunpack.c.l.b16 %v3846
      %v4049 = vunpack.c.l.b16 %v3847
      %v4050 = vpack.c.b16 %v4047, %v4046
      %v4051 = vpack.c.b16 %v4049, %v4048
      %v4054 = vsel %vm3968, %v3885, 0
      %v4056 = vsel %vm3968, %v3886, 0
      %v4058 = vsel %vm3968, %v3887, 0
      %v4060 = vsel %vm3968, %v3888, 0
      %v4062 = vsel %vm3968, %v3889, 0
      %v4064 = vsel %vm3968, %v3890, 0
      %v4066 = vsel %vm3968, %v3891, 0
      %v4069 = vsel %vm3968, %v4041, 0
      %4071 = vmatpush.bf16.msra.mxu0 0
      %4072 = vmatpush.bf16.msra.mxu0 0
      %4073 = vmatpush.bf16.msra.mxu0 0
      %4074 = vmatpush.bf16.msra.mxu0 0
      %4075 = vmatpush.bf16.msra.mxu0 0
      %4076 = vmatpush.bf16.msra.mxu0 0
      %4077 = vmatpush.bf16.msra.mxu0 %v4051
      %4078 = vmatpush.bf16.msra.mxu0 %v4050
      %4079 = vmatmul.bf16.gmra.mxu0 %v4054
      %v4080 = vpop.f32.mrf.mxu0
      %v4081 = vadd.f32 %v4003, %v4080
      %v4082 = vpop.f32.mrf.mxu0
      %v4083 = vadd.f32 %v4005, %v4082
      %4084 = vmatmul.bf16.gmra.mxu0 %v4056
      %v4085 = vpop.f32.mrf.mxu0
      %v4086 = vadd.f32 %v4008, %v4085
      %v4087 = vpop.f32.mrf.mxu0
      %v4088 = vadd.f32 %v4010, %v4087
      %4089 = vmatmul.bf16.gmra.mxu0 %v4058
      %v4090 = vpop.f32.mrf.mxu0
      %v4091 = vadd.f32 %v4013, %v4090
      %v4092 = vpop.f32.mrf.mxu0
      %v4093 = vadd.f32 %v4015, %v4092
      %4094 = vmatmul.bf16.gmra.mxu0 %v4060
      %v4095 = vpop.f32.mrf.mxu0
      %v4096 = vadd.f32 %v4018, %v4095
      %v4097 = vpop.f32.mrf.mxu0
      %v4098 = vadd.f32 %v4020, %v4097
      %4099 = vmatmul.bf16.gmra.mxu0 %v4062
      %v4100 = vpop.f32.mrf.mxu0
      %v4101 = vadd.f32 %v4023, %v4100
      %v4102 = vpop.f32.mrf.mxu0
      %v4103 = vadd.f32 %v4025, %v4102
      %4104 = vmatmul.bf16.gmra.mxu0 %v4064
      %v4105 = vpop.f32.mrf.mxu0
      %v4106 = vadd.f32 %v4028, %v4105
      %v4107 = vpop.f32.mrf.mxu0
      %v4108 = vadd.f32 %v4030, %v4107
      %4109 = vmatmul.bf16.gmra.mxu0 %v4066
      %v4110 = vpop.f32.mrf.mxu0
      %v4111 = vadd.f32 %v4033, %v4110
      %v4112 = vpop.f32.mrf.mxu0
      %v4113 = vadd.f32 %v4035, %v4112
      %4114 = vmatmul.bf16.gmra.mxu0 %v4069
      %v4115 = vpop.f32.mrf.mxu0
      %v4116 = vadd.f32 %v4038, %v4115
      %v4117 = vpop.f32.mrf.mxu0
      %4118 = vdwg.mxu0
      %v4119 = vld [vmem:[#allocation2 + $0x4] sm:$0xc]
      %v4120 = vld [vmem:[#allocation2 + $0x8] sm:$0xf]
      %v4121 = vld [vmem:[#allocation2 + $0xc] sm:$0xf]
      %v4122 = vld [vmem:[#allocation2 + $0x10] sm:$0xf]
      %v4123 = vld [vmem:[#allocation2 + $0x14] sm:$0xf]
      %v4124 = vld [vmem:[#allocation2 + $0x18] sm:$0xf]
      %v4125 = vld [vmem:[#allocation2 + $0x1c] sm:$0xf]
      %v4126 = vld [vmem:[#allocation2 + $0x20] sm:$0xf]
      %v4127 = vld [vmem:[#allocation2 + $0x24] sm:$0xf]
      %v4128 = vld [vmem:[#allocation2 + $0x28] sm:$0xf]
      %v4129 = vld [vmem:[#allocation2 + $0x2c] sm:$0xf]
      %v4130 = vld [vmem:[#allocation2 + $0x30] sm:$0xf]
      %v4131 = vld [vmem:[#allocation2 + $0x34] sm:$0xf]
      %v4132 = vld [vmem:[#allocation2 + $0x38] sm:$0xf]
      %v4133 = vld [vmem:[#allocation2 + $0x3c] sm:$0xf]
      %v4134 = vld [vmem:[#allocation2 + $0x40] sm:$0x3]
      %v4135 = vld [vmem:[%s3 + $0x20] sm:$0xf]
      %v4136 = vld [vmem:[%s3 + $0x24] sm:$0xf]
      %v4137 = vld [vmem:[%s3 + $0x28] sm:$0xf]
      %v4138 = vld [vmem:[%s3 + $0x2c] sm:$0xf]
      %v4155 = vunpack.c.l.b16 %v4119
      %v4156 = vunpack.c.l.b16 %v4120
      %v4157 = vunpack.c.l.b16 %v4121
      %v4158 = vunpack.c.l.b16 %v4122
      %v4159 = vunpack.c.l.b16 %v4123
      %v4160 = vunpack.c.l.b16 %v4124
      %v4161 = vunpack.c.l.b16 %v4125
      %v4162 = vunpack.c.l.b16 %v4126
      %v4163 = vunpack.c.l.b16 %v4127
      %v4164 = vunpack.c.l.b16 %v4128
      %v4165 = vunpack.c.l.b16 %v4129
      %v4166 = vunpack.c.l.b16 %v4130
      %v4167 = vunpack.c.l.b16 %v4131
      %v4168 = vunpack.c.l.b16 %v4132
      %v4169 = vunpack.c.l.b16 %v4133
      %v4170 = vunpack.c.l.b16 %v4134
      %v4171 = vpack.c.b16 %v4156, %v4155
      %v4172 = vpack.c.b16 %v4158, %v4157
      %v4173 = vpack.c.b16 %v4160, %v4159
      %v4174 = vpack.c.b16 %v4162, %v4161
      %v4175 = vpack.c.b16 %v4164, %v4163
      %v4176 = vpack.c.b16 %v4166, %v4165
      %v4177 = vpack.c.b16 %v4168, %v4167
      %v4178 = vpack.c.b16 %v4170, %v4169
      %v4179 = vrot.slane %v4171, 2
      %v4180 = vrot.slane %v4172, 2
      %v4181 = vsel %vm2424, %v4179, %v4180
      %v4182 = vrot.slane %v4173, 2
      %v4183 = vsel %vm2424, %v4180, %v4182
      %v4184 = vrot.slane %v4174, 2
      %v4185 = vsel %vm2424, %v4182, %v4184
      %v4186 = vrot.slane %v4175, 2
      %v4187 = vsel %vm2424, %v4184, %v4186
      %v4188 = vrot.slane %v4176, 2
      %v4189 = vsel %vm2424, %v4186, %v4188
      %v4190 = vrot.slane %v4177, 2
      %v4191 = vsel %vm2424, %v4188, %v4190
      %v4192 = vrot.slane %v4178, 2
      %v4193 = vsel %vm2424, %v4190, %v4192
      %v4198 = vunpack.c.l.b16 %v4135
      %v4199 = vunpack.c.l.b16 %v4136
      %v4200 = vunpack.c.l.b16 %v4137
      %v4201 = vunpack.c.l.b16 %v4138
      %v4202 = vpack.c.b16 %v4199, %v4198
      %v4203 = vpack.c.b16 %v4201, %v4200
      %v4207 = vsel %vm3968, %v4181, 0
      %v4210 = vsel %vm3968, %v4183, 0
      %v4213 = vsel %vm3968, %v4185, 0
      %v4216 = vsel %vm3968, %v4187, 0
      %v4219 = vsel %vm3968, %v4189, 0
      %v4222 = vsel %vm3968, %v4191, 0
      %v4225 = vsel %vm3968, %v4193, 0
      %v4228 = vsel %vm3968, %v4192, 0
      %4230 = vmatpush.bf16.msra.mxu0 0
      %4231 = vmatpush.bf16.msra.mxu0 0
      %4232 = vmatpush.bf16.msra.mxu0 0
      %4233 = vmatpush.bf16.msra.mxu0 0
      %4234 = vmatpush.bf16.msra.mxu0 0
      %4235 = vmatpush.bf16.msra.mxu0 0
      %4236 = vmatpush.bf16.msra.mxu0 %v4203
      %4237 = vmatpush.bf16.msra.mxu0 %v4202
      %4238 = vmatmul.bf16.gmra.mxu0 %v4207
      %v4239 = vpop.f32.mrf.mxu0
      %v4240 = vadd.f32 0.0, %v4239
      %v4241 = vpop.f32.mrf.mxu0
      %v4242 = vadd.f32 0.0, %v4241
      %4243 = vmatmul.bf16.gmra.mxu0 %v4210
      %v4244 = vpop.f32.mrf.mxu0
      %v4245 = vadd.f32 0.0, %v4244
      %v4246 = vpop.f32.mrf.mxu0
      %v4247 = vadd.f32 0.0, %v4246
      %4248 = vmatmul.bf16.gmra.mxu0 %v4213
      %v4249 = vpop.f32.mrf.mxu0
      %v4250 = vadd.f32 0.0, %v4249
      %v4251 = vpop.f32.mrf.mxu0
      %v4252 = vadd.f32 0.0, %v4251
      %4253 = vmatmul.bf16.gmra.mxu0 %v4216
      %v4254 = vpop.f32.mrf.mxu0
      %v4255 = vadd.f32 0.0, %v4254
      %v4256 = vpop.f32.mrf.mxu0
      %v4257 = vadd.f32 0.0, %v4256
      %4258 = vmatmul.bf16.gmra.mxu0 %v4219
      %v4259 = vpop.f32.mrf.mxu0
      %v4260 = vadd.f32 0.0, %v4259
      %v4261 = vpop.f32.mrf.mxu0
      %v4262 = vadd.f32 0.0, %v4261
      %4263 = vmatmul.bf16.gmra.mxu0 %v4222
      %v4264 = vpop.f32.mrf.mxu0
      %v4265 = vadd.f32 0.0, %v4264
      %v4266 = vpop.f32.mrf.mxu0
      %v4267 = vadd.f32 0.0, %v4266
      %4268 = vmatmul.bf16.gmra.mxu0 %v4225
      %v4269 = vpop.f32.mrf.mxu0
      %v4270 = vadd.f32 0.0, %v4269
      %v4271 = vpop.f32.mrf.mxu0
      %v4272 = vadd.f32 0.0, %v4271
      %4273 = vmatmul.bf16.gmra.mxu0 %v4228
      %v4274 = vpop.f32.mrf.mxu0
      %v4275 = vadd.f32 0.0, %v4274
      %v4276 = vpop.f32.mrf.mxu0
      %4277 = vdwg.mxu0
      %v4278 = vadd.f32 %v4081, %v4240
      %v4279 = vadd.f32 %v4083, %v4242
      %v4280 = vadd.f32 %v4086, %v4245
      %v4281 = vadd.f32 %v4088, %v4247
      %v4282 = vadd.f32 %v4091, %v4250
      %v4283 = vadd.f32 %v4093, %v4252
      %v4284 = vadd.f32 %v4096, %v4255
      %v4285 = vadd.f32 %v4098, %v4257
      %v4286 = vadd.f32 %v4101, %v4260
      %v4287 = vadd.f32 %v4103, %v4262
      %v4288 = vadd.f32 %v4106, %v4265
      %v4289 = vadd.f32 %v4108, %v4267
      %v4290 = vadd.f32 %v4111, %v4270
      %v4291 = vadd.f32 %v4113, %v4272
      %v4292 = vadd.f32 %v4116, %v4275
      %v4293 = vld [vmem:[#allocation2 + $0x40] sm:$0x7]
      %v4294 = vld [vmem:[%s3 + $0x30] sm:$0xf]
      %v4295 = vld [vmem:[%s3 + $0x34] sm:$0xf]
      %v4296 = vld [vmem:[%s3 + $0x38] sm:$0xf]
      %v4297 = vld [vmem:[%s3 + $0x3c] sm:$0xf]
      %v4299 = vunpack.c.l.b16 %v4293
      %v4300 = vpack.c.b16 %v4299, %v4169
      %v4302 = vshrl.u32 %v4171, 16
      %v4304 = vrot.slane %v4302, 2
      %v4305 = vshll.u32 %v4171, 16
      %v4307 = vrot.slane %v4305, 3
      %v4308 = vor.u32 %v4304, %v4307
      %v4310 = vshrl.u32 %v4172, 16
      %v4312 = vrot.slane %v4310, 2
      %v4313 = vshll.u32 %v4172, 16
      %v4315 = vrot.slane %v4313, 3
      %v4316 = vor.u32 %v4312, %v4315
      %v4317 = vsel %vm3545, %v4308, %v4316
      %v4319 = vshrl.u32 %v4173, 16
      %v4321 = vrot.slane %v4319, 2
      %v4322 = vshll.u32 %v4173, 16
      %v4324 = vrot.slane %v4322, 3
      %v4325 = vor.u32 %v4321, %v4324
      %v4326 = vsel %vm3545, %v4316, %v4325
      %v4328 = vshrl.u32 %v4174, 16
      %v4330 = vrot.slane %v4328, 2
      %v4331 = vshll.u32 %v4174, 16
      %v4333 = vrot.slane %v4331, 3
      %v4334 = vor.u32 %v4330, %v4333
      %v4335 = vsel %vm3545, %v4325, %v4334
      %v4337 = vshrl.u32 %v4175, 16
      %v4339 = vrot.slane %v4337, 2
      %v4340 = vshll.u32 %v4175, 16
      %v4342 = vrot.slane %v4340, 3
      %v4343 = vor.u32 %v4339, %v4342
      %v4344 = vsel %vm3545, %v4334, %v4343
      %v4346 = vshrl.u32 %v4176, 16
      %v4348 = vrot.slane %v4346, 2
      %v4349 = vshll.u32 %v4176, 16
      %v4351 = vrot.slane %v4349, 3
      %v4352 = vor.u32 %v4348, %v4351
      %v4353 = vsel %vm3545, %v4343, %v4352
      %v4355 = vshrl.u32 %v4177, 16
      %v4357 = vrot.slane %v4355, 2
      %v4358 = vshll.u32 %v4177, 16
      %v4360 = vrot.slane %v4358, 3
      %v4361 = vor.u32 %v4357, %v4360
      %v4362 = vsel %vm3545, %v4352, %v4361
      %v4364 = vshrl.u32 %v4300, 16
      %v4366 = vrot.slane %v4364, 2
      %v4367 = vshll.u32 %v4300, 16
      %v4369 = vrot.slane %v4367, 3
      %v4370 = vor.u32 %v4366, %v4369
      %v4371 = vsel %vm3545, %v4361, %v4370
      %v4376 = vunpack.c.l.b16 %v4294
      %v4377 = vunpack.c.l.b16 %v4295
      %v4378 = vunpack.c.l.b16 %v4296
      %v4379 = vunpack.c.l.b16 %v4297
      %v4380 = vpack.c.b16 %v4377, %v4376
      %v4381 = vpack.c.b16 %v4379, %v4378
      %v4385 = vsel %vm3968, %v4317, 0
      %v4388 = vsel %vm3968, %v4326, 0
      %v4391 = vsel %vm3968, %v4335, 0
      %v4394 = vsel %vm3968, %v4344, 0
      %v4397 = vsel %vm3968, %v4353, 0
      %v4400 = vsel %vm3968, %v4362, 0
      %v4403 = vsel %vm3968, %v4371, 0
      %v4406 = vsel %vm3968, %v4370, 0
      %4408 = vmatpush.bf16.msra.mxu0 0
      %4409 = vmatpush.bf16.msra.mxu0 0
      %4410 = vmatpush.bf16.msra.mxu0 0
      %4411 = vmatpush.bf16.msra.mxu0 0
      %4412 = vmatpush.bf16.msra.mxu0 0
      %4413 = vmatpush.bf16.msra.mxu0 0
      %4414 = vmatpush.bf16.msra.mxu0 %v4381
      %4415 = vmatpush.bf16.msra.mxu0 %v4380
      %4416 = vmatmul.bf16.gmra.mxu0 %v4385
      %v4417 = vpop.f32.mrf.mxu0
      %v4418 = vadd.f32 0.0, %v4417
      %v4419 = vpop.f32.mrf.mxu0
      %v4420 = vadd.f32 0.0, %v4419
      %4421 = vmatmul.bf16.gmra.mxu0 %v4388
      %v4422 = vpop.f32.mrf.mxu0
      %v4423 = vadd.f32 0.0, %v4422
      %v4424 = vpop.f32.mrf.mxu0
      %v4425 = vadd.f32 0.0, %v4424
      %4426 = vmatmul.bf16.gmra.mxu0 %v4391
      %v4427 = vpop.f32.mrf.mxu0
      %v4428 = vadd.f32 0.0, %v4427
      %v4429 = vpop.f32.mrf.mxu0
      %v4430 = vadd.f32 0.0, %v4429
      %4431 = vmatmul.bf16.gmra.mxu0 %v4394
      %v4432 = vpop.f32.mrf.mxu0
      %v4433 = vadd.f32 0.0, %v4432
      %v4434 = vpop.f32.mrf.mxu0
      %v4435 = vadd.f32 0.0, %v4434
      %4436 = vmatmul.bf16.gmra.mxu0 %v4397
      %v4437 = vpop.f32.mrf.mxu0
      %v4438 = vadd.f32 0.0, %v4437
      %v4439 = vpop.f32.mrf.mxu0
      %v4440 = vadd.f32 0.0, %v4439
      %4441 = vmatmul.bf16.gmra.mxu0 %v4400
      %v4442 = vpop.f32.mrf.mxu0
      %v4443 = vadd.f32 0.0, %v4442
      %v4444 = vpop.f32.mrf.mxu0
      %v4445 = vadd.f32 0.0, %v4444
      %4446 = vmatmul.bf16.gmra.mxu0 %v4403
      %v4447 = vpop.f32.mrf.mxu0
      %v4448 = vadd.f32 0.0, %v4447
      %v4449 = vpop.f32.mrf.mxu0
      %v4450 = vadd.f32 0.0, %v4449
      %4451 = vmatmul.bf16.gmra.mxu0 %v4406
      %v4452 = vpop.f32.mrf.mxu0
      %v4453 = vadd.f32 0.0, %v4452
      %v4454 = vpop.f32.mrf.mxu0
      %4455 = vdwg.mxu0
      %v4456 = vadd.f32 %v4278, %v4418
      %v4457 = vadd.f32 %v4279, %v4420
      %v4458 = vadd.f32 %v4280, %v4423
      %v4459 = vadd.f32 %v4281, %v4425
      %v4460 = vadd.f32 %v4282, %v4428
      %v4461 = vadd.f32 %v4283, %v4430
      %v4462 = vadd.f32 %v4284, %v4433
      %v4463 = vadd.f32 %v4285, %v4435
      %v4464 = vadd.f32 %v4286, %v4438
      %v4465 = vadd.f32 %v4287, %v4440
      %v4466 = vadd.f32 %v4288, %v4443
      %v4467 = vadd.f32 %v4289, %v4445
      %v4468 = vadd.f32 %v4290, %v4448
      %v4469 = vadd.f32 %v4291, %v4450
      %v4470 = vadd.f32 %v4292, %v4453
      %v4471 = vld [vmem:[%s1996] sm:$0xf]
      %v4472 = vld [vmem:[%s1996 + $0x4] sm:$0xf]
      %v4473 = vld [vmem:[%s1996 + $0x8] sm:$0xf]
      %v4474 = vld [vmem:[%s1996 + $0xc] sm:$0xf]
      %v4475 = vld [vmem:[%s1996 + $0x10] sm:$0xf]
      %v4476 = vld [vmem:[%s1996 + $0x14] sm:$0xf]
      %v4477 = vld [vmem:[%s1996 + $0x18] sm:$0xf]
      %v4478 = vld [vmem:[%s1996 + $0x1c] sm:$0xf]
      %v4479 = vld [vmem:[%s1996 + $0x20] sm:$0xf]
      %v4480 = vld [vmem:[%s1996 + $0x24] sm:$0xf]
      %v4481 = vld [vmem:[%s1996 + $0x28] sm:$0xf]
      %v4482 = vld [vmem:[%s1996 + $0x2c] sm:$0xf]
      %v4483 = vld [vmem:[%s1996 + $0x30] sm:$0xf]
      %v4484 = vld [vmem:[%s1996 + $0x34] sm:$0xf]
      %v4485 = vld [vmem:[%s1996 + $0x38] sm:$0xf]
      %v4486 = vld [vmem:[%s3 + $0x40] sm:$0xf]
      %v4487 = vld [vmem:[%s3 + $0x44] sm:$0xf]
      %v4488 = vld [vmem:[%s3 + $0x48] sm:$0xf]
      %v4489 = vld [vmem:[%s3 + $0x4c] sm:$0xf]
      %v4505 = vunpack.c.l.b16 %v4471
      %v4506 = vunpack.c.l.b16 %v4472
      %v4507 = vunpack.c.l.b16 %v4473
      %v4508 = vunpack.c.l.b16 %v4474
      %v4509 = vunpack.c.l.b16 %v4475
      %v4510 = vunpack.c.l.b16 %v4476
      %v4511 = vunpack.c.l.b16 %v4477
      %v4512 = vunpack.c.l.b16 %v4478
      %v4513 = vunpack.c.l.b16 %v4479
      %v4514 = vunpack.c.l.b16 %v4480
      %v4515 = vunpack.c.l.b16 %v4481
      %v4516 = vunpack.c.l.b16 %v4482
      %v4517 = vunpack.c.l.b16 %v4483
      %v4518 = vunpack.c.l.b16 %v4484
      %v4519 = vunpack.c.l.b16 %v4485
      %v4520 = vpack.c.b16 %v4506, %v4505
      %v4521 = vpack.c.b16 %v4508, %v4507
      %v4522 = vpack.c.b16 %v4510, %v4509
      %v4523 = vpack.c.b16 %v4512, %v4511
      %v4524 = vpack.c.b16 %v4514, %v4513
      %v4525 = vpack.c.b16 %v4516, %v4515
      %v4526 = vpack.c.b16 %v4518, %v4517
      %v4527 = vpack.c.b16 %v4519, %v4519
      %v4532 = vunpack.c.l.b16 %v4486
      %v4533 = vunpack.c.l.b16 %v4487
      %v4534 = vunpack.c.l.b16 %v4488
      %v4535 = vunpack.c.l.b16 %v4489
      %v4536 = vpack.c.b16 %v4533, %v4532
      %v4537 = vpack.c.b16 %v4535, %v4534
      %v4541 = vsel %vm3968, %v4520, 0
      %v4544 = vsel %vm3968, %v4521, 0
      %v4547 = vsel %vm3968, %v4522, 0
      %v4550 = vsel %vm3968, %v4523, 0
      %v4553 = vsel %vm3968, %v4524, 0
      %v4556 = vsel %vm3968, %v4525, 0
      %v4559 = vsel %vm3968, %v4526, 0
      %v4562 = vsel %vm3968, %v4527, 0
      %4564 = vmatpush.bf16.msra.mxu0 0
      %4565 = vmatpush.bf16.msra.mxu0 0
      %4566 = vmatpush.bf16.msra.mxu0 0
      %4567 = vmatpush.bf16.msra.mxu0 0
      %4568 = vmatpush.bf16.msra.mxu0 0
      %4569 = vmatpush.bf16.msra.mxu0 0
      %4570 = vmatpush.bf16.msra.mxu0 %v4537
      %4571 = vmatpush.bf16.msra.mxu0 %v4536
      %4572 = vmatmul.bf16.gmra.mxu0 %v4541
      %v4573 = vpop.f32.mrf.mxu0
      %v4574 = vadd.f32 0.0, %v4573
      %v4575 = vpop.f32.mrf.mxu0
      %v4576 = vadd.f32 0.0, %v4575
      %4577 = vmatmul.bf16.gmra.mxu0 %v4544
      %v4578 = vpop.f32.mrf.mxu0
      %v4579 = vadd.f32 0.0, %v4578
      %v4580 = vpop.f32.mrf.mxu0
      %v4581 = vadd.f32 0.0, %v4580
      %4582 = vmatmul.bf16.gmra.mxu0 %v4547
      %v4583 = vpop.f32.mrf.mxu0
      %v4584 = vadd.f32 0.0, %v4583
      %v4585 = vpop.f32.mrf.mxu0
      %v4586 = vadd.f32 0.0, %v4585
      %4587 = vmatmul.bf16.gmra.mxu0 %v4550
      %v4588 = vpop.f32.mrf.mxu0
      %v4589 = vadd.f32 0.0, %v4588
      %v4590 = vpop.f32.mrf.mxu0
      %v4591 = vadd.f32 0.0, %v4590
      %4592 = vmatmul.bf16.gmra.mxu0 %v4553
      %v4593 = vpop.f32.mrf.mxu0
      %v4594 = vadd.f32 0.0, %v4593
      %v4595 = vpop.f32.mrf.mxu0
      %v4596 = vadd.f32 0.0, %v4595
      %4597 = vmatmul.bf16.gmra.mxu0 %v4556
      %v4598 = vpop.f32.mrf.mxu0
      %v4599 = vadd.f32 0.0, %v4598
      %v4600 = vpop.f32.mrf.mxu0
      %v4601 = vadd.f32 0.0, %v4600
      %4602 = vmatmul.bf16.gmra.mxu0 %v4559
      %v4603 = vpop.f32.mrf.mxu0
      %v4604 = vadd.f32 0.0, %v4603
      %v4605 = vpop.f32.mrf.mxu0
      %v4606 = vadd.f32 0.0, %v4605
      %4607 = vmatmul.bf16.gmra.mxu0 %v4562
      %v4608 = vpop.f32.mrf.mxu0
      %v4609 = vadd.f32 0.0, %v4608
      %v4610 = vpop.f32.mrf.mxu0
      %4611 = vdwg.mxu0
      %v4612 = vadd.f32 %v4456, %v4574
      %v4613 = vadd.f32 %v4457, %v4576
      %v4614 = vadd.f32 %v4458, %v4579
      %v4615 = vadd.f32 %v4459, %v4581
      %v4616 = vadd.f32 %v4460, %v4584
      %v4617 = vadd.f32 %v4461, %v4586
      %v4618 = vadd.f32 %v4462, %v4589
      %v4619 = vadd.f32 %v4463, %v4591
      %v4620 = vadd.f32 %v4464, %v4594
      %v4621 = vadd.f32 %v4465, %v4596
      %v4622 = vadd.f32 %v4466, %v4599
      %v4623 = vadd.f32 %v4467, %v4601
      %v4624 = vadd.f32 %v4468, %v4604
      %v4625 = vadd.f32 %v4469, %v4606
      %v4626 = vadd.f32 %v4470, %v4609
      %v4627 = vld [vmem:[%s1996] sm:$0xf]
      %v4628 = vld [vmem:[%s1996 + $0x4] sm:$0xf]
      %v4629 = vld [vmem:[%s1996 + $0x8] sm:$0xf]
      %v4630 = vld [vmem:[%s1996 + $0xc] sm:$0xf]
      %v4631 = vld [vmem:[%s1996 + $0x10] sm:$0xf]
      %v4632 = vld [vmem:[%s1996 + $0x14] sm:$0xf]
      %v4633 = vld [vmem:[%s1996 + $0x18] sm:$0xf]
      %v4634 = vld [vmem:[%s1996 + $0x1c] sm:$0xf]
      %v4635 = vld [vmem:[%s1996 + $0x20] sm:$0xf]
      %v4636 = vld [vmem:[%s1996 + $0x24] sm:$0xf]
      %v4637 = vld [vmem:[%s1996 + $0x28] sm:$0xf]
      %v4638 = vld [vmem:[%s1996 + $0x2c] sm:$0xf]
      %v4639 = vld [vmem:[%s1996 + $0x30] sm:$0xf]
      %v4640 = vld [vmem:[%s1996 + $0x34] sm:$0xf]
      %v4641 = vld [vmem:[%s1996 + $0x38] sm:$0xf]
      %v4642 = vld [vmem:[%s1996 + $0x3c] sm:$0x1]
      %v4643 = vld [vmem:[%s3 + $0x50] sm:$0xf]
      %v4644 = vld [vmem:[%s3 + $0x54] sm:$0xf]
      %v4645 = vld [vmem:[%s3 + $0x58] sm:$0xf]
      %v4646 = vld [vmem:[%s3 + $0x5c] sm:$0xf]
      %v4663 = vunpack.c.l.b16 %v4627
      %v4664 = vunpack.c.l.b16 %v4628
      %v4665 = vunpack.c.l.b16 %v4629
      %v4666 = vunpack.c.l.b16 %v4630
      %v4667 = vunpack.c.l.b16 %v4631
      %v4668 = vunpack.c.l.b16 %v4632
      %v4669 = vunpack.c.l.b16 %v4633
      %v4670 = vunpack.c.l.b16 %v4634
      %v4671 = vunpack.c.l.b16 %v4635
      %v4672 = vunpack.c.l.b16 %v4636
      %v4673 = vunpack.c.l.b16 %v4637
      %v4674 = vunpack.c.l.b16 %v4638
      %v4675 = vunpack.c.l.b16 %v4639
      %v4676 = vunpack.c.l.b16 %v4640
      %v4677 = vunpack.c.l.b16 %v4641
      %v4678 = vunpack.c.l.b16 %v4642
      %v4679 = vpack.c.b16 %v4664, %v4663
      %v4680 = vpack.c.b16 %v4666, %v4665
      %v4681 = vpack.c.b16 %v4668, %v4667
      %v4682 = vpack.c.b16 %v4670, %v4669
      %v4683 = vpack.c.b16 %v4672, %v4671
      %v4684 = vpack.c.b16 %v4674, %v4673
      %v4685 = vpack.c.b16 %v4676, %v4675
      %v4686 = vpack.c.b16 %v4678, %v4677
      %v4688 = vshrl.u32 %v4679, 16
      %v4690 = vshll.u32 %v4679, 16
      %v4692 = vrot.slane %v4690, 1
      %v4693 = vor.u32 %v4688, %v4692
      %v4695 = vshll.u32 %v4680, 16
      %v4697 = vrot.slane %v4695, 1
      %v4698 = vsel %vm1166, %v4693, %v4697
      %v4699 = vshrl.u32 %v4680, 16
      %v4701 = vor.u32 %v4699, %v4697
      %v4703 = vshll.u32 %v4681, 16
      %v4705 = vrot.slane %v4703, 1
      %v4706 = vsel %vm1166, %v4701, %v4705
      %v4707 = vshrl.u32 %v4681, 16
      %v4709 = vor.u32 %v4707, %v4705
      %v4711 = vshll.u32 %v4682, 16
      %v4713 = vrot.slane %v4711, 1
      %v4714 = vsel %vm1166, %v4709, %v4713
      %v4715 = vshrl.u32 %v4682, 16
      %v4717 = vor.u32 %v4715, %v4713
      %v4719 = vshll.u32 %v4683, 16
      %v4721 = vrot.slane %v4719, 1
      %v4722 = vsel %vm1166, %v4717, %v4721
      %v4723 = vshrl.u32 %v4683, 16
      %v4725 = vor.u32 %v4723, %v4721
      %v4727 = vshll.u32 %v4684, 16
      %v4729 = vrot.slane %v4727, 1
      %v4730 = vsel %vm1166, %v4725, %v4729
      %v4731 = vshrl.u32 %v4684, 16
      %v4733 = vor.u32 %v4731, %v4729
      %v4735 = vshll.u32 %v4685, 16
      %v4737 = vrot.slane %v4735, 1
      %v4738 = vsel %vm1166, %v4733, %v4737
      %v4739 = vshrl.u32 %v4685, 16
      %v4741 = vor.u32 %v4739, %v4737
      %v4743 = vshll.u32 %v4686, 16
      %v4745 = vrot.slane %v4743, 1
      %v4746 = vsel %vm1166, %v4741, %v4745
      %v4747 = vshrl.u32 %v4686, 16
      %v4749 = vor.u32 %v4747, %v4745
      %v4754 = vunpack.c.l.b16 %v4643
      %v4755 = vunpack.c.l.b16 %v4644
      %v4756 = vunpack.c.l.b16 %v4645
      %v4757 = vunpack.c.l.b16 %v4646
      %v4758 = vpack.c.b16 %v4755, %v4754
      %v4759 = vpack.c.b16 %v4757, %v4756
      %v4763 = vsel %vm3968, %v4698, 0
      %v4766 = vsel %vm3968, %v4706, 0
      %v4769 = vsel %vm3968, %v4714, 0
      %v4772 = vsel %vm3968, %v4722, 0
      %v4775 = vsel %vm3968, %v4730, 0
      %v4778 = vsel %vm3968, %v4738, 0
      %v4781 = vsel %vm3968, %v4746, 0
      %v4784 = vsel %vm3968, %v4749, 0
      %4786 = vmatpush.bf16.msra.mxu0 0
      %4787 = vmatpush.bf16.msra.mxu0 0
      %4788 = vmatpush.bf16.msra.mxu0 0
      %4789 = vmatpush.bf16.msra.mxu0 0
      %4790 = vmatpush.bf16.msra.mxu0 0
      %4791 = vmatpush.bf16.msra.mxu0 0
      %4792 = vmatpush.bf16.msra.mxu0 %v4759
      %4793 = vmatpush.bf16.msra.mxu0 %v4758
      %4794 = vmatmul.bf16.gmra.mxu0 %v4763
      %v4795 = vpop.f32.mrf.mxu0
      %v4796 = vadd.f32 0.0, %v4795
      %v4797 = vpop.f32.mrf.mxu0
      %v4798 = vadd.f32 0.0, %v4797
      %4799 = vmatmul.bf16.gmra.mxu0 %v4766
      %v4800 = vpop.f32.mrf.mxu0
      %v4801 = vadd.f32 0.0, %v4800
      %v4802 = vpop.f32.mrf.mxu0
      %v4803 = vadd.f32 0.0, %v4802
      %4804 = vmatmul.bf16.gmra.mxu0 %v4769
      %v4805 = vpop.f32.mrf.mxu0
      %v4806 = vadd.f32 0.0, %v4805
      %v4807 = vpop.f32.mrf.mxu0
      %v4808 = vadd.f32 0.0, %v4807
      %4809 = vmatmul.bf16.gmra.mxu0 %v4772
      %v4810 = vpop.f32.mrf.mxu0
      %v4811 = vadd.f32 0.0, %v4810
      %v4812 = vpop.f32.mrf.mxu0
      %v4813 = vadd.f32 0.0, %v4812
      %4814 = vmatmul.bf16.gmra.mxu0 %v4775
      %v4815 = vpop.f32.mrf.mxu0
      %v4816 = vadd.f32 0.0, %v4815
      %v4817 = vpop.f32.mrf.mxu0
      %v4818 = vadd.f32 0.0, %v4817
      %4819 = vmatmul.bf16.gmra.mxu0 %v4778
      %v4820 = vpop.f32.mrf.mxu0
      %v4821 = vadd.f32 0.0, %v4820
      %v4822 = vpop.f32.mrf.mxu0
      %v4823 = vadd.f32 0.0, %v4822
      %4824 = vmatmul.bf16.gmra.mxu0 %v4781
      %v4825 = vpop.f32.mrf.mxu0
      %v4826 = vadd.f32 0.0, %v4825
      %v4827 = vpop.f32.mrf.mxu0
      %v4828 = vadd.f32 0.0, %v4827
      %4829 = vmatmul.bf16.gmra.mxu0 %v4784
      %v4830 = vpop.f32.mrf.mxu0
      %v4831 = vadd.f32 0.0, %v4830
      %v4832 = vpop.f32.mrf.mxu0
      %4833 = vdwg.mxu0
      %v4834 = vadd.f32 %v4612, %v4796
      %v4835 = vadd.f32 %v4613, %v4798
      %v4836 = vadd.f32 %v4614, %v4801
      %v4837 = vadd.f32 %v4615, %v4803
      %v4838 = vadd.f32 %v4616, %v4806
      %v4839 = vadd.f32 %v4617, %v4808
      %v4840 = vadd.f32 %v4618, %v4811
      %v4841 = vadd.f32 %v4619, %v4813
      %v4842 = vadd.f32 %v4620, %v4816
      %v4843 = vadd.f32 %v4621, %v4818
      %v4844 = vadd.f32 %v4622, %v4821
      %v4845 = vadd.f32 %v4623, %v4823
      %v4846 = vadd.f32 %v4624, %v4826
      %v4847 = vadd.f32 %v4625, %v4828
      %v4848 = vadd.f32 %v4626, %v4831
      %v4849 = vld [vmem:[%s1996 + $0x4] sm:$0xc]
      %v4850 = vld [vmem:[%s1996 + $0x8] sm:$0xf]
      %v4851 = vld [vmem:[%s1996 + $0xc] sm:$0xf]
      %v4852 = vld [vmem:[%s1996 + $0x10] sm:$0xf]
      %v4853 = vld [vmem:[%s1996 + $0x14] sm:$0xf]
      %v4854 = vld [vmem:[%s1996 + $0x18] sm:$0xf]
      %v4855 = vld [vmem:[%s1996 + $0x1c] sm:$0xf]
      %v4856 = vld [vmem:[%s1996 + $0x20] sm:$0xf]
      %v4857 = vld [vmem:[%s1996 + $0x24] sm:$0xf]
      %v4858 = vld [vmem:[%s1996 + $0x28] sm:$0xf]
      %v4859 = vld [vmem:[%s1996 + $0x2c] sm:$0xf]
      %v4860 = vld [vmem:[%s1996 + $0x30] sm:$0xf]
      %v4861 = vld [vmem:[%s1996 + $0x34] sm:$0xf]
      %v4862 = vld [vmem:[%s1996 + $0x38] sm:$0xf]
      %v4863 = vld [vmem:[%s1996 + $0x3c] sm:$0xf]
      %v4864 = vld [vmem:[%s1996 + $0x40] sm:$0x3]
      %v4865 = vld [vmem:[%s3 + $0x60] sm:$0xf]
      %v4866 = vld [vmem:[%s3 + $0x64] sm:$0xf]
      %v4867 = vld [vmem:[%s3 + $0x68] sm:$0xf]
      %v4868 = vld [vmem:[%s3 + $0x6c] sm:$0xf]
      %v4885 = vunpack.c.l.b16 %v4849
      %v4886 = vunpack.c.l.b16 %v4850
      %v4887 = vunpack.c.l.b16 %v4851
      %v4888 = vunpack.c.l.b16 %v4852
      %v4889 = vunpack.c.l.b16 %v4853
      %v4890 = vunpack.c.l.b16 %v4854
      %v4891 = vunpack.c.l.b16 %v4855
      %v4892 = vunpack.c.l.b16 %v4856
      %v4893 = vunpack.c.l.b16 %v4857
      %v4894 = vunpack.c.l.b16 %v4858
      %v4895 = vunpack.c.l.b16 %v4859
      %v4896 = vunpack.c.l.b16 %v4860
      %v4897 = vunpack.c.l.b16 %v4861
      %v4898 = vunpack.c.l.b16 %v4862
      %v4899 = vunpack.c.l.b16 %v4863
      %v4900 = vunpack.c.l.b16 %v4864
      %v4901 = vpack.c.b16 %v4886, %v4885
      %v4902 = vpack.c.b16 %v4888, %v4887
      %v4903 = vpack.c.b16 %v4890, %v4889
      %v4904 = vpack.c.b16 %v4892, %v4891
      %v4905 = vpack.c.b16 %v4894, %v4893
      %v4906 = vpack.c.b16 %v4896, %v4895
      %v4907 = vpack.c.b16 %v4898, %v4897
      %v4908 = vpack.c.b16 %v4900, %v4899
      %v4909 = vrot.slane %v4901, 2
      %v4910 = vrot.slane %v4902, 2
      %v4911 = vsel %vm2424, %v4909, %v4910
      %v4912 = vrot.slane %v4903, 2
      %v4913 = vsel %vm2424, %v4910, %v4912
      %v4914 = vrot.slane %v4904, 2
      %v4915 = vsel %vm2424, %v4912, %v4914
      %v4916 = vrot.slane %v4905, 2
      %v4917 = vsel %vm2424, %v4914, %v4916
      %v4918 = vrot.slane %v4906, 2
      %v4919 = vsel %vm2424, %v4916, %v4918
      %v4920 = vrot.slane %v4907, 2
      %v4921 = vsel %vm2424, %v4918, %v4920
      %v4922 = vrot.slane %v4908, 2
      %v4923 = vsel %vm2424, %v4920, %v4922
      %v4928 = vunpack.c.l.b16 %v4865
      %v4929 = vunpack.c.l.b16 %v4866
      %v4930 = vunpack.c.l.b16 %v4867
      %v4931 = vunpack.c.l.b16 %v4868
      %v4932 = vpack.c.b16 %v4929, %v4928
      %v4933 = vpack.c.b16 %v4931, %v4930
      %v4937 = vsel %vm3968, %v4911, 0
      %v4940 = vsel %vm3968, %v4913, 0
      %v4943 = vsel %vm3968, %v4915, 0
      %v4946 = vsel %vm3968, %v4917, 0
      %v4949 = vsel %vm3968, %v4919, 0
      %v4952 = vsel %vm3968, %v4921, 0
      %v4955 = vsel %vm3968, %v4923, 0
      %v4958 = vsel %vm3968, %v4922, 0
      %4960 = vmatpush.bf16.msra.mxu0 0
      %4961 = vmatpush.bf16.msra.mxu0 0
      %4962 = vmatpush.bf16.msra.mxu0 0
      %4963 = vmatpush.bf16.msra.mxu0 0
      %4964 = vmatpush.bf16.msra.mxu0 0
      %4965 = vmatpush.bf16.msra.mxu0 0
      %4966 = vmatpush.bf16.msra.mxu0 %v4933
      %4967 = vmatpush.bf16.msra.mxu0 %v4932
      %4968 = vmatmul.bf16.gmra.mxu0 %v4937
      %v4969 = vpop.f32.mrf.mxu0
      %v4970 = vadd.f32 0.0, %v4969
      %v4971 = vpop.f32.mrf.mxu0
      %v4972 = vadd.f32 0.0, %v4971
      %4973 = vmatmul.bf16.gmra.mxu0 %v4940
      %v4974 = vpop.f32.mrf.mxu0
      %v4975 = vadd.f32 0.0, %v4974
      %v4976 = vpop.f32.mrf.mxu0
      %v4977 = vadd.f32 0.0, %v4976
      %4978 = vmatmul.bf16.gmra.mxu0 %v4943
      %v4979 = vpop.f32.mrf.mxu0
      %v4980 = vadd.f32 0.0, %v4979
      %v4981 = vpop.f32.mrf.mxu0
      %v4982 = vadd.f32 0.0, %v4981
      %4983 = vmatmul.bf16.gmra.mxu0 %v4946
      %v4984 = vpop.f32.mrf.mxu0
      %v4985 = vadd.f32 0.0, %v4984
      %v4986 = vpop.f32.mrf.mxu0
      %v4987 = vadd.f32 0.0, %v4986
      %4988 = vmatmul.bf16.gmra.mxu0 %v4949
      %v4989 = vpop.f32.mrf.mxu0
      %v4990 = vadd.f32 0.0, %v4989
      %v4991 = vpop.f32.mrf.mxu0
      %v4992 = vadd.f32 0.0, %v4991
      %4993 = vmatmul.bf16.gmra.mxu0 %v4952
      %v4994 = vpop.f32.mrf.mxu0
      %v4995 = vadd.f32 0.0, %v4994
      %v4996 = vpop.f32.mrf.mxu0
      %v4997 = vadd.f32 0.0, %v4996
      %4998 = vmatmul.bf16.gmra.mxu0 %v4955
      %v4999 = vpop.f32.mrf.mxu0
      %v5000 = vadd.f32 0.0, %v4999
      %v5001 = vpop.f32.mrf.mxu0
      %v5002 = vadd.f32 0.0, %v5001
      %5003 = vmatmul.bf16.gmra.mxu0 %v4958
      %v5004 = vpop.f32.mrf.mxu0
      %v5005 = vadd.f32 0.0, %v5004
      %v5006 = vpop.f32.mrf.mxu0
      %5007 = vdwg.mxu0
      %v5008 = vadd.f32 %v4834, %v4970
      %v5009 = vadd.f32 %v4835, %v4972
      %v5010 = vadd.f32 %v4836, %v4975
      %v5011 = vadd.f32 %v4837, %v4977
      %v5012 = vadd.f32 %v4838, %v4980
      %v5013 = vadd.f32 %v4839, %v4982
      %v5014 = vadd.f32 %v4840, %v4985
      %v5015 = vadd.f32 %v4841, %v4987
      %v5016 = vadd.f32 %v4842, %v4990
      %v5017 = vadd.f32 %v4843, %v4992
      %v5018 = vadd.f32 %v4844, %v4995
      %v5019 = vadd.f32 %v4845, %v4997
      %v5020 = vadd.f32 %v4846, %v5000
      %v5021 = vadd.f32 %v4847, %v5002
      %v5022 = vadd.f32 %v4848, %v5005
      %v5023 = vld [vmem:[%s1996 + $0x40] sm:$0x7]
      %v5024 = vld [vmem:[%s3 + $0x70] sm:$0xf]
      %v5025 = vld [vmem:[%s3 + $0x74] sm:$0xf]
      %v5026 = vld [vmem:[%s3 + $0x78] sm:$0xf]
      %v5027 = vld [vmem:[%s3 + $0x7c] sm:$0xf]
      %v5029 = vunpack.c.l.b16 %v5023
      %v5030 = vpack.c.b16 %v5029, %v4899
      %v5032 = vshrl.u32 %v4901, 16
      %v5034 = vrot.slane %v5032, 2
      %v5035 = vshll.u32 %v4901, 16
      %v5037 = vrot.slane %v5035, 3
      %v5038 = vor.u32 %v5034, %v5037
      %v5040 = vshrl.u32 %v4902, 16
      %v5042 = vrot.slane %v5040, 2
      %v5043 = vshll.u32 %v4902, 16
      %v5045 = vrot.slane %v5043, 3
      %v5046 = vor.u32 %v5042, %v5045
      %v5047 = vsel %vm3545, %v5038, %v5046
      %v5049 = vshrl.u32 %v4903, 16
      %v5051 = vrot.slane %v5049, 2
      %v5052 = vshll.u32 %v4903, 16
      %v5054 = vrot.slane %v5052, 3
      %v5055 = vor.u32 %v5051, %v5054
      %v5056 = vsel %vm3545, %v5046, %v5055
      %v5058 = vshrl.u32 %v4904, 16
      %v5060 = vrot.slane %v5058, 2
      %v5061 = vshll.u32 %v4904, 16
      %v5063 = vrot.slane %v5061, 3
      %v5064 = vor.u32 %v5060, %v5063
      %v5065 = vsel %vm3545, %v5055, %v5064
      %v5067 = vshrl.u32 %v4905, 16
      %v5069 = vrot.slane %v5067, 2
      %v5070 = vshll.u32 %v4905, 16
      %v5072 = vrot.slane %v5070, 3
      %v5073 = vor.u32 %v5069, %v5072
      %v5074 = vsel %vm3545, %v5064, %v5073
      %v5076 = vshrl.u32 %v4906, 16
      %v5078 = vrot.slane %v5076, 2
      %v5079 = vshll.u32 %v4906, 16
      %v5081 = vrot.slane %v5079, 3
      %v5082 = vor.u32 %v5078, %v5081
      %v5083 = vsel %vm3545, %v5073, %v5082
      %v5085 = vshrl.u32 %v4907, 16
      %v5087 = vrot.slane %v5085, 2
      %v5088 = vshll.u32 %v4907, 16
      %v5090 = vrot.slane %v5088, 3
      %v5091 = vor.u32 %v5087, %v5090
      %v5092 = vsel %vm3545, %v5082, %v5091
      %v5094 = vshrl.u32 %v5030, 16
      %v5096 = vrot.slane %v5094, 2
      %v5097 = vshll.u32 %v5030, 16
      %v5099 = vrot.slane %v5097, 3
      %v5100 = vor.u32 %v5096, %v5099
      %v5101 = vsel %vm3545, %v5091, %v5100
      %v5106 = vunpack.c.l.b16 %v5024
      %v5107 = vunpack.c.l.b16 %v5025
      %v5108 = vunpack.c.l.b16 %v5026
      %v5109 = vunpack.c.l.b16 %v5027
      %v5110 = vpack.c.b16 %v5107, %v5106
      %v5111 = vpack.c.b16 %v5109, %v5108
      %v5115 = vsel %vm3968, %v5047, 0
      %v5118 = vsel %vm3968, %v5056, 0
      %v5121 = vsel %vm3968, %v5065, 0
      %v5124 = vsel %vm3968, %v5074, 0
      %v5127 = vsel %vm3968, %v5083, 0
      %v5130 = vsel %vm3968, %v5092, 0
      %v5133 = vsel %vm3968, %v5101, 0
      %v5136 = vsel %vm3968, %v5100, 0
      %5138 = vmatpush.bf16.msra.mxu0 0
      %5139 = vmatpush.bf16.msra.mxu0 0
      %5140 = vmatpush.bf16.msra.mxu0 0
      %5141 = vmatpush.bf16.msra.mxu0 0
      %5142 = vmatpush.bf16.msra.mxu0 0
      %5143 = vmatpush.bf16.msra.mxu0 0
      %5144 = vmatpush.bf16.msra.mxu0 %v5111
      %5145 = vmatpush.bf16.msra.mxu0 %v5110
      %5146 = vmatmul.bf16.gmra.mxu0 %v5115
      %v5147 = vpop.f32.mrf.mxu0
      %v5148 = vadd.f32 0.0, %v5147
      %v5149 = vpop.f32.mrf.mxu0
      %v5150 = vadd.f32 0.0, %v5149
      %5151 = vmatmul.bf16.gmra.mxu0 %v5118
      %v5152 = vpop.f32.mrf.mxu0
      %v5153 = vadd.f32 0.0, %v5152
      %v5154 = vpop.f32.mrf.mxu0
      %v5155 = vadd.f32 0.0, %v5154
      %5156 = vmatmul.bf16.gmra.mxu0 %v5121
      %v5157 = vpop.f32.mrf.mxu0
      %v5158 = vadd.f32 0.0, %v5157
      %v5159 = vpop.f32.mrf.mxu0
      %v5160 = vadd.f32 0.0, %v5159
      %5161 = vmatmul.bf16.gmra.mxu0 %v5124
      %v5162 = vpop.f32.mrf.mxu0
      %v5163 = vadd.f32 0.0, %v5162
      %v5164 = vpop.f32.mrf.mxu0
      %v5165 = vadd.f32 0.0, %v5164
      %5166 = vmatmul.bf16.gmra.mxu0 %v5127
      %v5167 = vpop.f32.mrf.mxu0
      %v5168 = vadd.f32 0.0, %v5167
      %v5169 = vpop.f32.mrf.mxu0
      %v5170 = vadd.f32 0.0, %v5169
      %5171 = vmatmul.bf16.gmra.mxu0 %v5130
      %v5172 = vpop.f32.mrf.mxu0
      %v5173 = vadd.f32 0.0, %v5172
      %v5174 = vpop.f32.mrf.mxu0
      %v5175 = vadd.f32 0.0, %v5174
      %5176 = vmatmul.bf16.gmra.mxu0 %v5133
      %v5177 = vpop.f32.mrf.mxu0
      %v5178 = vadd.f32 0.0, %v5177
      %v5179 = vpop.f32.mrf.mxu0
      %v5180 = vadd.f32 0.0, %v5179
      %5181 = vmatmul.bf16.gmra.mxu0 %v5136
      %v5182 = vpop.f32.mrf.mxu0
      %v5183 = vadd.f32 0.0, %v5182
      %v5184 = vpop.f32.mrf.mxu0
      %5185 = vdwg.mxu0
      %v5186 = vadd.f32 %v5008, %v5148
      %v5187 = vadd.f32 %v5009, %v5150
      %v5188 = vadd.f32 %v5010, %v5153
      %v5189 = vadd.f32 %v5011, %v5155
      %v5190 = vadd.f32 %v5012, %v5158
      %v5191 = vadd.f32 %v5013, %v5160
      %v5192 = vadd.f32 %v5014, %v5163
      %v5193 = vadd.f32 %v5015, %v5165
      %v5194 = vadd.f32 %v5016, %v5168
      %v5195 = vadd.f32 %v5017, %v5170
      %v5196 = vadd.f32 %v5018, %v5173
      %v5197 = vadd.f32 %v5019, %v5175
      %v5198 = vadd.f32 %v5020, %v5178
      %v5199 = vadd.f32 %v5021, %v5180
      %v5200 = vadd.f32 %v5022, %v5183
      %v5201 = vld [vmem:[%s2828] sm:$0xf]
      %v5202 = vld [vmem:[%s2828 + $0x4] sm:$0xf]
      %v5203 = vld [vmem:[%s2828 + $0x8] sm:$0xf]
      %v5204 = vld [vmem:[%s2828 + $0xc] sm:$0xf]
      %v5205 = vld [vmem:[%s2828 + $0x10] sm:$0xf]
      %v5206 = vld [vmem:[%s2828 + $0x14] sm:$0xf]
      %v5207 = vld [vmem:[%s2828 + $0x18] sm:$0xf]
      %v5208 = vld [vmem:[%s2828 + $0x1c] sm:$0xf]
      %v5209 = vld [vmem:[%s2828 + $0x20] sm:$0xf]
      %v5210 = vld [vmem:[%s2828 + $0x24] sm:$0xf]
      %v5211 = vld [vmem:[%s2828 + $0x28] sm:$0xf]
      %v5212 = vld [vmem:[%s2828 + $0x2c] sm:$0xf]
      %v5213 = vld [vmem:[%s2828 + $0x30] sm:$0xf]
      %v5214 = vld [vmem:[%s2828 + $0x34] sm:$0xf]
      %v5215 = vld [vmem:[%s2828 + $0x38] sm:$0xf]
      %v5216 = vld [vmem:[%s3 + $0x80] sm:$0xf]
      %v5217 = vld [vmem:[%s3 + $0x84] sm:$0xf]
      %v5218 = vld [vmem:[%s3 + $0x88] sm:$0xf]
      %v5219 = vld [vmem:[%s3 + $0x8c] sm:$0xf]
      %v5235 = vunpack.c.l.b16 %v5201
      %v5236 = vunpack.c.l.b16 %v5202
      %v5237 = vunpack.c.l.b16 %v5203
      %v5238 = vunpack.c.l.b16 %v5204
      %v5239 = vunpack.c.l.b16 %v5205
      %v5240 = vunpack.c.l.b16 %v5206
      %v5241 = vunpack.c.l.b16 %v5207
      %v5242 = vunpack.c.l.b16 %v5208
      %v5243 = vunpack.c.l.b16 %v5209
      %v5244 = vunpack.c.l.b16 %v5210
      %v5245 = vunpack.c.l.b16 %v5211
      %v5246 = vunpack.c.l.b16 %v5212
      %v5247 = vunpack.c.l.b16 %v5213
      %v5248 = vunpack.c.l.b16 %v5214
      %v5249 = vunpack.c.l.b16 %v5215
      %v5250 = vpack.c.b16 %v5236, %v5235
      %v5251 = vpack.c.b16 %v5238, %v5237
      %v5252 = vpack.c.b16 %v5240, %v5239
      %v5253 = vpack.c.b16 %v5242, %v5241
      %v5254 = vpack.c.b16 %v5244, %v5243
      %v5255 = vpack.c.b16 %v5246, %v5245
      %v5256 = vpack.c.b16 %v5248, %v5247
      %v5257 = vpack.c.b16 %v5249, %v5249
      %v5262 = vunpack.c.l.b16 %v5216
      %v5263 = vunpack.c.l.b16 %v5217
      %v5264 = vunpack.c.l.b16 %v5218
      %v5265 = vunpack.c.l.b16 %v5219
      %v5266 = vpack.c.b16 %v5263, %v5262
      %v5267 = vpack.c.b16 %v5265, %v5264
      %v5271 = vsel %vm3968, %v5250, 0
      %v5274 = vsel %vm3968, %v5251, 0
      %v5277 = vsel %vm3968, %v5252, 0
      %v5280 = vsel %vm3968, %v5253, 0
      %v5283 = vsel %vm3968, %v5254, 0
      %v5286 = vsel %vm3968, %v5255, 0
      %v5289 = vsel %vm3968, %v5256, 0
      %v5292 = vsel %vm3968, %v5257, 0
      %5294 = vmatpush.bf16.msra.mxu0 0
      %5295 = vmatpush.bf16.msra.mxu0 0
      %5296 = vmatpush.bf16.msra.mxu0 0
      %5297 = vmatpush.bf16.msra.mxu0 0
      %5298 = vmatpush.bf16.msra.mxu0 0
      %5299 = vmatpush.bf16.msra.mxu0 0
      %5300 = vmatpush.bf16.msra.mxu0 %v5267
      %5301 = vmatpush.bf16.msra.mxu0 %v5266
      %5302 = vmatmul.bf16.gmra.mxu0 %v5271
      %v5303 = vpop.f32.mrf.mxu0
      %v5304 = vadd.f32 0.0, %v5303
      %v5305 = vpop.f32.mrf.mxu0
      %v5306 = vadd.f32 0.0, %v5305
      %5307 = vmatmul.bf16.gmra.mxu0 %v5274
      %v5308 = vpop.f32.mrf.mxu0
      %v5309 = vadd.f32 0.0, %v5308
      %v5310 = vpop.f32.mrf.mxu0
      %v5311 = vadd.f32 0.0, %v5310
      %5312 = vmatmul.bf16.gmra.mxu0 %v5277
      %v5313 = vpop.f32.mrf.mxu0
      %v5314 = vadd.f32 0.0, %v5313
      %v5315 = vpop.f32.mrf.mxu0
      %v5316 = vadd.f32 0.0, %v5315
      %5317 = vmatmul.bf16.gmra.mxu0 %v5280
      %v5318 = vpop.f32.mrf.mxu0
      %v5319 = vadd.f32 0.0, %v5318
      %v5320 = vpop.f32.mrf.mxu0
      %v5321 = vadd.f32 0.0, %v5320
      %5322 = vmatmul.bf16.gmra.mxu0 %v5283
      %v5323 = vpop.f32.mrf.mxu0
      %v5324 = vadd.f32 0.0, %v5323
      %v5325 = vpop.f32.mrf.mxu0
      %v5326 = vadd.f32 0.0, %v5325
      %5327 = vmatmul.bf16.gmra.mxu0 %v5286
      %v5328 = vpop.f32.mrf.mxu0
      %v5329 = vadd.f32 0.0, %v5328
      %v5330 = vpop.f32.mrf.mxu0
      %v5331 = vadd.f32 0.0, %v5330
      %5332 = vmatmul.bf16.gmra.mxu0 %v5289
      %v5333 = vpop.f32.mrf.mxu0
      %v5334 = vadd.f32 0.0, %v5333
      %v5335 = vpop.f32.mrf.mxu0
      %v5336 = vadd.f32 0.0, %v5335
      %5337 = vmatmul.bf16.gmra.mxu0 %v5292
      %v5338 = vpop.f32.mrf.mxu0
      %v5339 = vadd.f32 0.0, %v5338
      %v5340 = vpop.f32.mrf.mxu0
      %5341 = vdwg.mxu0
      %v5342 = vadd.f32 %v5186, %v5304
      %v5343 = vadd.f32 %v5187, %v5306
      %v5344 = vadd.f32 %v5188, %v5309
      %v5345 = vadd.f32 %v5189, %v5311
      %v5346 = vadd.f32 %v5190, %v5314
      %v5347 = vadd.f32 %v5191, %v5316
      %v5348 = vadd.f32 %v5192, %v5319
      %v5349 = vadd.f32 %v5193, %v5321
      %v5350 = vadd.f32 %v5194, %v5324
      %v5351 = vadd.f32 %v5195, %v5326
      %v5352 = vadd.f32 %v5196, %v5329
      %v5353 = vadd.f32 %v5197, %v5331
      %v5354 = vadd.f32 %v5198, %v5334
      %v5355 = vadd.f32 %v5199, %v5336
      %v5356 = vadd.f32 %v5200, %v5339
      %v5357 = vld [vmem:[%s2828] sm:$0xf]
      %v5358 = vld [vmem:[%s2828 + $0x4] sm:$0xf]
      %v5359 = vld [vmem:[%s2828 + $0x8] sm:$0xf]
      %v5360 = vld [vmem:[%s2828 + $0xc] sm:$0xf]
      %v5361 = vld [vmem:[%s2828 + $0x10] sm:$0xf]
      %v5362 = vld [vmem:[%s2828 + $0x14] sm:$0xf]
      %v5363 = vld [vmem:[%s2828 + $0x18] sm:$0xf]
      %v5364 = vld [vmem:[%s2828 + $0x1c] sm:$0xf]
      %v5365 = vld [vmem:[%s2828 + $0x20] sm:$0xf]
      %v5366 = vld [vmem:[%s2828 + $0x24] sm:$0xf]
      %v5367 = vld [vmem:[%s2828 + $0x28] sm:$0xf]
      %v5368 = vld [vmem:[%s2828 + $0x2c] sm:$0xf]
      %v5369 = vld [vmem:[%s2828 + $0x30] sm:$0xf]
      %v5370 = vld [vmem:[%s2828 + $0x34] sm:$0xf]
      %v5371 = vld [vmem:[%s2828 + $0x38] sm:$0xf]
      %v5372 = vld [vmem:[%s2828 + $0x3c] sm:$0x1]
      %v5373 = vld [vmem:[%s3 + $0x90] sm:$0xf]
      %v5374 = vld [vmem:[%s3 + $0x94] sm:$0xf]
      %v5375 = vld [vmem:[%s3 + $0x98] sm:$0xf]
      %v5376 = vld [vmem:[%s3 + $0x9c] sm:$0xf]
      %v5393 = vunpack.c.l.b16 %v5357
      %v5394 = vunpack.c.l.b16 %v5358
      %v5395 = vunpack.c.l.b16 %v5359
      %v5396 = vunpack.c.l.b16 %v5360
      %v5397 = vunpack.c.l.b16 %v5361
      %v5398 = vunpack.c.l.b16 %v5362
      %v5399 = vunpack.c.l.b16 %v5363
      %v5400 = vunpack.c.l.b16 %v5364
      %v5401 = vunpack.c.l.b16 %v5365
      %v5402 = vunpack.c.l.b16 %v5366
      %v5403 = vunpack.c.l.b16 %v5367
      %v5404 = vunpack.c.l.b16 %v5368
      %v5405 = vunpack.c.l.b16 %v5369
      %v5406 = vunpack.c.l.b16 %v5370
      %v5407 = vunpack.c.l.b16 %v5371
      %v5408 = vunpack.c.l.b16 %v5372
      %v5409 = vpack.c.b16 %v5394, %v5393
      %v5410 = vpack.c.b16 %v5396, %v5395
      %v5411 = vpack.c.b16 %v5398, %v5397
      %v5412 = vpack.c.b16 %v5400, %v5399
      %v5413 = vpack.c.b16 %v5402, %v5401
      %v5414 = vpack.c.b16 %v5404, %v5403
      %v5415 = vpack.c.b16 %v5406, %v5405
      %v5416 = vpack.c.b16 %v5408, %v5407
      %v5418 = vshrl.u32 %v5409, 16
      %v5420 = vshll.u32 %v5409, 16
      %v5422 = vrot.slane %v5420, 1
      %v5423 = vor.u32 %v5418, %v5422
      %v5425 = vshll.u32 %v5410, 16
      %v5427 = vrot.slane %v5425, 1
      %v5428 = vsel %vm1166, %v5423, %v5427
      %v5429 = vshrl.u32 %v5410, 16
      %v5431 = vor.u32 %v5429, %v5427
      %v5433 = vshll.u32 %v5411, 16
      %v5435 = vrot.slane %v5433, 1
      %v5436 = vsel %vm1166, %v5431, %v5435
      %v5437 = vshrl.u32 %v5411, 16
      %v5439 = vor.u32 %v5437, %v5435
      %v5441 = vshll.u32 %v5412, 16
      %v5443 = vrot.slane %v5441, 1
      %v5444 = vsel %vm1166, %v5439, %v5443
      %v5445 = vshrl.u32 %v5412, 16
      %v5447 = vor.u32 %v5445, %v5443
      %v5449 = vshll.u32 %v5413, 16
      %v5451 = vrot.slane %v5449, 1
      %v5452 = vsel %vm1166, %v5447, %v5451
      %v5453 = vshrl.u32 %v5413, 16
      %v5455 = vor.u32 %v5453, %v5451
      %v5457 = vshll.u32 %v5414, 16
      %v5459 = vrot.slane %v5457, 1
      %v5460 = vsel %vm1166, %v5455, %v5459
      %v5461 = vshrl.u32 %v5414, 16
      %v5463 = vor.u32 %v5461, %v5459
      %v5465 = vshll.u32 %v5415, 16
      %v5467 = vrot.slane %v5465, 1
      %v5468 = vsel %vm1166, %v5463, %v5467
      %v5469 = vshrl.u32 %v5415, 16
      %v5471 = vor.u32 %v5469, %v5467
      %v5473 = vshll.u32 %v5416, 16
      %v5475 = vrot.slane %v5473, 1
      %v5476 = vsel %vm1166, %v5471, %v5475
      %v5477 = vshrl.u32 %v5416, 16
      %v5479 = vor.u32 %v5477, %v5475
      %v5484 = vunpack.c.l.b16 %v5373
      %v5485 = vunpack.c.l.b16 %v5374
      %v5486 = vunpack.c.l.b16 %v5375
      %v5487 = vunpack.c.l.b16 %v5376
      %v5488 = vpack.c.b16 %v5485, %v5484
      %v5489 = vpack.c.b16 %v5487, %v5486
      %v5493 = vsel %vm3968, %v5428, 0
      %v5496 = vsel %vm3968, %v5436, 0
      %v5499 = vsel %vm3968, %v5444, 0
      %v5502 = vsel %vm3968, %v5452, 0
      %v5505 = vsel %vm3968, %v5460, 0
      %v5508 = vsel %vm3968, %v5468, 0
      %v5511 = vsel %vm3968, %v5476, 0
      %v5514 = vsel %vm3968, %v5479, 0
      %5516 = vmatpush.bf16.msra.mxu0 0
      %5517 = vmatpush.bf16.msra.mxu0 0
      %5518 = vmatpush.bf16.msra.mxu0 0
      %5519 = vmatpush.bf16.msra.mxu0 0
      %5520 = vmatpush.bf16.msra.mxu0 0
      %5521 = vmatpush.bf16.msra.mxu0 0
      %5522 = vmatpush.bf16.msra.mxu0 %v5489
      %5523 = vmatpush.bf16.msra.mxu0 %v5488
      %5524 = vmatmul.bf16.gmra.mxu0 %v5493
      %v5525 = vpop.f32.mrf.mxu0
      %v5526 = vadd.f32 0.0, %v5525
      %v5527 = vpop.f32.mrf.mxu0
      %v5528 = vadd.f32 0.0, %v5527
      %5529 = vmatmul.bf16.gmra.mxu0 %v5496
      %v5530 = vpop.f32.mrf.mxu0
      %v5531 = vadd.f32 0.0, %v5530
      %v5532 = vpop.f32.mrf.mxu0
      %v5533 = vadd.f32 0.0, %v5532
      %5534 = vmatmul.bf16.gmra.mxu0 %v5499
      %v5535 = vpop.f32.mrf.mxu0
      %v5536 = vadd.f32 0.0, %v5535
      %v5537 = vpop.f32.mrf.mxu0
      %v5538 = vadd.f32 0.0, %v5537
      %5539 = vmatmul.bf16.gmra.mxu0 %v5502
      %v5540 = vpop.f32.mrf.mxu0
      %v5541 = vadd.f32 0.0, %v5540
      %v5542 = vpop.f32.mrf.mxu0
      %v5543 = vadd.f32 0.0, %v5542
      %5544 = vmatmul.bf16.gmra.mxu0 %v5505
      %v5545 = vpop.f32.mrf.mxu0
      %v5546 = vadd.f32 0.0, %v5545
      %v5547 = vpop.f32.mrf.mxu0
      %v5548 = vadd.f32 0.0, %v5547
      %5549 = vmatmul.bf16.gmra.mxu0 %v5508
      %v5550 = vpop.f32.mrf.mxu0
      %v5551 = vadd.f32 0.0, %v5550
      %v5552 = vpop.f32.mrf.mxu0
      %v5553 = vadd.f32 0.0, %v5552
      %5554 = vmatmul.bf16.gmra.mxu0 %v5511
      %v5555 = vpop.f32.mrf.mxu0
      %v5556 = vadd.f32 0.0, %v5555
      %v5557 = vpop.f32.mrf.mxu0
      %v5558 = vadd.f32 0.0, %v5557
      %5559 = vmatmul.bf16.gmra.mxu0 %v5514
      %v5560 = vpop.f32.mrf.mxu0
      %v5561 = vadd.f32 0.0, %v5560
      %v5562 = vpop.f32.mrf.mxu0
      %5563 = vdwg.mxu0
      %v5564 = vadd.f32 %v5342, %v5526
      %v5565 = vadd.f32 %v5343, %v5528
      %v5566 = vadd.f32 %v5344, %v5531
      %v5567 = vadd.f32 %v5345, %v5533
      %v5568 = vadd.f32 %v5346, %v5536
      %v5569 = vadd.f32 %v5347, %v5538
      %v5570 = vadd.f32 %v5348, %v5541
      %v5571 = vadd.f32 %v5349, %v5543
      %v5572 = vadd.f32 %v5350, %v5546
      %v5573 = vadd.f32 %v5351, %v5548
      %v5574 = vadd.f32 %v5352, %v5551
      %v5575 = vadd.f32 %v5353, %v5553
      %v5576 = vadd.f32 %v5354, %v5556
      %v5577 = vadd.f32 %v5355, %v5558
      %v5578 = vadd.f32 %v5356, %v5561
      %v5579 = vld [vmem:[%s2828 + $0x4] sm:$0xc]
      %v5580 = vld [vmem:[%s2828 + $0x8] sm:$0xf]
      %v5581 = vld [vmem:[%s2828 + $0xc] sm:$0xf]
      %v5582 = vld [vmem:[%s2828 + $0x10] sm:$0xf]
      %v5583 = vld [vmem:[%s2828 + $0x14] sm:$0xf]
      %v5584 = vld [vmem:[%s2828 + $0x18] sm:$0xf]
      %v5585 = vld [vmem:[%s2828 + $0x1c] sm:$0xf]
      %v5586 = vld [vmem:[%s2828 + $0x20] sm:$0xf]
      %v5587 = vld [vmem:[%s2828 + $0x24] sm:$0xf]
      %v5588 = vld [vmem:[%s2828 + $0x28] sm:$0xf]
      %v5589 = vld [vmem:[%s2828 + $0x2c] sm:$0xf]
      %v5590 = vld [vmem:[%s2828 + $0x30] sm:$0xf]
      %v5591 = vld [vmem:[%s2828 + $0x34] sm:$0xf]
      %v5592 = vld [vmem:[%s2828 + $0x38] sm:$0xf]
      %v5593 = vld [vmem:[%s2828 + $0x3c] sm:$0xf]
      %v5594 = vld [vmem:[%s2828 + $0x40] sm:$0x3]
      %v5595 = vld [vmem:[%s3 + $0xa0] sm:$0xf]
      %v5596 = vld [vmem:[%s3 + $0xa4] sm:$0xf]
      %v5597 = vld [vmem:[%s3 + $0xa8] sm:$0xf]
      %v5598 = vld [vmem:[%s3 + $0xac] sm:$0xf]
      %v5615 = vunpack.c.l.b16 %v5579
      %v5616 = vunpack.c.l.b16 %v5580
      %v5617 = vunpack.c.l.b16 %v5581
      %v5618 = vunpack.c.l.b16 %v5582
      %v5619 = vunpack.c.l.b16 %v5583
      %v5620 = vunpack.c.l.b16 %v5584
      %v5621 = vunpack.c.l.b16 %v5585
      %v5622 = vunpack.c.l.b16 %v5586
      %v5623 = vunpack.c.l.b16 %v5587
      %v5624 = vunpack.c.l.b16 %v5588
      %v5625 = vunpack.c.l.b16 %v5589
      %v5626 = vunpack.c.l.b16 %v5590
      %v5627 = vunpack.c.l.b16 %v5591
      %v5628 = vunpack.c.l.b16 %v5592
      %v5629 = vunpack.c.l.b16 %v5593
      %v5630 = vunpack.c.l.b16 %v5594
      %v5631 = vpack.c.b16 %v5616, %v5615
      %v5632 = vpack.c.b16 %v5618, %v5617
      %v5633 = vpack.c.b16 %v5620, %v5619
      %v5634 = vpack.c.b16 %v5622, %v5621
      %v5635 = vpack.c.b16 %v5624, %v5623
      %v5636 = vpack.c.b16 %v5626, %v5625
      %v5637 = vpack.c.b16 %v5628, %v5627
      %v5638 = vpack.c.b16 %v5630, %v5629
      %v5639 = vrot.slane %v5631, 2
      %v5640 = vrot.slane %v5632, 2
      %v5641 = vsel %vm2424, %v5639, %v5640
      %v5642 = vrot.slane %v5633, 2
      %v5643 = vsel %vm2424, %v5640, %v5642
      %v5644 = vrot.slane %v5634, 2
      %v5645 = vsel %vm2424, %v5642, %v5644
      %v5646 = vrot.slane %v5635, 2
      %v5647 = vsel %vm2424, %v5644, %v5646
      %v5648 = vrot.slane %v5636, 2
      %v5649 = vsel %vm2424, %v5646, %v5648
      %v5650 = vrot.slane %v5637, 2
      %v5651 = vsel %vm2424, %v5648, %v5650
      %v5652 = vrot.slane %v5638, 2
      %v5653 = vsel %vm2424, %v5650, %v5652
      %v5658 = vunpack.c.l.b16 %v5595
      %v5659 = vunpack.c.l.b16 %v5596
      %v5660 = vunpack.c.l.b16 %v5597
      %v5661 = vunpack.c.l.b16 %v5598
      %v5662 = vpack.c.b16 %v5659, %v5658
      %v5663 = vpack.c.b16 %v5661, %v5660
      %v5667 = vsel %vm3968, %v5641, 0
      %v5670 = vsel %vm3968, %v5643, 0
      %v5673 = vsel %vm3968, %v5645, 0
      %v5676 = vsel %vm3968, %v5647, 0
      %v5679 = vsel %vm3968, %v5649, 0
      %v5682 = vsel %vm3968, %v5651, 0
      %v5685 = vsel %vm3968, %v5653, 0
      %v5688 = vsel %vm3968, %v5652, 0
      %5690 = vmatpush.bf16.msra.mxu0 0
      %5691 = vmatpush.bf16.msra.mxu0 0
      %5692 = vmatpush.bf16.msra.mxu0 0
      %5693 = vmatpush.bf16.msra.mxu0 0
      %5694 = vmatpush.bf16.msra.mxu0 0
      %5695 = vmatpush.bf16.msra.mxu0 0
      %5696 = vmatpush.bf16.msra.mxu0 %v5663
      %5697 = vmatpush.bf16.msra.mxu0 %v5662
      %5698 = vmatmul.bf16.gmra.mxu0 %v5667
      %v5699 = vpop.f32.mrf.mxu0
      %v5700 = vadd.f32 0.0, %v5699
      %v5701 = vpop.f32.mrf.mxu0
      %v5702 = vadd.f32 0.0, %v5701
      %5703 = vmatmul.bf16.gmra.mxu0 %v5670
      %v5704 = vpop.f32.mrf.mxu0
      %v5705 = vadd.f32 0.0, %v5704
      %v5706 = vpop.f32.mrf.mxu0
      %v5707 = vadd.f32 0.0, %v5706
      %5708 = vmatmul.bf16.gmra.mxu0 %v5673
      %v5709 = vpop.f32.mrf.mxu0
      %v5710 = vadd.f32 0.0, %v5709
      %v5711 = vpop.f32.mrf.mxu0
      %v5712 = vadd.f32 0.0, %v5711
      %5713 = vmatmul.bf16.gmra.mxu0 %v5676
      %v5714 = vpop.f32.mrf.mxu0
      %v5715 = vadd.f32 0.0, %v5714
      %v5716 = vpop.f32.mrf.mxu0
      %v5717 = vadd.f32 0.0, %v5716
      %5718 = vmatmul.bf16.gmra.mxu0 %v5679
      %v5719 = vpop.f32.mrf.mxu0
      %v5720 = vadd.f32 0.0, %v5719
      %v5721 = vpop.f32.mrf.mxu0
      %v5722 = vadd.f32 0.0, %v5721
      %5723 = vmatmul.bf16.gmra.mxu0 %v5682
      %v5724 = vpop.f32.mrf.mxu0
      %v5725 = vadd.f32 0.0, %v5724
      %v5726 = vpop.f32.mrf.mxu0
      %v5727 = vadd.f32 0.0, %v5726
      %5728 = vmatmul.bf16.gmra.mxu0 %v5685
      %v5729 = vpop.f32.mrf.mxu0
      %v5730 = vadd.f32 0.0, %v5729
      %v5731 = vpop.f32.mrf.mxu0
      %v5732 = vadd.f32 0.0, %v5731
      %5733 = vmatmul.bf16.gmra.mxu0 %v5688
      %v5734 = vpop.f32.mrf.mxu0
      %v5735 = vadd.f32 0.0, %v5734
      %v5736 = vpop.f32.mrf.mxu0
      %5737 = vdwg.mxu0
      %v5738 = vadd.f32 %v5564, %v5700
      %v5739 = vadd.f32 %v5565, %v5702
      %v5740 = vadd.f32 %v5566, %v5705
      %v5741 = vadd.f32 %v5567, %v5707
      %v5742 = vadd.f32 %v5568, %v5710
      %v5743 = vadd.f32 %v5569, %v5712
      %v5744 = vadd.f32 %v5570, %v5715
      %v5745 = vadd.f32 %v5571, %v5717
      %v5746 = vadd.f32 %v5572, %v5720
      %v5747 = vadd.f32 %v5573, %v5722
      %v5748 = vadd.f32 %v5574, %v5725
      %v5749 = vadd.f32 %v5575, %v5727
      %v5750 = vadd.f32 %v5576, %v5730
      %v5751 = vadd.f32 %v5577, %v5732
      %v5752 = vadd.f32 %v5578, %v5735
      %v5753 = vld [vmem:[%s2828 + $0x40] sm:$0x7]
      %v5754 = vld [vmem:[%s3 + $0xb0] sm:$0xf]
      %v5755 = vld [vmem:[%s3 + $0xb4] sm:$0xf]
      %v5756 = vld [vmem:[%s3 + $0xb8] sm:$0xf]
      %v5757 = vld [vmem:[%s3 + $0xbc] sm:$0xf]
      %v5759 = vunpack.c.l.b16 %v5753
      %v5760 = vpack.c.b16 %v5759, %v5629
      %v5762 = vshrl.u32 %v5631, 16
      %v5764 = vrot.slane %v5762, 2
      %v5765 = vshll.u32 %v5631, 16
      %v5767 = vrot.slane %v5765, 3
      %v5768 = vor.u32 %v5764, %v5767
      %v5770 = vshrl.u32 %v5632, 16
      %v5772 = vrot.slane %v5770, 2
      %v5773 = vshll.u32 %v5632, 16
      %v5775 = vrot.slane %v5773, 3
      %v5776 = vor.u32 %v5772, %v5775
      %v5777 = vsel %vm3545, %v5768, %v5776
      %v5779 = vshrl.u32 %v5633, 16
      %v5781 = vrot.slane %v5779, 2
      %v5782 = vshll.u32 %v5633, 16
      %v5784 = vrot.slane %v5782, 3
      %v5785 = vor.u32 %v5781, %v5784
      %v5786 = vsel %vm3545, %v5776, %v5785
      %v5788 = vshrl.u32 %v5634, 16
      %v5790 = vrot.slane %v5788, 2
      %v5791 = vshll.u32 %v5634, 16
      %v5793 = vrot.slane %v5791, 3
      %v5794 = vor.u32 %v5790, %v5793
      %v5795 = vsel %vm3545, %v5785, %v5794
      %v5797 = vshrl.u32 %v5635, 16
      %v5799 = vrot.slane %v5797, 2
      %v5800 = vshll.u32 %v5635, 16
      %v5802 = vrot.slane %v5800, 3
      %v5803 = vor.u32 %v5799, %v5802
      %v5804 = vsel %vm3545, %v5794, %v5803
      %v5806 = vshrl.u32 %v5636, 16
      %v5808 = vrot.slane %v5806, 2
      %v5809 = vshll.u32 %v5636, 16
      %v5811 = vrot.slane %v5809, 3
      %v5812 = vor.u32 %v5808, %v5811
      %v5813 = vsel %vm3545, %v5803, %v5812
      %v5815 = vshrl.u32 %v5637, 16
      %v5817 = vrot.slane %v5815, 2
      %v5818 = vshll.u32 %v5637, 16
      %v5820 = vrot.slane %v5818, 3
      %v5821 = vor.u32 %v5817, %v5820
      %v5822 = vsel %vm3545, %v5812, %v5821
      %v5824 = vshrl.u32 %v5760, 16
      %v5826 = vrot.slane %v5824, 2
      %v5827 = vshll.u32 %v5760, 16
      %v5829 = vrot.slane %v5827, 3
      %v5830 = vor.u32 %v5826, %v5829
      %v5831 = vsel %vm3545, %v5821, %v5830
      %v5836 = vunpack.c.l.b16 %v5754
      %v5837 = vunpack.c.l.b16 %v5755
      %v5838 = vunpack.c.l.b16 %v5756
      %v5839 = vunpack.c.l.b16 %v5757
      %v5840 = vpack.c.b16 %v5837, %v5836
      %v5841 = vpack.c.b16 %v5839, %v5838
      %v5845 = vsel %vm3968, %v5777, 0
      %v5848 = vsel %vm3968, %v5786, 0
      %v5851 = vsel %vm3968, %v5795, 0
      %v5854 = vsel %vm3968, %v5804, 0
      %v5857 = vsel %vm3968, %v5813, 0
      %v5860 = vsel %vm3968, %v5822, 0
      %v5863 = vsel %vm3968, %v5831, 0
      %v5866 = vsel %vm3968, %v5830, 0
      %5868 = vmatpush.bf16.msra.mxu0 0
      %5869 = vmatpush.bf16.msra.mxu0 0
      %5870 = vmatpush.bf16.msra.mxu0 0
      %5871 = vmatpush.bf16.msra.mxu0 0
      %5872 = vmatpush.bf16.msra.mxu0 0
      %5873 = vmatpush.bf16.msra.mxu0 0
      %5874 = vmatpush.bf16.msra.mxu0 %v5841
      %5875 = vmatpush.bf16.msra.mxu0 %v5840
      %5876 = vmatmul.bf16.gmra.mxu0 %v5845
      %v5877 = vpop.f32.mrf.mxu0
      %v5878 = vadd.f32 0.0, %v5877
      %v5879 = vpop.f32.mrf.mxu0
      %v5880 = vadd.f32 0.0, %v5879
      %5881 = vmatmul.bf16.gmra.mxu0 %v5848
      %v5882 = vpop.f32.mrf.mxu0
      %v5883 = vadd.f32 0.0, %v5882
      %v5884 = vpop.f32.mrf.mxu0
      %v5885 = vadd.f32 0.0, %v5884
      %5886 = vmatmul.bf16.gmra.mxu0 %v5851
      %v5887 = vpop.f32.mrf.mxu0
      %v5888 = vadd.f32 0.0, %v5887
      %v5889 = vpop.f32.mrf.mxu0
      %v5890 = vadd.f32 0.0, %v5889
      %5891 = vmatmul.bf16.gmra.mxu0 %v5854
      %v5892 = vpop.f32.mrf.mxu0
      %v5893 = vadd.f32 0.0, %v5892
      %v5894 = vpop.f32.mrf.mxu0
      %v5895 = vadd.f32 0.0, %v5894
      %5896 = vmatmul.bf16.gmra.mxu0 %v5857
      %v5897 = vpop.f32.mrf.mxu0
      %v5898 = vadd.f32 0.0, %v5897
      %v5899 = vpop.f32.mrf.mxu0
      %v5900 = vadd.f32 0.0, %v5899
      %5901 = vmatmul.bf16.gmra.mxu0 %v5860
      %v5902 = vpop.f32.mrf.mxu0
      %v5903 = vadd.f32 0.0, %v5902
      %v5904 = vpop.f32.mrf.mxu0
      %v5905 = vadd.f32 0.0, %v5904
      %5906 = vmatmul.bf16.gmra.mxu0 %v5863
      %v5907 = vpop.f32.mrf.mxu0
      %v5908 = vadd.f32 0.0, %v5907
      %v5909 = vpop.f32.mrf.mxu0
      %v5910 = vadd.f32 0.0, %v5909
      %5911 = vmatmul.bf16.gmra.mxu0 %v5866
      %v5912 = vpop.f32.mrf.mxu0
      %v5913 = vadd.f32 0.0, %v5912
      %v5914 = vpop.f32.mrf.mxu0
      %5915 = vdwg.mxu0
      %v5916 = vadd.f32 %v5738, %v5878
      %v5917 = vadd.f32 %v5739, %v5880
      %v5918 = vadd.f32 %v5740, %v5883
      %v5919 = vadd.f32 %v5741, %v5885
      %v5920 = vadd.f32 %v5742, %v5888
      %v5921 = vadd.f32 %v5743, %v5890
      %v5922 = vadd.f32 %v5744, %v5893
      %v5923 = vadd.f32 %v5745, %v5895
      %v5924 = vadd.f32 %v5746, %v5898
      %v5925 = vadd.f32 %v5747, %v5900
      %v5926 = vadd.f32 %v5748, %v5903
      %v5927 = vadd.f32 %v5749, %v5905
      %v5928 = vadd.f32 %v5750, %v5908
      %v5929 = vadd.f32 %v5751, %v5910
      %v5930 = vadd.f32 %v5752, %v5913
      %v5931 = vld [vmem:[%s3810] sm:$0xf]
      %v5932 = vld [vmem:[%s3810 + $0x4] sm:$0xf]
      %v5933 = vld [vmem:[%s3810 + $0x8] sm:$0xf]
      %v5934 = vld [vmem:[%s3810 + $0xc] sm:$0xf]
      %v5935 = vld [vmem:[%s3810 + $0x10] sm:$0xf]
      %v5936 = vld [vmem:[%s3810 + $0x14] sm:$0xf]
      %v5937 = vld [vmem:[%s3810 + $0x18] sm:$0xf]
      %v5938 = vld [vmem:[%s3810 + $0x1c] sm:$0xf]
      %v5939 = vld [vmem:[%s3810 + $0x20] sm:$0xf]
      %v5940 = vld [vmem:[%s3810 + $0x24] sm:$0xf]
      %v5941 = vld [vmem:[%s3810 + $0x28] sm:$0xf]
      %v5942 = vld [vmem:[%s3810 + $0x2c] sm:$0xf]
      %v5943 = vld [vmem:[%s3810 + $0x30] sm:$0xf]
      %v5944 = vld [vmem:[%s3810 + $0x34] sm:$0xf]
      %v5945 = vld [vmem:[%s3810 + $0x38] sm:$0xf]
      %v5946 = vld [vmem:[%s3 + $0xc0] sm:$0xf]
      %v5947 = vld [vmem:[%s3 + $0xc4] sm:$0xf]
      %v5948 = vld [vmem:[%s3 + $0xc8] sm:$0xf]
      %v5949 = vld [vmem:[%s3 + $0xcc] sm:$0xf]
      %v5965 = vunpack.c.l.b16 %v5931
      %v5966 = vunpack.c.l.b16 %v5932
      %v5967 = vunpack.c.l.b16 %v5933
      %v5968 = vunpack.c.l.b16 %v5934
      %v5969 = vunpack.c.l.b16 %v5935
      %v5970 = vunpack.c.l.b16 %v5936
      %v5971 = vunpack.c.l.b16 %v5937
      %v5972 = vunpack.c.l.b16 %v5938
      %v5973 = vunpack.c.l.b16 %v5939
      %v5974 = vunpack.c.l.b16 %v5940
      %v5975 = vunpack.c.l.b16 %v5941
      %v5976 = vunpack.c.l.b16 %v5942
      %v5977 = vunpack.c.l.b16 %v5943
      %v5978 = vunpack.c.l.b16 %v5944
      %v5979 = vunpack.c.l.b16 %v5945
      %v5980 = vpack.c.b16 %v5966, %v5965
      %v5981 = vpack.c.b16 %v5968, %v5967
      %v5982 = vpack.c.b16 %v5970, %v5969
      %v5983 = vpack.c.b16 %v5972, %v5971
      %v5984 = vpack.c.b16 %v5974, %v5973
      %v5985 = vpack.c.b16 %v5976, %v5975
      %v5986 = vpack.c.b16 %v5978, %v5977
      %v5987 = vpack.c.b16 %v5979, %v5979
      %v5992 = vunpack.c.l.b16 %v5946
      %v5993 = vunpack.c.l.b16 %v5947
      %v5994 = vunpack.c.l.b16 %v5948
      %v5995 = vunpack.c.l.b16 %v5949
      %v5996 = vpack.c.b16 %v5993, %v5992
      %v5997 = vpack.c.b16 %v5995, %v5994
      %v6001 = vsel %vm3968, %v5980, 0
      %v6004 = vsel %vm3968, %v5981, 0
      %v6007 = vsel %vm3968, %v5982, 0
      %v6010 = vsel %vm3968, %v5983, 0
      %v6013 = vsel %vm3968, %v5984, 0
      %v6016 = vsel %vm3968, %v5985, 0
      %v6019 = vsel %vm3968, %v5986, 0
      %v6022 = vsel %vm3968, %v5987, 0
      %6024 = vmatpush.bf16.msra.mxu0 0
      %6025 = vmatpush.bf16.msra.mxu0 0
      %6026 = vmatpush.bf16.msra.mxu0 0
      %6027 = vmatpush.bf16.msra.mxu0 0
      %6028 = vmatpush.bf16.msra.mxu0 0
      %6029 = vmatpush.bf16.msra.mxu0 0
      %6030 = vmatpush.bf16.msra.mxu0 %v5997
      %6031 = vmatpush.bf16.msra.mxu0 %v5996
      %6032 = vmatmul.bf16.gmra.mxu0 %v6001
      %v6033 = vpop.f32.mrf.mxu0
      %v6034 = vadd.f32 0.0, %v6033
      %v6035 = vpop.f32.mrf.mxu0
      %v6036 = vadd.f32 0.0, %v6035
      %6037 = vmatmul.bf16.gmra.mxu0 %v6004
      %v6038 = vpop.f32.mrf.mxu0
      %v6039 = vadd.f32 0.0, %v6038
      %v6040 = vpop.f32.mrf.mxu0
      %v6041 = vadd.f32 0.0, %v6040
      %6042 = vmatmul.bf16.gmra.mxu0 %v6007
      %v6043 = vpop.f32.mrf.mxu0
      %v6044 = vadd.f32 0.0, %v6043
      %v6045 = vpop.f32.mrf.mxu0
      %v6046 = vadd.f32 0.0, %v6045
      %6047 = vmatmul.bf16.gmra.mxu0 %v6010
      %v6048 = vpop.f32.mrf.mxu0
      %v6049 = vadd.f32 0.0, %v6048
      %v6050 = vpop.f32.mrf.mxu0
      %v6051 = vadd.f32 0.0, %v6050
      %6052 = vmatmul.bf16.gmra.mxu0 %v6013
      %v6053 = vpop.f32.mrf.mxu0
      %v6054 = vadd.f32 0.0, %v6053
      %v6055 = vpop.f32.mrf.mxu0
      %v6056 = vadd.f32 0.0, %v6055
      %6057 = vmatmul.bf16.gmra.mxu0 %v6016
      %v6058 = vpop.f32.mrf.mxu0
      %v6059 = vadd.f32 0.0, %v6058
      %v6060 = vpop.f32.mrf.mxu0
      %v6061 = vadd.f32 0.0, %v6060
      %6062 = vmatmul.bf16.gmra.mxu0 %v6019
      %v6063 = vpop.f32.mrf.mxu0
      %v6064 = vadd.f32 0.0, %v6063
      %v6065 = vpop.f32.mrf.mxu0
      %v6066 = vadd.f32 0.0, %v6065
      %6067 = vmatmul.bf16.gmra.mxu0 %v6022
      %v6068 = vpop.f32.mrf.mxu0
      %v6069 = vadd.f32 0.0, %v6068
      %v6070 = vpop.f32.mrf.mxu0
      %6071 = vdwg.mxu0
      %v6072 = vadd.f32 %v5916, %v6034
      %v6073 = vadd.f32 %v5917, %v6036
      %v6074 = vadd.f32 %v5918, %v6039
      %v6075 = vadd.f32 %v5919, %v6041
      %v6076 = vadd.f32 %v5920, %v6044
      %v6077 = vadd.f32 %v5921, %v6046
      %v6078 = vadd.f32 %v5922, %v6049
      %v6079 = vadd.f32 %v5923, %v6051
      %v6080 = vadd.f32 %v5924, %v6054
      %v6081 = vadd.f32 %v5925, %v6056
      %v6082 = vadd.f32 %v5926, %v6059
      %v6083 = vadd.f32 %v5927, %v6061
      %v6084 = vadd.f32 %v5928, %v6064
      %v6085 = vadd.f32 %v5929, %v6066
      %v6086 = vadd.f32 %v5930, %v6069
      %v6087 = vld [vmem:[%s3810] sm:$0xf]
      %v6088 = vld [vmem:[%s3810 + $0x4] sm:$0xf]
      %v6089 = vld [vmem:[%s3810 + $0x8] sm:$0xf]
      %v6090 = vld [vmem:[%s3810 + $0xc] sm:$0xf]
      %v6091 = vld [vmem:[%s3810 + $0x10] sm:$0xf]
      %v6092 = vld [vmem:[%s3810 + $0x14] sm:$0xf]
      %v6093 = vld [vmem:[%s3810 + $0x18] sm:$0xf]
      %v6094 = vld [vmem:[%s3810 + $0x1c] sm:$0xf]
      %v6095 = vld [vmem:[%s3810 + $0x20] sm:$0xf]
      %v6096 = vld [vmem:[%s3810 + $0x24] sm:$0xf]
      %v6097 = vld [vmem:[%s3810 + $0x28] sm:$0xf]
      %v6098 = vld [vmem:[%s3810 + $0x2c] sm:$0xf]
      %v6099 = vld [vmem:[%s3810 + $0x30] sm:$0xf]
      %v6100 = vld [vmem:[%s3810 + $0x34] sm:$0xf]
      %v6101 = vld [vmem:[%s3810 + $0x38] sm:$0xf]
      %v6102 = vld [vmem:[%s3810 + $0x3c] sm:$0x1]
      %v6103 = vld [vmem:[%s3 + $0xd0] sm:$0xf]
      %v6104 = vld [vmem:[%s3 + $0xd4] sm:$0xf]
      %v6105 = vld [vmem:[%s3 + $0xd8] sm:$0xf]
      %v6106 = vld [vmem:[%s3 + $0xdc] sm:$0xf]
      %v6123 = vunpack.c.l.b16 %v6087
      %v6124 = vunpack.c.l.b16 %v6088
      %v6125 = vunpack.c.l.b16 %v6089
      %v6126 = vunpack.c.l.b16 %v6090
      %v6127 = vunpack.c.l.b16 %v6091
      %v6128 = vunpack.c.l.b16 %v6092
      %v6129 = vunpack.c.l.b16 %v6093
      %v6130 = vunpack.c.l.b16 %v6094
      %v6131 = vunpack.c.l.b16 %v6095
      %v6132 = vunpack.c.l.b16 %v6096
      %v6133 = vunpack.c.l.b16 %v6097
      %v6134 = vunpack.c.l.b16 %v6098
      %v6135 = vunpack.c.l.b16 %v6099
      %v6136 = vunpack.c.l.b16 %v6100
      %v6137 = vunpack.c.l.b16 %v6101
      %v6138 = vunpack.c.l.b16 %v6102
      %v6139 = vpack.c.b16 %v6124, %v6123
      %v6140 = vpack.c.b16 %v6126, %v6125
      %v6141 = vpack.c.b16 %v6128, %v6127
      %v6142 = vpack.c.b16 %v6130, %v6129
      %v6143 = vpack.c.b16 %v6132, %v6131
      %v6144 = vpack.c.b16 %v6134, %v6133
      %v6145 = vpack.c.b16 %v6136, %v6135
      %v6146 = vpack.c.b16 %v6138, %v6137
      %v6148 = vshrl.u32 %v6139, 16
      %v6150 = vshll.u32 %v6139, 16
      %v6152 = vrot.slane %v6150, 1
      %v6153 = vor.u32 %v6148, %v6152
      %v6155 = vshll.u32 %v6140, 16
      %v6157 = vrot.slane %v6155, 1
      %v6158 = vsel %vm1166, %v6153, %v6157
      %v6159 = vshrl.u32 %v6140, 16
      %v6161 = vor.u32 %v6159, %v6157
      %v6163 = vshll.u32 %v6141, 16
      %v6165 = vrot.slane %v6163, 1
      %v6166 = vsel %vm1166, %v6161, %v6165
      %v6167 = vshrl.u32 %v6141, 16
      %v6169 = vor.u32 %v6167, %v6165
      %v6171 = vshll.u32 %v6142, 16
      %v6173 = vrot.slane %v6171, 1
      %v6174 = vsel %vm1166, %v6169, %v6173
      %v6175 = vshrl.u32 %v6142, 16
      %v6177 = vor.u32 %v6175, %v6173
      %v6179 = vshll.u32 %v6143, 16
      %v6181 = vrot.slane %v6179, 1
      %v6182 = vsel %vm1166, %v6177, %v6181
      %v6183 = vshrl.u32 %v6143, 16
      %v6185 = vor.u32 %v6183, %v6181
      %v6187 = vshll.u32 %v6144, 16
      %v6189 = vrot.slane %v6187, 1
      %v6190 = vsel %vm1166, %v6185, %v6189
      %v6191 = vshrl.u32 %v6144, 16
      %v6193 = vor.u32 %v6191, %v6189
      %v6195 = vshll.u32 %v6145, 16
      %v6197 = vrot.slane %v6195, 1
      %v6198 = vsel %vm1166, %v6193, %v6197
      %v6199 = vshrl.u32 %v6145, 16
      %v6201 = vor.u32 %v6199, %v6197
      %v6203 = vshll.u32 %v6146, 16
      %v6205 = vrot.slane %v6203, 1
      %v6206 = vsel %vm1166, %v6201, %v6205
      %v6207 = vshrl.u32 %v6146, 16
      %v6209 = vor.u32 %v6207, %v6205
      %v6214 = vunpack.c.l.b16 %v6103
      %v6215 = vunpack.c.l.b16 %v6104
      %v6216 = vunpack.c.l.b16 %v6105
      %v6217 = vunpack.c.l.b16 %v6106
      %v6218 = vpack.c.b16 %v6215, %v6214
      %v6219 = vpack.c.b16 %v6217, %v6216
      %v6223 = vsel %vm3968, %v6158, 0
      %v6226 = vsel %vm3968, %v6166, 0
      %v6229 = vsel %vm3968, %v6174, 0
      %v6232 = vsel %vm3968, %v6182, 0
      %v6235 = vsel %vm3968, %v6190, 0
      %v6238 = vsel %vm3968, %v6198, 0
      %v6241 = vsel %vm3968, %v6206, 0
      %v6244 = vsel %vm3968, %v6209, 0
      %6246 = vmatpush.bf16.msra.mxu0 0
      %6247 = vmatpush.bf16.msra.mxu0 0
      %6248 = vmatpush.bf16.msra.mxu0 0
      %6249 = vmatpush.bf16.msra.mxu0 0
      %6250 = vmatpush.bf16.msra.mxu0 0
      %6251 = vmatpush.bf16.msra.mxu0 0
      %6252 = vmatpush.bf16.msra.mxu0 %v6219
      %6253 = vmatpush.bf16.msra.mxu0 %v6218
      %6254 = vmatmul.bf16.gmra.mxu0 %v6223
      %v6255 = vpop.f32.mrf.mxu0
      %v6256 = vadd.f32 0.0, %v6255
      %v6257 = vpop.f32.mrf.mxu0
      %v6258 = vadd.f32 0.0, %v6257
      %6259 = vmatmul.bf16.gmra.mxu0 %v6226
      %v6260 = vpop.f32.mrf.mxu0
      %v6261 = vadd.f32 0.0, %v6260
      %v6262 = vpop.f32.mrf.mxu0
      %v6263 = vadd.f32 0.0, %v6262
      %6264 = vmatmul.bf16.gmra.mxu0 %v6229
      %v6265 = vpop.f32.mrf.mxu0
      %v6266 = vadd.f32 0.0, %v6265
      %v6267 = vpop.f32.mrf.mxu0
      %v6268 = vadd.f32 0.0, %v6267
      %6269 = vmatmul.bf16.gmra.mxu0 %v6232
      %v6270 = vpop.f32.mrf.mxu0
      %v6271 = vadd.f32 0.0, %v6270
      %v6272 = vpop.f32.mrf.mxu0
      %v6273 = vadd.f32 0.0, %v6272
      %6274 = vmatmul.bf16.gmra.mxu0 %v6235
      %v6275 = vpop.f32.mrf.mxu0
      %v6276 = vadd.f32 0.0, %v6275
      %v6277 = vpop.f32.mrf.mxu0
      %v6278 = vadd.f32 0.0, %v6277
      %6279 = vmatmul.bf16.gmra.mxu0 %v6238
      %v6280 = vpop.f32.mrf.mxu0
      %v6281 = vadd.f32 0.0, %v6280
      %v6282 = vpop.f32.mrf.mxu0
      %v6283 = vadd.f32 0.0, %v6282
      %6284 = vmatmul.bf16.gmra.mxu0 %v6241
      %v6285 = vpop.f32.mrf.mxu0
      %v6286 = vadd.f32 0.0, %v6285
      %v6287 = vpop.f32.mrf.mxu0
      %v6288 = vadd.f32 0.0, %v6287
      %6289 = vmatmul.bf16.gmra.mxu0 %v6244
      %v6290 = vpop.f32.mrf.mxu0
      %v6291 = vadd.f32 0.0, %v6290
      %v6292 = vpop.f32.mrf.mxu0
      %6293 = vdwg.mxu0
      %v6294 = vadd.f32 %v6072, %v6256
      %v6295 = vadd.f32 %v6073, %v6258
      %v6296 = vadd.f32 %v6074, %v6261
      %v6297 = vadd.f32 %v6075, %v6263
      %v6298 = vadd.f32 %v6076, %v6266
      %v6299 = vadd.f32 %v6077, %v6268
      %v6300 = vadd.f32 %v6078, %v6271
      %v6301 = vadd.f32 %v6079, %v6273
      %v6302 = vadd.f32 %v6080, %v6276
      %v6303 = vadd.f32 %v6081, %v6278
      %v6304 = vadd.f32 %v6082, %v6281
      %v6305 = vadd.f32 %v6083, %v6283
      %v6306 = vadd.f32 %v6084, %v6286
      %v6307 = vadd.f32 %v6085, %v6288
      %v6308 = vadd.f32 %v6086, %v6291
      %v6309 = vld [vmem:[%s3810 + $0x4] sm:$0xc]
      %v6310 = vld [vmem:[%s3810 + $0x8] sm:$0xf]
      %v6311 = vld [vmem:[%s3810 + $0xc] sm:$0xf]
      %v6312 = vld [vmem:[%s3810 + $0x10] sm:$0xf]
      %v6313 = vld [vmem:[%s3810 + $0x14] sm:$0xf]
      %v6314 = vld [vmem:[%s3810 + $0x18] sm:$0xf]
      %v6315 = vld [vmem:[%s3810 + $0x1c] sm:$0xf]
      %v6316 = vld [vmem:[%s3810 + $0x20] sm:$0xf]
      %v6317 = vld [vmem:[%s3810 + $0x24] sm:$0xf]
      %v6318 = vld [vmem:[%s3810 + $0x28] sm:$0xf]
      %v6319 = vld [vmem:[%s3810 + $0x2c] sm:$0xf]
      %v6320 = vld [vmem:[%s3810 + $0x30] sm:$0xf]
      %v6321 = vld [vmem:[%s3810 + $0x34] sm:$0xf]
      %v6322 = vld [vmem:[%s3810 + $0x38] sm:$0xf]
      %v6323 = vld [vmem:[%s3810 + $0x3c] sm:$0xf]
      %v6324 = vld [vmem:[%s3810 + $0x40] sm:$0x3]
      %v6325 = vld [vmem:[%s3 + $0xe0] sm:$0xf]
      %v6326 = vld [vmem:[%s3 + $0xe4] sm:$0xf]
      %v6327 = vld [vmem:[%s3 + $0xe8] sm:$0xf]
      %v6328 = vld [vmem:[%s3 + $0xec] sm:$0xf]
      %v6345 = vunpack.c.l.b16 %v6309
      %v6346 = vunpack.c.l.b16 %v6310
      %v6347 = vunpack.c.l.b16 %v6311
      %v6348 = vunpack.c.l.b16 %v6312
      %v6349 = vunpack.c.l.b16 %v6313
      %v6350 = vunpack.c.l.b16 %v6314
      %v6351 = vunpack.c.l.b16 %v6315
      %v6352 = vunpack.c.l.b16 %v6316
      %v6353 = vunpack.c.l.b16 %v6317
      %v6354 = vunpack.c.l.b16 %v6318
      %v6355 = vunpack.c.l.b16 %v6319
      %v6356 = vunpack.c.l.b16 %v6320
      %v6357 = vunpack.c.l.b16 %v6321
      %v6358 = vunpack.c.l.b16 %v6322
      %v6359 = vunpack.c.l.b16 %v6323
      %v6360 = vunpack.c.l.b16 %v6324
      %v6361 = vpack.c.b16 %v6346, %v6345
      %v6362 = vpack.c.b16 %v6348, %v6347
      %v6363 = vpack.c.b16 %v6350, %v6349
      %v6364 = vpack.c.b16 %v6352, %v6351
      %v6365 = vpack.c.b16 %v6354, %v6353
      %v6366 = vpack.c.b16 %v6356, %v6355
      %v6367 = vpack.c.b16 %v6358, %v6357
      %v6368 = vpack.c.b16 %v6360, %v6359
      %v6369 = vrot.slane %v6361, 2
      %v6370 = vrot.slane %v6362, 2
      %v6371 = vsel %vm2424, %v6369, %v6370
      %v6372 = vrot.slane %v6363, 2
      %v6373 = vsel %vm2424, %v6370, %v6372
      %v6374 = vrot.slane %v6364, 2
      %v6375 = vsel %vm2424, %v6372, %v6374
      %v6376 = vrot.slane %v6365, 2
      %v6377 = vsel %vm2424, %v6374, %v6376
      %v6378 = vrot.slane %v6366, 2
      %v6379 = vsel %vm2424, %v6376, %v6378
      %v6380 = vrot.slane %v6367, 2
      %v6381 = vsel %vm2424, %v6378, %v6380
      %v6382 = vrot.slane %v6368, 2
      %v6383 = vsel %vm2424, %v6380, %v6382
      %v6388 = vunpack.c.l.b16 %v6325
      %v6389 = vunpack.c.l.b16 %v6326
      %v6390 = vunpack.c.l.b16 %v6327
      %v6391 = vunpack.c.l.b16 %v6328
      %v6392 = vpack.c.b16 %v6389, %v6388
      %v6393 = vpack.c.b16 %v6391, %v6390
      %v6397 = vsel %vm3968, %v6371, 0
      %v6400 = vsel %vm3968, %v6373, 0
      %v6403 = vsel %vm3968, %v6375, 0
      %v6406 = vsel %vm3968, %v6377, 0
      %v6409 = vsel %vm3968, %v6379, 0
      %v6412 = vsel %vm3968, %v6381, 0
      %v6415 = vsel %vm3968, %v6383, 0
      %v6418 = vsel %vm3968, %v6382, 0
      %6420 = vmatpush.bf16.msra.mxu0 0
      %6421 = vmatpush.bf16.msra.mxu0 0
      %6422 = vmatpush.bf16.msra.mxu0 0
      %6423 = vmatpush.bf16.msra.mxu0 0
      %6424 = vmatpush.bf16.msra.mxu0 0
      %6425 = vmatpush.bf16.msra.mxu0 0
      %6426 = vmatpush.bf16.msra.mxu0 %v6393
      %6427 = vmatpush.bf16.msra.mxu0 %v6392
      %6428 = vmatmul.bf16.gmra.mxu0 %v6397
      %v6429 = vpop.f32.mrf.mxu0
      %v6430 = vadd.f32 0.0, %v6429
      %v6431 = vpop.f32.mrf.mxu0
      %v6432 = vadd.f32 0.0, %v6431
      %6433 = vmatmul.bf16.gmra.mxu0 %v6400
      %v6434 = vpop.f32.mrf.mxu0
      %v6435 = vadd.f32 0.0, %v6434
      %v6436 = vpop.f32.mrf.mxu0
      %v6437 = vadd.f32 0.0, %v6436
      %6438 = vmatmul.bf16.gmra.mxu0 %v6403
      %v6439 = vpop.f32.mrf.mxu0
      %v6440 = vadd.f32 0.0, %v6439
      %v6441 = vpop.f32.mrf.mxu0
      %v6442 = vadd.f32 0.0, %v6441
      %6443 = vmatmul.bf16.gmra.mxu0 %v6406
      %v6444 = vpop.f32.mrf.mxu0
      %v6445 = vadd.f32 0.0, %v6444
      %v6446 = vpop.f32.mrf.mxu0
      %v6447 = vadd.f32 0.0, %v6446
      %6448 = vmatmul.bf16.gmra.mxu0 %v6409
      %v6449 = vpop.f32.mrf.mxu0
      %v6450 = vadd.f32 0.0, %v6449
      %v6451 = vpop.f32.mrf.mxu0
      %v6452 = vadd.f32 0.0, %v6451
      %6453 = vmatmul.bf16.gmra.mxu0 %v6412
      %v6454 = vpop.f32.mrf.mxu0
      %v6455 = vadd.f32 0.0, %v6454
      %v6456 = vpop.f32.mrf.mxu0
      %v6457 = vadd.f32 0.0, %v6456
      %6458 = vmatmul.bf16.gmra.mxu0 %v6415
      %v6459 = vpop.f32.mrf.mxu0
      %v6460 = vadd.f32 0.0, %v6459
      %v6461 = vpop.f32.mrf.mxu0
      %v6462 = vadd.f32 0.0, %v6461
      %6463 = vmatmul.bf16.gmra.mxu0 %v6418
      %v6464 = vpop.f32.mrf.mxu0
      %v6465 = vadd.f32 0.0, %v6464
      %v6466 = vpop.f32.mrf.mxu0
      %6467 = vdwg.mxu0
      %v6468 = vadd.f32 %v6294, %v6430
      %v6469 = vadd.f32 %v6295, %v6432
      %v6470 = vadd.f32 %v6296, %v6435
      %v6471 = vadd.f32 %v6297, %v6437
      %v6472 = vadd.f32 %v6298, %v6440
      %v6473 = vadd.f32 %v6299, %v6442
      %v6474 = vadd.f32 %v6300, %v6445
      %v6475 = vadd.f32 %v6301, %v6447
      %v6476 = vadd.f32 %v6302, %v6450
      %v6477 = vadd.f32 %v6303, %v6452
      %v6478 = vadd.f32 %v6304, %v6455
      %v6479 = vadd.f32 %v6305, %v6457
      %v6480 = vadd.f32 %v6306, %v6460
      %v6481 = vadd.f32 %v6307, %v6462
      %v6482 = vadd.f32 %v6308, %v6465
      %v6483 = vld [vmem:[%s3810 + $0x40] sm:$0x7]
      %v6484 = vld [vmem:[%s3 + $0xf0] sm:$0xf]
      %v6485 = vld [vmem:[%s3 + $0xf4] sm:$0xf]
      %v6486 = vld [vmem:[%s3 + $0xf8] sm:$0xf]
      %v6487 = vld [vmem:[%s3 + $0xfc] sm:$0xf]
      %v6489 = vunpack.c.l.b16 %v6483
      %v6490 = vpack.c.b16 %v6489, %v6359
      %v6492 = vshrl.u32 %v6361, 16
      %v6494 = vrot.slane %v6492, 2
      %v6495 = vshll.u32 %v6361, 16
      %v6497 = vrot.slane %v6495, 3
      %v6498 = vor.u32 %v6494, %v6497
      %v6500 = vshrl.u32 %v6362, 16
      %v6502 = vrot.slane %v6500, 2
      %v6503 = vshll.u32 %v6362, 16
      %v6505 = vrot.slane %v6503, 3
      %v6506 = vor.u32 %v6502, %v6505
      %v6507 = vsel %vm3545, %v6498, %v6506
      %v6509 = vshrl.u32 %v6363, 16
      %v6511 = vrot.slane %v6509, 2
      %v6512 = vshll.u32 %v6363, 16
      %v6514 = vrot.slane %v6512, 3
      %v6515 = vor.u32 %v6511, %v6514
      %v6516 = vsel %vm3545, %v6506, %v6515
      %v6518 = vshrl.u32 %v6364, 16
      %v6520 = vrot.slane %v6518, 2
      %v6521 = vshll.u32 %v6364, 16
      %v6523 = vrot.slane %v6521, 3
      %v6524 = vor.u32 %v6520, %v6523
      %v6525 = vsel %vm3545, %v6515, %v6524
      %v6527 = vshrl.u32 %v6365, 16
      %v6529 = vrot.slane %v6527, 2
      %v6530 = vshll.u32 %v6365, 16
      %v6532 = vrot.slane %v6530, 3
      %v6533 = vor.u32 %v6529, %v6532
      %v6534 = vsel %vm3545, %v6524, %v6533
      %v6536 = vshrl.u32 %v6366, 16
      %v6538 = vrot.slane %v6536, 2
      %v6539 = vshll.u32 %v6366, 16
      %v6541 = vrot.slane %v6539, 3
      %v6542 = vor.u32 %v6538, %v6541
      %v6543 = vsel %vm3545, %v6533, %v6542
      %v6545 = vshrl.u32 %v6367, 16
      %v6547 = vrot.slane %v6545, 2
      %v6548 = vshll.u32 %v6367, 16
      %v6550 = vrot.slane %v6548, 3
      %v6551 = vor.u32 %v6547, %v6550
      %v6552 = vsel %vm3545, %v6542, %v6551
      %v6554 = vshrl.u32 %v6490, 16
      %v6556 = vrot.slane %v6554, 2
      %v6557 = vshll.u32 %v6490, 16
      %v6559 = vrot.slane %v6557, 3
      %v6560 = vor.u32 %v6556, %v6559
      %v6561 = vsel %vm3545, %v6551, %v6560
      %v6566 = vunpack.c.l.b16 %v6484
      %v6567 = vunpack.c.l.b16 %v6485
      %v6568 = vunpack.c.l.b16 %v6486
      %v6569 = vunpack.c.l.b16 %v6487
      %v6570 = vpack.c.b16 %v6567, %v6566
      %v6571 = vpack.c.b16 %v6569, %v6568
      %v6575 = vsel %vm3968, %v6507, 0
      %v6578 = vsel %vm3968, %v6516, 0
      %v6581 = vsel %vm3968, %v6525, 0
      %v6584 = vsel %vm3968, %v6534, 0
      %v6587 = vsel %vm3968, %v6543, 0
      %v6590 = vsel %vm3968, %v6552, 0
      %v6593 = vsel %vm3968, %v6561, 0
      %v6596 = vsel %vm3968, %v6560, 0
      %6598 = vmatpush.bf16.msra.mxu0 0
      %6599 = vmatpush.bf16.msra.mxu0 0
      %6600 = vmatpush.bf16.msra.mxu0 0
      %6601 = vmatpush.bf16.msra.mxu0 0
      %6602 = vmatpush.bf16.msra.mxu0 0
      %6603 = vmatpush.bf16.msra.mxu0 0
      %6604 = vmatpush.bf16.msra.mxu0 %v6571
      %6605 = vmatpush.bf16.msra.mxu0 %v6570
      %6606 = vmatmul.bf16.gmra.mxu0 %v6575
      %v6607 = vpop.f32.mrf.mxu0
      %v6608 = vadd.f32 0.0, %v6607
      %v6609 = vpop.f32.mrf.mxu0
      %v6610 = vadd.f32 0.0, %v6609
      %6611 = vmatmul.bf16.gmra.mxu0 %v6578
      %v6612 = vpop.f32.mrf.mxu0
      %v6613 = vadd.f32 0.0, %v6612
      %v6614 = vpop.f32.mrf.mxu0
      %v6615 = vadd.f32 0.0, %v6614
      %6616 = vmatmul.bf16.gmra.mxu0 %v6581
      %v6617 = vpop.f32.mrf.mxu0
      %v6618 = vadd.f32 0.0, %v6617
      %v6619 = vpop.f32.mrf.mxu0
      %v6620 = vadd.f32 0.0, %v6619
      %6621 = vmatmul.bf16.gmra.mxu0 %v6584
      %v6622 = vpop.f32.mrf.mxu0
      %v6623 = vadd.f32 0.0, %v6622
      %v6624 = vpop.f32.mrf.mxu0
      %v6625 = vadd.f32 0.0, %v6624
      %6626 = vmatmul.bf16.gmra.mxu0 %v6587
      %v6627 = vpop.f32.mrf.mxu0
      %v6628 = vadd.f32 0.0, %v6627
      %v6629 = vpop.f32.mrf.mxu0
      %v6630 = vadd.f32 0.0, %v6629
      %6631 = vmatmul.bf16.gmra.mxu0 %v6590
      %v6632 = vpop.f32.mrf.mxu0
      %v6633 = vadd.f32 0.0, %v6632
      %v6634 = vpop.f32.mrf.mxu0
      %v6635 = vadd.f32 0.0, %v6634
      %6636 = vmatmul.bf16.gmra.mxu0 %v6593
      %v6637 = vpop.f32.mrf.mxu0
      %v6638 = vadd.f32 0.0, %v6637
      %v6639 = vpop.f32.mrf.mxu0
      %v6640 = vadd.f32 0.0, %v6639
      %6641 = vmatmul.bf16.gmra.mxu0 %v6596
      %v6642 = vpop.f32.mrf.mxu0
      %v6643 = vadd.f32 0.0, %v6642
      %v6644 = vpop.f32.mrf.mxu0
      %6645 = vdwg.mxu0
      %v6646 = vadd.f32 %v6468, %v6608
      %v6647 = vadd.f32 %v6469, %v6610
      %v6648 = vadd.f32 %v6470, %v6613
      %v6649 = vadd.f32 %v6471, %v6615
      %v6650 = vadd.f32 %v6472, %v6618
      %v6651 = vadd.f32 %v6473, %v6620
      %v6652 = vadd.f32 %v6474, %v6623
      %v6653 = vadd.f32 %v6475, %v6625
      %v6654 = vadd.f32 %v6476, %v6628
      %v6655 = vadd.f32 %v6477, %v6630
      %v6656 = vadd.f32 %v6478, %v6633
      %v6657 = vadd.f32 %v6479, %v6635
      %v6658 = vadd.f32 %v6480, %v6638
      %v6659 = vadd.f32 %v6481, %v6640
      %v6660 = vadd.f32 %v6482, %v6643
      %v6661 = vld [vmem:[%s4] sm:$0x1]
      %v6663 = vperm.slane %v6661, 0
      %v6665 = vadd.f32 %v6646, %v6663
      %v6666 = vadd.f32 %v6647, %v6663
      %v6667 = vadd.f32 %v6648, %v6663
      %v6668 = vadd.f32 %v6649, %v6663
      %v6669 = vadd.f32 %v6650, %v6663
      %v6670 = vadd.f32 %v6651, %v6663
      %v6671 = vadd.f32 %v6652, %v6663
      %v6672 = vadd.f32 %v6653, %v6663
      %v6673 = vadd.f32 %v6654, %v6663
      %v6674 = vadd.f32 %v6655, %v6663
      %v6675 = vadd.f32 %v6656, %v6663
      %v6676 = vadd.f32 %v6657, %v6663
      %v6677 = vadd.f32 %v6658, %v6663
      %v6678 = vadd.f32 %v6659, %v6663
      %v6679 = vadd.f32 %v6660, %v6663
      %v6680 = vmax.f32 %v6665, 0.0
      %v6681 = vmax.f32 %v6666, 0.0
      %v6682 = vmax.f32 %v6667, 0.0
      %v6683 = vmax.f32 %v6668, 0.0
      %v6684 = vmax.f32 %v6669, 0.0
      %v6685 = vmax.f32 %v6670, 0.0
      %v6686 = vmax.f32 %v6671, 0.0
      %v6687 = vmax.f32 %v6672, 0.0
      %v6688 = vmax.f32 %v6673, 0.0
      %v6689 = vmax.f32 %v6674, 0.0
      %v6690 = vmax.f32 %v6675, 0.0
      %v6691 = vmax.f32 %v6676, 0.0
      %v6692 = vmax.f32 %v6677, 0.0
      %v6693 = vmax.f32 %v6678, 0.0
      %v6694 = vmax.f32 %v6679, 0.0
      %v6695 = vpack.c.bf16 %v6680, %v6680
      %v6696 = vpack.c.bf16 %v6681, %v6681
      %v6697 = vpack.c.bf16 %v6682, %v6682
      %v6698 = vpack.c.bf16 %v6683, %v6683
      %v6699 = vpack.c.bf16 %v6684, %v6684
      %v6700 = vpack.c.bf16 %v6685, %v6685
      %v6701 = vpack.c.bf16 %v6686, %v6686
      %v6702 = vpack.c.bf16 %v6687, %v6687
      %v6703 = vpack.c.bf16 %v6688, %v6688
      %v6704 = vpack.c.bf16 %v6689, %v6689
      %v6705 = vpack.c.bf16 %v6690, %v6690
      %v6706 = vpack.c.bf16 %v6691, %v6691
      %v6707 = vpack.c.bf16 %v6692, %v6692
      %v6708 = vpack.c.bf16 %v6693, %v6693
      %v6709 = vpack.c.bf16 %v6694, %v6694
      %vm6710 = vcmask 519168
      %6711 = vst.msk [vmem:[#allocation3] sm:$0xf] %vm6710, %v6695
      %6712 = vst.msk [vmem:[#allocation3 + $0x4] sm:$0xf] %vm6710, %v6696
      %6713 = vst.msk [vmem:[#allocation3 + $0x8] sm:$0xf] %vm6710, %v6697
      %6714 = vst.msk [vmem:[#allocation3 + $0xc] sm:$0xf] %vm6710, %v6698
      %6715 = vst.msk [vmem:[#allocation3 + $0x10] sm:$0xf] %vm6710, %v6699
      %6716 = vst.msk [vmem:[#allocation3 + $0x14] sm:$0xf] %vm6710, %v6700
      %6717 = vst.msk [vmem:[#allocation3 + $0x18] sm:$0xf] %vm6710, %v6701
      %6718 = vst.msk [vmem:[#allocation3 + $0x1c] sm:$0xf] %vm6710, %v6702
      %6719 = vst.msk [vmem:[#allocation3 + $0x20] sm:$0xf] %vm6710, %v6703
      %6720 = vst.msk [vmem:[#allocation3 + $0x24] sm:$0xf] %vm6710, %v6704
      %6721 = vst.msk [vmem:[#allocation3 + $0x28] sm:$0xf] %vm6710, %v6705
      %6722 = vst.msk [vmem:[#allocation3 + $0x2c] sm:$0xf] %vm6710, %v6706
      %6723 = vst.msk [vmem:[#allocation3 + $0x30] sm:$0xf] %vm6710, %v6707
      %6724 = vst.msk [vmem:[#allocation3 + $0x34] sm:$0xf] %vm6710, %v6708
      %6725 = vst.msk [vmem:[#allocation3 + $0x38] sm:$0xf] %vm6710, %v6709
      %6726 = vst.msk [vmem:[#allocation3 + $0x3c] sm:$0xf] %vm6710, 0
      %v6727 = vld [vmem:[#allocation3] sm:$0xf]
      %v6728 = vld [vmem:[#allocation3 + $0x4] sm:$0xf]
      %v6729 = vld [vmem:[#allocation3 + $0x8] sm:$0xf]
      %v6730 = vld [vmem:[#allocation3 + $0xc] sm:$0xf]
      %v6731 = vld [vmem:[#allocation3 + $0x10] sm:$0xf]
      %v6732 = vld [vmem:[#allocation3 + $0x14] sm:$0xf]
      %v6733 = vld [vmem:[#allocation3 + $0x18] sm:$0xf]
      %v6734 = vld [vmem:[#allocation3 + $0x1c] sm:$0xf]
      %v6735 = vld [vmem:[#allocation3 + $0x20] sm:$0xf]
      %v6736 = vld [vmem:[#allocation3 + $0x24] sm:$0xf]
      %v6737 = vld [vmem:[#allocation3 + $0x28] sm:$0xf]
      %v6738 = vld [vmem:[#allocation3 + $0x2c] sm:$0xf]
      %v6739 = vld [vmem:[%s5] sm:$0xf]
      %v6740 = vld [vmem:[%s5 + $0x4] sm:$0xf]
      %v6741 = vld [vmem:[%s5 + $0x8] sm:$0xf]
      %v6742 = vld [vmem:[%s5 + $0xc] sm:$0xf]
      %v6743 = vld [vmem:[%s5 + $0x10] sm:$0xf]
      %v6744 = vld [vmem:[%s5 + $0x14] sm:$0xf]
      %v6745 = vld [vmem:[%s5 + $0x18] sm:$0xf]
      %v6746 = vld [vmem:[%s5 + $0x1c] sm:$0xf]
      %v6747 = vld [vmem:[#allocation3 + $0x30] sm:$0x1]
      %v6748 = vld [vmem:[%s5 + $0x20] sm:$0xf]
      %v6749 = vld [vmem:[%s5 + $0x24] sm:$0xf]
      %v6750 = vld [vmem:[%s5 + $0x28] sm:$0xf]
      %v6751 = vld [vmem:[%s5 + $0x2c] sm:$0xf]
      %v6752 = vld [vmem:[%s5 + $0x30] sm:$0xf]
      %v6753 = vld [vmem:[%s5 + $0x34] sm:$0xf]
      %v6754 = vld [vmem:[%s5 + $0x38] sm:$0xf]
      %v6755 = vld [vmem:[%s5 + $0x3c] sm:$0xf]
      %v6769 = vunpack.c.l.b16 %v6727
      %v6770 = vunpack.c.l.b16 %v6728
      %v6771 = vunpack.c.l.b16 %v6729
      %v6772 = vunpack.c.l.b16 %v6730
      %v6773 = vunpack.c.l.b16 %v6731
      %v6774 = vunpack.c.l.b16 %v6732
      %v6775 = vunpack.c.l.b16 %v6733
      %v6776 = vunpack.c.l.b16 %v6734
      %v6777 = vunpack.c.l.b16 %v6735
      %v6778 = vunpack.c.l.b16 %v6736
      %v6779 = vunpack.c.l.b16 %v6737
      %v6780 = vunpack.c.l.b16 %v6738
      %v6781 = vunpack.c.l.b16 %v6747
      %v6782 = vpack.c.b16 %v6770, %v6769
      %v6783 = vpack.c.b16 %v6772, %v6771
      %v6784 = vpack.c.b16 %v6774, %v6773
      %v6785 = vpack.c.b16 %v6776, %v6775
      %v6786 = vpack.c.b16 %v6778, %v6777
      %v6787 = vpack.c.b16 %v6780, %v6779
      %v6788 = vpack.c.b16 %v6781, %v6781
      %v6790 = vshrl.u32 %v6782, 16
      %v6792 = vshll.u32 %v6782, 16
      %v6794 = vrot.slane %v6792, 1
      %v6795 = vor.u32 %v6790, %v6794
      %v6797 = vshll.u32 %v6783, 16
      %v6799 = vrot.slane %v6797, 1
      %v6800 = vsel %vm1166, %v6795, %v6799
      %v6801 = vshrl.u32 %v6783, 16
      %v6803 = vor.u32 %v6801, %v6799
      %v6805 = vshll.u32 %v6784, 16
      %v6807 = vrot.slane %v6805, 1
      %v6808 = vsel %vm1166, %v6803, %v6807
      %v6809 = vshrl.u32 %v6784, 16
      %v6811 = vor.u32 %v6809, %v6807
      %v6813 = vshll.u32 %v6785, 16
      %v6815 = vrot.slane %v6813, 1
      %v6816 = vsel %vm1166, %v6811, %v6815
      %v6817 = vshrl.u32 %v6785, 16
      %v6819 = vor.u32 %v6817, %v6815
      %v6821 = vshll.u32 %v6786, 16
      %v6823 = vrot.slane %v6821, 1
      %v6824 = vsel %vm1166, %v6819, %v6823
      %v6825 = vshrl.u32 %v6786, 16
      %v6827 = vor.u32 %v6825, %v6823
      %v6829 = vshll.u32 %v6787, 16
      %v6831 = vrot.slane %v6829, 1
      %v6832 = vsel %vm1166, %v6827, %v6831
      %v6833 = vshrl.u32 %v6787, 16
      %v6835 = vor.u32 %v6833, %v6831
      %v6837 = vshll.u32 %v6788, 16
      %v6839 = vrot.slane %v6837, 1
      %v6840 = vsel %vm1166, %v6835, %v6839
      %v6849 = vunpack.c.l.b16 %v6748
      %v6850 = vunpack.c.l.b16 %v6749
      %v6851 = vunpack.c.l.b16 %v6750
      %v6852 = vunpack.c.l.b16 %v6751
      %v6853 = vunpack.c.l.b16 %v6752
      %v6854 = vunpack.c.l.b16 %v6753
      %v6855 = vunpack.c.l.b16 %v6754
      %v6856 = vunpack.c.l.b16 %v6755
      %v6857 = vpack.c.b16 %v6850, %v6849
      %v6858 = vpack.c.b16 %v6852, %v6851
      %v6859 = vpack.c.b16 %v6854, %v6853
      %v6860 = vpack.c.b16 %v6856, %v6855
      %vm6865 = vcmask 523264
      %v6867 = vsel %vm6865, %v6800, 0
      %v6870 = vsel %vm6865, %v6808, 0
      %v6873 = vsel %vm6865, %v6816, 0
      %v6876 = vsel %vm6865, %v6824, 0
      %v6879 = vsel %vm6865, %v6832, 0
      %v6882 = vsel %vm6865, %v6840, 0
      %6884 = vmatpush.bf16.msra.mxu0 0
      %6885 = vmatpush.bf16.msra.mxu0 0
      %6886 = vmatpush.bf16.msra.mxu0 0
      %6887 = vmatpush.bf16.msra.mxu0 0
      %6888 = vmatpush.bf16.msra.mxu0 %v6860
      %6889 = vmatpush.bf16.msra.mxu0 %v6859
      %6890 = vmatpush.bf16.msra.mxu0 %v6858
      %6891 = vmatpush.bf16.msra.mxu0 %v6857
      %6892 = vmatmul.bf16.gmra.mxu0 %v6867
      %v6893 = vpop.f32.mrf.mxu0
      %v6894 = vadd.f32 0.0, %v6893
      %v6895 = vpop.f32.mrf.mxu0
      %v6896 = vadd.f32 0.0, %v6895
      %6897 = vmatmul.bf16.gmra.mxu0 %v6870
      %v6898 = vpop.f32.mrf.mxu0
      %v6899 = vadd.f32 0.0, %v6898
      %v6900 = vpop.f32.mrf.mxu0
      %v6901 = vadd.f32 0.0, %v6900
      %6902 = vmatmul.bf16.gmra.mxu0 %v6873
      %v6903 = vpop.f32.mrf.mxu0
      %v6904 = vadd.f32 0.0, %v6903
      %v6905 = vpop.f32.mrf.mxu0
      %v6906 = vadd.f32 0.0, %v6905
      %6907 = vmatmul.bf16.gmra.mxu0 %v6876
      %v6908 = vpop.f32.mrf.mxu0
      %v6909 = vadd.f32 0.0, %v6908
      %v6910 = vpop.f32.mrf.mxu0
      %v6911 = vadd.f32 0.0, %v6910
      %6912 = vmatmul.bf16.gmra.mxu0 %v6879
      %v6913 = vpop.f32.mrf.mxu0
      %v6914 = vadd.f32 0.0, %v6913
      %v6915 = vpop.f32.mrf.mxu0
      %v6916 = vadd.f32 0.0, %v6915
      %6917 = vmatmul.bf16.gmra.mxu0 %v6882
      %v6918 = vpop.f32.mrf.mxu0
      %v6919 = vadd.f32 0.0, %v6918
      %v6920 = vpop.f32.mrf.mxu0
      %v6921 = vadd.f32 0.0, %v6920
      %6922 = vdwg.mxu0
      %v6931 = vunpack.c.l.b16 %v6739
      %v6932 = vunpack.c.l.b16 %v6740
      %v6933 = vunpack.c.l.b16 %v6741
      %v6934 = vunpack.c.l.b16 %v6742
      %v6935 = vunpack.c.l.b16 %v6743
      %v6936 = vunpack.c.l.b16 %v6744
      %v6937 = vunpack.c.l.b16 %v6745
      %v6938 = vunpack.c.l.b16 %v6746
      %v6939 = vpack.c.b16 %v6932, %v6931
      %v6940 = vpack.c.b16 %v6934, %v6933
      %v6941 = vpack.c.b16 %v6936, %v6935
      %v6942 = vpack.c.b16 %v6938, %v6937
      %v6947 = vsel %vm6865, %v6782, 0
      %v6949 = vsel %vm6865, %v6783, 0
      %v6951 = vsel %vm6865, %v6784, 0
      %v6953 = vsel %vm6865, %v6785, 0
      %v6955 = vsel %vm6865, %v6786, 0
      %v6957 = vsel %vm6865, %v6787, 0
      %6959 = vmatpush.bf16.msra.mxu0 0
      %6960 = vmatpush.bf16.msra.mxu0 0
      %6961 = vmatpush.bf16.msra.mxu0 0
      %6962 = vmatpush.bf16.msra.mxu0 0
      %6963 = vmatpush.bf16.msra.mxu0 %v6942
      %6964 = vmatpush.bf16.msra.mxu0 %v6941
      %6965 = vmatpush.bf16.msra.mxu0 %v6940
      %6966 = vmatpush.bf16.msra.mxu0 %v6939
      %6967 = vmatmul.bf16.gmra.mxu0 %v6947
      %v6968 = vpop.f32.mrf.mxu0
      %v6969 = vadd.f32 %v6894, %v6968
      %v6970 = vpop.f32.mrf.mxu0
      %v6971 = vadd.f32 %v6896, %v6970
      %6972 = vmatmul.bf16.gmra.mxu0 %v6949
      %v6973 = vpop.f32.mrf.mxu0
      %v6974 = vadd.f32 %v6899, %v6973
      %v6975 = vpop.f32.mrf.mxu0
      %v6976 = vadd.f32 %v6901, %v6975
      %6977 = vmatmul.bf16.gmra.mxu0 %v6951
      %v6978 = vpop.f32.mrf.mxu0
      %v6979 = vadd.f32 %v6904, %v6978
      %v6980 = vpop.f32.mrf.mxu0
      %v6981 = vadd.f32 %v6906, %v6980
      %6982 = vmatmul.bf16.gmra.mxu0 %v6953
      %v6983 = vpop.f32.mrf.mxu0
      %v6984 = vadd.f32 %v6909, %v6983
      %v6985 = vpop.f32.mrf.mxu0
      %v6986 = vadd.f32 %v6911, %v6985
      %6987 = vmatmul.bf16.gmra.mxu0 %v6955
      %v6988 = vpop.f32.mrf.mxu0
      %v6989 = vadd.f32 %v6914, %v6988
      %v6990 = vpop.f32.mrf.mxu0
      %v6991 = vadd.f32 %v6916, %v6990
      %6992 = vmatmul.bf16.gmra.mxu0 %v6957
      %v6993 = vpop.f32.mrf.mxu0
      %v6994 = vadd.f32 %v6919, %v6993
      %v6995 = vpop.f32.mrf.mxu0
      %v6996 = vadd.f32 %v6921, %v6995
      %6997 = vdwg.mxu0
      %v6998 = vld [vmem:[#allocation3] sm:$0xe]
      %v6999 = vld [vmem:[%s5 + $0x40] sm:$0xf]
      %v7000 = vld [vmem:[%s5 + $0x44] sm:$0xf]
      %v7001 = vld [vmem:[%s5 + $0x48] sm:$0xf]
      %v7002 = vld [vmem:[%s5 + $0x4c] sm:$0xf]
      %v7003 = vld [vmem:[%s5 + $0x50] sm:$0xf]
      %v7004 = vld [vmem:[%s5 + $0x54] sm:$0xf]
      %v7005 = vld [vmem:[%s5 + $0x58] sm:$0xf]
      %v7006 = vld [vmem:[%s5 + $0x5c] sm:$0xf]
      %v7008 = vunpack.c.l.b16 %v6998
      %v7009 = vpack.c.b16 %v6770, %v7008
      %vm7010 = vcmask 1046528
      %v7011 = vrot.slane %v7009, 1
      %v7012 = vrot.slane %v6783, 1
      %v7013 = vsel %vm7010, %v7011, %v7012
      %v7014 = vrot.slane %v6784, 1
      %v7015 = vsel %vm7010, %v7012, %v7014
      %v7016 = vrot.slane %v6785, 1
      %v7017 = vsel %vm7010, %v7014, %v7016
      %v7018 = vrot.slane %v6786, 1
      %v7019 = vsel %vm7010, %v7016, %v7018
      %v7020 = vrot.slane %v6787, 1
      %v7021 = vsel %vm7010, %v7018, %v7020
      %v7022 = vrot.slane %v6788, 1
      %v7023 = vsel %vm7010, %v7020, %v7022
      %v7032 = vunpack.c.l.b16 %v6999
      %v7033 = vunpack.c.l.b16 %v7000
      %v7034 = vunpack.c.l.b16 %v7001
      %v7035 = vunpack.c.l.b16 %v7002
      %v7036 = vunpack.c.l.b16 %v7003
      %v7037 = vunpack.c.l.b16 %v7004
      %v7038 = vunpack.c.l.b16 %v7005
      %v7039 = vunpack.c.l.b16 %v7006
      %v7040 = vpack.c.b16 %v7033, %v7032
      %v7041 = vpack.c.b16 %v7035, %v7034
      %v7042 = vpack.c.b16 %v7037, %v7036
      %v7043 = vpack.c.b16 %v7039, %v7038
      %v7049 = vsel %vm6865, %v7013, 0
      %v7052 = vsel %vm6865, %v7015, 0
      %v7055 = vsel %vm6865, %v7017, 0
      %v7058 = vsel %vm6865, %v7019, 0
      %v7061 = vsel %vm6865, %v7021, 0
      %v7064 = vsel %vm6865, %v7023, 0
      %7066 = vmatpush.bf16.msra.mxu0 0
      %7067 = vmatpush.bf16.msra.mxu0 0
      %7068 = vmatpush.bf16.msra.mxu0 0
      %7069 = vmatpush.bf16.msra.mxu0 0
      %7070 = vmatpush.bf16.msra.mxu0 %v7043
      %7071 = vmatpush.bf16.msra.mxu0 %v7042
      %7072 = vmatpush.bf16.msra.mxu0 %v7041
      %7073 = vmatpush.bf16.msra.mxu0 %v7040
      %7074 = vmatmul.bf16.gmra.mxu0 %v7049
      %v7075 = vpop.f32.mrf.mxu0
      %v7076 = vadd.f32 0.0, %v7075
      %v7077 = vpop.f32.mrf.mxu0
      %v7078 = vadd.f32 0.0, %v7077
      %7079 = vmatmul.bf16.gmra.mxu0 %v7052
      %v7080 = vpop.f32.mrf.mxu0
      %v7081 = vadd.f32 0.0, %v7080
      %v7082 = vpop.f32.mrf.mxu0
      %v7083 = vadd.f32 0.0, %v7082
      %7084 = vmatmul.bf16.gmra.mxu0 %v7055
      %v7085 = vpop.f32.mrf.mxu0
      %v7086 = vadd.f32 0.0, %v7085
      %v7087 = vpop.f32.mrf.mxu0
      %v7088 = vadd.f32 0.0, %v7087
      %7089 = vmatmul.bf16.gmra.mxu0 %v7058
      %v7090 = vpop.f32.mrf.mxu0
      %v7091 = vadd.f32 0.0, %v7090
      %v7092 = vpop.f32.mrf.mxu0
      %v7093 = vadd.f32 0.0, %v7092
      %7094 = vmatmul.bf16.gmra.mxu0 %v7061
      %v7095 = vpop.f32.mrf.mxu0
      %v7096 = vadd.f32 0.0, %v7095
      %v7097 = vpop.f32.mrf.mxu0
      %v7098 = vadd.f32 0.0, %v7097
      %7099 = vmatmul.bf16.gmra.mxu0 %v7064
      %v7100 = vpop.f32.mrf.mxu0
      %v7101 = vadd.f32 0.0, %v7100
      %v7102 = vpop.f32.mrf.mxu0
      %v7103 = vadd.f32 0.0, %v7102
      %7104 = vdwg.mxu0
      %v7105 = vadd.f32 %v6969, %v7076
      %v7106 = vadd.f32 %v6971, %v7078
      %v7107 = vadd.f32 %v6974, %v7081
      %v7108 = vadd.f32 %v6976, %v7083
      %v7109 = vadd.f32 %v6979, %v7086
      %v7110 = vadd.f32 %v6981, %v7088
      %v7111 = vadd.f32 %v6984, %v7091
      %v7112 = vadd.f32 %v6986, %v7093
      %v7113 = vadd.f32 %v6989, %v7096
      %v7114 = vadd.f32 %v6991, %v7098
      %v7115 = vadd.f32 %v6994, %v7101
      %v7116 = vadd.f32 %v6996, %v7103
      %v7117 = vld [vmem:[#allocation3 + $0x4] sm:$0xc]
      %v7118 = vld [vmem:[#allocation3 + $0x8] sm:$0xf]
      %v7119 = vld [vmem:[#allocation3 + $0xc] sm:$0xf]
      %v7120 = vld [vmem:[#allocation3 + $0x10] sm:$0xf]
      %v7121 = vld [vmem:[#allocation3 + $0x14] sm:$0xf]
      %v7122 = vld [vmem:[#allocation3 + $0x18] sm:$0xf]
      %v7123 = vld [vmem:[#allocation3 + $0x1c] sm:$0xf]
      %v7124 = vld [vmem:[#allocation3 + $0x20] sm:$0xf]
      %v7125 = vld [vmem:[#allocation3 + $0x24] sm:$0xf]
      %v7126 = vld [vmem:[#allocation3 + $0x28] sm:$0xf]
      %v7127 = vld [vmem:[#allocation3 + $0x2c] sm:$0xf]
      %v7128 = vld [vmem:[#allocation3 + $0x30] sm:$0xf]
      %v7129 = vld [vmem:[#allocation3 + $0x34] sm:$0x3]
      %v7130 = vld [vmem:[%s5 + $0x60] sm:$0xf]
      %v7131 = vld [vmem:[%s5 + $0x64] sm:$0xf]
      %v7132 = vld [vmem:[%s5 + $0x68] sm:$0xf]
      %v7133 = vld [vmem:[%s5 + $0x6c] sm:$0xf]
      %v7134 = vld [vmem:[%s5 + $0x70] sm:$0xf]
      %v7135 = vld [vmem:[%s5 + $0x74] sm:$0xf]
      %v7136 = vld [vmem:[%s5 + $0x78] sm:$0xf]
      %v7137 = vld [vmem:[%s5 + $0x7c] sm:$0xf]
      %v7151 = vunpack.c.l.b16 %v7117
      %v7152 = vunpack.c.l.b16 %v7118
      %v7153 = vunpack.c.l.b16 %v7119
      %v7154 = vunpack.c.l.b16 %v7120
      %v7155 = vunpack.c.l.b16 %v7121
      %v7156 = vunpack.c.l.b16 %v7122
      %v7157 = vunpack.c.l.b16 %v7123
      %v7158 = vunpack.c.l.b16 %v7124
      %v7159 = vunpack.c.l.b16 %v7125
      %v7160 = vunpack.c.l.b16 %v7126
      %v7161 = vunpack.c.l.b16 %v7127
      %v7162 = vunpack.c.l.b16 %v7128
      %v7163 = vunpack.c.l.b16 %v7129
      %v7164 = vpack.c.b16 %v7152, %v7151
      %v7165 = vpack.c.b16 %v7154, %v7153
      %v7166 = vpack.c.b16 %v7156, %v7155
      %v7167 = vpack.c.b16 %v7158, %v7157
      %v7168 = vpack.c.b16 %v7160, %v7159
      %v7169 = vpack.c.b16 %v7162, %v7161
      %v7170 = vpack.c.b16 %v7163, %v7163
      %v7171 = vrot.slane %v7164, 2
      %v7172 = vrot.slane %v7165, 2
      %v7173 = vsel %vm2424, %v7171, %v7172
      %v7174 = vrot.slane %v7166, 2
      %v7175 = vsel %vm2424, %v7172, %v7174
      %v7176 = vrot.slane %v7167, 2
      %v7177 = vsel %vm2424, %v7174, %v7176
      %v7178 = vrot.slane %v7168, 2
      %v7179 = vsel %vm2424, %v7176, %v7178
      %v7180 = vrot.slane %v7169, 2
      %v7181 = vsel %vm2424, %v7178, %v7180
      %v7182 = vrot.slane %v7170, 2
      %v7183 = vsel %vm2424, %v7180, %v7182
      %v7192 = vunpack.c.l.b16 %v7130
      %v7193 = vunpack.c.l.b16 %v7131
      %v7194 = vunpack.c.l.b16 %v7132
      %v7195 = vunpack.c.l.b16 %v7133
      %v7196 = vunpack.c.l.b16 %v7134
      %v7197 = vunpack.c.l.b16 %v7135
      %v7198 = vunpack.c.l.b16 %v7136
      %v7199 = vunpack.c.l.b16 %v7137
      %v7200 = vpack.c.b16 %v7193, %v7192
      %v7201 = vpack.c.b16 %v7195, %v7194
      %v7202 = vpack.c.b16 %v7197, %v7196
      %v7203 = vpack.c.b16 %v7199, %v7198
      %v7209 = vsel %vm6865, %v7173, 0
      %v7212 = vsel %vm6865, %v7175, 0
      %v7215 = vsel %vm6865, %v7177, 0
      %v7218 = vsel %vm6865, %v7179, 0
      %v7221 = vsel %vm6865, %v7181, 0
      %v7224 = vsel %vm6865, %v7183, 0
      %7226 = vmatpush.bf16.msra.mxu0 0
      %7227 = vmatpush.bf16.msra.mxu0 0
      %7228 = vmatpush.bf16.msra.mxu0 0
      %7229 = vmatpush.bf16.msra.mxu0 0
      %7230 = vmatpush.bf16.msra.mxu0 %v7203
      %7231 = vmatpush.bf16.msra.mxu0 %v7202
      %7232 = vmatpush.bf16.msra.mxu0 %v7201
      %7233 = vmatpush.bf16.msra.mxu0 %v7200
      %7234 = vmatmul.bf16.gmra.mxu0 %v7209
      %v7235 = vpop.f32.mrf.mxu0
      %v7236 = vadd.f32 0.0, %v7235
      %v7237 = vpop.f32.mrf.mxu0
      %v7238 = vadd.f32 0.0, %v7237
      %7239 = vmatmul.bf16.gmra.mxu0 %v7212
      %v7240 = vpop.f32.mrf.mxu0
      %v7241 = vadd.f32 0.0, %v7240
      %v7242 = vpop.f32.mrf.mxu0
      %v7243 = vadd.f32 0.0, %v7242
      %7244 = vmatmul.bf16.gmra.mxu0 %v7215
      %v7245 = vpop.f32.mrf.mxu0
      %v7246 = vadd.f32 0.0, %v7245
      %v7247 = vpop.f32.mrf.mxu0
      %v7248 = vadd.f32 0.0, %v7247
      %7249 = vmatmul.bf16.gmra.mxu0 %v7218
      %v7250 = vpop.f32.mrf.mxu0
      %v7251 = vadd.f32 0.0, %v7250
      %v7252 = vpop.f32.mrf.mxu0
      %v7253 = vadd.f32 0.0, %v7252
      %7254 = vmatmul.bf16.gmra.mxu0 %v7221
      %v7255 = vpop.f32.mrf.mxu0
      %v7256 = vadd.f32 0.0, %v7255
      %v7257 = vpop.f32.mrf.mxu0
      %v7258 = vadd.f32 0.0, %v7257
      %7259 = vmatmul.bf16.gmra.mxu0 %v7224
      %v7260 = vpop.f32.mrf.mxu0
      %v7261 = vadd.f32 0.0, %v7260
      %v7262 = vpop.f32.mrf.mxu0
      %v7263 = vadd.f32 0.0, %v7262
      %7264 = vdwg.mxu0
      %v7265 = vadd.f32 %v7105, %v7236
      %v7266 = vadd.f32 %v7106, %v7238
      %v7267 = vadd.f32 %v7107, %v7241
      %v7268 = vadd.f32 %v7108, %v7243
      %v7269 = vadd.f32 %v7109, %v7246
      %v7270 = vadd.f32 %v7110, %v7248
      %v7271 = vadd.f32 %v7111, %v7251
      %v7272 = vadd.f32 %v7112, %v7253
      %v7273 = vadd.f32 %v7113, %v7256
      %v7274 = vadd.f32 %v7114, %v7258
      %v7275 = vadd.f32 %v7115, %v7261
      %v7276 = vadd.f32 %v7116, %v7263
      %v7277 = vld [vmem:[#allocation3 + $0x34] sm:$0x7]
      %v7278 = vld [vmem:[%s5 + $0x80] sm:$0xf]
      %v7279 = vld [vmem:[%s5 + $0x84] sm:$0xf]
      %v7280 = vld [vmem:[%s5 + $0x88] sm:$0xf]
      %v7281 = vld [vmem:[%s5 + $0x8c] sm:$0xf]
      %v7282 = vld [vmem:[%s5 + $0x90] sm:$0xf]
      %v7283 = vld [vmem:[%s5 + $0x94] sm:$0xf]
      %v7284 = vld [vmem:[%s5 + $0x98] sm:$0xf]
      %v7285 = vld [vmem:[%s5 + $0x9c] sm:$0xf]
      %v7287 = vunpack.c.l.b16 %v7277
      %v7288 = vpack.c.b16 %v7287, %v7287
      %v7290 = vshrl.u32 %v7164, 16
      %v7292 = vrot.slane %v7290, 2
      %v7293 = vshll.u32 %v7164, 16
      %v7295 = vrot.slane %v7293, 3
      %v7296 = vor.u32 %v7292, %v7295
      %v7298 = vshrl.u32 %v7165, 16
      %v7300 = vrot.slane %v7298, 2
      %v7301 = vshll.u32 %v7165, 16
      %v7303 = vrot.slane %v7301, 3
      %v7304 = vor.u32 %v7300, %v7303
      %v7305 = vsel %vm3545, %v7296, %v7304
      %v7307 = vshrl.u32 %v7166, 16
      %v7309 = vrot.slane %v7307, 2
      %v7310 = vshll.u32 %v7166, 16
      %v7312 = vrot.slane %v7310, 3
      %v7313 = vor.u32 %v7309, %v7312
      %v7314 = vsel %vm3545, %v7304, %v7313
      %v7316 = vshrl.u32 %v7167, 16
      %v7318 = vrot.slane %v7316, 2
      %v7319 = vshll.u32 %v7167, 16
      %v7321 = vrot.slane %v7319, 3
      %v7322 = vor.u32 %v7318, %v7321
      %v7323 = vsel %vm3545, %v7313, %v7322
      %v7325 = vshrl.u32 %v7168, 16
      %v7327 = vrot.slane %v7325, 2
      %v7328 = vshll.u32 %v7168, 16
      %v7330 = vrot.slane %v7328, 3
      %v7331 = vor.u32 %v7327, %v7330
      %v7332 = vsel %vm3545, %v7322, %v7331
      %v7334 = vshrl.u32 %v7169, 16
      %v7336 = vrot.slane %v7334, 2
      %v7337 = vshll.u32 %v7169, 16
      %v7339 = vrot.slane %v7337, 3
      %v7340 = vor.u32 %v7336, %v7339
      %v7341 = vsel %vm3545, %v7331, %v7340
      %v7343 = vshrl.u32 %v7288, 16
      %v7345 = vrot.slane %v7343, 2
      %v7346 = vshll.u32 %v7288, 16
      %v7348 = vrot.slane %v7346, 3
      %v7349 = vor.u32 %v7345, %v7348
      %v7350 = vsel %vm3545, %v7340, %v7349
      %v7359 = vunpack.c.l.b16 %v7278
      %v7360 = vunpack.c.l.b16 %v7279
      %v7361 = vunpack.c.l.b16 %v7280
      %v7362 = vunpack.c.l.b16 %v7281
      %v7363 = vunpack.c.l.b16 %v7282
      %v7364 = vunpack.c.l.b16 %v7283
      %v7365 = vunpack.c.l.b16 %v7284
      %v7366 = vunpack.c.l.b16 %v7285
      %v7367 = vpack.c.b16 %v7360, %v7359
      %v7368 = vpack.c.b16 %v7362, %v7361
      %v7369 = vpack.c.b16 %v7364, %v7363
      %v7370 = vpack.c.b16 %v7366, %v7365
      %v7376 = vsel %vm6865, %v7305, 0
      %v7379 = vsel %vm6865, %v7314, 0
      %v7382 = vsel %vm6865, %v7323, 0
      %v7385 = vsel %vm6865, %v7332, 0
      %v7388 = vsel %vm6865, %v7341, 0
      %v7391 = vsel %vm6865, %v7350, 0
      %7393 = vmatpush.bf16.msra.mxu0 0
      %7394 = vmatpush.bf16.msra.mxu0 0
      %7395 = vmatpush.bf16.msra.mxu0 0
      %7396 = vmatpush.bf16.msra.mxu0 0
      %7397 = vmatpush.bf16.msra.mxu0 %v7370
      %7398 = vmatpush.bf16.msra.mxu0 %v7369
      %7399 = vmatpush.bf16.msra.mxu0 %v7368
      %7400 = vmatpush.bf16.msra.mxu0 %v7367
      %7401 = vmatmul.bf16.gmra.mxu0 %v7376
      %v7402 = vpop.f32.mrf.mxu0
      %v7403 = vadd.f32 0.0, %v7402
      %v7404 = vpop.f32.mrf.mxu0
      %v7405 = vadd.f32 0.0, %v7404
      %7406 = vmatmul.bf16.gmra.mxu0 %v7379
      %v7407 = vpop.f32.mrf.mxu0
      %v7408 = vadd.f32 0.0, %v7407
      %v7409 = vpop.f32.mrf.mxu0
      %v7410 = vadd.f32 0.0, %v7409
      %7411 = vmatmul.bf16.gmra.mxu0 %v7382
      %v7412 = vpop.f32.mrf.mxu0
      %v7413 = vadd.f32 0.0, %v7412
      %v7414 = vpop.f32.mrf.mxu0
      %v7415 = vadd.f32 0.0, %v7414
      %7416 = vmatmul.bf16.gmra.mxu0 %v7385
      %v7417 = vpop.f32.mrf.mxu0
      %v7418 = vadd.f32 0.0, %v7417
      %v7419 = vpop.f32.mrf.mxu0
      %v7420 = vadd.f32 0.0, %v7419
      %7421 = vmatmul.bf16.gmra.mxu0 %v7388
      %v7422 = vpop.f32.mrf.mxu0
      %v7423 = vadd.f32 0.0, %v7422
      %v7424 = vpop.f32.mrf.mxu0
      %v7425 = vadd.f32 0.0, %v7424
      %7426 = vmatmul.bf16.gmra.mxu0 %v7391
      %v7427 = vpop.f32.mrf.mxu0
      %v7428 = vadd.f32 0.0, %v7427
      %v7429 = vpop.f32.mrf.mxu0
      %v7430 = vadd.f32 0.0, %v7429
      %7431 = vdwg.mxu0
      %v7432 = vadd.f32 %v7265, %v7403
      %v7433 = vadd.f32 %v7266, %v7405
      %v7434 = vadd.f32 %v7267, %v7408
      %v7435 = vadd.f32 %v7268, %v7410
      %v7436 = vadd.f32 %v7269, %v7413
      %v7437 = vadd.f32 %v7270, %v7415
      %v7438 = vadd.f32 %v7271, %v7418
      %v7439 = vadd.f32 %v7272, %v7420
      %v7440 = vadd.f32 %v7273, %v7423
      %v7441 = vadd.f32 %v7274, %v7425
      %v7442 = vadd.f32 %v7275, %v7428
      %v7443 = vadd.f32 %v7276, %v7430
      %v7444 = vld [vmem:[#allocation3 + $0x4] sm:$0x8]
      %v7445 = vld [vmem:[%s5 + $0xa0] sm:$0xf]
      %v7446 = vld [vmem:[%s5 + $0xa4] sm:$0xf]
      %v7447 = vld [vmem:[%s5 + $0xa8] sm:$0xf]
      %v7448 = vld [vmem:[%s5 + $0xac] sm:$0xf]
      %v7449 = vld [vmem:[%s5 + $0xb0] sm:$0xf]
      %v7450 = vld [vmem:[%s5 + $0xb4] sm:$0xf]
      %v7451 = vld [vmem:[%s5 + $0xb8] sm:$0xf]
      %v7452 = vld [vmem:[%s5 + $0xbc] sm:$0xf]
      %v7454 = vunpack.c.l.b16 %v7444
      %v7455 = vpack.c.b16 %v7152, %v7454
      %vm7456 = vcmask 1044480
      %v7457 = vrot.slane %v7455, 3
      %v7458 = vrot.slane %v7165, 3
      %v7459 = vsel %vm7456, %v7457, %v7458
      %v7460 = vrot.slane %v7166, 3
      %v7461 = vsel %vm7456, %v7458, %v7460
      %v7462 = vrot.slane %v7167, 3
      %v7463 = vsel %vm7456, %v7460, %v7462
      %v7464 = vrot.slane %v7168, 3
      %v7465 = vsel %vm7456, %v7462, %v7464
      %v7466 = vrot.slane %v7169, 3
      %v7467 = vsel %vm7456, %v7464, %v7466
      %v7468 = vrot.slane %v7288, 3
      %v7469 = vsel %vm7456, %v7466, %v7468
      %v7478 = vunpack.c.l.b16 %v7445
      %v7479 = vunpack.c.l.b16 %v7446
      %v7480 = vunpack.c.l.b16 %v7447
      %v7481 = vunpack.c.l.b16 %v7448
      %v7482 = vunpack.c.l.b16 %v7449
      %v7483 = vunpack.c.l.b16 %v7450
      %v7484 = vunpack.c.l.b16 %v7451
      %v7485 = vunpack.c.l.b16 %v7452
      %v7486 = vpack.c.b16 %v7479, %v7478
      %v7487 = vpack.c.b16 %v7481, %v7480
      %v7488 = vpack.c.b16 %v7483, %v7482
      %v7489 = vpack.c.b16 %v7485, %v7484
      %v7495 = vsel %vm6865, %v7459, 0
      %v7498 = vsel %vm6865, %v7461, 0
      %v7501 = vsel %vm6865, %v7463, 0
      %v7504 = vsel %vm6865, %v7465, 0
      %v7507 = vsel %vm6865, %v7467, 0
      %v7510 = vsel %vm6865, %v7469, 0
      %7512 = vmatpush.bf16.msra.mxu0 0
      %7513 = vmatpush.bf16.msra.mxu0 0
      %7514 = vmatpush.bf16.msra.mxu0 0
      %7515 = vmatpush.bf16.msra.mxu0 0
      %7516 = vmatpush.bf16.msra.mxu0 %v7489
      %7517 = vmatpush.bf16.msra.mxu0 %v7488
      %7518 = vmatpush.bf16.msra.mxu0 %v7487
      %7519 = vmatpush.bf16.msra.mxu0 %v7486
      %7520 = vmatmul.bf16.gmra.mxu0 %v7495
      %v7521 = vpop.f32.mrf.mxu0
      %v7522 = vadd.f32 0.0, %v7521
      %v7523 = vpop.f32.mrf.mxu0
      %v7524 = vadd.f32 0.0, %v7523
      %7525 = vmatmul.bf16.gmra.mxu0 %v7498
      %v7526 = vpop.f32.mrf.mxu0
      %v7527 = vadd.f32 0.0, %v7526
      %v7528 = vpop.f32.mrf.mxu0
      %v7529 = vadd.f32 0.0, %v7528
      %7530 = vmatmul.bf16.gmra.mxu0 %v7501
      %v7531 = vpop.f32.mrf.mxu0
      %v7532 = vadd.f32 0.0, %v7531
      %v7533 = vpop.f32.mrf.mxu0
      %v7534 = vadd.f32 0.0, %v7533
      %7535 = vmatmul.bf16.gmra.mxu0 %v7504
      %v7536 = vpop.f32.mrf.mxu0
      %v7537 = vadd.f32 0.0, %v7536
      %v7538 = vpop.f32.mrf.mxu0
      %v7539 = vadd.f32 0.0, %v7538
      %7540 = vmatmul.bf16.gmra.mxu0 %v7507
      %v7541 = vpop.f32.mrf.mxu0
      %v7542 = vadd.f32 0.0, %v7541
      %v7543 = vpop.f32.mrf.mxu0
      %v7544 = vadd.f32 0.0, %v7543
      %7545 = vmatmul.bf16.gmra.mxu0 %v7510
      %v7546 = vpop.f32.mrf.mxu0
      %v7547 = vadd.f32 0.0, %v7546
      %v7548 = vpop.f32.mrf.mxu0
      %v7549 = vadd.f32 0.0, %v7548
      %7550 = vdwg.mxu0
      %v7551 = vadd.f32 %v7432, %v7522
      %v7552 = vadd.f32 %v7433, %v7524
      %v7553 = vadd.f32 %v7434, %v7527
      %v7554 = vadd.f32 %v7435, %v7529
      %v7555 = vadd.f32 %v7436, %v7532
      %v7556 = vadd.f32 %v7437, %v7534
      %v7557 = vadd.f32 %v7438, %v7537
      %v7558 = vadd.f32 %v7439, %v7539
      %v7559 = vadd.f32 %v7440, %v7542
      %v7560 = vadd.f32 %v7441, %v7544
      %v7561 = vadd.f32 %v7442, %v7547
      %v7562 = vadd.f32 %v7443, %v7549
      %v7563 = vld [vmem:[#allocation3 + $0xc] sm:$0xf]
      %v7564 = vld [vmem:[#allocation3 + $0x10] sm:$0xf]
      %v7565 = vld [vmem:[#allocation3 + $0x14] sm:$0xf]
      %v7566 = vld [vmem:[#allocation3 + $0x18] sm:$0xf]
      %v7567 = vld [vmem:[#allocation3 + $0x1c] sm:$0xf]
      %v7568 = vld [vmem:[#allocation3 + $0x20] sm:$0xf]
      %v7569 = vld [vmem:[#allocation3 + $0x24] sm:$0xf]
      %v7570 = vld [vmem:[#allocation3 + $0x28] sm:$0xf]
      %v7571 = vld [vmem:[#allocation3 + $0x2c] sm:$0xf]
      %v7572 = vld [vmem:[#allocation3 + $0x30] sm:$0xf]
      %v7573 = vld [vmem:[#allocation3 + $0x34] sm:$0xf]
      %v7574 = vld [vmem:[#allocation3 + $0x38] sm:$0xf]
      %v7575 = vld [vmem:[%s5 + $0xc0] sm:$0xf]
      %v7576 = vld [vmem:[%s5 + $0xc4] sm:$0xf]
      %v7577 = vld [vmem:[%s5 + $0xc8] sm:$0xf]
      %v7578 = vld [vmem:[%s5 + $0xcc] sm:$0xf]
      %v7579 = vld [vmem:[%s5 + $0xd0] sm:$0xf]
      %v7580 = vld [vmem:[%s5 + $0xd4] sm:$0xf]
      %v7581 = vld [vmem:[%s5 + $0xd8] sm:$0xf]
      %v7582 = vld [vmem:[%s5 + $0xdc] sm:$0xf]
      %v7595 = vunpack.c.l.b16 %v7563
      %v7596 = vunpack.c.l.b16 %v7564
      %v7597 = vunpack.c.l.b16 %v7565
      %v7598 = vunpack.c.l.b16 %v7566
      %v7599 = vunpack.c.l.b16 %v7567
      %v7600 = vunpack.c.l.b16 %v7568
      %v7601 = vunpack.c.l.b16 %v7569
      %v7602 = vunpack.c.l.b16 %v7570
      %v7603 = vunpack.c.l.b16 %v7571
      %v7604 = vunpack.c.l.b16 %v7572
      %v7605 = vunpack.c.l.b16 %v7573
      %v7606 = vunpack.c.l.b16 %v7574
      %v7607 = vpack.c.b16 %v7596, %v7595
      %v7608 = vpack.c.b16 %v7598, %v7597
      %v7609 = vpack.c.b16 %v7600, %v7599
      %v7610 = vpack.c.b16 %v7602, %v7601
      %v7611 = vpack.c.b16 %v7604, %v7603
      %v7612 = vpack.c.b16 %v7606, %v7605
      %v7621 = vunpack.c.l.b16 %v7575
      %v7622 = vunpack.c.l.b16 %v7576
      %v7623 = vunpack.c.l.b16 %v7577
      %v7624 = vunpack.c.l.b16 %v7578
      %v7625 = vunpack.c.l.b16 %v7579
      %v7626 = vunpack.c.l.b16 %v7580
      %v7627 = vunpack.c.l.b16 %v7581
      %v7628 = vunpack.c.l.b16 %v7582
      %v7629 = vpack.c.b16 %v7622, %v7621
      %v7630 = vpack.c.b16 %v7624, %v7623
      %v7631 = vpack.c.b16 %v7626, %v7625
      %v7632 = vpack.c.b16 %v7628, %v7627
      %v7638 = vsel %vm6865, %v7607, 0
      %v7641 = vsel %vm6865, %v7608, 0
      %v7644 = vsel %vm6865, %v7609, 0
      %v7647 = vsel %vm6865, %v7610, 0
      %v7650 = vsel %vm6865, %v7611, 0
      %v7653 = vsel %vm6865, %v7612, 0
      %7655 = vmatpush.bf16.msra.mxu0 0
      %7656 = vmatpush.bf16.msra.mxu0 0
      %7657 = vmatpush.bf16.msra.mxu0 0
      %7658 = vmatpush.bf16.msra.mxu0 0
      %7659 = vmatpush.bf16.msra.mxu0 %v7632
      %7660 = vmatpush.bf16.msra.mxu0 %v7631
      %7661 = vmatpush.bf16.msra.mxu0 %v7630
      %7662 = vmatpush.bf16.msra.mxu0 %v7629
      %7663 = vmatmul.bf16.gmra.mxu0 %v7638
      %v7664 = vpop.f32.mrf.mxu0
      %v7665 = vadd.f32 0.0, %v7664
      %v7666 = vpop.f32.mrf.mxu0
      %v7667 = vadd.f32 0.0, %v7666
      %7668 = vmatmul.bf16.gmra.mxu0 %v7641
      %v7669 = vpop.f32.mrf.mxu0
      %v7670 = vadd.f32 0.0, %v7669
      %v7671 = vpop.f32.mrf.mxu0
      %v7672 = vadd.f32 0.0, %v7671
      %7673 = vmatmul.bf16.gmra.mxu0 %v7644
      %v7674 = vpop.f32.mrf.mxu0
      %v7675 = vadd.f32 0.0, %v7674
      %v7676 = vpop.f32.mrf.mxu0
      %v7677 = vadd.f32 0.0, %v7676
      %7678 = vmatmul.bf16.gmra.mxu0 %v7647
      %v7679 = vpop.f32.mrf.mxu0
      %v7680 = vadd.f32 0.0, %v7679
      %v7681 = vpop.f32.mrf.mxu0
      %v7682 = vadd.f32 0.0, %v7681
      %7683 = vmatmul.bf16.gmra.mxu0 %v7650
      %v7684 = vpop.f32.mrf.mxu0
      %v7685 = vadd.f32 0.0, %v7684
      %v7686 = vpop.f32.mrf.mxu0
      %v7687 = vadd.f32 0.0, %v7686
      %7688 = vmatmul.bf16.gmra.mxu0 %v7653
      %v7689 = vpop.f32.mrf.mxu0
      %v7690 = vadd.f32 0.0, %v7689
      %v7691 = vpop.f32.mrf.mxu0
      %v7692 = vadd.f32 0.0, %v7691
      %7693 = vdwg.mxu0
      %v7694 = vadd.f32 %v7551, %v7665
      %v7695 = vadd.f32 %v7552, %v7667
      %v7696 = vadd.f32 %v7553, %v7670
      %v7697 = vadd.f32 %v7554, %v7672
      %v7698 = vadd.f32 %v7555, %v7675
      %v7699 = vadd.f32 %v7556, %v7677
      %v7700 = vadd.f32 %v7557, %v7680
      %v7701 = vadd.f32 %v7558, %v7682
      %v7702 = vadd.f32 %v7559, %v7685
      %v7703 = vadd.f32 %v7560, %v7687
      %v7704 = vadd.f32 %v7561, %v7690
      %v7705 = vadd.f32 %v7562, %v7692
      %v7706 = vld [vmem:[#allocation3 + $0xc] sm:$0xf]
      %v7707 = vld [vmem:[#allocation3 + $0x10] sm:$0xf]
      %v7708 = vld [vmem:[#allocation3 + $0x14] sm:$0xf]
      %v7709 = vld [vmem:[#allocation3 + $0x18] sm:$0xf]
      %v7710 = vld [vmem:[#allocation3 + $0x1c] sm:$0xf]
      %v7711 = vld [vmem:[#allocation3 + $0x20] sm:$0xf]
      %v7712 = vld [vmem:[#allocation3 + $0x24] sm:$0xf]
      %v7713 = vld [vmem:[#allocation3 + $0x28] sm:$0xf]
      %v7714 = vld [vmem:[#allocation3 + $0x2c] sm:$0xf]
      %v7715 = vld [vmem:[#allocation3 + $0x30] sm:$0xf]
      %v7716 = vld [vmem:[#allocation3 + $0x34] sm:$0xf]
      %v7717 = vld [vmem:[#allocation3 + $0x38] sm:$0xf]
      %v7718 = vld [vmem:[#allocation3 + $0x3c] sm:$0x1]
      %v7719 = vld [vmem:[%s5 + $0xe0] sm:$0xf]
      %v7720 = vld [vmem:[%s5 + $0xe4] sm:$0xf]
      %v7721 = vld [vmem:[%s5 + $0xe8] sm:$0xf]
      %v7722 = vld [vmem:[%s5 + $0xec] sm:$0xf]
      %v7723 = vld [vmem:[%s5 + $0xf0] sm:$0xf]
      %v7724 = vld [vmem:[%s5 + $0xf4] sm:$0xf]
      %v7725 = vld [vmem:[%s5 + $0xf8] sm:$0xf]
      %v7726 = vld [vmem:[%s5 + $0xfc] sm:$0xf]
      %v7740 = vunpack.c.l.b16 %v7706
      %v7741 = vunpack.c.l.b16 %v7707
      %v7742 = vunpack.c.l.b16 %v7708
      %v7743 = vunpack.c.l.b16 %v7709
      %v7744 = vunpack.c.l.b16 %v7710
      %v7745 = vunpack.c.l.b16 %v7711
      %v7746 = vunpack.c.l.b16 %v7712
      %v7747 = vunpack.c.l.b16 %v7713
      %v7748 = vunpack.c.l.b16 %v7714
      %v7749 = vunpack.c.l.b16 %v7715
      %v7750 = vunpack.c.l.b16 %v7716
      %v7751 = vunpack.c.l.b16 %v7717
      %v7752 = vunpack.c.l.b16 %v7718
      %v7753 = vpack.c.b16 %v7741, %v7740
      %v7754 = vpack.c.b16 %v7743, %v7742
      %v7755 = vpack.c.b16 %v7745, %v7744
      %v7756 = vpack.c.b16 %v7747, %v7746
      %v7757 = vpack.c.b16 %v7749, %v7748
      %v7758 = vpack.c.b16 %v7751, %v7750
      %v7759 = vpack.c.b16 %v7752, %v7752
      %v7761 = vshrl.u32 %v7753, 16
      %v7763 = vshll.u32 %v7753, 16
      %v7765 = vrot.slane %v7763, 1
      %v7766 = vor.u32 %v7761, %v7765
      %v7768 = vshll.u32 %v7754, 16
      %v7770 = vrot.slane %v7768, 1
      %v7771 = vsel %vm1166, %v7766, %v7770
      %v7772 = vshrl.u32 %v7754, 16
      %v7774 = vor.u32 %v7772, %v7770
      %v7776 = vshll.u32 %v7755, 16
      %v7778 = vrot.slane %v7776, 1
      %v7779 = vsel %vm1166, %v7774, %v7778
      %v7780 = vshrl.u32 %v7755, 16
      %v7782 = vor.u32 %v7780, %v7778
      %v7784 = vshll.u32 %v7756, 16
      %v7786 = vrot.slane %v7784, 1
      %v7787 = vsel %vm1166, %v7782, %v7786
      %v7788 = vshrl.u32 %v7756, 16
      %v7790 = vor.u32 %v7788, %v7786
      %v7792 = vshll.u32 %v7757, 16
      %v7794 = vrot.slane %v7792, 1
      %v7795 = vsel %vm1166, %v7790, %v7794
      %v7796 = vshrl.u32 %v7757, 16
      %v7798 = vor.u32 %v7796, %v7794
      %v7800 = vshll.u32 %v7758, 16
      %v7802 = vrot.slane %v7800, 1
      %v7803 = vsel %vm1166, %v7798, %v7802
      %v7804 = vshrl.u32 %v7758, 16
      %v7806 = vor.u32 %v7804, %v7802
      %v7808 = vshll.u32 %v7759, 16
      %v7810 = vrot.slane %v7808, 1
      %v7811 = vsel %vm1166, %v7806, %v7810
      %v7820 = vunpack.c.l.b16 %v7719
      %v7821 = vunpack.c.l.b16 %v7720
      %v7822 = vunpack.c.l.b16 %v7721
      %v7823 = vunpack.c.l.b16 %v7722
      %v7824 = vunpack.c.l.b16 %v7723
      %v7825 = vunpack.c.l.b16 %v7724
      %v7826 = vunpack.c.l.b16 %v7725
      %v7827 = vunpack.c.l.b16 %v7726
      %v7828 = vpack.c.b16 %v7821, %v7820
      %v7829 = vpack.c.b16 %v7823, %v7822
      %v7830 = vpack.c.b16 %v7825, %v7824
      %v7831 = vpack.c.b16 %v7827, %v7826
      %v7837 = vsel %vm6865, %v7771, 0
      %v7840 = vsel %vm6865, %v7779, 0
      %v7843 = vsel %vm6865, %v7787, 0
      %v7846 = vsel %vm6865, %v7795, 0
      %v7849 = vsel %vm6865, %v7803, 0
      %v7852 = vsel %vm6865, %v7811, 0
      %7854 = vmatpush.bf16.msra.mxu0 0
      %7855 = vmatpush.bf16.msra.mxu0 0
      %7856 = vmatpush.bf16.msra.mxu0 0
      %7857 = vmatpush.bf16.msra.mxu0 0
      %7858 = vmatpush.bf16.msra.mxu0 %v7831
      %7859 = vmatpush.bf16.msra.mxu0 %v7830
      %7860 = vmatpush.bf16.msra.mxu0 %v7829
      %7861 = vmatpush.bf16.msra.mxu0 %v7828
      %7862 = vmatmul.bf16.gmra.mxu0 %v7837
      %v7863 = vpop.f32.mrf.mxu0
      %v7864 = vadd.f32 0.0, %v7863
      %v7865 = vpop.f32.mrf.mxu0
      %v7866 = vadd.f32 0.0, %v7865
      %7867 = vmatmul.bf16.gmra.mxu0 %v7840
      %v7868 = vpop.f32.mrf.mxu0
      %v7869 = vadd.f32 0.0, %v7868
      %v7870 = vpop.f32.mrf.mxu0
      %v7871 = vadd.f32 0.0, %v7870
      %7872 = vmatmul.bf16.gmra.mxu0 %v7843
      %v7873 = vpop.f32.mrf.mxu0
      %v7874 = vadd.f32 0.0, %v7873
      %v7875 = vpop.f32.mrf.mxu0
      %v7876 = vadd.f32 0.0, %v7875
      %7877 = vmatmul.bf16.gmra.mxu0 %v7846
      %v7878 = vpop.f32.mrf.mxu0
      %v7879 = vadd.f32 0.0, %v7878
      %v7880 = vpop.f32.mrf.mxu0
      %v7881 = vadd.f32 0.0, %v7880
      %7882 = vmatmul.bf16.gmra.mxu0 %v7849
      %v7883 = vpop.f32.mrf.mxu0
      %v7884 = vadd.f32 0.0, %v7883
      %v7885 = vpop.f32.mrf.mxu0
      %v7886 = vadd.f32 0.0, %v7885
      %7887 = vmatmul.bf16.gmra.mxu0 %v7852
      %v7888 = vpop.f32.mrf.mxu0
      %v7889 = vadd.f32 0.0, %v7888
      %v7890 = vpop.f32.mrf.mxu0
      %v7891 = vadd.f32 0.0, %v7890
      %7892 = vdwg.mxu0
      %v7893 = vadd.f32 %v7694, %v7864
      %v7894 = vadd.f32 %v7695, %v7866
      %v7895 = vadd.f32 %v7696, %v7869
      %v7896 = vadd.f32 %v7697, %v7871
      %v7897 = vadd.f32 %v7698, %v7874
      %v7898 = vadd.f32 %v7699, %v7876
      %v7899 = vadd.f32 %v7700, %v7879
      %v7900 = vadd.f32 %v7701, %v7881
      %v7901 = vadd.f32 %v7702, %v7884
      %v7902 = vadd.f32 %v7703, %v7886
      %v7903 = vadd.f32 %v7704, %v7889
      %v7904 = vadd.f32 %v7705, %v7891
      %v7905 = vld [vmem:[#allocation3 + $0xc] sm:$0xe]
      %v7906 = vld [vmem:[%s5 + $0x100] sm:$0xf]
      %v7907 = vld [vmem:[%s5 + $0x104] sm:$0xf]
      %v7908 = vld [vmem:[%s5 + $0x108] sm:$0xf]
      %v7909 = vld [vmem:[%s5 + $0x10c] sm:$0xf]
      %v7910 = vld [vmem:[%s5 + $0x110] sm:$0xf]
      %v7911 = vld [vmem:[%s5 + $0x114] sm:$0xf]
      %v7912 = vld [vmem:[%s5 + $0x118] sm:$0xf]
      %v7913 = vld [vmem:[%s5 + $0x11c] sm:$0xf]
      %v7915 = vunpack.c.l.b16 %v7905
      %v7916 = vpack.c.b16 %v7741, %v7915
      %v7917 = vrot.slane %v7916, 1
      %v7918 = vrot.slane %v7754, 1
      %v7919 = vsel %vm7010, %v7917, %v7918
      %v7920 = vrot.slane %v7755, 1
      %v7921 = vsel %vm7010, %v7918, %v7920
      %v7922 = vrot.slane %v7756, 1
      %v7923 = vsel %vm7010, %v7920, %v7922
      %v7924 = vrot.slane %v7757, 1
      %v7925 = vsel %vm7010, %v7922, %v7924
      %v7926 = vrot.slane %v7758, 1
      %v7927 = vsel %vm7010, %v7924, %v7926
      %v7928 = vrot.slane %v7759, 1
      %v7929 = vsel %vm7010, %v7926, %v7928
      %v7938 = vunpack.c.l.b16 %v7906
      %v7939 = vunpack.c.l.b16 %v7907
      %v7940 = vunpack.c.l.b16 %v7908
      %v7941 = vunpack.c.l.b16 %v7909
      %v7942 = vunpack.c.l.b16 %v7910
      %v7943 = vunpack.c.l.b16 %v7911
      %v7944 = vunpack.c.l.b16 %v7912
      %v7945 = vunpack.c.l.b16 %v7913
      %v7946 = vpack.c.b16 %v7939, %v7938
      %v7947 = vpack.c.b16 %v7941, %v7940
      %v7948 = vpack.c.b16 %v7943, %v7942
      %v7949 = vpack.c.b16 %v7945, %v7944
      %v7955 = vsel %vm6865, %v7919, 0
      %v7958 = vsel %vm6865, %v7921, 0
      %v7961 = vsel %vm6865, %v7923, 0
      %v7964 = vsel %vm6865, %v7925, 0
      %v7967 = vsel %vm6865, %v7927, 0
      %v7970 = vsel %vm6865, %v7929, 0
      %7972 = vmatpush.bf16.msra.mxu0 0
      %7973 = vmatpush.bf16.msra.mxu0 0
      %7974 = vmatpush.bf16.msra.mxu0 0
      %7975 = vmatpush.bf16.msra.mxu0 0
      %7976 = vmatpush.bf16.msra.mxu0 %v7949
      %7977 = vmatpush.bf16.msra.mxu0 %v7948
      %7978 = vmatpush.bf16.msra.mxu0 %v7947
      %7979 = vmatpush.bf16.msra.mxu0 %v7946
      %7980 = vmatmul.bf16.gmra.mxu0 %v7955
      %v7981 = vpop.f32.mrf.mxu0
      %v7982 = vadd.f32 0.0, %v7981
      %v7983 = vpop.f32.mrf.mxu0
      %v7984 = vadd.f32 0.0, %v7983
      %7985 = vmatmul.bf16.gmra.mxu0 %v7958
      %v7986 = vpop.f32.mrf.mxu0
      %v7987 = vadd.f32 0.0, %v7986
      %v7988 = vpop.f32.mrf.mxu0
      %v7989 = vadd.f32 0.0, %v7988
      %7990 = vmatmul.bf16.gmra.mxu0 %v7961
      %v7991 = vpop.f32.mrf.mxu0
      %v7992 = vadd.f32 0.0, %v7991
      %v7993 = vpop.f32.mrf.mxu0
      %v7994 = vadd.f32 0.0, %v7993
      %7995 = vmatmul.bf16.gmra.mxu0 %v7964
      %v7996 = vpop.f32.mrf.mxu0
      %v7997 = vadd.f32 0.0, %v7996
      %v7998 = vpop.f32.mrf.mxu0
      %v7999 = vadd.f32 0.0, %v7998
      %8000 = vmatmul.bf16.gmra.mxu0 %v7967
      %v8001 = vpop.f32.mrf.mxu0
      %v8002 = vadd.f32 0.0, %v8001
      %v8003 = vpop.f32.mrf.mxu0
      %v8004 = vadd.f32 0.0, %v8003
      %8005 = vmatmul.bf16.gmra.mxu0 %v7970
      %v8006 = vpop.f32.mrf.mxu0
      %v8007 = vadd.f32 0.0, %v8006
      %v8008 = vpop.f32.mrf.mxu0
      %v8009 = vadd.f32 0.0, %v8008
      %8010 = vdwg.mxu0
      %v8011 = vadd.f32 %v7893, %v7982
      %v8012 = vadd.f32 %v7894, %v7984
      %v8013 = vadd.f32 %v7895, %v7987
      %v8014 = vadd.f32 %v7896, %v7989
      %v8015 = vadd.f32 %v7897, %v7992
      %v8016 = vadd.f32 %v7898, %v7994
      %v8017 = vadd.f32 %v7899, %v7997
      %v8018 = vadd.f32 %v7900, %v7999
      %v8019 = vadd.f32 %v7901, %v8002
      %v8020 = vadd.f32 %v7902, %v8004
      %v8021 = vadd.f32 %v7903, %v8007
      %v8022 = vadd.f32 %v7904, %v8009
      %v8023 = vld [vmem:[%s6] sm:$0x1]
      %v8025 = vperm.slane %v8023, 0
      %v8027 = vadd.f32 %v8011, %v8025
      %v8028 = vadd.f32 %v8012, %v8025
      %v8029 = vadd.f32 %v8013, %v8025
      %v8030 = vadd.f32 %v8014, %v8025
      %v8031 = vadd.f32 %v8015, %v8025
      %v8032 = vadd.f32 %v8016, %v8025
      %v8033 = vadd.f32 %v8017, %v8025
      %v8034 = vadd.f32 %v8018, %v8025
      %v8035 = vadd.f32 %v8019, %v8025
      %v8036 = vadd.f32 %v8020, %v8025
      %v8037 = vadd.f32 %v8021, %v8025
      %v8038 = vadd.f32 %v8022, %v8025
      %v8039 = vmax.f32 %v8027, 0.0
      %v8040 = vmax.f32 %v8028, 0.0
      %v8041 = vmax.f32 %v8029, 0.0
      %v8042 = vmax.f32 %v8030, 0.0
      %v8043 = vmax.f32 %v8031, 0.0
      %v8044 = vmax.f32 %v8032, 0.0
      %v8045 = vmax.f32 %v8033, 0.0
      %v8046 = vmax.f32 %v8034, 0.0
      %v8047 = vmax.f32 %v8035, 0.0
      %v8048 = vmax.f32 %v8036, 0.0
      %v8049 = vmax.f32 %v8037, 0.0
      %v8050 = vmax.f32 %v8038, 0.0
      %v8051 = vpack.c.bf16 %v8039, %v8039
      %v8052 = vpack.c.bf16 %v8040, %v8040
      %v8053 = vpack.c.bf16 %v8041, %v8041
      %v8054 = vpack.c.bf16 %v8042, %v8042
      %v8055 = vpack.c.bf16 %v8043, %v8043
      %v8056 = vpack.c.bf16 %v8044, %v8044
      %v8057 = vpack.c.bf16 %v8045, %v8045
      %v8058 = vpack.c.bf16 %v8046, %v8046
      %v8059 = vpack.c.bf16 %v8047, %v8047
      %v8060 = vpack.c.bf16 %v8048, %v8048
      %v8061 = vpack.c.bf16 %v8049, %v8049
      %v8062 = vpack.c.bf16 %v8050, %v8050
      %8063 = vst.msk [vmem:[%s278] sm:$0xf] %vm6710, %v8051
      %8064 = vst.msk [vmem:[%s278 + $0x4] sm:$0xf] %vm6710, %v8052
      %8065 = vst.msk [vmem:[%s278 + $0x8] sm:$0xf] %vm6710, %v8053
      %8066 = vst.msk [vmem:[%s278 + $0xc] sm:$0xf] %vm6710, %v8054
      %8067 = vst.msk [vmem:[%s278 + $0x10] sm:$0xf] %vm6710, %v8055
      %8068 = vst.msk [vmem:[%s278 + $0x14] sm:$0xf] %vm6710, %v8056
      %8069 = vst.msk [vmem:[%s278 + $0x18] sm:$0xf] %vm6710, %v8057
      %8070 = vst.msk [vmem:[%s278 + $0x1c] sm:$0xf] %vm6710, %v8058
      %8071 = vst.msk [vmem:[%s278 + $0x20] sm:$0xf] %vm6710, %v8059
      %8072 = vst.msk [vmem:[%s278 + $0x24] sm:$0xf] %vm6710, %v8060
      %8073 = vst.msk [vmem:[%s278 + $0x28] sm:$0xf] %vm6710, %v8061
      %8074 = vst.msk [vmem:[%s278 + $0x2c] sm:$0xf] %vm6710, %v8062
      %p8075 = scmp.lt.s32.totalorder %s18, 1
      %s8076 = scalar_select %p8075, %s18, 1
      %s8077 = smul.addr %s8076, 12
      %s8078 = smul.addr %s8077, 4
      %s8079 = scalar_lea.vmem %s7, %s8078
      // Predicated region
      $region49: #{cnn_encoder_forward.2} parent=47 // pred_check
        %p8080 = pneg %p188
      $region50: #{cnn_encoder_forward.2} parent=47 // pred_check_branch
        %8082 = sbr.rel (%p8080) target = $region52
      $region51: #{cnn_encoder_forward.2} parent=47 // pred_region
        _
      $region52: #{cnn_encoder_forward.2} parent=47 // pred_fallthru
        _
    $region48: #{cnn_encoder_forward.2} parent=5 // pred_fallthru
      _
    %p8083 = scmp.le.s32.totalorder 2, %s13
    // Predicated region
    $region53: #{cnn_encoder_forward.2} parent=5 // pred_check
      %p8084 = pneg %p8083
    $region54: #{cnn_encoder_forward.2} parent=5 // pred_check_branch
      %8086 = sbr.rel (%p8084) target = $region56
    $region55: #{cnn_encoder_forward.2} parent=5 // pred_region
      %s8087 = ssub.s32 %s13, 2
      // Predicated region
      $region57: #{cnn_encoder_forward.2} parent=55 // pred_check
        %p8088 = pneg %p194
      $region58: #{cnn_encoder_forward.2} parent=55 // pred_check_branch
        %8090 = sbr.rel (%p8088) target = $region60
      $region59: #{cnn_encoder_forward.2} parent=55 // pred_region
        %p8091 = scmp.lt.s32.totalorder %s19, 1
        %s8092 = scalar_select %p8091, %s19, 1
        %s8093 = smul.addr %s8092, 12
        %s8094 = smul.addr %s8093, 4
        %s8095 = scalar_lea.vmem %s7, %s8094
      $region60: #{cnn_encoder_forward.2} parent=55 // pred_fallthru
        _
    $region56: #{cnn_encoder_forward.2} parent=5 // pred_fallthru
      _
  $region6: #{cnn_encoder_forward.2} parent=0 // loop_footer
    %s17 = sadd.s32 1, %s13
  $region7: #{cnn_encoder_forward.2} parent=0 // loop_footer_branch
    %12 = sbr.rel target = $region3
  $region8: #{cnn_encoder_forward.2} parent=0 // loop_exit
    _

// kernel: cnn_encoder_forward.3
$region0: #{cnn_encoder_forward.3}
  #allocation0 [shape = 'u32[]', space=smem, size = 0x4, offset = 0x4, fixed_abs, tag = 'smem constant byte address 0x4 - core index']
  #allocation1 [shape = 'u32[72,128]{1,0:T(1,128)}', space=vmem, size = 0x9000, scoped, tag = 'internal scratch']
  %s0 = inlined_call_operand.vmem [shape: bf16[2,4096], index: 0, kind: input, shape index: {}]
  %s1 = inlined_call_operand.vmem [shape: bf16[4096,32], index: 1, kind: input, shape index: {}]
  %s2 = inlined_call_operand.vmem [shape: f32[1,32], index: 2, kind: input, shape index: {}]
  %s3 = inlined_call_operand.hbm [shape: f32[2,32], index: 3, kind: output, shape index: {}]
  %s4 = sld [smem:[#allocation0]]
  $region22: #{cnn_encoder_forward.3} parent=0
    _
  %s6 = ssub.s32 1, %s4
  %s7 = scalar_select 0, %s6, %s4
  $region1: #{cnn_encoder_forward.3} parent=0
    #allocation2 [shape = 'u8[1024]{0}', space=vmem, size = 0x400, scoped, tag = 'output window, operand 0, single buffered']
    #allocation3 [shape = 's32[1]{0}', space=sflag, size = 0x4, scoped, tag = 'scoped memory for cnn_encoder_forward.3']
    %8 = vsyncpa [#allocation3], 0
    // Predicated region
    $region2: #{cnn_encoder_forward.3} parent=1 // pred_check
      _
    $region3: #{cnn_encoder_forward.3} parent=1 // pred_check_branch
      %10 = sbr.rel (0) target = $region5
    $region4: #{cnn_encoder_forward.3} parent=1 // pred_region
      _
    $region5: #{cnn_encoder_forward.3} parent=1 // pred_fallthru
      _
    // Predicated region
    $region6: #{cnn_encoder_forward.3} parent=1 // pred_check
      _
    $region7: #{cnn_encoder_forward.3} parent=1 // pred_check_branch
      %12 = sbr.rel (0) target = $region9
    $region8: #{cnn_encoder_forward.3} parent=1 // pred_region
      _
    $region9: #{cnn_encoder_forward.3} parent=1 // pred_fallthru
      _
    // Predicated region
    $region10: #{cnn_encoder_forward.3} parent=1 // pred_check
      _
    $region11: #{cnn_encoder_forward.3} parent=1 // pred_check_branch
      %14 = sbr.rel (0) target = $region13
    $region12: #{cnn_encoder_forward.3} parent=1 // pred_region
      _
    $region13: #{cnn_encoder_forward.3} parent=1 // pred_fallthru
      _
    %v15 = vld [vmem:[%s0] sm:$0xff]
    %v16 = vld [vmem:[%s0 + $0x8] sm:$0xff]
    %v17 = vld [vmem:[%s0 + $0x10] sm:$0xff]
    %v18 = vld [vmem:[%s0 + $0x18] sm:$0xff]
    %v19 = vld [vmem:[%s1] sm:$0xf]
    %v20 = vld [vmem:[%s1 + $0x4] sm:$0xf]
    %v21 = vld [vmem:[%s1 + $0x8] sm:$0xf]
    %v22 = vld [vmem:[%s1 + $0xc] sm:$0xf]
    %v23 = vld [vmem:[%s1 + $0x10] sm:$0xf]
    %v24 = vld [vmem:[%s1 + $0x14] sm:$0xf]
    %v25 = vld [vmem:[%s1 + $0x18] sm:$0xf]
    %v26 = vld [vmem:[%s1 + $0x1c] sm:$0xf]
    %v27 = vld [vmem:[%s1 + $0x20] sm:$0xf]
    %v28 = vld [vmem:[%s1 + $0x24] sm:$0xf]
    %v29 = vld [vmem:[%s1 + $0x28] sm:$0xf]
    %v30 = vld [vmem:[%s1 + $0x2c] sm:$0xf]
    %v31 = vld [vmem:[%s1 + $0x30] sm:$0xf]
    %v32 = vld [vmem:[%s1 + $0x34] sm:$0xf]
    %v33 = vld [vmem:[%s1 + $0x38] sm:$0xf]
    %v34 = vld [vmem:[%s1 + $0x3c] sm:$0xf]
    %v35 = vld [vmem:[%s1 + $0x40] sm:$0xf]
    %v36 = vld [vmem:[%s1 + $0x44] sm:$0xf]
    %v37 = vld [vmem:[%s1 + $0x48] sm:$0xf]
    %v38 = vld [vmem:[%s1 + $0x4c] sm:$0xf]
    %v39 = vld [vmem:[%s1 + $0x50] sm:$0xf]
    %v40 = vld [vmem:[%s1 + $0x54] sm:$0xf]
    %v41 = vld [vmem:[%s1 + $0x58] sm:$0xf]
    %v42 = vld [vmem:[%s1 + $0x5c] sm:$0xf]
    %v43 = vld [vmem:[%s1 + $0x60] sm:$0xf]
    %v44 = vld [vmem:[%s1 + $0x64] sm:$0xf]
    %v45 = vld [vmem:[%s1 + $0x68] sm:$0xf]
    %v46 = vld [vmem:[%s1 + $0x6c] sm:$0xf]
    %v47 = vld [vmem:[%s1 + $0x70] sm:$0xf]
    %v48 = vld [vmem:[%s1 + $0x74] sm:$0xf]
    %v49 = vld [vmem:[%s1 + $0x78] sm:$0xf]
    %v50 = vld [vmem:[%s1 + $0x7c] sm:$0xf]
    %v51 = vld [vmem:[%s1 + $0x80] sm:$0xf]
    %v52 = vld [vmem:[%s1 + $0x84] sm:$0xf]
    %v53 = vld [vmem:[%s1 + $0x88] sm:$0xf]
    %v54 = vld [vmem:[%s1 + $0x8c] sm:$0xf]
    %v55 = vld [vmem:[%s1 + $0x90] sm:$0xf]
    %v56 = vld [vmem:[%s1 + $0x94] sm:$0xf]
    %v57 = vld [vmem:[%s1 + $0x98] sm:$0xf]
    %v58 = vld [vmem:[%s1 + $0x9c] sm:$0xf]
    %v59 = vld [vmem:[%s1 + $0xa0] sm:$0xf]
    %v60 = vld [vmem:[%s1 + $0xa4] sm:$0xf]
    %v61 = vld [vmem:[%s1 + $0xa8] sm:$0xf]
    %v62 = vld [vmem:[%s1 + $0xac] sm:$0xf]
    %v63 = vld [vmem:[%s1 + $0xb0] sm:$0xf]
    %v64 = vld [vmem:[%s1 + $0xb4] sm:$0xf]
    %v65 = vld [vmem:[%s1 + $0xb8] sm:$0xf]
    %v66 = vld [vmem:[%s1 + $0xbc] sm:$0xf]
    %v67 = vld [vmem:[%s1 + $0xc0] sm:$0xf]
    %v68 = vld [vmem:[%s1 + $0xc4] sm:$0xf]
    %v69 = vld [vmem:[%s1 + $0xc8] sm:$0xf]
    %v70 = vld [vmem:[%s1 + $0xcc] sm:$0xf]
    %v71 = vld [vmem:[%s1 + $0xd0] sm:$0xf]
    %v72 = vld [vmem:[%s1 + $0xd4] sm:$0xf]
    %v73 = vld [vmem:[%s1 + $0xd8] sm:$0xf]
    %v74 = vld [vmem:[%s1 + $0xdc] sm:$0xf]
    %v75 = vld [vmem:[%s1 + $0xe0] sm:$0xf]
    %v76 = vld [vmem:[%s1 + $0xe4] sm:$0xf]
    %v77 = vld [vmem:[%s1 + $0xe8] sm:$0xf]
    %v78 = vld [vmem:[%s1 + $0xec] sm:$0xf]
    %v79 = vld [vmem:[%s1 + $0xf0] sm:$0xf]
    %v80 = vld [vmem:[%s1 + $0xf4] sm:$0xf]
    %v81 = vld [vmem:[%s1 + $0xf8] sm:$0xf]
    %v82 = vld [vmem:[%s1 + $0xfc] sm:$0xf]
    %v83 = vld [vmem:[%s1 + $0x100] sm:$0xf]
    %v84 = vld [vmem:[%s1 + $0x104] sm:$0xf]
    %v85 = vld [vmem:[%s1 + $0x108] sm:$0xf]
    %v86 = vld [vmem:[%s1 + $0x10c] sm:$0xf]
    %v87 = vld [vmem:[%s1 + $0x110] sm:$0xf]
    %v88 = vld [vmem:[%s1 + $0x114] sm:$0xf]
    %v89 = vld [vmem:[%s1 + $0x118] sm:$0xf]
    %v90 = vld [vmem:[%s1 + $0x11c] sm:$0xf]
    %v91 = vld [vmem:[%s1 + $0x120] sm:$0xf]
    %v92 = vld [vmem:[%s1 + $0x124] sm:$0xf]
    %v93 = vld [vmem:[%s1 + $0x128] sm:$0xf]
    %v94 = vld [vmem:[%s1 + $0x12c] sm:$0xf]
    %v95 = vld [vmem:[%s1 + $0x130] sm:$0xf]
    %v96 = vld [vmem:[%s1 + $0x134] sm:$0xf]
    %v97 = vld [vmem:[%s1 + $0x138] sm:$0xf]
    %v98 = vld [vmem:[%s1 + $0x13c] sm:$0xf]
    %v99 = vld [vmem:[%s1 + $0x140] sm:$0xf]
    %v100 = vld [vmem:[%s1 + $0x144] sm:$0xf]
    %v101 = vld [vmem:[%s1 + $0x148] sm:$0xf]
    %v102 = vld [vmem:[%s1 + $0x14c] sm:$0xf]
    %v103 = vld [vmem:[%s1 + $0x150] sm:$0xf]
    %v104 = vld [vmem:[%s1 + $0x154] sm:$0xf]
    %v105 = vld [vmem:[%s1 + $0x158] sm:$0xf]
    %v106 = vld [vmem:[%s1 + $0x15c] sm:$0xf]
    %v107 = vld [vmem:[%s1 + $0x160] sm:$0xf]
    %v108 = vld [vmem:[%s1 + $0x164] sm:$0xf]
    %v109 = vld [vmem:[%s1 + $0x168] sm:$0xf]
    %v110 = vld [vmem:[%s1 + $0x16c] sm:$0xf]
    %v111 = vld [vmem:[%s1 + $0x170] sm:$0xf]
    %v112 = vld [vmem:[%s1 + $0x174] sm:$0xf]
    %v113 = vld [vmem:[%s1 + $0x178] sm:$0xf]
    %v114 = vld [vmem:[%s1 + $0x17c] sm:$0xf]
    %v115 = vld [vmem:[%s1 + $0x180] sm:$0xf]
    %v116 = vld [vmem:[%s1 + $0x184] sm:$0xf]
    %v117 = vld [vmem:[%s1 + $0x188] sm:$0xf]
    %v118 = vld [vmem:[%s1 + $0x18c] sm:$0xf]
    %v119 = vld [vmem:[%s1 + $0x190] sm:$0xf]
    %v120 = vld [vmem:[%s1 + $0x194] sm:$0xf]
    %v121 = vld [vmem:[%s1 + $0x198] sm:$0xf]
    %v122 = vld [vmem:[%s1 + $0x19c] sm:$0xf]
    %v123 = vld [vmem:[%s1 + $0x1a0] sm:$0xf]
    %v124 = vld [vmem:[%s1 + $0x1a4] sm:$0xf]
    %v125 = vld [vmem:[%s1 + $0x1a8] sm:$0xf]
    %v126 = vld [vmem:[%s1 + $0x1ac] sm:$0xf]
    %v127 = vld [vmem:[%s1 + $0x1b0] sm:$0xf]
    %v128 = vld [vmem:[%s1 + $0x1b4] sm:$0xf]
    %v129 = vld [vmem:[%s1 + $0x1b8] sm:$0xf]
    %v130 = vld [vmem:[%s1 + $0x1bc] sm:$0xf]
    %v131 = vld [vmem:[%s1 + $0x1c0] sm:$0xf]
    %v132 = vld [vmem:[%s1 + $0x1c4] sm:$0xf]
    %v133 = vld [vmem:[%s1 + $0x1c8] sm:$0xf]
    %v134 = vld [vmem:[%s1 + $0x1cc] sm:$0xf]
    %v135 = vld [vmem:[%s1 + $0x1d0] sm:$0xf]
    %v136 = vld [vmem:[%s1 + $0x1d4] sm:$0xf]
    %v137 = vld [vmem:[%s1 + $0x1d8] sm:$0xf]
    %v138 = vld [vmem:[%s1 + $0x1dc] sm:$0xf]
    %v139 = vld [vmem:[%s1 + $0x1e0] sm:$0xf]
    %v140 = vld [vmem:[%s1 + $0x1e4] sm:$0xf]
    %v141 = vld [vmem:[%s1 + $0x1e8] sm:$0xf]
    %v142 = vld [vmem:[%s1 + $0x1ec] sm:$0xf]
    %v143 = vld [vmem:[%s1 + $0x1f0] sm:$0xf]
    %v144 = vld [vmem:[%s1 + $0x1f4] sm:$0xf]
    %v145 = vld [vmem:[%s1 + $0x1f8] sm:$0xf]
    %v146 = vld [vmem:[%s1 + $0x1fc] sm:$0xf]
    %v147 = vld [vmem:[%s1 + $0x200] sm:$0xf]
    %v148 = vld [vmem:[%s1 + $0x204] sm:$0xf]
    %v149 = vld [vmem:[%s1 + $0x208] sm:$0xf]
    %v150 = vld [vmem:[%s1 + $0x20c] sm:$0xf]
    %v151 = vld [vmem:[%s1 + $0x210] sm:$0xf]
    %v152 = vld [vmem:[%s1 + $0x214] sm:$0xf]
    %v153 = vld [vmem:[%s1 + $0x218] sm:$0xf]
    %v154 = vld [vmem:[%s1 + $0x21c] sm:$0xf]
    %v155 = vld [vmem:[%s1 + $0x220] sm:$0xf]
    %v156 = vld [vmem:[%s1 + $0x224] sm:$0xf]
    %v157 = vld [vmem:[%s1 + $0x228] sm:$0xf]
    %v158 = vld [vmem:[%s1 + $0x22c] sm:$0xf]
    %v159 = vld [vmem:[%s1 + $0x230] sm:$0xf]
    %v160 = vld [vmem:[%s1 + $0x234] sm:$0xf]
    %v161 = vld [vmem:[%s1 + $0x238] sm:$0xf]
    %v162 = vld [vmem:[%s1 + $0x23c] sm:$0xf]
    %v163 = vld [vmem:[%s1 + $0x240] sm:$0xf]
    %v164 = vld [vmem:[%s1 + $0x244] sm:$0xf]
    %v165 = vld [vmem:[%s1 + $0x248] sm:$0xf]
    %v166 = vld [vmem:[%s1 + $0x24c] sm:$0xf]
    %v167 = vld [vmem:[%s1 + $0x250] sm:$0xf]
    %v168 = vld [vmem:[%s1 + $0x254] sm:$0xf]
    %v169 = vld [vmem:[%s1 + $0x258] sm:$0xf]
    %v170 = vld [vmem:[%s1 + $0x25c] sm:$0xf]
    %v171 = vld [vmem:[%s1 + $0x260] sm:$0xf]
    %v172 = vld [vmem:[%s1 + $0x264] sm:$0xf]
    %v173 = vld [vmem:[%s1 + $0x268] sm:$0xf]
    %v174 = vld [vmem:[%s1 + $0x26c] sm:$0xf]
    %v175 = vld [vmem:[%s1 + $0x270] sm:$0xf]
    %v176 = vld [vmem:[%s1 + $0x274] sm:$0xf]
    %v177 = vld [vmem:[%s1 + $0x278] sm:$0xf]
    %v178 = vld [vmem:[%s1 + $0x27c] sm:$0xf]
    %v179 = vld [vmem:[%s1 + $0x280] sm:$0xf]
    %v180 = vld [vmem:[%s1 + $0x284] sm:$0xf]
    %v181 = vld [vmem:[%s1 + $0x288] sm:$0xf]
    %v182 = vld [vmem:[%s1 + $0x28c] sm:$0xf]
    %v183 = vld [vmem:[%s1 + $0x290] sm:$0xf]
    %v184 = vld [vmem:[%s1 + $0x294] sm:$0xf]
    %v185 = vld [vmem:[%s1 + $0x298] sm:$0xf]
    %v186 = vld [vmem:[%s1 + $0x29c] sm:$0xf]
    %v187 = vld [vmem:[%s1 + $0x2a0] sm:$0xf]
    %v188 = vld [vmem:[%s1 + $0x2a4] sm:$0xf]
    %v189 = vld [vmem:[%s1 + $0x2a8] sm:$0xf]
    %v190 = vld [vmem:[%s1 + $0x2ac] sm:$0xf]
    %v191 = vld [vmem:[%s1 + $0x2b0] sm:$0xf]
    %v192 = vld [vmem:[%s1 + $0x2b4] sm:$0xf]
    %v193 = vld [vmem:[%s1 + $0x2b8] sm:$0xf]
    %v194 = vld [vmem:[%s1 + $0x2bc] sm:$0xf]
    %v195 = vld [vmem:[%s1 + $0x2c0] sm:$0xf]
    %v196 = vld [vmem:[%s1 + $0x2c4] sm:$0xf]
    %v197 = vld [vmem:[%s1 + $0x2c8] sm:$0xf]
    %v198 = vld [vmem:[%s1 + $0x2cc] sm:$0xf]
    %v199 = vld [vmem:[%s1 + $0x2d0] sm:$0xf]
    %v200 = vld [vmem:[%s1 + $0x2d4] sm:$0xf]
    %v201 = vld [vmem:[%s1 + $0x2d8] sm:$0xf]
    %v202 = vld [vmem:[%s1 + $0x2dc] sm:$0xf]
    %v203 = vld [vmem:[%s1 + $0x2e0] sm:$0xf]
    %v204 = vld [vmem:[%s1 + $0x2e4] sm:$0xf]
    %v205 = vld [vmem:[%s1 + $0x2e8] sm:$0xf]
    %v206 = vld [vmem:[%s1 + $0x2ec] sm:$0xf]
    %v207 = vld [vmem:[%s1 + $0x2f0] sm:$0xf]
    %v208 = vld [vmem:[%s1 + $0x2f4] sm:$0xf]
    %v209 = vld [vmem:[%s1 + $0x2f8] sm:$0xf]
    %v210 = vld [vmem:[%s1 + $0x2fc] sm:$0xf]
    %v211 = vld [vmem:[%s1 + $0x300] sm:$0xf]
    %v212 = vld [vmem:[%s1 + $0x304] sm:$0xf]
    %v213 = vld [vmem:[%s1 + $0x308] sm:$0xf]
    %v214 = vld [vmem:[%s1 + $0x30c] sm:$0xf]
    %v215 = vld [vmem:[%s1 + $0x310] sm:$0xf]
    %v216 = vld [vmem:[%s1 + $0x314] sm:$0xf]
    %v217 = vld [vmem:[%s1 + $0x318] sm:$0xf]
    %v218 = vld [vmem:[%s1 + $0x31c] sm:$0xf]
    %v219 = vld [vmem:[%s1 + $0x320] sm:$0xf]
    %v220 = vld [vmem:[%s1 + $0x324] sm:$0xf]
    %v221 = vld [vmem:[%s1 + $0x328] sm:$0xf]
    %v222 = vld [vmem:[%s1 + $0x32c] sm:$0xf]
    %v223 = vld [vmem:[%s1 + $0x330] sm:$0xf]
    %v224 = vld [vmem:[%s1 + $0x334] sm:$0xf]
    %v225 = vld [vmem:[%s1 + $0x338] sm:$0xf]
    %v226 = vld [vmem:[%s1 + $0x33c] sm:$0xf]
    %v227 = vld [vmem:[%s1 + $0x340] sm:$0xf]
    %v228 = vld [vmem:[%s1 + $0x344] sm:$0xf]
    %v229 = vld [vmem:[%s1 + $0x348] sm:$0xf]
    %v230 = vld [vmem:[%s1 + $0x34c] sm:$0xf]
    %v231 = vld [vmem:[%s1 + $0x350] sm:$0xf]
    %v232 = vld [vmem:[%s1 + $0x354] sm:$0xf]
    %v233 = vld [vmem:[%s1 + $0x358] sm:$0xf]
    %v234 = vld [vmem:[%s1 + $0x35c] sm:$0xf]
    %v235 = vld [vmem:[%s1 + $0x360] sm:$0xf]
    %v236 = vld [vmem:[%s1 + $0x364] sm:$0xf]
    %v237 = vld [vmem:[%s1 + $0x368] sm:$0xf]
    %v238 = vld [vmem:[%s1 + $0x36c] sm:$0xf]
    %v239 = vld [vmem:[%s1 + $0x370] sm:$0xf]
    %v240 = vld [vmem:[%s1 + $0x374] sm:$0xf]
    %v241 = vld [vmem:[%s1 + $0x378] sm:$0xf]
    %v242 = vld [vmem:[%s1 + $0x37c] sm:$0xf]
    %v243 = vld [vmem:[%s1 + $0x380] sm:$0xf]
    %v244 = vld [vmem:[%s1 + $0x384] sm:$0xf]
    %v245 = vld [vmem:[%s1 + $0x388] sm:$0xf]
    %v246 = vld [vmem:[%s1 + $0x38c] sm:$0xf]
    %v247 = vld [vmem:[%s1 + $0x390] sm:$0xf]
    %v248 = vld [vmem:[%s1 + $0x394] sm:$0xf]
    %v249 = vld [vmem:[%s1 + $0x398] sm:$0xf]
    %v250 = vld [vmem:[%s1 + $0x39c] sm:$0xf]
    %v251 = vld [vmem:[%s1 + $0x3a0] sm:$0xf]
    %v252 = vld [vmem:[%s1 + $0x3a4] sm:$0xf]
    %v253 = vld [vmem:[%s1 + $0x3a8] sm:$0xf]
    %v254 = vld [vmem:[%s1 + $0x3ac] sm:$0xf]
    %v255 = vld [vmem:[%s1 + $0x3b0] sm:$0xf]
    %v256 = vld [vmem:[%s1 + $0x3b4] sm:$0xf]
    %v257 = vld [vmem:[%s1 + $0x3b8] sm:$0xf]
    %v258 = vld [vmem:[%s1 + $0x3bc] sm:$0xf]
    %v259 = vld [vmem:[%s1 + $0x3c0] sm:$0xf]
    %v260 = vld [vmem:[%s1 + $0x3c4] sm:$0xf]
    %v261 = vld [vmem:[%s1 + $0x3c8] sm:$0xf]
    %v262 = vld [vmem:[%s1 + $0x3cc] sm:$0xf]
    %v263 = vld [vmem:[%s1 + $0x3d0] sm:$0xf]
    %v264 = vld [vmem:[%s1 + $0x3d4] sm:$0xf]
    %v265 = vld [vmem:[%s1 + $0x3d8] sm:$0xf]
    %v266 = vld [vmem:[%s1 + $0x3dc] sm:$0xf]
    %v267 = vld [vmem:[%s1 + $0x3e0] sm:$0xf]
    %v268 = vld [vmem:[%s1 + $0x3e4] sm:$0xf]
    %v269 = vld [vmem:[%s1 + $0x3e8] sm:$0xf]
    %v270 = vld [vmem:[%s1 + $0x3ec] sm:$0xf]
    %v271 = vld [vmem:[%s1 + $0x3f0] sm:$0xf]
    %v272 = vld [vmem:[%s1 + $0x3f4] sm:$0xf]
    %v273 = vld [vmem:[%s1 + $0x3f8] sm:$0xf]
    %v274 = vld [vmem:[%s1 + $0x3fc] sm:$0xf]
    %v275 = vld [vmem:[%s1 + $0x400] sm:$0xf]
    %v276 = vld [vmem:[%s1 + $0x404] sm:$0xf]
    %v277 = vld [vmem:[%s1 + $0x408] sm:$0xf]
    %v278 = vld [vmem:[%s1 + $0x40c] sm:$0xf]
    %v279 = vld [vmem:[%s1 + $0x410] sm:$0xf]
    %v280 = vld [vmem:[%s1 + $0x414] sm:$0xf]
    %v281 = vld [vmem:[%s1 + $0x418] sm:$0xf]
    %v282 = vld [vmem:[%s1 + $0x41c] sm:$0xf]
    %v283 = vld [vmem:[%s1 + $0x420] sm:$0xf]
    %v284 = vld [vmem:[%s1 + $0x424] sm:$0xf]
    %v285 = vld [vmem:[%s1 + $0x428] sm:$0xf]
    %v286 = vld [vmem:[%s1 + $0x42c] sm:$0xf]
    %v287 = vld [vmem:[%s1 + $0x430] sm:$0xf]
    %v288 = vld [vmem:[%s1 + $0x434] sm:$0xf]
    %v289 = vld [vmem:[%s1 + $0x438] sm:$0xf]
    %v290 = vld [vmem:[%s1 + $0x43c] sm:$0xf]
    %v291 = vld [vmem:[%s1 + $0x440] sm:$0xf]
    %v292 = vld [vmem:[%s1 + $0x444] sm:$0xf]
    %v293 = vld [vmem:[%s1 + $0x448] sm:$0xf]
    %v294 = vld [vmem:[%s1 + $0x44c] sm:$0xf]
    %v295 = vld [vmem:[%s1 + $0x450] sm:$0xf]
    %v296 = vld [vmem:[%s1 + $0x454] sm:$0xf]
    %v297 = vld [vmem:[%s1 + $0x458] sm:$0xf]
    %v298 = vld [vmem:[%s1 + $0x45c] sm:$0xf]
    %v299 = vld [vmem:[%s1 + $0x460] sm:$0xf]
    %v300 = vld [vmem:[%s1 + $0x464] sm:$0xf]
    %v301 = vld [vmem:[%s1 + $0x468] sm:$0xf]
    %v302 = vld [vmem:[%s1 + $0x46c] sm:$0xf]
    %v303 = vld [vmem:[%s1 + $0x470] sm:$0xf]
    %v304 = vld [vmem:[%s1 + $0x474] sm:$0xf]
    %v305 = vld [vmem:[%s1 + $0x478] sm:$0xf]
    %v306 = vld [vmem:[%s1 + $0x47c] sm:$0xf]
    %v307 = vld [vmem:[%s1 + $0x480] sm:$0xf]
    %v308 = vld [vmem:[%s1 + $0x484] sm:$0xf]
    %v309 = vld [vmem:[%s1 + $0x488] sm:$0xf]
    %v310 = vld [vmem:[%s1 + $0x48c] sm:$0xf]
    %v311 = vld [vmem:[%s1 + $0x490] sm:$0xf]
    %v312 = vld [vmem:[%s1 + $0x494] sm:$0xf]
    %v313 = vld [vmem:[%s1 + $0x498] sm:$0xf]
    %v314 = vld [vmem:[%s1 + $0x49c] sm:$0xf]
    %v315 = vld [vmem:[%s1 + $0x4a0] sm:$0xf]
    %v316 = vld [vmem:[%s1 + $0x4a4] sm:$0xf]
    %v317 = vld [vmem:[%s1 + $0x4a8] sm:$0xf]
    %v318 = vld [vmem:[%s1 + $0x4ac] sm:$0xf]
    %v319 = vld [vmem:[%s1 + $0x4b0] sm:$0xf]
    %v320 = vld [vmem:[%s1 + $0x4b4] sm:$0xf]
    %v321 = vld [vmem:[%s1 + $0x4b8] sm:$0xf]
    %v322 = vld [vmem:[%s1 + $0x4bc] sm:$0xf]
    %v323 = vld [vmem:[%s1 + $0x4c0] sm:$0xf]
    %v324 = vld [vmem:[%s1 + $0x4c4] sm:$0xf]
    %v325 = vld [vmem:[%s1 + $0x4c8] sm:$0xf]
    %v326 = vld [vmem:[%s1 + $0x4cc] sm:$0xf]
    %v327 = vld [vmem:[%s1 + $0x4d0] sm:$0xf]
    %v328 = vld [vmem:[%s1 + $0x4d4] sm:$0xf]
    %v329 = vld [vmem:[%s1 + $0x4d8] sm:$0xf]
    %v330 = vld [vmem:[%s1 + $0x4dc] sm:$0xf]
    %v331 = vld [vmem:[%s1 + $0x4e0] sm:$0xf]
    %v332 = vld [vmem:[%s1 + $0x4e4] sm:$0xf]
    %v333 = vld [vmem:[%s1 + $0x4e8] sm:$0xf]
    %v334 = vld [vmem:[%s1 + $0x4ec] sm:$0xf]
    %v335 = vld [vmem:[%s1 + $0x4f0] sm:$0xf]
    %v336 = vld [vmem:[%s1 + $0x4f4] sm:$0xf]
    %v337 = vld [vmem:[%s1 + $0x4f8] sm:$0xf]
    %v338 = vld [vmem:[%s1 + $0x4fc] sm:$0xf]
    %v339 = vld [vmem:[%s1 + $0x500] sm:$0xf]
    %v340 = vld [vmem:[%s1 + $0x504] sm:$0xf]
    %v341 = vld [vmem:[%s1 + $0x508] sm:$0xf]
    %v342 = vld [vmem:[%s1 + $0x50c] sm:$0xf]
    %v343 = vld [vmem:[%s1 + $0x510] sm:$0xf]
    %v344 = vld [vmem:[%s1 + $0x514] sm:$0xf]
    %v345 = vld [vmem:[%s1 + $0x518] sm:$0xf]
    %v346 = vld [vmem:[%s1 + $0x51c] sm:$0xf]
    %v347 = vld [vmem:[%s1 + $0x520] sm:$0xf]
    %v348 = vld [vmem:[%s1 + $0x524] sm:$0xf]
    %v349 = vld [vmem:[%s1 + $0x528] sm:$0xf]
    %v350 = vld [vmem:[%s1 + $0x52c] sm:$0xf]
    %v351 = vld [vmem:[%s1 + $0x530] sm:$0xf]
    %v352 = vld [vmem:[%s1 + $0x534] sm:$0xf]
    %v353 = vld [vmem:[%s1 + $0x538] sm:$0xf]
    %v354 = vld [vmem:[%s1 + $0x53c] sm:$0xf]
    %v355 = vld [vmem:[%s1 + $0x540] sm:$0xf]
    %v356 = vld [vmem:[%s1 + $0x544] sm:$0xf]
    %v357 = vld [vmem:[%s1 + $0x548] sm:$0xf]
    %v358 = vld [vmem:[%s1 + $0x54c] sm:$0xf]
    %v359 = vld [vmem:[%s1 + $0x550] sm:$0xf]
    %v360 = vld [vmem:[%s1 + $0x554] sm:$0xf]
    %v361 = vld [vmem:[%s1 + $0x558] sm:$0xf]
    %v362 = vld [vmem:[%s1 + $0x55c] sm:$0xf]
    %v363 = vld [vmem:[%s1 + $0x560] sm:$0xf]
    %v364 = vld [vmem:[%s1 + $0x564] sm:$0xf]
    %v365 = vld [vmem:[%s1 + $0x568] sm:$0xf]
    %v366 = vld [vmem:[%s1 + $0x56c] sm:$0xf]
    %v367 = vld [vmem:[%s1 + $0x570] sm:$0xf]
    %v368 = vld [vmem:[%s1 + $0x574] sm:$0xf]
    %v369 = vld [vmem:[%s1 + $0x578] sm:$0xf]
    %v370 = vld [vmem:[%s1 + $0x57c] sm:$0xf]
    %v371 = vld [vmem:[%s1 + $0x580] sm:$0xf]
    %v372 = vld [vmem:[%s1 + $0x584] sm:$0xf]
    %v373 = vld [vmem:[%s1 + $0x588] sm:$0xf]
    %v374 = vld [vmem:[%s1 + $0x58c] sm:$0xf]
    %v375 = vld [vmem:[%s1 + $0x590] sm:$0xf]
    %v376 = vld [vmem:[%s1 + $0x594] sm:$0xf]
    %v377 = vld [vmem:[%s1 + $0x598] sm:$0xf]
    %v378 = vld [vmem:[%s1 + $0x59c] sm:$0xf]
    %v379 = vld [vmem:[%s1 + $0x5a0] sm:$0xf]
    %v380 = vld [vmem:[%s1 + $0x5a4] sm:$0xf]
    %v381 = vld [vmem:[%s1 + $0x5a8] sm:$0xf]
    %v382 = vld [vmem:[%s1 + $0x5ac] sm:$0xf]
    %v383 = vld [vmem:[%s1 + $0x5b0] sm:$0xf]
    %v384 = vld [vmem:[%s1 + $0x5b4] sm:$0xf]
    %v385 = vld [vmem:[%s1 + $0x5b8] sm:$0xf]
    %v386 = vld [vmem:[%s1 + $0x5bc] sm:$0xf]
    %v387 = vld [vmem:[%s1 + $0x5c0] sm:$0xf]
    %v388 = vld [vmem:[%s1 + $0x5c4] sm:$0xf]
    %v389 = vld [vmem:[%s1 + $0x5c8] sm:$0xf]
    %v390 = vld [vmem:[%s1 + $0x5cc] sm:$0xf]
    %v391 = vld [vmem:[%s1 + $0x5d0] sm:$0xf]
    %v392 = vld [vmem:[%s1 + $0x5d4] sm:$0xf]
    %v393 = vld [vmem:[%s1 + $0x5d8] sm:$0xf]
    %v394 = vld [vmem:[%s1 + $0x5dc] sm:$0xf]
    %v395 = vld [vmem:[%s1 + $0x5e0] sm:$0xf]
    %v396 = vld [vmem:[%s1 + $0x5e4] sm:$0xf]
    %v397 = vld [vmem:[%s1 + $0x5e8] sm:$0xf]
    %v398 = vld [vmem:[%s1 + $0x5ec] sm:$0xf]
    %v399 = vld [vmem:[%s1 + $0x5f0] sm:$0xf]
    %v400 = vld [vmem:[%s1 + $0x5f4] sm:$0xf]
    %v401 = vld [vmem:[%s1 + $0x5f8] sm:$0xf]
    %v402 = vld [vmem:[%s1 + $0x5fc] sm:$0xf]
    %v403 = vld [vmem:[%s1 + $0x600] sm:$0xf]
    %v404 = vld [vmem:[%s1 + $0x604] sm:$0xf]
    %v405 = vld [vmem:[%s1 + $0x608] sm:$0xf]
    %v406 = vld [vmem:[%s1 + $0x60c] sm:$0xf]
    %v407 = vld [vmem:[%s1 + $0x610] sm:$0xf]
    %v408 = vld [vmem:[%s1 + $0x614] sm:$0xf]
    %v409 = vld [vmem:[%s1 + $0x618] sm:$0xf]
    %v410 = vld [vmem:[%s1 + $0x61c] sm:$0xf]
    %v411 = vld [vmem:[%s1 + $0x620] sm:$0xf]
    %v412 = vld [vmem:[%s1 + $0x624] sm:$0xf]
    %v413 = vld [vmem:[%s1 + $0x628] sm:$0xf]
    %v414 = vld [vmem:[%s1 + $0x62c] sm:$0xf]
    %v415 = vld [vmem:[%s1 + $0x630] sm:$0xf]
    %v416 = vld [vmem:[%s1 + $0x634] sm:$0xf]
    %v417 = vld [vmem:[%s1 + $0x638] sm:$0xf]
    %v418 = vld [vmem:[%s1 + $0x63c] sm:$0xf]
    %v419 = vld [vmem:[%s1 + $0x640] sm:$0xf]
    %v420 = vld [vmem:[%s1 + $0x644] sm:$0xf]
    %v421 = vld [vmem:[%s1 + $0x648] sm:$0xf]
    %v422 = vld [vmem:[%s1 + $0x64c] sm:$0xf]
    %v423 = vld [vmem:[%s1 + $0x650] sm:$0xf]
    %v424 = vld [vmem:[%s1 + $0x654] sm:$0xf]
    %v425 = vld [vmem:[%s1 + $0x658] sm:$0xf]
    %v426 = vld [vmem:[%s1 + $0x65c] sm:$0xf]
    %v427 = vld [vmem:[%s1 + $0x660] sm:$0xf]
    %v428 = vld [vmem:[%s1 + $0x664] sm:$0xf]
    %v429 = vld [vmem:[%s1 + $0x668] sm:$0xf]
    %v430 = vld [vmem:[%s1 + $0x66c] sm:$0xf]
    %v431 = vld [vmem:[%s1 + $0x670] sm:$0xf]
    %v432 = vld [vmem:[%s1 + $0x674] sm:$0xf]
    %v433 = vld [vmem:[%s1 + $0x678] sm:$0xf]
    %v434 = vld [vmem:[%s1 + $0x67c] sm:$0xf]
    %v435 = vld [vmem:[%s1 + $0x680] sm:$0xf]
    %v436 = vld [vmem:[%s1 + $0x684] sm:$0xf]
    %v437 = vld [vmem:[%s1 + $0x688] sm:$0xf]
    %v438 = vld [vmem:[%s1 + $0x68c] sm:$0xf]
    %v439 = vld [vmem:[%s1 + $0x690] sm:$0xf]
    %v440 = vld [vmem:[%s1 + $0x694] sm:$0xf]
    %v441 = vld [vmem:[%s1 + $0x698] sm:$0xf]
    %v442 = vld [vmem:[%s1 + $0x69c] sm:$0xf]
    %v443 = vld [vmem:[%s1 + $0x6a0] sm:$0xf]
    %v444 = vld [vmem:[%s1 + $0x6a4] sm:$0xf]
    %v445 = vld [vmem:[%s1 + $0x6a8] sm:$0xf]
    %v446 = vld [vmem:[%s1 + $0x6ac] sm:$0xf]
    %v447 = vld [vmem:[%s1 + $0x6b0] sm:$0xf]
    %v448 = vld [vmem:[%s1 + $0x6b4] sm:$0xf]
    %v449 = vld [vmem:[%s1 + $0x6b8] sm:$0xf]
    %v450 = vld [vmem:[%s1 + $0x6bc] sm:$0xf]
    %v451 = vld [vmem:[%s1 + $0x6c0] sm:$0xf]
    %v452 = vld [vmem:[%s1 + $0x6c4] sm:$0xf]
    %v453 = vld [vmem:[%s1 + $0x6c8] sm:$0xf]
    %v454 = vld [vmem:[%s1 + $0x6cc] sm:$0xf]
    %v455 = vld [vmem:[%s1 + $0x6d0] sm:$0xf]
    %v456 = vld [vmem:[%s1 + $0x6d4] sm:$0xf]
    %v457 = vld [vmem:[%s1 + $0x6d8] sm:$0xf]
    %v458 = vld [vmem:[%s1 + $0x6dc] sm:$0xf]
    %v459 = vld [vmem:[%s1 + $0x6e0] sm:$0xf]
    %v460 = vld [vmem:[%s1 + $0x6e4] sm:$0xf]
    %v461 = vld [vmem:[%s1 + $0x6e8] sm:$0xf]
    %v462 = vld [vmem:[%s1 + $0x6ec] sm:$0xf]
    %v463 = vld [vmem:[%s1 + $0x6f0] sm:$0xf]
    %v464 = vld [vmem:[%s1 + $0x6f4] sm:$0xf]
    %v465 = vld [vmem:[%s1 + $0x6f8] sm:$0xf]
    %v466 = vld [vmem:[%s1 + $0x6fc] sm:$0xf]
    %v467 = vld [vmem:[%s1 + $0x700] sm:$0xf]
    %v468 = vld [vmem:[%s1 + $0x704] sm:$0xf]
    %v469 = vld [vmem:[%s1 + $0x708] sm:$0xf]
    %v470 = vld [vmem:[%s1 + $0x70c] sm:$0xf]
    %v471 = vld [vmem:[%s1 + $0x710] sm:$0xf]
    %v472 = vld [vmem:[%s1 + $0x714] sm:$0xf]
    %v473 = vld [vmem:[%s1 + $0x718] sm:$0xf]
    %v474 = vld [vmem:[%s1 + $0x71c] sm:$0xf]
    %v475 = vld [vmem:[%s1 + $0x720] sm:$0xf]
    %v476 = vld [vmem:[%s1 + $0x724] sm:$0xf]
    %v477 = vld [vmem:[%s1 + $0x728] sm:$0xf]
    %v478 = vld [vmem:[%s1 + $0x72c] sm:$0xf]
    %v479 = vld [vmem:[%s1 + $0x730] sm:$0xf]
    %v480 = vld [vmem:[%s1 + $0x734] sm:$0xf]
    %v481 = vld [vmem:[%s1 + $0x738] sm:$0xf]
    %v482 = vld [vmem:[%s1 + $0x73c] sm:$0xf]
    %v483 = vld [vmem:[%s1 + $0x740] sm:$0xf]
    %v484 = vld [vmem:[%s1 + $0x744] sm:$0xf]
    %v485 = vld [vmem:[%s1 + $0x748] sm:$0xf]
    %v486 = vld [vmem:[%s1 + $0x74c] sm:$0xf]
    %v487 = vld [vmem:[%s1 + $0x750] sm:$0xf]
    %v488 = vld [vmem:[%s1 + $0x754] sm:$0xf]
    %v489 = vld [vmem:[%s1 + $0x758] sm:$0xf]
    %v490 = vld [vmem:[%s1 + $0x75c] sm:$0xf]
    %v491 = vld [vmem:[%s1 + $0x760] sm:$0xf]
    %v492 = vld [vmem:[%s1 + $0x764] sm:$0xf]
    %v493 = vld [vmem:[%s1 + $0x768] sm:$0xf]
    %v494 = vld [vmem:[%s1 + $0x76c] sm:$0xf]
    %v495 = vld [vmem:[%s1 + $0x770] sm:$0xf]
    %v496 = vld [vmem:[%s1 + $0x774] sm:$0xf]
    %v497 = vld [vmem:[%s1 + $0x778] sm:$0xf]
    %v498 = vld [vmem:[%s1 + $0x77c] sm:$0xf]
    %v499 = vld [vmem:[%s1 + $0x780] sm:$0xf]
    %v500 = vld [vmem:[%s1 + $0x784] sm:$0xf]
    %v501 = vld [vmem:[%s1 + $0x788] sm:$0xf]
    %v502 = vld [vmem:[%s1 + $0x78c] sm:$0xf]
    %v503 = vld [vmem:[%s1 + $0x790] sm:$0xf]
    %v504 = vld [vmem:[%s1 + $0x794] sm:$0xf]
    %v505 = vld [vmem:[%s1 + $0x798] sm:$0xf]
    %v506 = vld [vmem:[%s1 + $0x79c] sm:$0xf]
    %v507 = vld [vmem:[%s1 + $0x7a0] sm:$0xf]
    %v508 = vld [vmem:[%s1 + $0x7a4] sm:$0xf]
    %v509 = vld [vmem:[%s1 + $0x7a8] sm:$0xf]
    %v510 = vld [vmem:[%s1 + $0x7ac] sm:$0xf]
    %v511 = vld [vmem:[%s1 + $0x7b0] sm:$0xf]
    %v512 = vld [vmem:[%s1 + $0x7b4] sm:$0xf]
    %v513 = vld [vmem:[%s1 + $0x7b8] sm:$0xf]
    %v514 = vld [vmem:[%s1 + $0x7bc] sm:$0xf]
    %v515 = vld [vmem:[%s1 + $0x7c0] sm:$0xf]
    %v516 = vld [vmem:[%s1 + $0x7c4] sm:$0xf]
    %v517 = vld [vmem:[%s1 + $0x7c8] sm:$0xf]
    %v518 = vld [vmem:[%s1 + $0x7cc] sm:$0xf]
    %v519 = vld [vmem:[%s1 + $0x7d0] sm:$0xf]
    %v520 = vld [vmem:[%s1 + $0x7d4] sm:$0xf]
    %v521 = vld [vmem:[%s1 + $0x7d8] sm:$0xf]
    %v522 = vld [vmem:[%s1 + $0x7dc] sm:$0xf]
    %v523 = vld [vmem:[%s1 + $0x7e0] sm:$0xf]
    %v524 = vld [vmem:[%s1 + $0x7e4] sm:$0xf]
    %v525 = vld [vmem:[%s1 + $0x7e8] sm:$0xf]
    %v526 = vld [vmem:[%s1 + $0x7ec] sm:$0xf]
    %v527 = vld [vmem:[%s1 + $0x7f0] sm:$0xf]
    %v528 = vld [vmem:[%s1 + $0x7f4] sm:$0xf]
    %v529 = vld [vmem:[%s1 + $0x7f8] sm:$0xf]
    %v530 = vld [vmem:[%s1 + $0x7fc] sm:$0xf]
    %v531 = vld [vmem:[%s2] sm:$0x1]
    %v533 = vperm.slane %v531, 0
    %536 = vst [vmem:[#allocation1] ss:$9 sm:$0xff] %v15
    %v537 = vld [vmem:[#allocation1] sm:$0xff]
    %v538 = vld [vmem:[#allocation1 + $0x9] sm:$0xff]
    %v539 = vld [vmem:[#allocation1 + $0x12] sm:$0xff]
    %v540 = vld [vmem:[#allocation1 + $0x1b] sm:$0xff]
    %v541 = vld [vmem:[#allocation1 + $0x24] sm:$0xff]
    %v542 = vld [vmem:[#allocation1 + $0x2d] sm:$0xff]
    %v543 = vld [vmem:[#allocation1 + $0x36] sm:$0xff]
    %v544 = vld [vmem:[#allocation1 + $0x3f] sm:$0xff]
    %546 = vst [vmem:[#allocation1] ss:$9 sm:$0xff] %v16
    %v547 = vld [vmem:[#allocation1] sm:$0xff]
    %v548 = vld [vmem:[#allocation1 + $0x9] sm:$0xff]
    %v549 = vld [vmem:[#allocation1 + $0x12] sm:$0xff]
    %v550 = vld [vmem:[#allocation1 + $0x1b] sm:$0xff]
    %v551 = vld [vmem:[#allocation1 + $0x24] sm:$0xff]
    %v552 = vld [vmem:[#allocation1 + $0x2d] sm:$0xff]
    %v553 = vld [vmem:[#allocation1 + $0x36] sm:$0xff]
    %v554 = vld [vmem:[#allocation1 + $0x3f] sm:$0xff]
    %556 = vst [vmem:[#allocation1] ss:$9 sm:$0xff] %v17
    %v557 = vld [vmem:[#allocation1] sm:$0xff]
    %v558 = vld [vmem:[#allocation1 + $0x9] sm:$0xff]
    %v559 = vld [vmem:[#allocation1 + $0x12] sm:$0xff]
    %v560 = vld [vmem:[#allocation1 + $0x1b] sm:$0xff]
    %v561 = vld [vmem:[#allocation1 + $0x24] sm:$0xff]
    %v562 = vld [vmem:[#allocation1 + $0x2d] sm:$0xff]
    %v563 = vld [vmem:[#allocation1 + $0x36] sm:$0xff]
    %v564 = vld [vmem:[#allocation1 + $0x3f] sm:$0xff]
    %566 = vst [vmem:[#allocation1] ss:$9 sm:$0xff] %v18
    %v567 = vld [vmem:[#allocation1] sm:$0xff]
    %v568 = vld [vmem:[#allocation1 + $0x9] sm:$0xff]
    %v569 = vld [vmem:[#allocation1 + $0x12] sm:$0xff]
    %v570 = vld [vmem:[#allocation1 + $0x1b] sm:$0xff]
    %v571 = vld [vmem:[#allocation1 + $0x24] sm:$0xff]
    %v572 = vld [vmem:[#allocation1 + $0x2d] sm:$0xff]
    %v573 = vld [vmem:[#allocation1 + $0x36] sm:$0xff]
    %v574 = vld [vmem:[#allocation1 + $0x3f] sm:$0xff]
    %v1119 = vunpack.c.l.b16 %v19
    %v1120 = vunpack.c.l.b16 %v20
    %v1121 = vunpack.c.l.b16 %v21
    %v1122 = vunpack.c.l.b16 %v22
    %v1123 = vunpack.c.l.b16 %v23
    %v1124 = vunpack.c.l.b16 %v24
    %v1125 = vunpack.c.l.b16 %v25
    %v1126 = vunpack.c.l.b16 %v26
    %v1127 = vunpack.c.l.b16 %v27
    %v1128 = vunpack.c.l.b16 %v28
    %v1129 = vunpack.c.l.b16 %v29
    %v1130 = vunpack.c.l.b16 %v30
    %v1131 = vunpack.c.l.b16 %v31
    %v1132 = vunpack.c.l.b16 %v32
    %v1133 = vunpack.c.l.b16 %v33
    %v1134 = vunpack.c.l.b16 %v34
    %v1135 = vunpack.c.l.b16 %v35
    %v1136 = vunpack.c.l.b16 %v36
    %v1137 = vunpack.c.l.b16 %v37
    %v1138 = vunpack.c.l.b16 %v38
    %v1139 = vunpack.c.l.b16 %v39
    %v1140 = vunpack.c.l.b16 %v40
    %v1141 = vunpack.c.l.b16 %v41
    %v1142 = vunpack.c.l.b16 %v42
    %v1143 = vunpack.c.l.b16 %v43
    %v1144 = vunpack.c.l.b16 %v44
    %v1145 = vunpack.c.l.b16 %v45
    %v1146 = vunpack.c.l.b16 %v46
    %v1147 = vunpack.c.l.b16 %v47
    %v1148 = vunpack.c.l.b16 %v48
    %v1149 = vunpack.c.l.b16 %v49
    %v1150 = vunpack.c.l.b16 %v50
    %v1151 = vunpack.c.l.b16 %v51
    %v1152 = vunpack.c.l.b16 %v52
    %v1153 = vunpack.c.l.b16 %v53
    %v1154 = vunpack.c.l.b16 %v54
    %v1155 = vunpack.c.l.b16 %v55
    %v1156 = vunpack.c.l.b16 %v56
    %v1157 = vunpack.c.l.b16 %v57
    %v1158 = vunpack.c.l.b16 %v58
    %v1159 = vunpack.c.l.b16 %v59
    %v1160 = vunpack.c.l.b16 %v60
    %v1161 = vunpack.c.l.b16 %v61
    %v1162 = vunpack.c.l.b16 %v62
    %v1163 = vunpack.c.l.b16 %v63
    %v1164 = vunpack.c.l.b16 %v64
    %v1165 = vunpack.c.l.b16 %v65
    %v1166 = vunpack.c.l.b16 %v66
    %v1167 = vunpack.c.l.b16 %v67
    %v1168 = vunpack.c.l.b16 %v68
    %v1169 = vunpack.c.l.b16 %v69
    %v1170 = vunpack.c.l.b16 %v70
    %v1171 = vunpack.c.l.b16 %v71
    %v1172 = vunpack.c.l.b16 %v72
    %v1173 = vunpack.c.l.b16 %v73
    %v1174 = vunpack.c.l.b16 %v74
    %v1175 = vunpack.c.l.b16 %v75
    %v1176 = vunpack.c.l.b16 %v76
    %v1177 = vunpack.c.l.b16 %v77
    %v1178 = vunpack.c.l.b16 %v78
    %v1179 = vunpack.c.l.b16 %v79
    %v1180 = vunpack.c.l.b16 %v80
    %v1181 = vunpack.c.l.b16 %v81
    %v1182 = vunpack.c.l.b16 %v82
    %v1183 = vunpack.c.l.b16 %v83
    %v1184 = vunpack.c.l.b16 %v84
    %v1185 = vunpack.c.l.b16 %v85
    %v1186 = vunpack.c.l.b16 %v86
    %v1187 = vunpack.c.l.b16 %v87
    %v1188 = vunpack.c.l.b16 %v88
    %v1189 = vunpack.c.l.b16 %v89
    %v1190 = vunpack.c.l.b16 %v90
    %v1191 = vunpack.c.l.b16 %v91
    %v1192 = vunpack.c.l.b16 %v92
    %v1193 = vunpack.c.l.b16 %v93
    %v1194 = vunpack.c.l.b16 %v94
    %v1195 = vunpack.c.l.b16 %v95
    %v1196 = vunpack.c.l.b16 %v96
    %v1197 = vunpack.c.l.b16 %v97
    %v1198 = vunpack.c.l.b16 %v98
    %v1199 = vunpack.c.l.b16 %v99
    %v1200 = vunpack.c.l.b16 %v100
    %v1201 = vunpack.c.l.b16 %v101
    %v1202 = vunpack.c.l.b16 %v102
    %v1203 = vunpack.c.l.b16 %v103
    %v1204 = vunpack.c.l.b16 %v104
    %v1205 = vunpack.c.l.b16 %v105
    %v1206 = vunpack.c.l.b16 %v106
    %v1207 = vunpack.c.l.b16 %v107
    %v1208 = vunpack.c.l.b16 %v108
    %v1209 = vunpack.c.l.b16 %v109
    %v1210 = vunpack.c.l.b16 %v110
    %v1211 = vunpack.c.l.b16 %v111
    %v1212 = vunpack.c.l.b16 %v112
    %v1213 = vunpack.c.l.b16 %v113
    %v1214 = vunpack.c.l.b16 %v114
    %v1215 = vunpack.c.l.b16 %v115
    %v1216 = vunpack.c.l.b16 %v116
    %v1217 = vunpack.c.l.b16 %v117
    %v1218 = vunpack.c.l.b16 %v118
    %v1219 = vunpack.c.l.b16 %v119
    %v1220 = vunpack.c.l.b16 %v120
    %v1221 = vunpack.c.l.b16 %v121
    %v1222 = vunpack.c.l.b16 %v122
    %v1223 = vunpack.c.l.b16 %v123
    %v1224 = vunpack.c.l.b16 %v124
    %v1225 = vunpack.c.l.b16 %v125
    %v1226 = vunpack.c.l.b16 %v126
    %v1227 = vunpack.c.l.b16 %v127
    %v1228 = vunpack.c.l.b16 %v128
    %v1229 = vunpack.c.l.b16 %v129
    %v1230 = vunpack.c.l.b16 %v130
    %v1231 = vunpack.c.l.b16 %v131
    %v1232 = vunpack.c.l.b16 %v132
    %v1233 = vunpack.c.l.b16 %v133
    %v1234 = vunpack.c.l.b16 %v134
    %v1235 = vunpack.c.l.b16 %v135
    %v1236 = vunpack.c.l.b16 %v136
    %v1237 = vunpack.c.l.b16 %v137
    %v1238 = vunpack.c.l.b16 %v138
    %v1239 = vunpack.c.l.b16 %v139
    %v1240 = vunpack.c.l.b16 %v140
    %v1241 = vunpack.c.l.b16 %v141
    %v1242 = vunpack.c.l.b16 %v142
    %v1243 = vunpack.c.l.b16 %v143
    %v1244 = vunpack.c.l.b16 %v144
    %v1245 = vunpack.c.l.b16 %v145
    %v1246 = vunpack.c.l.b16 %v146
    %v1247 = vunpack.c.l.b16 %v147
    %v1248 = vunpack.c.l.b16 %v148
    %v1249 = vunpack.c.l.b16 %v149
    %v1250 = vunpack.c.l.b16 %v150
    %v1251 = vunpack.c.l.b16 %v151
    %v1252 = vunpack.c.l.b16 %v152
    %v1253 = vunpack.c.l.b16 %v153
    %v1254 = vunpack.c.l.b16 %v154
    %v1255 = vunpack.c.l.b16 %v155
    %v1256 = vunpack.c.l.b16 %v156
    %v1257 = vunpack.c.l.b16 %v157
    %v1258 = vunpack.c.l.b16 %v158
    %v1259 = vunpack.c.l.b16 %v159
    %v1260 = vunpack.c.l.b16 %v160
    %v1261 = vunpack.c.l.b16 %v161
    %v1262 = vunpack.c.l.b16 %v162
    %v1263 = vunpack.c.l.b16 %v163
    %v1264 = vunpack.c.l.b16 %v164
    %v1265 = vunpack.c.l.b16 %v165
    %v1266 = vunpack.c.l.b16 %v166
    %v1267 = vunpack.c.l.b16 %v167
    %v1268 = vunpack.c.l.b16 %v168
    %v1269 = vunpack.c.l.b16 %v169
    %v1270 = vunpack.c.l.b16 %v170
    %v1271 = vunpack.c.l.b16 %v171
    %v1272 = vunpack.c.l.b16 %v172
    %v1273 = vunpack.c.l.b16 %v173
    %v1274 = vunpack.c.l.b16 %v174
    %v1275 = vunpack.c.l.b16 %v175
    %v1276 = vunpack.c.l.b16 %v176
    %v1277 = vunpack.c.l.b16 %v177
    %v1278 = vunpack.c.l.b16 %v178
    %v1279 = vunpack.c.l.b16 %v179
    %v1280 = vunpack.c.l.b16 %v180
    %v1281 = vunpack.c.l.b16 %v181
    %v1282 = vunpack.c.l.b16 %v182
    %v1283 = vunpack.c.l.b16 %v183
    %v1284 = vunpack.c.l.b16 %v184
    %v1285 = vunpack.c.l.b16 %v185
    %v1286 = vunpack.c.l.b16 %v186
    %v1287 = vunpack.c.l.b16 %v187
    %v1288 = vunpack.c.l.b16 %v188
    %v1289 = vunpack.c.l.b16 %v189
    %v1290 = vunpack.c.l.b16 %v190
    %v1291 = vunpack.c.l.b16 %v191
    %v1292 = vunpack.c.l.b16 %v192
    %v1293 = vunpack.c.l.b16 %v193
    %v1294 = vunpack.c.l.b16 %v194
    %v1295 = vunpack.c.l.b16 %v195
    %v1296 = vunpack.c.l.b16 %v196
    %v1297 = vunpack.c.l.b16 %v197
    %v1298 = vunpack.c.l.b16 %v198
    %v1299 = vunpack.c.l.b16 %v199
    %v1300 = vunpack.c.l.b16 %v200
    %v1301 = vunpack.c.l.b16 %v201
    %v1302 = vunpack.c.l.b16 %v202
    %v1303 = vunpack.c.l.b16 %v203
    %v1304 = vunpack.c.l.b16 %v204
    %v1305 = vunpack.c.l.b16 %v205
    %v1306 = vunpack.c.l.b16 %v206
    %v1307 = vunpack.c.l.b16 %v207
    %v1308 = vunpack.c.l.b16 %v208
    %v1309 = vunpack.c.l.b16 %v209
    %v1310 = vunpack.c.l.b16 %v210
    %v1311 = vunpack.c.l.b16 %v211
    %v1312 = vunpack.c.l.b16 %v212
    %v1313 = vunpack.c.l.b16 %v213
    %v1314 = vunpack.c.l.b16 %v214
    %v1315 = vunpack.c.l.b16 %v215
    %v1316 = vunpack.c.l.b16 %v216
    %v1317 = vunpack.c.l.b16 %v217
    %v1318 = vunpack.c.l.b16 %v218
    %v1319 = vunpack.c.l.b16 %v219
    %v1320 = vunpack.c.l.b16 %v220
    %v1321 = vunpack.c.l.b16 %v221
    %v1322 = vunpack.c.l.b16 %v222
    %v1323 = vunpack.c.l.b16 %v223
    %v1324 = vunpack.c.l.b16 %v224
    %v1325 = vunpack.c.l.b16 %v225
    %v1326 = vunpack.c.l.b16 %v226
    %v1327 = vunpack.c.l.b16 %v227
    %v1328 = vunpack.c.l.b16 %v228
    %v1329 = vunpack.c.l.b16 %v229
    %v1330 = vunpack.c.l.b16 %v230
    %v1331 = vunpack.c.l.b16 %v231
    %v1332 = vunpack.c.l.b16 %v232
    %v1333 = vunpack.c.l.b16 %v233
    %v1334 = vunpack.c.l.b16 %v234
    %v1335 = vunpack.c.l.b16 %v235
    %v1336 = vunpack.c.l.b16 %v236
    %v1337 = vunpack.c.l.b16 %v237
    %v1338 = vunpack.c.l.b16 %v238
    %v1339 = vunpack.c.l.b16 %v239
    %v1340 = vunpack.c.l.b16 %v240
    %v1341 = vunpack.c.l.b16 %v241
    %v1342 = vunpack.c.l.b16 %v242
    %v1343 = vunpack.c.l.b16 %v243
    %v1344 = vunpack.c.l.b16 %v244
    %v1345 = vunpack.c.l.b16 %v245
    %v1346 = vunpack.c.l.b16 %v246
    %v1347 = vunpack.c.l.b16 %v247
    %v1348 = vunpack.c.l.b16 %v248
    %v1349 = vunpack.c.l.b16 %v249
    %v1350 = vunpack.c.l.b16 %v250
    %v1351 = vunpack.c.l.b16 %v251
    %v1352 = vunpack.c.l.b16 %v252
    %v1353 = vunpack.c.l.b16 %v253
    %v1354 = vunpack.c.l.b16 %v254
    %v1355 = vunpack.c.l.b16 %v255
    %v1356 = vunpack.c.l.b16 %v256
    %v1357 = vunpack.c.l.b16 %v257
    %v1358 = vunpack.c.l.b16 %v258
    %v1359 = vunpack.c.l.b16 %v259
    %v1360 = vunpack.c.l.b16 %v260
    %v1361 = vunpack.c.l.b16 %v261
    %v1362 = vunpack.c.l.b16 %v262
    %v1363 = vunpack.c.l.b16 %v263
    %v1364 = vunpack.c.l.b16 %v264
    %v1365 = vunpack.c.l.b16 %v265
    %v1366 = vunpack.c.l.b16 %v266
    %v1367 = vunpack.c.l.b16 %v267
    %v1368 = vunpack.c.l.b16 %v268
    %v1369 = vunpack.c.l.b16 %v269
    %v1370 = vunpack.c.l.b16 %v270
    %v1371 = vunpack.c.l.b16 %v271
    %v1372 = vunpack.c.l.b16 %v272
    %v1373 = vunpack.c.l.b16 %v273
    %v1374 = vunpack.c.l.b16 %v274
    %v1375 = vunpack.c.l.b16 %v275
    %v1376 = vunpack.c.l.b16 %v276
    %v1377 = vunpack.c.l.b16 %v277
    %v1378 = vunpack.c.l.b16 %v278
    %v1379 = vunpack.c.l.b16 %v279
    %v1380 = vunpack.c.l.b16 %v280
    %v1381 = vunpack.c.l.b16 %v281
    %v1382 = vunpack.c.l.b16 %v282
    %v1383 = vunpack.c.l.b16 %v283
    %v1384 = vunpack.c.l.b16 %v284
    %v1385 = vunpack.c.l.b16 %v285
    %v1386 = vunpack.c.l.b16 %v286
    %v1387 = vunpack.c.l.b16 %v287
    %v1388 = vunpack.c.l.b16 %v288
    %v1389 = vunpack.c.l.b16 %v289
    %v1390 = vunpack.c.l.b16 %v290
    %v1391 = vunpack.c.l.b16 %v291
    %v1392 = vunpack.c.l.b16 %v292
    %v1393 = vunpack.c.l.b16 %v293
    %v1394 = vunpack.c.l.b16 %v294
    %v1395 = vunpack.c.l.b16 %v295
    %v1396 = vunpack.c.l.b16 %v296
    %v1397 = vunpack.c.l.b16 %v297
    %v1398 = vunpack.c.l.b16 %v298
    %v1399 = vunpack.c.l.b16 %v299
    %v1400 = vunpack.c.l.b16 %v300
    %v1401 = vunpack.c.l.b16 %v301
    %v1402 = vunpack.c.l.b16 %v302
    %v1403 = vunpack.c.l.b16 %v303
    %v1404 = vunpack.c.l.b16 %v304
    %v1405 = vunpack.c.l.b16 %v305
    %v1406 = vunpack.c.l.b16 %v306
    %v1407 = vunpack.c.l.b16 %v307
    %v1408 = vunpack.c.l.b16 %v308
    %v1409 = vunpack.c.l.b16 %v309
    %v1410 = vunpack.c.l.b16 %v310
    %v1411 = vunpack.c.l.b16 %v311
    %v1412 = vunpack.c.l.b16 %v312
    %v1413 = vunpack.c.l.b16 %v313
    %v1414 = vunpack.c.l.b16 %v314
    %v1415 = vunpack.c.l.b16 %v315
    %v1416 = vunpack.c.l.b16 %v316
    %v1417 = vunpack.c.l.b16 %v317
    %v1418 = vunpack.c.l.b16 %v318
    %v1419 = vunpack.c.l.b16 %v319
    %v1420 = vunpack.c.l.b16 %v320
    %v1421 = vunpack.c.l.b16 %v321
    %v1422 = vunpack.c.l.b16 %v322
    %v1423 = vunpack.c.l.b16 %v323
    %v1424 = vunpack.c.l.b16 %v324
    %v1425 = vunpack.c.l.b16 %v325
    %v1426 = vunpack.c.l.b16 %v326
    %v1427 = vunpack.c.l.b16 %v327
    %v1428 = vunpack.c.l.b16 %v328
    %v1429 = vunpack.c.l.b16 %v329
    %v1430 = vunpack.c.l.b16 %v330
    %v1431 = vunpack.c.l.b16 %v331
    %v1432 = vunpack.c.l.b16 %v332
    %v1433 = vunpack.c.l.b16 %v333
    %v1434 = vunpack.c.l.b16 %v334
    %v1435 = vunpack.c.l.b16 %v335
    %v1436 = vunpack.c.l.b16 %v336
    %v1437 = vunpack.c.l.b16 %v337
    %v1438 = vunpack.c.l.b16 %v338
    %v1439 = vunpack.c.l.b16 %v339
    %v1440 = vunpack.c.l.b16 %v340
    %v1441 = vunpack.c.l.b16 %v341
    %v1442 = vunpack.c.l.b16 %v342
    %v1443 = vunpack.c.l.b16 %v343
    %v1444 = vunpack.c.l.b16 %v344
    %v1445 = vunpack.c.l.b16 %v345
    %v1446 = vunpack.c.l.b16 %v346
    %v1447 = vunpack.c.l.b16 %v347
    %v1448 = vunpack.c.l.b16 %v348
    %v1449 = vunpack.c.l.b16 %v349
    %v1450 = vunpack.c.l.b16 %v350
    %v1451 = vunpack.c.l.b16 %v351
    %v1452 = vunpack.c.l.b16 %v352
    %v1453 = vunpack.c.l.b16 %v353
    %v1454 = vunpack.c.l.b16 %v354
    %v1455 = vunpack.c.l.b16 %v355
    %v1456 = vunpack.c.l.b16 %v356
    %v1457 = vunpack.c.l.b16 %v357
    %v1458 = vunpack.c.l.b16 %v358
    %v1459 = vunpack.c.l.b16 %v359
    %v1460 = vunpack.c.l.b16 %v360
    %v1461 = vunpack.c.l.b16 %v361
    %v1462 = vunpack.c.l.b16 %v362
    %v1463 = vunpack.c.l.b16 %v363
    %v1464 = vunpack.c.l.b16 %v364
    %v1465 = vunpack.c.l.b16 %v365
    %v1466 = vunpack.c.l.b16 %v366
    %v1467 = vunpack.c.l.b16 %v367
    %v1468 = vunpack.c.l.b16 %v368
    %v1469 = vunpack.c.l.b16 %v369
    %v1470 = vunpack.c.l.b16 %v370
    %v1471 = vunpack.c.l.b16 %v371
    %v1472 = vunpack.c.l.b16 %v372
    %v1473 = vunpack.c.l.b16 %v373
    %v1474 = vunpack.c.l.b16 %v374
    %v1475 = vunpack.c.l.b16 %v375
    %v1476 = vunpack.c.l.b16 %v376
    %v1477 = vunpack.c.l.b16 %v377
    %v1478 = vunpack.c.l.b16 %v378
    %v1479 = vunpack.c.l.b16 %v379
    %v1480 = vunpack.c.l.b16 %v380
    %v1481 = vunpack.c.l.b16 %v381
    %v1482 = vunpack.c.l.b16 %v382
    %v1483 = vunpack.c.l.b16 %v383
    %v1484 = vunpack.c.l.b16 %v384
    %v1485 = vunpack.c.l.b16 %v385
    %v1486 = vunpack.c.l.b16 %v386
    %v1487 = vunpack.c.l.b16 %v387
    %v1488 = vunpack.c.l.b16 %v388
    %v1489 = vunpack.c.l.b16 %v389
    %v1490 = vunpack.c.l.b16 %v390
    %v1491 = vunpack.c.l.b16 %v391
    %v1492 = vunpack.c.l.b16 %v392
    %v1493 = vunpack.c.l.b16 %v393
    %v1494 = vunpack.c.l.b16 %v394
    %v1495 = vunpack.c.l.b16 %v395
    %v1496 = vunpack.c.l.b16 %v396
    %v1497 = vunpack.c.l.b16 %v397
    %v1498 = vunpack.c.l.b16 %v398
    %v1499 = vunpack.c.l.b16 %v399
    %v1500 = vunpack.c.l.b16 %v400
    %v1501 = vunpack.c.l.b16 %v401
    %v1502 = vunpack.c.l.b16 %v402
    %v1503 = vunpack.c.l.b16 %v403
    %v1504 = vunpack.c.l.b16 %v404
    %v1505 = vunpack.c.l.b16 %v405
    %v1506 = vunpack.c.l.b16 %v406
    %v1507 = vunpack.c.l.b16 %v407
    %v1508 = vunpack.c.l.b16 %v408
    %v1509 = vunpack.c.l.b16 %v409
    %v1510 = vunpack.c.l.b16 %v410
    %v1511 = vunpack.c.l.b16 %v411
    %v1512 = vunpack.c.l.b16 %v412
    %v1513 = vunpack.c.l.b16 %v413
    %v1514 = vunpack.c.l.b16 %v414
    %v1515 = vunpack.c.l.b16 %v415
    %v1516 = vunpack.c.l.b16 %v416
    %v1517 = vunpack.c.l.b16 %v417
    %v1518 = vunpack.c.l.b16 %v418
    %v1519 = vunpack.c.l.b16 %v419
    %v1520 = vunpack.c.l.b16 %v420
    %v1521 = vunpack.c.l.b16 %v421
    %v1522 = vunpack.c.l.b16 %v422
    %v1523 = vunpack.c.l.b16 %v423
    %v1524 = vunpack.c.l.b16 %v424
    %v1525 = vunpack.c.l.b16 %v425
    %v1526 = vunpack.c.l.b16 %v426
    %v1527 = vunpack.c.l.b16 %v427
    %v1528 = vunpack.c.l.b16 %v428
    %v1529 = vunpack.c.l.b16 %v429
    %v1530 = vunpack.c.l.b16 %v430
    %v1531 = vunpack.c.l.b16 %v431
    %v1532 = vunpack.c.l.b16 %v432
    %v1533 = vunpack.c.l.b16 %v433
    %v1534 = vunpack.c.l.b16 %v434
    %v1535 = vunpack.c.l.b16 %v435
    %v1536 = vunpack.c.l.b16 %v436
    %v1537 = vunpack.c.l.b16 %v437
    %v1538 = vunpack.c.l.b16 %v438
    %v1539 = vunpack.c.l.b16 %v439
    %v1540 = vunpack.c.l.b16 %v440
    %v1541 = vunpack.c.l.b16 %v441
    %v1542 = vunpack.c.l.b16 %v442
    %v1543 = vunpack.c.l.b16 %v443
    %v1544 = vunpack.c.l.b16 %v444
    %v1545 = vunpack.c.l.b16 %v445
    %v1546 = vunpack.c.l.b16 %v446
    %v1547 = vunpack.c.l.b16 %v447
    %v1548 = vunpack.c.l.b16 %v448
    %v1549 = vunpack.c.l.b16 %v449
    %v1550 = vunpack.c.l.b16 %v450
    %v1551 = vunpack.c.l.b16 %v451
    %v1552 = vunpack.c.l.b16 %v452
    %v1553 = vunpack.c.l.b16 %v453
    %v1554 = vunpack.c.l.b16 %v454
    %v1555 = vunpack.c.l.b16 %v455
    %v1556 = vunpack.c.l.b16 %v456
    %v1557 = vunpack.c.l.b16 %v457
    %v1558 = vunpack.c.l.b16 %v458
    %v1559 = vunpack.c.l.b16 %v459
    %v1560 = vunpack.c.l.b16 %v460
    %v1561 = vunpack.c.l.b16 %v461
    %v1562 = vunpack.c.l.b16 %v462
    %v1563 = vunpack.c.l.b16 %v463
    %v1564 = vunpack.c.l.b16 %v464
    %v1565 = vunpack.c.l.b16 %v465
    %v1566 = vunpack.c.l.b16 %v466
    %v1567 = vunpack.c.l.b16 %v467
    %v1568 = vunpack.c.l.b16 %v468
    %v1569 = vunpack.c.l.b16 %v469
    %v1570 = vunpack.c.l.b16 %v470
    %v1571 = vunpack.c.l.b16 %v471
    %v1572 = vunpack.c.l.b16 %v472
    %v1573 = vunpack.c.l.b16 %v473
    %v1574 = vunpack.c.l.b16 %v474
    %v1575 = vunpack.c.l.b16 %v475
    %v1576 = vunpack.c.l.b16 %v476
    %v1577 = vunpack.c.l.b16 %v477
    %v1578 = vunpack.c.l.b16 %v478
    %v1579 = vunpack.c.l.b16 %v479
    %v1580 = vunpack.c.l.b16 %v480
    %v1581 = vunpack.c.l.b16 %v481
    %v1582 = vunpack.c.l.b16 %v482
    %v1583 = vunpack.c.l.b16 %v483
    %v1584 = vunpack.c.l.b16 %v484
    %v1585 = vunpack.c.l.b16 %v485
    %v1586 = vunpack.c.l.b16 %v486
    %v1587 = vunpack.c.l.b16 %v487
    %v1588 = vunpack.c.l.b16 %v488
    %v1589 = vunpack.c.l.b16 %v489
    %v1590 = vunpack.c.l.b16 %v490
    %v1591 = vunpack.c.l.b16 %v491
    %v1592 = vunpack.c.l.b16 %v492
    %v1593 = vunpack.c.l.b16 %v493
    %v1594 = vunpack.c.l.b16 %v494
    %v1595 = vunpack.c.l.b16 %v495
    %v1596 = vunpack.c.l.b16 %v496
    %v1597 = vunpack.c.l.b16 %v497
    %v1598 = vunpack.c.l.b16 %v498
    %v1599 = vunpack.c.l.b16 %v499
    %v1600 = vunpack.c.l.b16 %v500
    %v1601 = vunpack.c.l.b16 %v501
    %v1602 = vunpack.c.l.b16 %v502
    %v1603 = vunpack.c.l.b16 %v503
    %v1604 = vunpack.c.l.b16 %v504
    %v1605 = vunpack.c.l.b16 %v505
    %v1606 = vunpack.c.l.b16 %v506
    %v1607 = vunpack.c.l.b16 %v507
    %v1608 = vunpack.c.l.b16 %v508
    %v1609 = vunpack.c.l.b16 %v509
    %v1610 = vunpack.c.l.b16 %v510
    %v1611 = vunpack.c.l.b16 %v511
    %v1612 = vunpack.c.l.b16 %v512
    %v1613 = vunpack.c.l.b16 %v513
    %v1614 = vunpack.c.l.b16 %v514
    %v1615 = vunpack.c.l.b16 %v515
    %v1616 = vunpack.c.l.b16 %v516
    %v1617 = vunpack.c.l.b16 %v517
    %v1618 = vunpack.c.l.b16 %v518
    %v1619 = vunpack.c.l.b16 %v519
    %v1620 = vunpack.c.l.b16 %v520
    %v1621 = vunpack.c.l.b16 %v521
    %v1622 = vunpack.c.l.b16 %v522
    %v1623 = vunpack.c.l.b16 %v523
    %v1624 = vunpack.c.l.b16 %v524
    %v1625 = vunpack.c.l.b16 %v525
    %v1626 = vunpack.c.l.b16 %v526
    %v1627 = vunpack.c.l.b16 %v527
    %v1628 = vunpack.c.l.b16 %v528
    %v1629 = vunpack.c.l.b16 %v529
    %v1630 = vunpack.c.l.b16 %v530
    %v1631 = vpack.c.b16 %v1120, %v1119
    %v1632 = vpack.c.b16 %v1122, %v1121
    %v1633 = vpack.c.b16 %v1124, %v1123
    %v1634 = vpack.c.b16 %v1126, %v1125
    %v1635 = vpack.c.b16 %v1128, %v1127
    %v1636 = vpack.c.b16 %v1130, %v1129
    %v1637 = vpack.c.b16 %v1132, %v1131
    %v1638 = vpack.c.b16 %v1134, %v1133
    %v1639 = vpack.c.b16 %v1136, %v1135
    %v1640 = vpack.c.b16 %v1138, %v1137
    %v1641 = vpack.c.b16 %v1140, %v1139
    %v1642 = vpack.c.b16 %v1142, %v1141
    %v1643 = vpack.c.b16 %v1144, %v1143
    %v1644 = vpack.c.b16 %v1146, %v1145
    %v1645 = vpack.c.b16 %v1148, %v1147
    %v1646 = vpack.c.b16 %v1150, %v1149
    %v1647 = vpack.c.b16 %v1152, %v1151
    %v1648 = vpack.c.b16 %v1154, %v1153
    %v1649 = vpack.c.b16 %v1156, %v1155
    %v1650 = vpack.c.b16 %v1158, %v1157
    %v1651 = vpack.c.b16 %v1160, %v1159
    %v1652 = vpack.c.b16 %v1162, %v1161
    %v1653 = vpack.c.b16 %v1164, %v1163
    %v1654 = vpack.c.b16 %v1166, %v1165
    %v1655 = vpack.c.b16 %v1168, %v1167
    %v1656 = vpack.c.b16 %v1170, %v1169
    %v1657 = vpack.c.b16 %v1172, %v1171
    %v1658 = vpack.c.b16 %v1174, %v1173
    %v1659 = vpack.c.b16 %v1176, %v1175
    %v1660 = vpack.c.b16 %v1178, %v1177
    %v1661 = vpack.c.b16 %v1180, %v1179
    %v1662 = vpack.c.b16 %v1182, %v1181
    %v1663 = vpack.c.b16 %v1184, %v1183
    %v1664 = vpack.c.b16 %v1186, %v1185
    %v1665 = vpack.c.b16 %v1188, %v1187
    %v1666 = vpack.c.b16 %v1190, %v1189
    %v1667 = vpack.c.b16 %v1192, %v1191
    %v1668 = vpack.c.b16 %v1194, %v1193
    %v1669 = vpack.c.b16 %v1196, %v1195
    %v1670 = vpack.c.b16 %v1198, %v1197
    %v1671 = vpack.c.b16 %v1200, %v1199
    %v1672 = vpack.c.b16 %v1202, %v1201
    %v1673 = vpack.c.b16 %v1204, %v1203
    %v1674 = vpack.c.b16 %v1206, %v1205
    %v1675 = vpack.c.b16 %v1208, %v1207
    %v1676 = vpack.c.b16 %v1210, %v1209
    %v1677 = vpack.c.b16 %v1212, %v1211
    %v1678 = vpack.c.b16 %v1214, %v1213
    %v1679 = vpack.c.b16 %v1216, %v1215
    %v1680 = vpack.c.b16 %v1218, %v1217
    %v1681 = vpack.c.b16 %v1220, %v1219
    %v1682 = vpack.c.b16 %v1222, %v1221
    %v1683 = vpack.c.b16 %v1224, %v1223
    %v1684 = vpack.c.b16 %v1226, %v1225
    %v1685 = vpack.c.b16 %v1228, %v1227
    %v1686 = vpack.c.b16 %v1230, %v1229
    %v1687 = vpack.c.b16 %v1232, %v1231
    %v1688 = vpack.c.b16 %v1234, %v1233
    %v1689 = vpack.c.b16 %v1236, %v1235
    %v1690 = vpack.c.b16 %v1238, %v1237
    %v1691 = vpack.c.b16 %v1240, %v1239
    %v1692 = vpack.c.b16 %v1242, %v1241
    %v1693 = vpack.c.b16 %v1244, %v1243
    %v1694 = vpack.c.b16 %v1246, %v1245
    %v1695 = vpack.c.b16 %v1248, %v1247
    %v1696 = vpack.c.b16 %v1250, %v1249
    %v1697 = vpack.c.b16 %v1252, %v1251
    %v1698 = vpack.c.b16 %v1254, %v1253
    %v1699 = vpack.c.b16 %v1256, %v1255
    %v1700 = vpack.c.b16 %v1258, %v1257
    %v1701 = vpack.c.b16 %v1260, %v1259
    %v1702 = vpack.c.b16 %v1262, %v1261
    %v1703 = vpack.c.b16 %v1264, %v1263
    %v1704 = vpack.c.b16 %v1266, %v1265
    %v1705 = vpack.c.b16 %v1268, %v1267
    %v1706 = vpack.c.b16 %v1270, %v1269
    %v1707 = vpack.c.b16 %v1272, %v1271
    %v1708 = vpack.c.b16 %v1274, %v1273
    %v1709 = vpack.c.b16 %v1276, %v1275
    %v1710 = vpack.c.b16 %v1278, %v1277
    %v1711 = vpack.c.b16 %v1280, %v1279
    %v1712 = vpack.c.b16 %v1282, %v1281
    %v1713 = vpack.c.b16 %v1284, %v1283
    %v1714 = vpack.c.b16 %v1286, %v1285
    %v1715 = vpack.c.b16 %v1288, %v1287
    %v1716 = vpack.c.b16 %v1290, %v1289
    %v1717 = vpack.c.b16 %v1292, %v1291
    %v1718 = vpack.c.b16 %v1294, %v1293
    %v1719 = vpack.c.b16 %v1296, %v1295
    %v1720 = vpack.c.b16 %v1298, %v1297
    %v1721 = vpack.c.b16 %v1300, %v1299
    %v1722 = vpack.c.b16 %v1302, %v1301
    %v1723 = vpack.c.b16 %v1304, %v1303
    %v1724 = vpack.c.b16 %v1306, %v1305
    %v1725 = vpack.c.b16 %v1308, %v1307
    %v1726 = vpack.c.b16 %v1310, %v1309
    %v1727 = vpack.c.b16 %v1312, %v1311
    %v1728 = vpack.c.b16 %v1314, %v1313
    %v1729 = vpack.c.b16 %v1316, %v1315
    %v1730 = vpack.c.b16 %v1318, %v1317
    %v1731 = vpack.c.b16 %v1320, %v1319
    %v1732 = vpack.c.b16 %v1322, %v1321
    %v1733 = vpack.c.b16 %v1324, %v1323
    %v1734 = vpack.c.b16 %v1326, %v1325
    %v1735 = vpack.c.b16 %v1328, %v1327
    %v1736 = vpack.c.b16 %v1330, %v1329
    %v1737 = vpack.c.b16 %v1332, %v1331
    %v1738 = vpack.c.b16 %v1334, %v1333
    %v1739 = vpack.c.b16 %v1336, %v1335
    %v1740 = vpack.c.b16 %v1338, %v1337
    %v1741 = vpack.c.b16 %v1340, %v1339
    %v1742 = vpack.c.b16 %v1342, %v1341
    %v1743 = vpack.c.b16 %v1344, %v1343
    %v1744 = vpack.c.b16 %v1346, %v1345
    %v1745 = vpack.c.b16 %v1348, %v1347
    %v1746 = vpack.c.b16 %v1350, %v1349
    %v1747 = vpack.c.b16 %v1352, %v1351
    %v1748 = vpack.c.b16 %v1354, %v1353
    %v1749 = vpack.c.b16 %v1356, %v1355
    %v1750 = vpack.c.b16 %v1358, %v1357
    %v1751 = vpack.c.b16 %v1360, %v1359
    %v1752 = vpack.c.b16 %v1362, %v1361
    %v1753 = vpack.c.b16 %v1364, %v1363
    %v1754 = vpack.c.b16 %v1366, %v1365
    %v1755 = vpack.c.b16 %v1368, %v1367
    %v1756 = vpack.c.b16 %v1370, %v1369
    %v1757 = vpack.c.b16 %v1372, %v1371
    %v1758 = vpack.c.b16 %v1374, %v1373
    %v1759 = vpack.c.b16 %v1376, %v1375
    %v1760 = vpack.c.b16 %v1378, %v1377
    %v1761 = vpack.c.b16 %v1380, %v1379
    %v1762 = vpack.c.b16 %v1382, %v1381
    %v1763 = vpack.c.b16 %v1384, %v1383
    %v1764 = vpack.c.b16 %v1386, %v1385
    %v1765 = vpack.c.b16 %v1388, %v1387
    %v1766 = vpack.c.b16 %v1390, %v1389
    %v1767 = vpack.c.b16 %v1392, %v1391
    %v1768 = vpack.c.b16 %v1394, %v1393
    %v1769 = vpack.c.b16 %v1396, %v1395
    %v1770 = vpack.c.b16 %v1398, %v1397
    %v1771 = vpack.c.b16 %v1400, %v1399
    %v1772 = vpack.c.b16 %v1402, %v1401
    %v1773 = vpack.c.b16 %v1404, %v1403
    %v1774 = vpack.c.b16 %v1406, %v1405
    %v1775 = vpack.c.b16 %v1408, %v1407
    %v1776 = vpack.c.b16 %v1410, %v1409
    %v1777 = vpack.c.b16 %v1412, %v1411
    %v1778 = vpack.c.b16 %v1414, %v1413
    %v1779 = vpack.c.b16 %v1416, %v1415
    %v1780 = vpack.c.b16 %v1418, %v1417
    %v1781 = vpack.c.b16 %v1420, %v1419
    %v1782 = vpack.c.b16 %v1422, %v1421
    %v1783 = vpack.c.b16 %v1424, %v1423
    %v1784 = vpack.c.b16 %v1426, %v1425
    %v1785 = vpack.c.b16 %v1428, %v1427
    %v1786 = vpack.c.b16 %v1430, %v1429
    %v1787 = vpack.c.b16 %v1432, %v1431
    %v1788 = vpack.c.b16 %v1434, %v1433
    %v1789 = vpack.c.b16 %v1436, %v1435
    %v1790 = vpack.c.b16 %v1438, %v1437
    %v1791 = vpack.c.b16 %v1440, %v1439
    %v1792 = vpack.c.b16 %v1442, %v1441
    %v1793 = vpack.c.b16 %v1444, %v1443
    %v1794 = vpack.c.b16 %v1446, %v1445
    %v1795 = vpack.c.b16 %v1448, %v1447
    %v1796 = vpack.c.b16 %v1450, %v1449
    %v1797 = vpack.c.b16 %v1452, %v1451
    %v1798 = vpack.c.b16 %v1454, %v1453
    %v1799 = vpack.c.b16 %v1456, %v1455
    %v1800 = vpack.c.b16 %v1458, %v1457
    %v1801 = vpack.c.b16 %v1460, %v1459
    %v1802 = vpack.c.b16 %v1462, %v1461
    %v1803 = vpack.c.b16 %v1464, %v1463
    %v1804 = vpack.c.b16 %v1466, %v1465
    %v1805 = vpack.c.b16 %v1468, %v1467
    %v1806 = vpack.c.b16 %v1470, %v1469
    %v1807 = vpack.c.b16 %v1472, %v1471
    %v1808 = vpack.c.b16 %v1474, %v1473
    %v1809 = vpack.c.b16 %v1476, %v1475
    %v1810 = vpack.c.b16 %v1478, %v1477
    %v1811 = vpack.c.b16 %v1480, %v1479
    %v1812 = vpack.c.b16 %v1482, %v1481
    %v1813 = vpack.c.b16 %v1484, %v1483
    %v1814 = vpack.c.b16 %v1486, %v1485
    %v1815 = vpack.c.b16 %v1488, %v1487
    %v1816 = vpack.c.b16 %v1490, %v1489
    %v1817 = vpack.c.b16 %v1492, %v1491
    %v1818 = vpack.c.b16 %v1494, %v1493
    %v1819 = vpack.c.b16 %v1496, %v1495
    %v1820 = vpack.c.b16 %v1498, %v1497
    %v1821 = vpack.c.b16 %v1500, %v1499
    %v1822 = vpack.c.b16 %v1502, %v1501
    %v1823 = vpack.c.b16 %v1504, %v1503
    %v1824 = vpack.c.b16 %v1506, %v1505
    %v1825 = vpack.c.b16 %v1508, %v1507
    %v1826 = vpack.c.b16 %v1510, %v1509
    %v1827 = vpack.c.b16 %v1512, %v1511
    %v1828 = vpack.c.b16 %v1514, %v1513
    %v1829 = vpack.c.b16 %v1516, %v1515
    %v1830 = vpack.c.b16 %v1518, %v1517
    %v1831 = vpack.c.b16 %v1520, %v1519
    %v1832 = vpack.c.b16 %v1522, %v1521
    %v1833 = vpack.c.b16 %v1524, %v1523
    %v1834 = vpack.c.b16 %v1526, %v1525
    %v1835 = vpack.c.b16 %v1528, %v1527
    %v1836 = vpack.c.b16 %v1530, %v1529
    %v1837 = vpack.c.b16 %v1532, %v1531
    %v1838 = vpack.c.b16 %v1534, %v1533
    %v1839 = vpack.c.b16 %v1536, %v1535
    %v1840 = vpack.c.b16 %v1538, %v1537
    %v1841 = vpack.c.b16 %v1540, %v1539
    %v1842 = vpack.c.b16 %v1542, %v1541
    %v1843 = vpack.c.b16 %v1544, %v1543
    %v1844 = vpack.c.b16 %v1546, %v1545
    %v1845 = vpack.c.b16 %v1548, %v1547
    %v1846 = vpack.c.b16 %v1550, %v1549
    %v1847 = vpack.c.b16 %v1552, %v1551
    %v1848 = vpack.c.b16 %v1554, %v1553
    %v1849 = vpack.c.b16 %v1556, %v1555
    %v1850 = vpack.c.b16 %v1558, %v1557
    %v1851 = vpack.c.b16 %v1560, %v1559
    %v1852 = vpack.c.b16 %v1562, %v1561
    %v1853 = vpack.c.b16 %v1564, %v1563
    %v1854 = vpack.c.b16 %v1566, %v1565
    %v1855 = vpack.c.b16 %v1568, %v1567
    %v1856 = vpack.c.b16 %v1570, %v1569
    %v1857 = vpack.c.b16 %v1572, %v1571
    %v1858 = vpack.c.b16 %v1574, %v1573
    %v1859 = vpack.c.b16 %v1576, %v1575
    %v1860 = vpack.c.b16 %v1578, %v1577
    %v1861 = vpack.c.b16 %v1580, %v1579
    %v1862 = vpack.c.b16 %v1582, %v1581
    %v1863 = vpack.c.b16 %v1584, %v1583
    %v1864 = vpack.c.b16 %v1586, %v1585
    %v1865 = vpack.c.b16 %v1588, %v1587
    %v1866 = vpack.c.b16 %v1590, %v1589
    %v1867 = vpack.c.b16 %v1592, %v1591
    %v1868 = vpack.c.b16 %v1594, %v1593
    %v1869 = vpack.c.b16 %v1596, %v1595
    %v1870 = vpack.c.b16 %v1598, %v1597
    %v1871 = vpack.c.b16 %v1600, %v1599
    %v1872 = vpack.c.b16 %v1602, %v1601
    %v1873 = vpack.c.b16 %v1604, %v1603
    %v1874 = vpack.c.b16 %v1606, %v1605
    %v1875 = vpack.c.b16 %v1608, %v1607
    %v1876 = vpack.c.b16 %v1610, %v1609
    %v1877 = vpack.c.b16 %v1612, %v1611
    %v1878 = vpack.c.b16 %v1614, %v1613
    %v1879 = vpack.c.b16 %v1616, %v1615
    %v1880 = vpack.c.b16 %v1618, %v1617
    %v1881 = vpack.c.b16 %v1620, %v1619
    %v1882 = vpack.c.b16 %v1622, %v1621
    %v1883 = vpack.c.b16 %v1624, %v1623
    %v1884 = vpack.c.b16 %v1626, %v1625
    %v1885 = vpack.c.b16 %v1628, %v1627
    %v1886 = vpack.c.b16 %v1630, %v1629
    %2143 = vmatpush.bf16.msra.mxu0 %v1638
    %2144 = vmatpush.bf16.msra.mxu0 %v1637
    %2145 = vmatpush.bf16.msra.mxu0 %v1636
    %2146 = vmatpush.bf16.msra.mxu0 %v1635
    %2147 = vmatpush.bf16.msra.mxu0 %v1634
    %2148 = vmatpush.bf16.msra.mxu0 %v1633
    %2149 = vmatpush.bf16.msra.mxu0 %v1632
    %2150 = vmatpush.bf16.msra.mxu0 %v1631
    %2151 = vmatmul.bf16.gmra.mxu0 %v537
    %v2152 = vpop.f32.mrf.mxu0
    %v2153 = vadd.f32 %v533, %v2152
    %v2154 = vpop.f32.mrf.mxu0
    %2155 = vdwg.mxu0
    %2156 = vmatpush.bf16.msra.mxu0 %v1646
    %2157 = vmatpush.bf16.msra.mxu0 %v1645
    %2158 = vmatpush.bf16.msra.mxu0 %v1644
    %2159 = vmatpush.bf16.msra.mxu0 %v1643
    %2160 = vmatpush.bf16.msra.mxu0 %v1642
    %2161 = vmatpush.bf16.msra.mxu0 %v1641
    %2162 = vmatpush.bf16.msra.mxu0 %v1640
    %2163 = vmatpush.bf16.msra.mxu0 %v1639
    %2164 = vmatmul.bf16.gmra.mxu0 %v538
    %v2165 = vpop.f32.mrf.mxu0
    %v2166 = vadd.f32 %v2153, %v2165
    %v2167 = vpop.f32.mrf.mxu0
    %2168 = vdwg.mxu0
    %2169 = vmatpush.bf16.msra.mxu0 %v1654
    %2170 = vmatpush.bf16.msra.mxu0 %v1653
    %2171 = vmatpush.bf16.msra.mxu0 %v1652
    %2172 = vmatpush.bf16.msra.mxu0 %v1651
    %2173 = vmatpush.bf16.msra.mxu0 %v1650
    %2174 = vmatpush.bf16.msra.mxu0 %v1649
    %2175 = vmatpush.bf16.msra.mxu0 %v1648
    %2176 = vmatpush.bf16.msra.mxu0 %v1647
    %2177 = vmatmul.bf16.gmra.mxu0 %v539
    %v2178 = vpop.f32.mrf.mxu0
    %v2179 = vadd.f32 %v2166, %v2178
    %v2180 = vpop.f32.mrf.mxu0
    %2181 = vdwg.mxu0
    %2182 = vmatpush.bf16.msra.mxu0 %v1662
    %2183 = vmatpush.bf16.msra.mxu0 %v1661
    %2184 = vmatpush.bf16.msra.mxu0 %v1660
    %2185 = vmatpush.bf16.msra.mxu0 %v1659
    %2186 = vmatpush.bf16.msra.mxu0 %v1658
    %2187 = vmatpush.bf16.msra.mxu0 %v1657
    %2188 = vmatpush.bf16.msra.mxu0 %v1656
    %2189 = vmatpush.bf16.msra.mxu0 %v1655
    %2190 = vmatmul.bf16.gmra.mxu0 %v540
    %v2191 = vpop.f32.mrf.mxu0
    %v2192 = vadd.f32 %v2179, %v2191
    %v2193 = vpop.f32.mrf.mxu0
    %2194 = vdwg.mxu0
    %2195 = vmatpush.bf16.msra.mxu0 %v1670
    %2196 = vmatpush.bf16.msra.mxu0 %v1669
    %2197 = vmatpush.bf16.msra.mxu0 %v1668
    %2198 = vmatpush.bf16.msra.mxu0 %v1667
    %2199 = vmatpush.bf16.msra.mxu0 %v1666
    %2200 = vmatpush.bf16.msra.mxu0 %v1665
    %2201 = vmatpush.bf16.msra.mxu0 %v1664
    %2202 = vmatpush.bf16.msra.mxu0 %v1663
    %2203 = vmatmul.bf16.gmra.mxu0 %v541
    %v2204 = vpop.f32.mrf.mxu0
    %v2205 = vadd.f32 %v2192, %v2204
    %v2206 = vpop.f32.mrf.mxu0
    %2207 = vdwg.mxu0
    %2208 = vmatpush.bf16.msra.mxu0 %v1678
    %2209 = vmatpush.bf16.msra.mxu0 %v1677
    %2210 = vmatpush.bf16.msra.mxu0 %v1676
    %2211 = vmatpush.bf16.msra.mxu0 %v1675
    %2212 = vmatpush.bf16.msra.mxu0 %v1674
    %2213 = vmatpush.bf16.msra.mxu0 %v1673
    %2214 = vmatpush.bf16.msra.mxu0 %v1672
    %2215 = vmatpush.bf16.msra.mxu0 %v1671
    %2216 = vmatmul.bf16.gmra.mxu0 %v542
    %v2217 = vpop.f32.mrf.mxu0
    %v2218 = vadd.f32 %v2205, %v2217
    %v2219 = vpop.f32.mrf.mxu0
    %2220 = vdwg.mxu0
    %2221 = vmatpush.bf16.msra.mxu0 %v1686
    %2222 = vmatpush.bf16.msra.mxu0 %v1685
    %2223 = vmatpush.bf16.msra.mxu0 %v1684
    %2224 = vmatpush.bf16.msra.mxu0 %v1683
    %2225 = vmatpush.bf16.msra.mxu0 %v1682
    %2226 = vmatpush.bf16.msra.mxu0 %v1681
    %2227 = vmatpush.bf16.msra.mxu0 %v1680
    %2228 = vmatpush.bf16.msra.mxu0 %v1679
    %2229 = vmatmul.bf16.gmra.mxu0 %v543
    %v2230 = vpop.f32.mrf.mxu0
    %v2231 = vadd.f32 %v2218, %v2230
    %v2232 = vpop.f32.mrf.mxu0
    %2233 = vdwg.mxu0
    %2234 = vmatpush.bf16.msra.mxu0 %v1694
    %2235 = vmatpush.bf16.msra.mxu0 %v1693
    %2236 = vmatpush.bf16.msra.mxu0 %v1692
    %2237 = vmatpush.bf16.msra.mxu0 %v1691
    %2238 = vmatpush.bf16.msra.mxu0 %v1690
    %2239 = vmatpush.bf16.msra.mxu0 %v1689
    %2240 = vmatpush.bf16.msra.mxu0 %v1688
    %2241 = vmatpush.bf16.msra.mxu0 %v1687
    %2242 = vmatmul.bf16.gmra.mxu0 %v544
    %v2243 = vpop.f32.mrf.mxu0
    %v2244 = vadd.f32 %v2231, %v2243
    %v2245 = vpop.f32.mrf.mxu0
    %2246 = vdwg.mxu0
    %2247 = vmatpush.bf16.msra.mxu0 %v1702
    %2248 = vmatpush.bf16.msra.mxu0 %v1701
    %2249 = vmatpush.bf16.msra.mxu0 %v1700
    %2250 = vmatpush.bf16.msra.mxu0 %v1699
    %2251 = vmatpush.bf16.msra.mxu0 %v1698
    %2252 = vmatpush.bf16.msra.mxu0 %v1697
    %2253 = vmatpush.bf16.msra.mxu0 %v1696
    %2254 = vmatpush.bf16.msra.mxu0 %v1695
    %2255 = vmatmul.bf16.gmra.mxu0 %v547
    %v2256 = vpop.f32.mrf.mxu0
    %v2257 = vadd.f32 %v2244, %v2256
    %v2258 = vpop.f32.mrf.mxu0
    %2259 = vdwg.mxu0
    %2260 = vmatpush.bf16.msra.mxu0 %v1710
    %2261 = vmatpush.bf16.msra.mxu0 %v1709
    %2262 = vmatpush.bf16.msra.mxu0 %v1708
    %2263 = vmatpush.bf16.msra.mxu0 %v1707
    %2264 = vmatpush.bf16.msra.mxu0 %v1706
    %2265 = vmatpush.bf16.msra.mxu0 %v1705
    %2266 = vmatpush.bf16.msra.mxu0 %v1704
    %2267 = vmatpush.bf16.msra.mxu0 %v1703
    %2268 = vmatmul.bf16.gmra.mxu0 %v548
    %v2269 = vpop.f32.mrf.mxu0
    %v2270 = vadd.f32 %v2257, %v2269
    %v2271 = vpop.f32.mrf.mxu0
    %2272 = vdwg.mxu0
    %2273 = vmatpush.bf16.msra.mxu0 %v1718
    %2274 = vmatpush.bf16.msra.mxu0 %v1717
    %2275 = vmatpush.bf16.msra.mxu0 %v1716
    %2276 = vmatpush.bf16.msra.mxu0 %v1715
    %2277 = vmatpush.bf16.msra.mxu0 %v1714
    %2278 = vmatpush.bf16.msra.mxu0 %v1713
    %2279 = vmatpush.bf16.msra.mxu0 %v1712
    %2280 = vmatpush.bf16.msra.mxu0 %v1711
    %2281 = vmatmul.bf16.gmra.mxu0 %v549
    %v2282 = vpop.f32.mrf.mxu0
    %v2283 = vadd.f32 %v2270, %v2282
    %v2284 = vpop.f32.mrf.mxu0
    %2285 = vdwg.mxu0
    %2286 = vmatpush.bf16.msra.mxu0 %v1726
    %2287 = vmatpush.bf16.msra.mxu0 %v1725
    %2288 = vmatpush.bf16.msra.mxu0 %v1724
    %2289 = vmatpush.bf16.msra.mxu0 %v1723
    %2290 = vmatpush.bf16.msra.mxu0 %v1722
    %2291 = vmatpush.bf16.msra.mxu0 %v1721
    %2292 = vmatpush.bf16.msra.mxu0 %v1720
    %2293 = vmatpush.bf16.msra.mxu0 %v1719
    %2294 = vmatmul.bf16.gmra.mxu0 %v550
    %v2295 = vpop.f32.mrf.mxu0
    %v2296 = vadd.f32 %v2283, %v2295
    %v2297 = vpop.f32.mrf.mxu0
    %2298 = vdwg.mxu0
    %2299 = vmatpush.bf16.msra.mxu0 %v1734
    %2300 = vmatpush.bf16.msra.mxu0 %v1733
    %2301 = vmatpush.bf16.msra.mxu0 %v1732
    %2302 = vmatpush.bf16.msra.mxu0 %v1731
    %2303 = vmatpush.bf16.msra.mxu0 %v1730
    %2304 = vmatpush.bf16.msra.mxu0 %v1729
    %2305 = vmatpush.bf16.msra.mxu0 %v1728
    %2306 = vmatpush.bf16.msra.mxu0 %v1727
    %2307 = vmatmul.bf16.gmra.mxu0 %v551
    %v2308 = vpop.f32.mrf.mxu0
    %v2309 = vadd.f32 %v2296, %v2308
    %v2310 = vpop.f32.mrf.mxu0
    %2311 = vdwg.mxu0
    %2312 = vmatpush.bf16.msra.mxu0 %v1742
    %2313 = vmatpush.bf16.msra.mxu0 %v1741
    %2314 = vmatpush.bf16.msra.mxu0 %v1740
    %2315 = vmatpush.bf16.msra.mxu0 %v1739
    %2316 = vmatpush.bf16.msra.mxu0 %v1738
    %2317 = vmatpush.bf16.msra.mxu0 %v1737
    %2318 = vmatpush.bf16.msra.mxu0 %v1736
    %2319 = vmatpush.bf16.msra.mxu0 %v1735
    %2320 = vmatmul.bf16.gmra.mxu0 %v552
    %v2321 = vpop.f32.mrf.mxu0
    %v2322 = vadd.f32 %v2309, %v2321
    %v2323 = vpop.f32.mrf.mxu0
    %2324 = vdwg.mxu0
    %2325 = vmatpush.bf16.msra.mxu0 %v1750
    %2326 = vmatpush.bf16.msra.mxu0 %v1749
    %2327 = vmatpush.bf16.msra.mxu0 %v1748
    %2328 = vmatpush.bf16.msra.mxu0 %v1747
    %2329 = vmatpush.bf16.msra.mxu0 %v1746
    %2330 = vmatpush.bf16.msra.mxu0 %v1745
    %2331 = vmatpush.bf16.msra.mxu0 %v1744
    %2332 = vmatpush.bf16.msra.mxu0 %v1743
    %2333 = vmatmul.bf16.gmra.mxu0 %v553
    %v2334 = vpop.f32.mrf.mxu0
    %v2335 = vadd.f32 %v2322, %v2334
    %v2336 = vpop.f32.mrf.mxu0
    %2337 = vdwg.mxu0
    %2338 = vmatpush.bf16.msra.mxu0 %v1758
    %2339 = vmatpush.bf16.msra.mxu0 %v1757
    %2340 = vmatpush.bf16.msra.mxu0 %v1756
    %2341 = vmatpush.bf16.msra.mxu0 %v1755
    %2342 = vmatpush.bf16.msra.mxu0 %v1754
    %2343 = vmatpush.bf16.msra.mxu0 %v1753
    %2344 = vmatpush.bf16.msra.mxu0 %v1752
    %2345 = vmatpush.bf16.msra.mxu0 %v1751
    %2346 = vmatmul.bf16.gmra.mxu0 %v554
    %v2347 = vpop.f32.mrf.mxu0
    %v2348 = vadd.f32 %v2335, %v2347
    %v2349 = vpop.f32.mrf.mxu0
    %2350 = vdwg.mxu0
    %2351 = vmatpush.bf16.msra.mxu0 %v1766
    %2352 = vmatpush.bf16.msra.mxu0 %v1765
    %2353 = vmatpush.bf16.msra.mxu0 %v1764
    %2354 = vmatpush.bf16.msra.mxu0 %v1763
    %2355 = vmatpush.bf16.msra.mxu0 %v1762
    %2356 = vmatpush.bf16.msra.mxu0 %v1761
    %2357 = vmatpush.bf16.msra.mxu0 %v1760
    %2358 = vmatpush.bf16.msra.mxu0 %v1759
    %2359 = vmatmul.bf16.gmra.mxu0 %v557
    %v2360 = vpop.f32.mrf.mxu0
    %v2361 = vadd.f32 %v2348, %v2360
    %v2362 = vpop.f32.mrf.mxu0
    %2363 = vdwg.mxu0
    %2364 = vmatpush.bf16.msra.mxu0 %v1774
    %2365 = vmatpush.bf16.msra.mxu0 %v1773
    %2366 = vmatpush.bf16.msra.mxu0 %v1772
    %2367 = vmatpush.bf16.msra.mxu0 %v1771
    %2368 = vmatpush.bf16.msra.mxu0 %v1770
    %2369 = vmatpush.bf16.msra.mxu0 %v1769
    %2370 = vmatpush.bf16.msra.mxu0 %v1768
    %2371 = vmatpush.bf16.msra.mxu0 %v1767
    %2372 = vmatmul.bf16.gmra.mxu0 %v558
    %v2373 = vpop.f32.mrf.mxu0
    %v2374 = vadd.f32 %v2361, %v2373
    %v2375 = vpop.f32.mrf.mxu0
    %2376 = vdwg.mxu0
    %2377 = vmatpush.bf16.msra.mxu0 %v1782
    %2378 = vmatpush.bf16.msra.mxu0 %v1781
    %2379 = vmatpush.bf16.msra.mxu0 %v1780
    %2380 = vmatpush.bf16.msra.mxu0 %v1779
    %2381 = vmatpush.bf16.msra.mxu0 %v1778
    %2382 = vmatpush.bf16.msra.mxu0 %v1777
    %2383 = vmatpush.bf16.msra.mxu0 %v1776
    %2384 = vmatpush.bf16.msra.mxu0 %v1775
    %2385 = vmatmul.bf16.gmra.mxu0 %v559
    %v2386 = vpop.f32.mrf.mxu0
    %v2387 = vadd.f32 %v2374, %v2386
    %v2388 = vpop.f32.mrf.mxu0
    %2389 = vdwg.mxu0
    %2390 = vmatpush.bf16.msra.mxu0 %v1790
    %2391 = vmatpush.bf16.msra.mxu0 %v1789
    %2392 = vmatpush.bf16.msra.mxu0 %v1788
    %2393 = vmatpush.bf16.msra.mxu0 %v1787
    %2394 = vmatpush.bf16.msra.mxu0 %v1786
    %2395 = vmatpush.bf16.msra.mxu0 %v1785
    %2396 = vmatpush.bf16.msra.mxu0 %v1784
    %2397 = vmatpush.bf16.msra.mxu0 %v1783
    %2398 = vmatmul.bf16.gmra.mxu0 %v560
    %v2399 = vpop.f32.mrf.mxu0
    %v2400 = vadd.f32 %v2387, %v2399
    %v2401 = vpop.f32.mrf.mxu0
    %2402 = vdwg.mxu0
    %2403 = vmatpush.bf16.msra.mxu0 %v1798
    %2404 = vmatpush.bf16.msra.mxu0 %v1797
    %2405 = vmatpush.bf16.msra.mxu0 %v1796
    %2406 = vmatpush.bf16.msra.mxu0 %v1795
    %2407 = vmatpush.bf16.msra.mxu0 %v1794
    %2408 = vmatpush.bf16.msra.mxu0 %v1793
    %2409 = vmatpush.bf16.msra.mxu0 %v1792
    %2410 = vmatpush.bf16.msra.mxu0 %v1791
    %2411 = vmatmul.bf16.gmra.mxu0 %v561
    %v2412 = vpop.f32.mrf.mxu0
    %v2413 = vadd.f32 %v2400, %v2412
    %v2414 = vpop.f32.mrf.mxu0
    %2415 = vdwg.mxu0
    %2416 = vmatpush.bf16.msra.mxu0 %v1806
    %2417 = vmatpush.bf16.msra.mxu0 %v1805
    %2418 = vmatpush.bf16.msra.mxu0 %v1804
    %2419 = vmatpush.bf16.msra.mxu0 %v1803
    %2420 = vmatpush.bf16.msra.mxu0 %v1802
    %2421 = vmatpush.bf16.msra.mxu0 %v1801
    %2422 = vmatpush.bf16.msra.mxu0 %v1800
    %2423 = vmatpush.bf16.msra.mxu0 %v1799
    %2424 = vmatmul.bf16.gmra.mxu0 %v562
    %v2425 = vpop.f32.mrf.mxu0
    %v2426 = vadd.f32 %v2413, %v2425
    %v2427 = vpop.f32.mrf.mxu0
    %2428 = vdwg.mxu0
    %2429 = vmatpush.bf16.msra.mxu0 %v1814
    %2430 = vmatpush.bf16.msra.mxu0 %v1813
    %2431 = vmatpush.bf16.msra.mxu0 %v1812
    %2432 = vmatpush.bf16.msra.mxu0 %v1811
    %2433 = vmatpush.bf16.msra.mxu0 %v1810
    %2434 = vmatpush.bf16.msra.mxu0 %v1809
    %2435 = vmatpush.bf16.msra.mxu0 %v1808
    %2436 = vmatpush.bf16.msra.mxu0 %v1807
    %2437 = vmatmul.bf16.gmra.mxu0 %v563
    %v2438 = vpop.f32.mrf.mxu0
    %v2439 = vadd.f32 %v2426, %v2438
    %v2440 = vpop.f32.mrf.mxu0
    %2441 = vdwg.mxu0
    %2442 = vmatpush.bf16.msra.mxu0 %v1822
    %2443 = vmatpush.bf16.msra.mxu0 %v1821
    %2444 = vmatpush.bf16.msra.mxu0 %v1820
    %2445 = vmatpush.bf16.msra.mxu0 %v1819
    %2446 = vmatpush.bf16.msra.mxu0 %v1818
    %2447 = vmatpush.bf16.msra.mxu0 %v1817
    %2448 = vmatpush.bf16.msra.mxu0 %v1816
    %2449 = vmatpush.bf16.msra.mxu0 %v1815
    %2450 = vmatmul.bf16.gmra.mxu0 %v564
    %v2451 = vpop.f32.mrf.mxu0
    %v2452 = vadd.f32 %v2439, %v2451
    %v2453 = vpop.f32.mrf.mxu0
    %2454 = vdwg.mxu0
    %2455 = vmatpush.bf16.msra.mxu0 %v1830
    %2456 = vmatpush.bf16.msra.mxu0 %v1829
    %2457 = vmatpush.bf16.msra.mxu0 %v1828
    %2458 = vmatpush.bf16.msra.mxu0 %v1827
    %2459 = vmatpush.bf16.msra.mxu0 %v1826
    %2460 = vmatpush.bf16.msra.mxu0 %v1825
    %2461 = vmatpush.bf16.msra.mxu0 %v1824
    %2462 = vmatpush.bf16.msra.mxu0 %v1823
    %2463 = vmatmul.bf16.gmra.mxu0 %v567
    %v2464 = vpop.f32.mrf.mxu0
    %v2465 = vadd.f32 %v2452, %v2464
    %v2466 = vpop.f32.mrf.mxu0
    %2467 = vdwg.mxu0
    %2468 = vmatpush.bf16.msra.mxu0 %v1838
    %2469 = vmatpush.bf16.msra.mxu0 %v1837
    %2470 = vmatpush.bf16.msra.mxu0 %v1836
    %2471 = vmatpush.bf16.msra.mxu0 %v1835
    %2472 = vmatpush.bf16.msra.mxu0 %v1834
    %2473 = vmatpush.bf16.msra.mxu0 %v1833
    %2474 = vmatpush.bf16.msra.mxu0 %v1832
    %2475 = vmatpush.bf16.msra.mxu0 %v1831
    %2476 = vmatmul.bf16.gmra.mxu0 %v568
    %v2477 = vpop.f32.mrf.mxu0
    %v2478 = vadd.f32 %v2465, %v2477
    %v2479 = vpop.f32.mrf.mxu0
    %2480 = vdwg.mxu0
    %2481 = vmatpush.bf16.msra.mxu0 %v1846
    %2482 = vmatpush.bf16.msra.mxu0 %v1845
    %2483 = vmatpush.bf16.msra.mxu0 %v1844
    %2484 = vmatpush.bf16.msra.mxu0 %v1843
    %2485 = vmatpush.bf16.msra.mxu0 %v1842
    %2486 = vmatpush.bf16.msra.mxu0 %v1841
    %2487 = vmatpush.bf16.msra.mxu0 %v1840
    %2488 = vmatpush.bf16.msra.mxu0 %v1839
    %2489 = vmatmul.bf16.gmra.mxu0 %v569
    %v2490 = vpop.f32.mrf.mxu0
    %v2491 = vadd.f32 %v2478, %v2490
    %v2492 = vpop.f32.mrf.mxu0
    %2493 = vdwg.mxu0
    %2494 = vmatpush.bf16.msra.mxu0 %v1854
    %2495 = vmatpush.bf16.msra.mxu0 %v1853
    %2496 = vmatpush.bf16.msra.mxu0 %v1852
    %2497 = vmatpush.bf16.msra.mxu0 %v1851
    %2498 = vmatpush.bf16.msra.mxu0 %v1850
    %2499 = vmatpush.bf16.msra.mxu0 %v1849
    %2500 = vmatpush.bf16.msra.mxu0 %v1848
    %2501 = vmatpush.bf16.msra.mxu0 %v1847
    %2502 = vmatmul.bf16.gmra.mxu0 %v570
    %v2503 = vpop.f32.mrf.mxu0
    %v2504 = vadd.f32 %v2491, %v2503
    %v2505 = vpop.f32.mrf.mxu0
    %2506 = vdwg.mxu0
    %2507 = vmatpush.bf16.msra.mxu0 %v1862
    %2508 = vmatpush.bf16.msra.mxu0 %v1861
    %2509 = vmatpush.bf16.msra.mxu0 %v1860
    %2510 = vmatpush.bf16.msra.mxu0 %v1859
    %2511 = vmatpush.bf16.msra.mxu0 %v1858
    %2512 = vmatpush.bf16.msra.mxu0 %v1857
    %2513 = vmatpush.bf16.msra.mxu0 %v1856
    %2514 = vmatpush.bf16.msra.mxu0 %v1855
    %2515 = vmatmul.bf16.gmra.mxu0 %v571
    %v2516 = vpop.f32.mrf.mxu0
    %v2517 = vadd.f32 %v2504, %v2516
    %v2518 = vpop.f32.mrf.mxu0
    %2519 = vdwg.mxu0
    %2520 = vmatpush.bf16.msra.mxu0 %v1870
    %2521 = vmatpush.bf16.msra.mxu0 %v1869
    %2522 = vmatpush.bf16.msra.mxu0 %v1868
    %2523 = vmatpush.bf16.msra.mxu0 %v1867
    %2524 = vmatpush.bf16.msra.mxu0 %v1866
    %2525 = vmatpush.bf16.msra.mxu0 %v1865
    %2526 = vmatpush.bf16.msra.mxu0 %v1864
    %2527 = vmatpush.bf16.msra.mxu0 %v1863
    %2528 = vmatmul.bf16.gmra.mxu0 %v572
    %v2529 = vpop.f32.mrf.mxu0
    %v2530 = vadd.f32 %v2517, %v2529
    %v2531 = vpop.f32.mrf.mxu0
    %2532 = vdwg.mxu0
    %2533 = vmatpush.bf16.msra.mxu0 %v1878
    %2534 = vmatpush.bf16.msra.mxu0 %v1877
    %2535 = vmatpush.bf16.msra.mxu0 %v1876
    %2536 = vmatpush.bf16.msra.mxu0 %v1875
    %2537 = vmatpush.bf16.msra.mxu0 %v1874
    %2538 = vmatpush.bf16.msra.mxu0 %v1873
    %2539 = vmatpush.bf16.msra.mxu0 %v1872
    %2540 = vmatpush.bf16.msra.mxu0 %v1871
    %2541 = vmatmul.bf16.gmra.mxu0 %v573
    %v2542 = vpop.f32.mrf.mxu0
    %v2543 = vadd.f32 %v2530, %v2542
    %v2544 = vpop.f32.mrf.mxu0
    %2545 = vdwg.mxu0
    %2546 = vmatpush.bf16.msra.mxu0 %v1886
    %2547 = vmatpush.bf16.msra.mxu0 %v1885
    %2548 = vmatpush.bf16.msra.mxu0 %v1884
    %2549 = vmatpush.bf16.msra.mxu0 %v1883
    %2550 = vmatpush.bf16.msra.mxu0 %v1882
    %2551 = vmatpush.bf16.msra.mxu0 %v1881
    %2552 = vmatpush.bf16.msra.mxu0 %v1880
    %2553 = vmatpush.bf16.msra.mxu0 %v1879
    %2554 = vmatmul.bf16.gmra.mxu0 %v574
    %v2555 = vpop.f32.mrf.mxu0
    %v2556 = vadd.f32 %v2543, %v2555
    %v2557 = vpop.f32.mrf.mxu0
    %2558 = vdwg.mxu0
    %vm2559 = vcmask 254976
    %2560 = vst.msk [vmem:[#allocation2] sm:$0x3] %vm2559, %v2556
    // Predicated region
    $region14: #{cnn_encoder_forward.3} parent=1 // pred_check
      _
    $region15: #{cnn_encoder_forward.3} parent=1 // pred_check_branch
      %2562 = sbr.rel (0) target = $region17
    $region16: #{cnn_encoder_forward.3} parent=1 // pred_region
      %2564 = vsyncadd [#allocation3], 0
      %s2566 = sshll.u32 [#allocation2], 4
      %s2567 = int_to_ptr.vmem [resolvable:$true] %s2566
      %s2568 = sshll.u32 %s3, 4
      %s2569 = int_to_ptr.hbm [resolvable:$true] %s2568
      %2571 = dma.vmem_to_hbm [thread:$0]  %s2567, 32, %s2569, [#allocation3]
    $region17: #{cnn_encoder_forward.3} parent=1 // pred_fallthru
      _
    // Predicated region
    $region18: #{cnn_encoder_forward.3} parent=1 // pred_check
      _
    $region19: #{cnn_encoder_forward.3} parent=1 // pred_check_branch
      %2573 = sbr.rel (0) target = $region21
    $region20: #{cnn_encoder_forward.3} parent=1 // pred_region
      %2575 = dma.done [#allocation3], 32
    $region21: #{cnn_encoder_forward.3} parent=1 // pred_fallthru
      _
    %2576 = vsyncpa [#allocation3], 1

</llo_original>
